<compile_context>
chip_gen: v7x
topology: tpu7x:2x2x1
jax: 0.10.0
libtpu: 0.0.40
codegen_flags: <defaults>
</compile_context>

<pallas_src>
import jax
import jax.numpy as jnp
from jax.experimental import pallas as pl
from jax.experimental.pallas import tpu as pltpu


# ---------------------------------------------------------------------------
# Generation-aware VMEM sizing
# ---------------------------------------------------------------------------
def _vmem_params():
    cap = 64 << 20                       # conservative default (v7x per-TC VMEM)
    try:
        info = pltpu.get_tpu_info()
        cap = int(getattr(info, "vmem_capacity_bytes", cap)) or cap
    except Exception:
        pass
    budget = cap // 4                    # per-step working-set budget for tiling
    limit = (cap * 3) // 4               # scoped VMEM limit handed to Mosaic
    return budget, limit


# ---------------------------------------------------------------------------
# Kernel 1: fused 3x3 / stride-2 / pad-1 conv + bias + ReLU (single big-K dot)
# ---------------------------------------------------------------------------
def _make_conv_kernel(emit_nhwc, emit_nchw):
    assert emit_nhwc or emit_nchw

    def kernel(p_ref, w_ref, b_ref, *out_refs):
        # p_ref: (1, t_m, 9*cin) bf16 im2col patches (t_m = t_ho * wo)
        # w_ref: (9*cin, cout)   bf16
        # b_ref: (1, cout)       f32
        acc = jnp.dot(p_ref[0], w_ref[...],
                      preferred_element_type=jnp.float32)      # one MXU dot
        acc = jnp.maximum(acc + b_ref[...], 0.0)                # f32 epilogue
        idx = 0
        if emit_nhwc:
            # NHWC-flattened bf16, consumed by the next stage (lane = cout)
            out_refs[idx][0] = acc.astype(out_refs[idx].dtype)
            idx += 1
        if emit_nchw:
            # NCHW-flattened f32, lane = t_m (lane-dense store; free reshape to
            # (cout, ho, wo) outside -> no XLA transpose for returned maps)
            out_refs[idx][0] = acc.T
    return kernel


def _choose_row_tile(ho, wo, cin, cout, emit_nhwc, emit_nchw, n_batch, budget_bytes):
    """Largest divisor of `ho` whose per-step working set fits the budget while
    keeping >= ~4 total grid steps (>= 2 per TensorCore on v7x) when possible."""
    k = 9 * cin

    def step_bytes(d):
        m = d * wo
        blocks = m * k * 2                                    # patches (bf16)
        if emit_nhwc:
            blocks += m * cout * 2
        if emit_nchw:
            blocks += m * cout * 4
        fixed = k * cout * 2 + cout * 4                       # weights + bias
        scratch = 2 * m * cout * 4                            # f32 acc + transpose tmp
        return 2 * blocks + fixed + scratch                   # 2x = double buffering

    def lane_ok(d):
        m = d * wo
        if emit_nchw and not (d == ho or m % 128 == 0):       # lane-dense NCHW store
            return False
        return d == ho or m % 8 == 0                          # (8,128) tiling rule

    cands = [d for d in range(1, ho + 1) if ho % d == 0 and lane_ok(d)]
    fitting = [d for d in cands if step_bytes(d) <= budget_bytes] or [min(cands)]
    preferred = [d for d in fitting if n_batch * (ho // d) >= 4]
    return max(preferred) if preferred else max(fitting)


def conv3x3_s2_relu(x_nhwc, w, b, *, emit_nhwc=True, emit_nchw=True):
    """3x3 / stride-2 / pad-1 conv + bias + ReLU.

    x_nhwc: (N, H, W, Cin)   w: (3, 3, Cin, Cout) HWIO   b: (Cout,)
    Returns (y_nhwc bf16 (N, Ho, Wo, Cout) or None,
             feat_nchw f32 (N, Cout, Ho, Wo) or None)
    with Ho = ceil(H/2), Wo = ceil(W/2) (matches PyTorch for odd sizes).
    """
    n, h, wdt, cin = x_nhwc.shape
    cout = w.shape[-1]
    ho, wo = (h + 1) // 2, (wdt + 1) // 2
    k = 9 * cin

    # --- XLA glue: pad + stride-2 im2col; tap order (kh, kw) row-major matches
    #     w.reshape(9*cin, cout). ---
    x_bf = x_nhwc.astype(jnp.bfloat16)
    xp = jnp.pad(x_bf, ((0, 0), (1, 1), (1, 1), (0, 0)))
    taps = [xp[:, kh:kh + 2 * ho - 1:2, kw:kw + 2 * wo - 1:2, :]
            for kh in range(3) for kw in range(3)]
    patches = jnp.concatenate(taps, axis=-1).reshape(n, ho * wo, k)

    wk = w.reshape(k, cout).astype(jnp.bfloat16)
    b2 = b.reshape(1, cout).astype(jnp.float32)

    budget, vmem_limit = _vmem_params()
    t_ho = _choose_row_tile(ho, wo, cin, cout, emit_nhwc, emit_nchw, n, budget)
    t_m = t_ho * wo
    grid = (n, ho // t_ho)

    in_specs = [pl.BlockSpec((1, t_m, k), lambda i, r: (i, r, 0)),
                pl.BlockSpec((k, cout), lambda i, r: (0, 0)),
                pl.BlockSpec((1, cout), lambda i, r: (0, 0))]

    out_shape, out_specs = [], []
    if emit_nhwc:
        out_shape.append(jax.ShapeDtypeStruct((n, ho * wo, cout), jnp.bfloat16))
        out_specs.append(pl.BlockSpec((1, t_m, cout), lambda i, r: (i, r, 0)))
    if emit_nchw:
        out_shape.append(jax.ShapeDtypeStruct((n, cout, ho * wo), jnp.float32))
        out_specs.append(pl.BlockSpec((1, cout, t_m), lambda i, r: (i, 0, r)))

    outs = pl.pallas_call(
        _make_conv_kernel(emit_nhwc, emit_nchw),
        out_shape=tuple(out_shape),
        grid=grid,
        in_specs=in_specs,
        out_specs=tuple(out_specs),
        compiler_params=pltpu.CompilerParams(
            dimension_semantics=("parallel", "parallel"),
            vmem_limit_bytes=vmem_limit),
    )(patches, wk, b2)
    if not isinstance(outs, (tuple, list)):
        outs = (outs,)

    idx = 0
    y_nhwc, feat_nchw = None, None
    if emit_nhwc:
        y_nhwc = outs[idx].reshape(n, ho, wo, cout)
        idx += 1
    if emit_nchw:
        feat_nchw = outs[idx].reshape(n, cout, ho, wo)
    return y_nhwc, feat_nchw


# ---------------------------------------------------------------------------
# Kernel 2: all nearest-neighbor mask downsamples fused into one pallas_call
# (tiled over batch; exact bf16 one-hot selection on the MXU, int8 write-back)
# ---------------------------------------------------------------------------
def _make_mask_kernel(n_out):
    def kernel(*refs):
        m_ref = refs[0]                            # (1, h, w) bf16
        row_refs = refs[1:1 + n_out]               # (hf_i, h) bf16 one-hot
        col_refs = refs[1 + n_out:1 + 2 * n_out]   # (w, wf_i) bf16 one-hot
        out_refs = refs[1 + 2 * n_out:]            # (1, hf_i, wf_i) int8
        m = m_ref[0]
        for i in range(n_out):
            rows = jnp.dot(row_refs[i][...], m,
                           preferred_element_type=jnp.float32)          # (hf, w)
            sel = jnp.dot(rows.astype(jnp.bfloat16), col_refs[i][...],
                          preferred_element_type=jnp.float32)           # (hf, wf)
            out_refs[i][0] = (sel > 0.5).astype(jnp.int8)
    return kernel


def interpolate_masks_nearest(mask_bool, sizes):
    """[F.interpolate(mask[None].float(), size=s).to(bool)[0] for s in sizes]
    ('nearest': src = floor(dst * in / out)) in one fused Pallas kernel."""
    n, h, w = mask_bool.shape
    m_bf = mask_bool.astype(jnp.bfloat16)
    row_sels, col_sels = [], []
    for hf, wf in sizes:
        ri = (jnp.arange(hf) * h) // hf
        ci = (jnp.arange(wf) * w) // wf
        row_sels.append(jax.nn.one_hot(ri, h, dtype=jnp.bfloat16))              # (hf, h)
        col_sels.append(jnp.transpose(jax.nn.one_hot(ci, w, dtype=jnp.bfloat16)))  # (w, wf)

    n_out = len(sizes)
    _, vmem_limit = _vmem_params()
    in_specs = ([pl.BlockSpec((1, h, w), lambda b: (b, 0, 0))]
                + [pl.BlockSpec((hf, h), lambda b: (0, 0)) for hf, _ in sizes]
                + [pl.BlockSpec((w, wf), lambda b: (0, 0)) for _, wf in sizes])
    out_shape = tuple(jax.ShapeDtypeStruct((n, hf, wf), jnp.int8) for hf, wf in sizes)
    out_specs = tuple(pl.BlockSpec((1, hf, wf), lambda b: (b, 0, 0)) for hf, wf in sizes)

    outs = pl.pallas_call(
        _make_mask_kernel(n_out),
        out_shape=out_shape,
        grid=(n,),
        in_specs=in_specs,
        out_specs=out_specs,
        compiler_params=pltpu.CompilerParams(
            dimension_semantics=("parallel",),
            vmem_limit_bytes=vmem_limit),
    )(m_bf, *row_sels, *col_sels)
    return [o.astype(jnp.bool_) for o in outs]


# ---------------------------------------------------------------------------
# BackboneBase (JAX/Pallas port)
# ---------------------------------------------------------------------------
class BackboneBase:
    def __init__(self, params, train_backbone, num_channels, return_interm_layers):
        # `train_backbone` only toggles requires_grad in the reference - no
        # effect on the forward pass, so it is accepted and ignored here.
        del train_backbone
        self.params = params
        self.num_channels = num_channels
        if return_interm_layers:
            self.return_layers = {'layer1': '0', 'layer2': '1',
                                  'layer3': '2', 'layer4': '3'}
        else:
            self.return_layers = {'layer4': '0'}

    def forward(self, tensors_nchw, mask):
        """tensors_nchw: (N, C, H, W) float32;  mask: (N, H, W) bool.
        Returns dict name -> (features NCHW float32, mask (N, Hf, Wf) bool)."""
        assert mask is not None
        # One-time NHWC + bf16 relayout of the input; every stage then stays in
        # bf16 NHWC and returned maps are produced in NCHW by the kernel itself.
        x = jnp.transpose(tensors_nchw, (0, 2, 3, 1)).astype(jnp.bfloat16)
        layer_names = ('layer1', 'layer2', 'layer3', 'layer4')
        xs = {}
        for li, lname in enumerate(layer_names):
            w, b = self.params[lname]
            is_last = li == len(layer_names) - 1
            want_feat = lname in self.return_layers
            x, feat_nchw = conv3x3_s2_relu(
                x, w, b,
                emit_nhwc=not is_last,          # layer4 NHWC output is dead -> drop
                emit_nchw=want_feat)
            if want_feat:
                xs[self.return_layers[lname]] = feat_nchw

        names = list(xs.keys())
        sizes = [tuple(int(d) for d in xs[k].shape[-2:]) for k in names]
        masks = interpolate_masks_nearest(mask, sizes)
        return {k: (xs[k], m) for k, m in zip(names, masks)}   # NestedTensor(x, mask)


def make_backbone_params(key, cin, widths=(64, 128, 256, 256)):
    params = {}
    c = cin
    for i, cout in enumerate(widths, start=1):
        key, k1, k2 = jax.random.split(key, 3)
        w = jax.random.normal(k1, (3, 3, c, cout), jnp.float32) / jnp.sqrt(9.0 * c)
        b = 0.01 * jax.random.normal(k2, (cout,), jnp.float32)
        params[f'layer{i}'] = (w, b)
        c = cout
    return params, c


if __name__ == "__main__":
    key = jax.random.PRNGKey(0)
    N, C, H, W = 2, 4, 32, 32
    key, kx, kp = jax.random.split(key, 3)

    images = jax.random.normal(kx, (N, C, H, W), jnp.float32)

    # DETR-style padding mask: True where padded.
    col = jnp.arange(W)[None, None, :]
    row = jnp.arange(H)[None, :, None]
    valid_w = jnp.array([W, W - 8])[:, None, None]
    valid_h = jnp.array([H, H - 4])[:, None, None]
    mask = (col >= valid_w) | (row >= valid_h)   # (N, H, W) bool

    params, num_channels = make_backbone_params(kp, C)
    model = BackboneBase(params, train_backbone=True,
                         num_channels=num_channels, return_interm_layers=True)

    fwd = jax.jit(model.forward)
    out = fwd(images, mask)

    expected = {'0': (64, 16), '1': (128, 8), '2': (256, 4), '3': (256, 2)}
    for name in sorted(out.keys()):
        feat, m = out[name]
        jax.block_until_ready(feat)
        jax.block_until_ready(m)
        cexp, sexp = expected[name]
        assert feat.shape == (N, cexp, sexp, sexp) and feat.dtype == jnp.float32
        assert m.shape == (N, sexp, sexp) and m.dtype == jnp.bool_

    print("KERNEL_OK")
</pallas_src>

<mosaic_0001>
module attributes {stable_mosaic.version = 11 : i64} {
  func.func @kernel(%arg0: i32, %arg1: i32, %arg2: memref<1x128x36xbf16, #tpu.memory_space<vmem>>, %arg3: memref<36x64xbf16, #tpu.memory_space<vmem>>, %arg4: memref<1x64xf32, #tpu.memory_space<vmem>>, %arg5: memref<1x128x64xbf16, #tpu.memory_space<vmem>>, %arg6: memref<1x64x128xf32, #tpu.memory_space<vmem>>) attributes {dimension_semantics = [#tpu.dimension_semantics<parallel>, #tpu.dimension_semantics<parallel>], iteration_bounds = array<i64: 2, 2>, scalar_prefetch = 0 : i64, scratch_operands = 0 : i64, tpu.core_type = #tpu.core_type<tc>, window_params = [{transform_indices = @transform_0, window_bounds = array<i64: 1, 128, 36>}, {pipeline_mode = #tpu.pipeline_mode<synchronous>, transform_indices = @transform_1, window_bounds = array<i64: 36, 64>}, {pipeline_mode = #tpu.pipeline_mode<synchronous>, transform_indices = @transform_2, window_bounds = array<i64: 1, 64>}, {transform_indices = @transform_3, window_bounds = array<i64: 1, 128, 64>}, {transform_indices = @transform_4, window_bounds = array<i64: 1, 64, 128>}]} {
    %c0 = arith.constant 0 : index
    %c0_0 = arith.constant 0 : index
    %c0_1 = arith.constant 0 : index
    %0 = vector.load %arg2[%c0, %c0_0, %c0_1] : memref<1x128x36xbf16, #tpu.memory_space<vmem>>, vector<1x128x36xbf16>
    %1 = vector.shape_cast %0 : vector<1x128x36xbf16> to vector<128x36xbf16>
    %c0_2 = arith.constant 0 : index
    %c0_3 = arith.constant 0 : index
    %2 = vector.load %arg3[%c0_2, %c0_3] : memref<36x64xbf16, #tpu.memory_space<vmem>>, vector<36x64xbf16>
    %cst = arith.constant dense<0.000000e+00> : vector<128x64xf32>
    %3 = tpu.matmul %1, %2, %cst {dimension_numbers = #tpu.dot_dimension_numbers<[1], [0], [0], [1], [0, 0, 1, 1], [], []>} : vector<128x36xbf16>, vector<36x64xbf16>, vector<128x64xf32> -> vector<128x64xf32>
    %c0_4 = arith.constant 0 : index
    %c0_5 = arith.constant 0 : index
    %4 = vector.load %arg4[%c0_4, %c0_5] : memref<1x64xf32, #tpu.memory_space<vmem>>, vector<1x64xf32>
    %5 = vector.broadcast %4 : vector<1x64xf32> to vector<128x64xf32>
    %6 = arith.addf %3, %5 : vector<128x64xf32>
    %cst_6 = arith.constant 0.000000e+00 : f32
    %7 = vector.broadcast %cst_6 : f32 to vector<128x64xf32>
    %8 = arith.maximumf %6, %7 : vector<128x64xf32>
    %9 = arith.truncf %8 : vector<128x64xf32> to vector<128x64xbf16>
    %c0_7 = arith.constant 0 : index
    %c0_8 = arith.constant 0 : index
    %c0_9 = arith.constant 0 : index
    %10 = vector.load %arg5[%c0_7, %c0_8, %c0_9] : memref<1x128x64xbf16, #tpu.memory_space<vmem>>, vector<1x128x64xbf16>
    %11 = vector.shape_cast %10 : vector<1x128x64xbf16> to vector<128x64xbf16>
    %12 = vector.shape_cast %9 : vector<128x64xbf16> to vector<1x128x64xbf16>
    tpu.vector_store %arg5[%c0_7, %c0_8, %c0_9], %12 {strides = array<i32>} : memref<1x128x64xbf16, #tpu.memory_space<vmem>>, vector<1x128x64xbf16>,
    %13 = tpu.transpose %8, [1, 0] : vector<128x64xf32> -> vector<64x128xf32>
    %c0_10 = arith.constant 0 : index
    %c0_11 = arith.constant 0 : index
    %c0_12 = arith.constant 0 : index
    %14 = vector.load %arg6[%c0_10, %c0_11, %c0_12] : memref<1x64x128xf32, #tpu.memory_space<vmem>>, vector<1x64x128xf32>
    %15 = vector.shape_cast %14 : vector<1x64x128xf32> to vector<64x128xf32>
    %16 = vector.shape_cast %13 : vector<64x128xf32> to vector<1x64x128xf32>
    tpu.vector_store %arg6[%c0_10, %c0_11, %c0_12], %16 {strides = array<i32>} : memref<1x64x128xf32, #tpu.memory_space<vmem>>, vector<1x64x128xf32>,
    return
  }
  func.func @transform_0(%arg0: i32, %arg1: i32) -> (i32, i32, i32) {
    %c0_i32 = arith.constant 0 : i32
    %c0_i32_0 = arith.constant 0 : i32
    return %arg0, %arg1, %c0_i32 : i32, i32, i32
  }
  func.func @transform_1(%arg0: i32, %arg1: i32) -> (i32, i32) {
    %c0_i32 = arith.constant 0 : i32
    %c0_i32_0 = arith.constant 0 : i32
    %c0_i32_1 = arith.constant 0 : i32
    return %c0_i32, %c0_i32_0 : i32, i32
  }
  func.func @transform_2(%arg0: i32, %arg1: i32) -> (i32, i32) {
    %c0_i32 = arith.constant 0 : i32
    %c0_i32_0 = arith.constant 0 : i32
    %c0_i32_1 = arith.constant 0 : i32
    return %c0_i32, %c0_i32_0 : i32, i32
  }
  func.func @transform_3(%arg0: i32, %arg1: i32) -> (i32, i32, i32) {
    %c0_i32 = arith.constant 0 : i32
    %c0_i32_0 = arith.constant 0 : i32
    return %arg0, %arg1, %c0_i32 : i32, i32, i32
  }
  func.func @transform_4(%arg0: i32, %arg1: i32) -> (i32, i32, i32) {
    %c0_i32 = arith.constant 0 : i32
    %c0_i32_0 = arith.constant 0 : i32
    return %arg0, %c0_i32, %arg1 : i32, i32, i32
  }
}

module attributes {stable_mosaic.version = 11 : i64} {
  func.func @kernel(%arg0: i32, %arg1: memref<1x32x32xbf16, #tpu.memory_space<vmem>>, %arg2: memref<16x32xbf16, #tpu.memory_space<vmem>>, %arg3: memref<8x32xbf16, #tpu.memory_space<vmem>>, %arg4: memref<4x32xbf16, #tpu.memory_space<vmem>>, %arg5: memref<2x32xbf16, #tpu.memory_space<vmem>>, %arg6: memref<32x16xbf16, #tpu.memory_space<vmem>>, %arg7: memref<32x8xbf16, #tpu.memory_space<vmem>>, %arg8: memref<32x4xbf16, #tpu.memory_space<vmem>>, %arg9: memref<32x2xbf16, #tpu.memory_space<vmem>>, %arg10: memref<1x16x16xi8, #tpu.memory_space<vmem>>, %arg11: memref<1x8x8xi8, #tpu.memory_space<vmem>>, %arg12: memref<1x4x4xi8, #tpu.memory_space<vmem>>, %arg13: memref<1x2x2xi8, #tpu.memory_space<vmem>>) attributes {dimension_semantics = [#tpu.dimension_semantics<parallel>], iteration_bounds = array<i64: 2>, scalar_prefetch = 0 : i64, scratch_operands = 0 : i64, tpu.core_type = #tpu.core_type<tc>, window_params = [{transform_indices = @transform_0, window_bounds = array<i64: 1, 32, 32>}, {pipeline_mode = #tpu.pipeline_mode<synchronous>, transform_indices = @transform_1, window_bounds = array<i64: 16, 32>}, {pipeline_mode = #tpu.pipeline_mode<synchronous>, transform_indices = @transform_2, window_bounds = array<i64: 8, 32>}, {pipeline_mode = #tpu.pipeline_mode<synchronous>, transform_indices = @transform_3, window_bounds = array<i64: 4, 32>}, {pipeline_mode = #tpu.pipeline_mode<synchronous>, transform_indices = @transform_4, window_bounds = array<i64: 2, 32>}, {pipeline_mode = #tpu.pipeline_mode<synchronous>, transform_indices = @transform_5, window_bounds = array<i64: 32, 16>}, {pipeline_mode = #tpu.pipeline_mode<synchronous>, transform_indices = @transform_6, window_bounds = array<i64: 32, 8>}, {pipeline_mode = #tpu.pipeline_mode<synchronous>, transform_indices = @transform_7, window_bounds = array<i64: 32, 4>}, {pipeline_mode = #tpu.pipeline_mode<synchronous>, transform_indices = @transform_8, window_bounds = array<i64: 32, 2>}, {transform_indices = @transform_9, window_bounds = array<i64: 1, 16, 16>}, {transform_indices = @transform_10, window_bounds = array<i64: 1, 8, 8>}, {transform_indices = @transform_11, window_bounds = array<i64: 1, 4, 4>}, {transform_indices = @transform_12, window_bounds = array<i64: 1, 2, 2>}]} {
    %c0 = arith.constant 0 : index
    %c0_0 = arith.constant 0 : index
    %c0_1 = arith.constant 0 : index
    %0 = vector.load %arg1[%c0, %c0_0, %c0_1] : memref<1x32x32xbf16, #tpu.memory_space<vmem>>, vector<1x32x32xbf16>
    %1 = vector.shape_cast %0 : vector<1x32x32xbf16> to vector<32x32xbf16>
    %c0_2 = arith.constant 0 : index
    %c0_3 = arith.constant 0 : index
    %2 = vector.load %arg2[%c0_2, %c0_3] : memref<16x32xbf16, #tpu.memory_space<vmem>>, vector<16x32xbf16>
    %cst = arith.constant dense<0.000000e+00> : vector<16x32xf32>
    %3 = tpu.matmul %2, %1, %cst {dimension_numbers = #tpu.dot_dimension_numbers<[1], [0], [0], [1], [0, 0, 1, 1], [], []>} : vector<16x32xbf16>, vector<32x32xbf16>, vector<16x32xf32> -> vector<16x32xf32>
    %4 = arith.truncf %3 : vector<16x32xf32> to vector<16x32xbf16>
    %c0_4 = arith.constant 0 : index
    %c0_5 = arith.constant 0 : index
    %5 = vector.load %arg6[%c0_4, %c0_5] : memref<32x16xbf16, #tpu.memory_space<vmem>>, vector<32x16xbf16>
    %cst_6 = arith.constant dense<0.000000e+00> : vector<16x16xf32>
    %6 = tpu.matmul %4, %5, %cst_6 {dimension_numbers = #tpu.dot_dimension_numbers<[1], [0], [0], [1], [0, 0, 1, 1], [], []>} : vector<16x32xbf16>, vector<32x16xbf16>, vector<16x16xf32> -> vector<16x16xf32>
    %cst_7 = arith.constant 5.000000e-01 : f32
    %7 = vector.broadcast %cst_7 : f32 to vector<16x16xf32>
    %8 = arith.cmpf ogt, %6, %7 : vector<16x16xf32>
    %9 = arith.extui %8 : vector<16x16xi1> to vector<16x16xi8>
    %c0_8 = arith.constant 0 : index
    %c0_9 = arith.constant 0 : index
    %c0_10 = arith.constant 0 : index
    %10 = vector.load %arg10[%c0_8, %c0_9, %c0_10] : memref<1x16x16xi8, #tpu.memory_space<vmem>>, vector<1x16x16xi8>
    %11 = vector.shape_cast %10 : vector<1x16x16xi8> to vector<16x16xi8>
    %12 = vector.shape_cast %9 : vector<16x16xi8> to vector<1x16x16xi8>
    tpu.vector_store %arg10[%c0_8, %c0_9, %c0_10], %12 {strides = array<i32>} : memref<1x16x16xi8, #tpu.memory_space<vmem>>, vector<1x16x16xi8>,
    %c0_11 = arith.constant 0 : index
    %c0_12 = arith.constant 0 : index
    %13 = vector.load %arg3[%c0_11, %c0_12] : memref<8x32xbf16, #tpu.memory_space<vmem>>, vector<8x32xbf16>
    %cst_13 = arith.constant dense<0.000000e+00> : vector<8x32xf32>
    %14 = tpu.matmul %13, %1, %cst_13 {dimension_numbers = #tpu.dot_dimension_numbers<[1], [0], [0], [1], [0, 0, 1, 1], [], []>} : vector<8x32xbf16>, vector<32x32xbf16>, vector<8x32xf32> -> vector<8x32xf32>
    %15 = arith.truncf %14 : vector<8x32xf32> to vector<8x32xbf16>
    %c0_14 = arith.constant 0 : index
    %c0_15 = arith.constant 0 : index
    %16 = vector.load %arg7[%c0_14, %c0_15] : memref<32x8xbf16, #tpu.memory_space<vmem>>, vector<32x8xbf16>
    %cst_16 = arith.constant dense<0.000000e+00> : vector<8x8xf32>
    %17 = tpu.matmul %15, %16, %cst_16 {dimension_numbers = #tpu.dot_dimension_numbers<[1], [0], [0], [1], [0, 0, 1, 1], [], []>} : vector<8x32xbf16>, vector<32x8xbf16>, vector<8x8xf32> -> vector<8x8xf32>
    %cst_17 = arith.constant 5.000000e-01 : f32
    %18 = vector.broadcast %cst_17 : f32 to vector<8x8xf32>
    %19 = arith.cmpf ogt, %17, %18 : vector<8x8xf32>
    %20 = arith.extui %19 : vector<8x8xi1> to vector<8x8xi8>
    %c0_18 = arith.constant 0 : index
    %c0_19 = arith.constant 0 : index
    %c0_20 = arith.constant 0 : index
    %21 = vector.load %arg11[%c0_18, %c0_19, %c0_20] : memref<1x8x8xi8, #tpu.memory_space<vmem>>, vector<1x8x8xi8>
    %22 = vector.shape_cast %21 : vector<1x8x8xi8> to vector<8x8xi8>
    %23 = vector.shape_cast %20 : vector<8x8xi8> to vector<1x8x8xi8>
    tpu.vector_store %arg11[%c0_18, %c0_19, %c0_20], %23 {strides = array<i32>} : memref<1x8x8xi8, #tpu.memory_space<vmem>>, vector<1x8x8xi8>,
    %c0_21 = arith.constant 0 : index
    %c0_22 = arith.constant 0 : index
    %24 = vector.load %arg4[%c0_21, %c0_22] : memref<4x32xbf16, #tpu.memory_space<vmem>>, vector<4x32xbf16>
    %cst_23 = arith.constant dense<0.000000e+00> : vector<4x32xf32>
    %25 = tpu.matmul %24, %1, %cst_23 {dimension_numbers = #tpu.dot_dimension_numbers<[1], [0], [0], [1], [0, 0, 1, 1], [], []>} : vector<4x32xbf16>, vector<32x32xbf16>, vector<4x32xf32> -> vector<4x32xf32>
    %26 = arith.truncf %25 : vector<4x32xf32> to vector<4x32xbf16>
    %c0_24 = arith.constant 0 : index
    %c0_25 = arith.constant 0 : index
    %27 = vector.load %arg8[%c0_24, %c0_25] : memref<32x4xbf16, #tpu.memory_space<vmem>>, vector<32x4xbf16>
    %cst_26 = arith.constant dense<0.000000e+00> : vector<4x4xf32>
    %28 = tpu.matmul %26, %27, %cst_26 {dimension_numbers = #tpu.dot_dimension_numbers<[1], [0], [0], [1], [0, 0, 1, 1], [], []>} : vector<4x32xbf16>, vector<32x4xbf16>, vector<4x4xf32> -> vector<4x4xf32>
    %cst_27 = arith.constant 5.000000e-01 : f32
    %29 = vector.broadcast %cst_27 : f32 to vector<4x4xf32>
    %30 = arith.cmpf ogt, %28, %29 : vector<4x4xf32>
    %31 = arith.extui %30 : vector<4x4xi1> to vector<4x4xi8>
    %c0_28 = arith.constant 0 : index
    %c0_29 = arith.constant 0 : index
    %c0_30 = arith.constant 0 : index
    %32 = vector.load %arg12[%c0_28, %c0_29, %c0_30] : memref<1x4x4xi8, #tpu.memory_space<vmem>>, vector<1x4x4xi8>
    %33 = vector.shape_cast %32 : vector<1x4x4xi8> to vector<4x4xi8>
    %34 = vector.shape_cast %31 : vector<4x4xi8> to vector<1x4x4xi8>
    tpu.vector_store %arg12[%c0_28, %c0_29, %c0_30], %34 {strides = array<i32>} : memref<1x4x4xi8, #tpu.memory_space<vmem>>, vector<1x4x4xi8>,
    %c0_31 = arith.constant 0 : index
    %c0_32 = arith.constant 0 : index
    %35 = vector.load %arg5[%c0_31, %c0_32] : memref<2x32xbf16, #tpu.memory_space<vmem>>, vector<2x32xbf16>
    %cst_33 = arith.constant dense<0.000000e+00> : vector<2x32xf32>
    %36 = tpu.matmul %35, %1, %cst_33 {dimension_numbers = #tpu.dot_dimension_numbers<[1], [0], [0], [1], [0, 0, 1, 1], [], []>} : vector<2x32xbf16>, vector<32x32xbf16>, vector<2x32xf32> -> vector<2x32xf32>
    %37 = arith.truncf %36 : vector<2x32xf32> to vector<2x32xbf16>
    %c0_34 = arith.constant 0 : index
    %c0_35 = arith.constant 0 : index
    %38 = vector.load %arg9[%c0_34, %c0_35] : memref<32x2xbf16, #tpu.memory_space<vmem>>, vector<32x2xbf16>
    %cst_36 = arith.constant dense<0.000000e+00> : vector<2x2xf32>
    %39 = tpu.matmul %37, %38, %cst_36 {dimension_numbers = #tpu.dot_dimension_numbers<[1], [0], [0], [1], [0, 0, 1, 1], [], []>} : vector<2x32xbf16>, vector<32x2xbf16>, vector<2x2xf32> -> vector<2x2xf32>
    %cst_37 = arith.constant 5.000000e-01 : f32
    %40 = vector.broadcast %cst_37 : f32 to vector<2x2xf32>
    %41 = arith.cmpf ogt, %39, %40 : vector<2x2xf32>
    %42 = arith.extui %41 : vector<2x2xi1> to vector<2x2xi8>
    %c0_38 = arith.constant 0 : index
    %c0_39 = arith.constant 0 : index
    %c0_40 = arith.constant 0 : index
    %43 = vector.load %arg13[%c0_38, %c0_39, %c0_40] : memref<1x2x2xi8, #tpu.memory_space<vmem>>, vector<1x2x2xi8>
    %44 = vector.shape_cast %43 : vector<1x2x2xi8> to vector<2x2xi8>
    %45 = vector.shape_cast %42 : vector<2x2xi8> to vector<1x2x2xi8>
    tpu.vector_store %arg13[%c0_38, %c0_39, %c0_40], %45 {strides = array<i32>} : memref<1x2x2xi8, #tpu.memory_space<vmem>>, vector<1x2x2xi8>,
    return
  }
  func.func @transform_0(%arg0: i32) -> (i32, i32, i32) {
    %c0_i32 = arith.constant 0 : i32
    %c0_i32_0 = arith.constant 0 : i32
    %c0_i32_1 = arith.constant 0 : i32
    return %arg0, %c0_i32, %c0_i32_0 : i32, i32, i32
  }
  func.func @transform_1(%arg0: i32) -> (i32, i32) {
    %c0_i32 = arith.constant 0 : i32
    %c0_i32_0 = arith.constant 0 : i32
    %c0_i32_1 = arith.constant 0 : i32
    return %c0_i32, %c0_i32_0 : i32, i32
  }
  func.func @transform_2(%arg0: i32) -> (i32, i32) {
    %c0_i32 = arith.constant 0 : i32
    %c0_i32_0 = arith.constant 0 : i32
    %c0_i32_1 = arith.constant 0 : i32
    return %c0_i32, %c0_i32_0 : i32, i32
  }
  func.func @transform_3(%arg0: i32) -> (i32, i32) {
    %c0_i32 = arith.constant 0 : i32
    %c0_i32_0 = arith.constant 0 : i32
    %c0_i32_1 = arith.constant 0 : i32
    return %c0_i32, %c0_i32_0 : i32, i32
  }
  func.func @transform_4(%arg0: i32) -> (i32, i32) {
    %c0_i32 = arith.constant 0 : i32
    %c0_i32_0 = arith.constant 0 : i32
    %c0_i32_1 = arith.constant 0 : i32
    return %c0_i32, %c0_i32_0 : i32, i32
  }
  func.func @transform_5(%arg0: i32) -> (i32, i32) {
    %c0_i32 = arith.constant 0 : i32
    %c0_i32_0 = arith.constant 0 : i32
    %c0_i32_1 = arith.constant 0 : i32
    return %c0_i32, %c0_i32_0 : i32, i32
  }
  func.func @transform_6(%arg0: i32) -> (i32, i32) {
    %c0_i32 = arith.constant 0 : i32
    %c0_i32_0 = arith.constant 0 : i32
    %c0_i32_1 = arith.constant 0 : i32
    return %c0_i32, %c0_i32_0 : i32, i32
  }
  func.func @transform_7(%arg0: i32) -> (i32, i32) {
    %c0_i32 = arith.constant 0 : i32
    %c0_i32_0 = arith.constant 0 : i32
    %c0_i32_1 = arith.constant 0 : i32
    return %c0_i32, %c0_i32_0 : i32, i32
  }
  func.func @transform_8(%arg0: i32) -> (i32, i32) {
    %c0_i32 = arith.constant 0 : i32
    %c0_i32_0 = arith.constant 0 : i32
    %c0_i32_1 = arith.constant 0 : i32
    return %c0_i32, %c0_i32_0 : i32, i32
  }
  func.func @transform_9(%arg0: i32) -> (i32, i32, i32) {
    %c0_i32 = arith.constant 0 : i32
    %c0_i32_0 = arith.constant 0 : i32
    %c0_i32_1 = arith.constant 0 : i32
    return %arg0, %c0_i32, %c0_i32_0 : i32, i32, i32
  }
  func.func @transform_10(%arg0: i32) -> (i32, i32, i32) {
    %c0_i32 = arith.constant 0 : i32
    %c0_i32_0 = arith.constant 0 : i32
    %c0_i32_1 = arith.constant 0 : i32
    return %arg0, %c0_i32, %c0_i32_0 : i32, i32, i32
  }
  func.func @transform_11(%arg0: i32) -> (i32, i32, i32) {
    %c0_i32 = arith.constant 0 : i32
    %c0_i32_0 = arith.constant 0 : i32
    %c0_i32_1 = arith.constant 0 : i32
    return %arg0, %c0_i32, %c0_i32_0 : i32, i32, i32
  }
  func.func @transform_12(%arg0: i32) -> (i32, i32, i32) {
    %c0_i32 = arith.constant 0 : i32
    %c0_i32_0 = arith.constant 0 : i32
    %c0_i32_1 = arith.constant 0 : i32
    return %arg0, %c0_i32, %c0_i32_0 : i32, i32, i32
  }
}

module attributes {stable_mosaic.version = 11 : i64} {
  func.func @kernel(%arg0: i32, %arg1: i32, %arg2: memref<1x64x576xbf16, #tpu.memory_space<vmem>>, %arg3: memref<576x128xbf16, #tpu.memory_space<vmem>>, %arg4: memref<1x128xf32, #tpu.memory_space<vmem>>, %arg5: memref<1x64x128xbf16, #tpu.memory_space<vmem>>, %arg6: memref<1x128x64xf32, #tpu.memory_space<vmem>>) attributes {dimension_semantics = [#tpu.dimension_semantics<parallel>, #tpu.dimension_semantics<parallel>], iteration_bounds = array<i64: 2, 1>, scalar_prefetch = 0 : i64, scratch_operands = 0 : i64, tpu.core_type = #tpu.core_type<tc>, window_params = [{transform_indices = @transform_0, window_bounds = array<i64: 1, 64, 576>}, {pipeline_mode = #tpu.pipeline_mode<synchronous>, transform_indices = @transform_1, window_bounds = array<i64: 576, 128>}, {pipeline_mode = #tpu.pipeline_mode<synchronous>, transform_indices = @transform_2, window_bounds = array<i64: 1, 128>}, {transform_indices = @transform_3, window_bounds = array<i64: 1, 64, 128>}, {transform_indices = @transform_4, window_bounds = array<i64: 1, 128, 64>}]} {
    %c0 = arith.constant 0 : index
    %c0_0 = arith.constant 0 : index
    %c0_1 = arith.constant 0 : index
    %0 = vector.load %arg2[%c0, %c0_0, %c0_1] : memref<1x64x576xbf16, #tpu.memory_space<vmem>>, vector<1x64x576xbf16>
    %1 = vector.shape_cast %0 : vector<1x64x576xbf16> to vector<64x576xbf16>
    %c0_2 = arith.constant 0 : index
    %c0_3 = arith.constant 0 : index
    %2 = vector.load %arg3[%c0_2, %c0_3] : memref<576x128xbf16, #tpu.memory_space<vmem>>, vector<576x128xbf16>
    %cst = arith.constant dense<0.000000e+00> : vector<64x128xf32>
    %3 = tpu.matmul %1, %2, %cst {dimension_numbers = #tpu.dot_dimension_numbers<[1], [0], [0], [1], [0, 0, 1, 1], [], []>} : vector<64x576xbf16>, vector<576x128xbf16>, vector<64x128xf32> -> vector<64x128xf32>
    %c0_4 = arith.constant 0 : index
    %c0_5 = arith.constant 0 : index
    %4 = vector.load %arg4[%c0_4, %c0_5] : memref<1x128xf32, #tpu.memory_space<vmem>>, vector<1x128xf32>
    %5 = vector.broadcast %4 : vector<1x128xf32> to vector<64x128xf32>
    %6 = arith.addf %3, %5 : vector<64x128xf32>
    %cst_6 = arith.constant 0.000000e+00 : f32
    %7 = vector.broadcast %cst_6 : f32 to vector<64x128xf32>
    %8 = arith.maximumf %6, %7 : vector<64x128xf32>
    %9 = arith.truncf %8 : vector<64x128xf32> to vector<64x128xbf16>
    %c0_7 = arith.constant 0 : index
    %c0_8 = arith.constant 0 : index
    %c0_9 = arith.constant 0 : index
    %10 = vector.load %arg5[%c0_7, %c0_8, %c0_9] : memref<1x64x128xbf16, #tpu.memory_space<vmem>>, vector<1x64x128xbf16>
    %11 = vector.shape_cast %10 : vector<1x64x128xbf16> to vector<64x128xbf16>
    %12 = vector.shape_cast %9 : vector<64x128xbf16> to vector<1x64x128xbf16>
    tpu.vector_store %arg5[%c0_7, %c0_8, %c0_9], %12 {strides = array<i32>} : memref<1x64x128xbf16, #tpu.memory_space<vmem>>, vector<1x64x128xbf16>,
    %13 = tpu.transpose %8, [1, 0] : vector<64x128xf32> -> vector<128x64xf32>
    %c0_10 = arith.constant 0 : index
    %c0_11 = arith.constant 0 : index
    %c0_12 = arith.constant 0 : index
    %14 = vector.load %arg6[%c0_10, %c0_11, %c0_12] : memref<1x128x64xf32, #tpu.memory_space<vmem>>, vector<1x128x64xf32>
    %15 = vector.shape_cast %14 : vector<1x128x64xf32> to vector<128x64xf32>
    %16 = vector.shape_cast %13 : vector<128x64xf32> to vector<1x128x64xf32>
    tpu.vector_store %arg6[%c0_10, %c0_11, %c0_12], %16 {strides = array<i32>} : memref<1x128x64xf32, #tpu.memory_space<vmem>>, vector<1x128x64xf32>,
    return
  }
  func.func @transform_0(%arg0: i32, %arg1: i32) -> (i32, i32, i32) {
    %c0_i32 = arith.constant 0 : i32
    %c0_i32_0 = arith.constant 0 : i32
    return %arg0, %arg1, %c0_i32 : i32, i32, i32
  }
  func.func @transform_1(%arg0: i32, %arg1: i32) -> (i32, i32) {
    %c0_i32 = arith.constant 0 : i32
    %c0_i32_0 = arith.constant 0 : i32
    %c0_i32_1 = arith.constant 0 : i32
    return %c0_i32, %c0_i32_0 : i32, i32
  }
  func.func @transform_2(%arg0: i32, %arg1: i32) -> (i32, i32) {
    %c0_i32 = arith.constant 0 : i32
    %c0_i32_0 = arith.constant 0 : i32
    %c0_i32_1 = arith.constant 0 : i32
    return %c0_i32, %c0_i32_0 : i32, i32
  }
  func.func @transform_3(%arg0: i32, %arg1: i32) -> (i32, i32, i32) {
    %c0_i32 = arith.constant 0 : i32
    %c0_i32_0 = arith.constant 0 : i32
    return %arg0, %arg1, %c0_i32 : i32, i32, i32
  }
  func.func @transform_4(%arg0: i32, %arg1: i32) -> (i32, i32, i32) {
    %c0_i32 = arith.constant 0 : i32
    %c0_i32_0 = arith.constant 0 : i32
    return %arg0, %c0_i32, %arg1 : i32, i32, i32
  }
}

module attributes {stable_mosaic.version = 11 : i64} {
  func.func @kernel(%arg0: i32, %arg1: i32, %arg2: memref<1x16x1152xbf16, #tpu.memory_space<vmem>>, %arg3: memref<1152x256xbf16, #tpu.memory_space<vmem>>, %arg4: memref<1x256xf32, #tpu.memory_space<vmem>>, %arg5: memref<1x16x256xbf16, #tpu.memory_space<vmem>>, %arg6: memref<1x256x16xf32, #tpu.memory_space<vmem>>) attributes {dimension_semantics = [#tpu.dimension_semantics<parallel>, #tpu.dimension_semantics<parallel>], iteration_bounds = array<i64: 2, 1>, scalar_prefetch = 0 : i64, scratch_operands = 0 : i64, tpu.core_type = #tpu.core_type<tc>, window_params = [{transform_indices = @transform_0, window_bounds = array<i64: 1, 16, 1152>}, {pipeline_mode = #tpu.pipeline_mode<synchronous>, transform_indices = @transform_1, window_bounds = array<i64: 1152, 256>}, {pipeline_mode = #tpu.pipeline_mode<synchronous>, transform_indices = @transform_2, window_bounds = array<i64: 1, 256>}, {transform_indices = @transform_3, window_bounds = array<i64: 1, 16, 256>}, {transform_indices = @transform_4, window_bounds = array<i64: 1, 256, 16>}]} {
    %c0 = arith.constant 0 : index
    %c0_0 = arith.constant 0 : index
    %c0_1 = arith.constant 0 : index
    %0 = vector.load %arg2[%c0, %c0_0, %c0_1] : memref<1x16x1152xbf16, #tpu.memory_space<vmem>>, vector<1x16x1152xbf16>
    %1 = vector.shape_cast %0 : vector<1x16x1152xbf16> to vector<16x1152xbf16>
    %c0_2 = arith.constant 0 : index
    %c0_3 = arith.constant 0 : index
    %2 = vector.load %arg3[%c0_2, %c0_3] : memref<1152x256xbf16, #tpu.memory_space<vmem>>, vector<1152x256xbf16>
    %cst = arith.constant dense<0.000000e+00> : vector<16x256xf32>
    %3 = tpu.matmul %1, %2, %cst {dimension_numbers = #tpu.dot_dimension_numbers<[1], [0], [0], [1], [0, 0, 1, 1], [], []>} : vector<16x1152xbf16>, vector<1152x256xbf16>, vector<16x256xf32> -> vector<16x256xf32>
    %c0_4 = arith.constant 0 : index
    %c0_5 = arith.constant 0 : index
    %4 = vector.load %arg4[%c0_4, %c0_5] : memref<1x256xf32, #tpu.memory_space<vmem>>, vector<1x256xf32>
    %5 = vector.broadcast %4 : vector<1x256xf32> to vector<16x256xf32>
    %6 = arith.addf %3, %5 : vector<16x256xf32>
    %cst_6 = arith.constant 0.000000e+00 : f32
    %7 = vector.broadcast %cst_6 : f32 to vector<16x256xf32>
    %8 = arith.maximumf %6, %7 : vector<16x256xf32>
    %9 = arith.truncf %8 : vector<16x256xf32> to vector<16x256xbf16>
    %c0_7 = arith.constant 0 : index
    %c0_8 = arith.constant 0 : index
    %c0_9 = arith.constant 0 : index
    %10 = vector.load %arg5[%c0_7, %c0_8, %c0_9] : memref<1x16x256xbf16, #tpu.memory_space<vmem>>, vector<1x16x256xbf16>
    %11 = vector.shape_cast %10 : vector<1x16x256xbf16> to vector<16x256xbf16>
    %12 = vector.shape_cast %9 : vector<16x256xbf16> to vector<1x16x256xbf16>
    tpu.vector_store %arg5[%c0_7, %c0_8, %c0_9], %12 {strides = array<i32>} : memref<1x16x256xbf16, #tpu.memory_space<vmem>>, vector<1x16x256xbf16>,
    %13 = tpu.transpose %8, [1, 0] : vector<16x256xf32> -> vector<256x16xf32>
    %c0_10 = arith.constant 0 : index
    %c0_11 = arith.constant 0 : index
    %c0_12 = arith.constant 0 : index
    %14 = vector.load %arg6[%c0_10, %c0_11, %c0_12] : memref<1x256x16xf32, #tpu.memory_space<vmem>>, vector<1x256x16xf32>
    %15 = vector.shape_cast %14 : vector<1x256x16xf32> to vector<256x16xf32>
    %16 = vector.shape_cast %13 : vector<256x16xf32> to vector<1x256x16xf32>
    tpu.vector_store %arg6[%c0_10, %c0_11, %c0_12], %16 {strides = array<i32>} : memref<1x256x16xf32, #tpu.memory_space<vmem>>, vector<1x256x16xf32>,
    return
  }
  func.func @transform_0(%arg0: i32, %arg1: i32) -> (i32, i32, i32) {
    %c0_i32 = arith.constant 0 : i32
    %c0_i32_0 = arith.constant 0 : i32
    return %arg0, %arg1, %c0_i32 : i32, i32, i32
  }
  func.func @transform_1(%arg0: i32, %arg1: i32) -> (i32, i32) {
    %c0_i32 = arith.constant 0 : i32
    %c0_i32_0 = arith.constant 0 : i32
    %c0_i32_1 = arith.constant 0 : i32
    return %c0_i32, %c0_i32_0 : i32, i32
  }
  func.func @transform_2(%arg0: i32, %arg1: i32) -> (i32, i32) {
    %c0_i32 = arith.constant 0 : i32
    %c0_i32_0 = arith.constant 0 : i32
    %c0_i32_1 = arith.constant 0 : i32
    return %c0_i32, %c0_i32_0 : i32, i32
  }
  func.func @transform_3(%arg0: i32, %arg1: i32) -> (i32, i32, i32) {
    %c0_i32 = arith.constant 0 : i32
    %c0_i32_0 = arith.constant 0 : i32
    return %arg0, %arg1, %c0_i32 : i32, i32, i32
  }
  func.func @transform_4(%arg0: i32, %arg1: i32) -> (i32, i32, i32) {
    %c0_i32 = arith.constant 0 : i32
    %c0_i32_0 = arith.constant 0 : i32
    return %arg0, %c0_i32, %arg1 : i32, i32, i32
  }
}

module attributes {stable_mosaic.version = 11 : i64} {
  func.func @kernel(%arg0: i32, %arg1: i32, %arg2: memref<1x4x2304xbf16, #tpu.memory_space<vmem>>, %arg3: memref<2304x256xbf16, #tpu.memory_space<vmem>>, %arg4: memref<1x256xf32, #tpu.memory_space<vmem>>, %arg5: memref<1x256x4xf32, #tpu.memory_space<vmem>>) attributes {dimension_semantics = [#tpu.dimension_semantics<parallel>, #tpu.dimension_semantics<parallel>], iteration_bounds = array<i64: 2, 1>, scalar_prefetch = 0 : i64, scratch_operands = 0 : i64, tpu.core_type = #tpu.core_type<tc>, window_params = [{transform_indices = @transform_0, window_bounds = array<i64: 1, 4, 2304>}, {pipeline_mode = #tpu.pipeline_mode<synchronous>, transform_indices = @transform_1, window_bounds = array<i64: 2304, 256>}, {pipeline_mode = #tpu.pipeline_mode<synchronous>, transform_indices = @transform_2, window_bounds = array<i64: 1, 256>}, {transform_indices = @transform_3, window_bounds = array<i64: 1, 256, 4>}]} {
    %c0 = arith.constant 0 : index
    %c0_0 = arith.constant 0 : index
    %c0_1 = arith.constant 0 : index
    %0 = vector.load %arg2[%c0, %c0_0, %c0_1] : memref<1x4x2304xbf16, #tpu.memory_space<vmem>>, vector<1x4x2304xbf16>
    %1 = vector.shape_cast %0 : vector<1x4x2304xbf16> to vector<4x2304xbf16>
    %c0_2 = arith.constant 0 : index
    %c0_3 = arith.constant 0 : index
    %2 = vector.load %arg3[%c0_2, %c0_3] : memref<2304x256xbf16, #tpu.memory_space<vmem>>, vector<2304x256xbf16>
    %cst = arith.constant dense<0.000000e+00> : vector<4x256xf32>
    %3 = tpu.matmul %1, %2, %cst {dimension_numbers = #tpu.dot_dimension_numbers<[1], [0], [0], [1], [0, 0, 1, 1], [], []>} : vector<4x2304xbf16>, vector<2304x256xbf16>, vector<4x256xf32> -> vector<4x256xf32>
    %c0_4 = arith.constant 0 : index
    %c0_5 = arith.constant 0 : index
    %4 = vector.load %arg4[%c0_4, %c0_5] : memref<1x256xf32, #tpu.memory_space<vmem>>, vector<1x256xf32>
    %5 = vector.broadcast %4 : vector<1x256xf32> to vector<4x256xf32>
    %6 = arith.addf %3, %5 : vector<4x256xf32>
    %cst_6 = arith.constant 0.000000e+00 : f32
    %7 = vector.broadcast %cst_6 : f32 to vector<4x256xf32>
    %8 = arith.maximumf %6, %7 : vector<4x256xf32>
    %9 = tpu.transpose %8, [1, 0] : vector<4x256xf32> -> vector<256x4xf32>
    %c0_7 = arith.constant 0 : index
    %c0_8 = arith.constant 0 : index
    %c0_9 = arith.constant 0 : index
    %10 = vector.load %arg5[%c0_7, %c0_8, %c0_9] : memref<1x256x4xf32, #tpu.memory_space<vmem>>, vector<1x256x4xf32>
    %11 = vector.shape_cast %10 : vector<1x256x4xf32> to vector<256x4xf32>
    %12 = vector.shape_cast %9 : vector<256x4xf32> to vector<1x256x4xf32>
    tpu.vector_store %arg5[%c0_7, %c0_8, %c0_9], %12 {strides = array<i32>} : memref<1x256x4xf32, #tpu.memory_space<vmem>>, vector<1x256x4xf32>,
    return
  }
  func.func @transform_0(%arg0: i32, %arg1: i32) -> (i32, i32, i32) {
    %c0_i32 = arith.constant 0 : i32
    %c0_i32_0 = arith.constant 0 : i32
    return %arg0, %arg1, %c0_i32 : i32, i32, i32
  }
  func.func @transform_1(%arg0: i32, %arg1: i32) -> (i32, i32) {
    %c0_i32 = arith.constant 0 : i32
    %c0_i32_0 = arith.constant 0 : i32
    %c0_i32_1 = arith.constant 0 : i32
    return %c0_i32, %c0_i32_0 : i32, i32
  }
  func.func @transform_2(%arg0: i32, %arg1: i32) -> (i32, i32) {
    %c0_i32 = arith.constant 0 : i32
    %c0_i32_0 = arith.constant 0 : i32
    %c0_i32_1 = arith.constant 0 : i32
    return %c0_i32, %c0_i32_0 : i32, i32
  }
  func.func @transform_3(%arg0: i32, %arg1: i32) -> (i32, i32, i32) {
    %c0_i32 = arith.constant 0 : i32
    %c0_i32_0 = arith.constant 0 : i32
    return %arg0, %c0_i32, %arg1 : i32, i32, i32
  }
}

</mosaic_0001>

<llo_original>
// kernel: forward.5
$region0: #{forward.5}
  #allocation0 [shape = 'u32[]', space=smem, size = 0x4, offset = 0x4, fixed_abs, tag = 'smem constant byte address 0x4 - core index']
  #allocation1 [shape = 'u32[144,128]{1,0:T(1,128)}', space=vmem, size = 0x12000, scoped, tag = 'internal scratch']
  %s0 = inlined_call_operand.vmem [shape: bf16[2,256,36], index: 0, kind: input, shape index: {}]
  %s1 = inlined_call_operand.vmem [shape: bf16[36,64], index: 1, kind: input, shape index: {}]
  %s2 = inlined_call_operand.vmem [shape: f32[1,64], index: 2, kind: input, shape index: {}]
  %s3 = inlined_call_operand.vmem [shape: bf16[2,256,64], index: 3, kind: output, shape index: {0}]
  %s4 = inlined_call_operand.vmem [shape: f32[2,64,256], index: 4, kind: output, shape index: {1}]
  %5 = xla_tuple %s3, %s4
  %s6 = sld [smem:[#allocation0]]
  $region87: #{forward.5} parent=0
    _
  %s8 = ssub.s32 1, %s6
  %s9 = scalar_select 0, %s8, %s6
  $region1: #{forward.5} parent=0
    #allocation2 [shape = 'u8[65536]{0}', space=vmem, size = 0x10000, scoped, tag = 'output window, operand 1']
    loop: start=0, step=1, limit=6
    $region2: #{forward.5} parent=1 // loop_pre_header
      _
    $region3: #{forward.5} parent=1 // loop_header
      %s11 = sphi 0, %s15
      %p12 = scmp.ge.s32.totalorder %s11, 6
      %s18 = sphi 0, %s30
      %s19 = sphi 0, %s26
      %s20 = sphi 0, %s18
      %s21 = sphi 0, %s19
      %s22 = sphi 0, %s20
      %s23 = sphi 0, %s21
      %s35 = sphi 0, %s37
      %s38 = sphi 0, %s35
      %s39 = sphi 0, %s38
      %s55 = sphi 0, %s39
      %s59 = sphi 0, %s59
      %s61 = sphi 0, %s59
      %s62 = sphi 0, %s61
      %s76 = sphi 0, %s62
      %s80 = sphi 0, %s80
      %s82 = sphi 0, %s80
      %s83 = sphi 0, %s82
      %s97 = sphi 0, %s83
      %s105 = sphi 0, %s107
      %s108 = sphi 0, %s105
      %s109 = sphi 0, %s108
      %s125 = sphi 0, %s109
      %s133 = sphi 0, %s135
      %s136 = sphi 0, %s133
      %s137 = sphi 0, %s136
      %s153 = sphi 0, %s137
    $region4: #{forward.5} parent=1 // loop_header_branch
      %14 = sbr.rel (%p12) target = $region8
    $region5: #{forward.5} parent=1 // loop_body
      %s16 = ssub.s32 %s11, 1
      %s17 = ssub.s32 %s11, 2
      %s24 = sadd.s32 1, %s19
      %p25 = scmp.ge.s32.totalorder %s24, 2
      %s26 = scalar_select %p25, 0, %s24
      %s27 = sadd.s32 1, %s18
      %s28 = scalar_select %p25, %s27, %s18
      %p29 = scmp.ge.s32.totalorder %s28, 2
      %s30 = scalar_select %p29, 0, %s28
      %s31 = ssub.s32 %s18, %s30
      %s32 = ssub.s32 %s19, %s26
      %s33 = sor.u32 %s31, %s32
      %p34 = scmp.eq.s32.totalorder %s33, 0
      %s36 = sadd.s32 %s35, 1
      %s37 = scalar_select %p34, %s35, %s36
      %p40 = pneg %p34
      %p41 = scmp.eq.s32.totalorder %s11, 3
      %p42 = por %p40, %p41
      %p43 = scmp.ne.s32.totalorder %s35, %s38
      %p44 = scmp.eq.s32.totalorder %s11, 0
      %p45 = por %p43, %p44
      %p46 = scmp.ne.s32.totalorder %s35, %s38
      %p47 = scmp.eq.s32.totalorder %s16, 3
      %p48 = por %p46, %p47
      %p49 = scmp.ne.s32.totalorder %s38, %s39
      %p50 = scmp.eq.s32.totalorder %s16, 0
      %p51 = por %p49, %p50
      %p52 = scmp.ne.s32.totalorder %s38, %s39
      %p53 = scmp.eq.s32.totalorder %s17, 3
      %p54 = por %p52, %p53
      %p56 = scmp.ne.s32.totalorder %s39, %s55
      %p57 = scmp.eq.s32.totalorder %s17, 0
      %p58 = por %p56, %p57
      %s60 = sadd.s32 %s59, 1
      %p63 = scmp.eq.s32.totalorder %s11, 3
      %p64 = scmp.ne.s32.totalorder %s59, %s61
      %p65 = scmp.eq.s32.totalorder %s11, 0
      %p66 = por %p64, %p65
      %p67 = scmp.ne.s32.totalorder %s59, %s61
      %p68 = scmp.eq.s32.totalorder %s16, 3
      %p69 = por %p67, %p68
      %p70 = scmp.ne.s32.totalorder %s61, %s62
      %p71 = scmp.eq.s32.totalorder %s16, 0
      %p72 = por %p70, %p71
      %p73 = scmp.ne.s32.totalorder %s61, %s62
      %p74 = scmp.eq.s32.totalorder %s17, 3
      %p75 = por %p73, %p74
      %p77 = scmp.ne.s32.totalorder %s62, %s76
      %p78 = scmp.eq.s32.totalorder %s17, 0
      %p79 = por %p77, %p78
      %s81 = sadd.s32 %s80, 1
      %p84 = scmp.eq.s32.totalorder %s11, 3
      %p85 = scmp.ne.s32.totalorder %s80, %s82
      %p86 = scmp.eq.s32.totalorder %s11, 0
      %p87 = por %p85, %p86
      %p88 = scmp.ne.s32.totalorder %s80, %s82
      %p89 = scmp.eq.s32.totalorder %s16, 3
      %p90 = por %p88, %p89
      %p91 = scmp.ne.s32.totalorder %s82, %s83
      %p92 = scmp.eq.s32.totalorder %s16, 0
      %p93 = por %p91, %p92
      %p94 = scmp.ne.s32.totalorder %s82, %s83
      %p95 = scmp.eq.s32.totalorder %s17, 3
      %p96 = por %p94, %p95
      %p98 = scmp.ne.s32.totalorder %s83, %s97
      %p99 = scmp.eq.s32.totalorder %s17, 0
      %p100 = por %p98, %p99
      %s101 = ssub.s32 %s18, %s30
      %s102 = ssub.s32 %s19, %s26
      %s103 = sor.u32 %s101, %s102
      %p104 = scmp.eq.s32.totalorder %s103, 0
      %s106 = sadd.s32 %s105, 1
      %s107 = scalar_select %p104, %s105, %s106
      %p110 = pneg %p104
      %p111 = scmp.eq.s32.totalorder %s11, 3
      %p112 = por %p110, %p111
      %p113 = scmp.ne.s32.totalorder %s105, %s108
      %p114 = scmp.eq.s32.totalorder %s11, 0
      %p115 = por %p113, %p114
      %p116 = scmp.ne.s32.totalorder %s105, %s108
      %p117 = scmp.eq.s32.totalorder %s16, 3
      %p118 = por %p116, %p117
      %p119 = scmp.ne.s32.totalorder %s108, %s109
      %p120 = scmp.eq.s32.totalorder %s16, 0
      %p121 = por %p119, %p120
      %p122 = scmp.ne.s32.totalorder %s108, %s109
      %p123 = scmp.eq.s32.totalorder %s17, 3
      %p124 = por %p122, %p123
      %p126 = scmp.ne.s32.totalorder %s109, %s125
      %p127 = scmp.eq.s32.totalorder %s17, 0
      %p128 = por %p126, %p127
      %s129 = ssub.s32 %s18, %s30
      %s130 = ssub.s32 %s19, %s26
      %s131 = sor.u32 %s129, %s130
      %p132 = scmp.eq.s32.totalorder %s131, 0
      %s134 = sadd.s32 %s133, 1
      %s135 = scalar_select %p132, %s133, %s134
      %p138 = pneg %p132
      %p139 = scmp.eq.s32.totalorder %s11, 3
      %p140 = por %p138, %p139
      %p141 = scmp.ne.s32.totalorder %s133, %s136
      %p142 = scmp.eq.s32.totalorder %s11, 0
      %p143 = por %p141, %p142
      %p144 = scmp.ne.s32.totalorder %s133, %s136
      %p145 = scmp.eq.s32.totalorder %s16, 3
      %p146 = por %p144, %p145
      %p147 = scmp.ne.s32.totalorder %s136, %s137
      %p148 = scmp.eq.s32.totalorder %s16, 0
      %p149 = por %p147, %p148
      %p150 = scmp.ne.s32.totalorder %s136, %s137
      %p151 = scmp.eq.s32.totalorder %s17, 3
      %p152 = por %p150, %p151
      %p154 = scmp.ne.s32.totalorder %s137, %s153
      %p155 = scmp.eq.s32.totalorder %s17, 0
      %p156 = por %p154, %p155
      %p157 = scmp.le.s32.totalorder 1, %s11
      %p158 = scmp.lt.s32.totalorder %s11, 5
      %p159 = pnand %p157, %p158
      %p160 = pneg %p159
      // Predicated region
      $region9: #{forward.5} parent=5 // pred_check
        _
      $region10: #{forward.5} parent=5 // pred_check_branch
        %162 = sbr.rel (%p159) target = $region12
      $region11: #{forward.5} parent=5 // pred_region
        %s163 = ssub.s32 %s11, 1
        // Predicated region
        $region13: #{forward.5} parent=11 // pred_check
          %p164 = pneg %p72
        $region14: #{forward.5} parent=11 // pred_check_branch
          %166 = sbr.rel (%p164) target = $region16
        $region15: #{forward.5} parent=11 // pred_region
          _
        $region16: #{forward.5} parent=11 // pred_fallthru
          _
        // Predicated region
        $region17: #{forward.5} parent=11 // pred_check
          %p167 = pneg %p93
        $region18: #{forward.5} parent=11 // pred_check_branch
          %169 = sbr.rel (%p167) target = $region20
        $region19: #{forward.5} parent=11 // pred_region
          _
        $region20: #{forward.5} parent=11 // pred_fallthru
          _
      $region12: #{forward.5} parent=5 // pred_fallthru
        _
      %p170 = scmp.lt.s32.totalorder %s11, 4
      // Predicated region
      $region21: #{forward.5} parent=5 // pred_check
        %p171 = pneg %p170
      $region22: #{forward.5} parent=5 // pred_check_branch
        %173 = sbr.rel (%p171) target = $region24
      $region23: #{forward.5} parent=5 // pred_region
        // Predicated region
        $region25: #{forward.5} parent=23 // pred_check
          %p174 = pneg %p45
        $region26: #{forward.5} parent=23 // pred_check_branch
          %176 = sbr.rel (%p174) target = $region28
        $region27: #{forward.5} parent=23 // pred_region
          %s177 = smul.u32 16, %s19
          %p178 = scmp.lt.s32.totalorder %s18, 1
          %s179 = scalar_select %p178, %s18, 1
          %p180 = scmp.lt.s32.totalorder %s177, 31
          %s181 = scalar_select %p180, %s177, 31
          %s182 = smul.addr %s179, 32
          %s183 = sadd.s32 %s181, %s182
          %s184 = smul.addr %s183, 4
          %s185 = scalar_lea.vmem %s0, %s184
          %s186 = smul.u32 16, %s19
        $region28: #{forward.5} parent=23 // pred_fallthru
          _
      $region24: #{forward.5} parent=5 // pred_fallthru
        _
      %p187 = scmp.le.s32.totalorder 1, %s11
      %p188 = scmp.lt.s32.totalorder %s11, 5
      %p189 = pnand %p187, %p188
      %p190 = pneg %p189
      // Predicated region
      $region29: #{forward.5} parent=5 // pred_check
        _
      $region30: #{forward.5} parent=5 // pred_check_branch
        %192 = sbr.rel (%p189) target = $region32
      $region31: #{forward.5} parent=5 // pred_region
        %s193 = ssub.s32 %s11, 1
        %s194 = smul.u32 16, %s21
        %p195 = scmp.lt.s32.totalorder %s20, 1
        %s196 = scalar_select %p195, %s20, 1
        %p197 = scmp.lt.s32.totalorder %s194, 31
        %s198 = scalar_select %p197, %s194, 31
        %s199 = smul.addr %s196, 32
        %s200 = sadd.s32 %s198, %s199
        %s201 = smul.addr %s200, 4
        %s202 = scalar_lea.vmem %s0, %s201
        %p203 = pneg %p51
        %p204 = pneg %p48
        %p205 = pneg %p72
        %p206 = pneg %p69
        %p207 = pneg %p93
        %p208 = pneg %p90
        %p209 = pneg %p121
        %p210 = pneg %p118
        %s211 = smul.u32 16, %s21
        %p212 = scmp.lt.s32.totalorder %s20, 1
        %s213 = scalar_select %p212, %s20, 1
        %p214 = scmp.lt.s32.totalorder %s211, 31
        %s215 = scalar_select %p214, %s211, 31
        %s216 = smul.addr %s213, 32
        %s217 = sadd.s32 %s215, %s216
        %s218 = smul.addr %s217, 4
        %s219 = scalar_lea.vmem %s3, %s218
        %p220 = pneg %p149
        %p221 = pneg %p146
        %s222 = sand.u32 %s136, 1
        %s223 = sand.u32 %s136, 1
        %s224 = smul.addr %s223, 64
        %s225 = scalar_lea.vmem [#allocation2], %s224
        %s226 = smul.u32 16, %s21
        %p227 = scmp.lt.s32.totalorder %s20, 1
        %s228 = scalar_select %p227, %s20, 1
        %p229 = scmp.lt.s32.totalorder %s226, 31
        %s230 = scalar_select %p229, %s226, 31
        %s231 = smul.addr %s228, 32
        %s232 = sadd.s32 %s230, %s231
        %s233 = smul.addr %s232, 4
        %s234 = scalar_lea.vmem %s0, %s233
        %s235 = smul.u32 16, %s21
        %s236 = smul.u32 16, %s21
        %p237 = scmp.lt.s32.totalorder %s20, 1
        %s238 = scalar_select %p237, %s20, 1
        %p239 = scmp.lt.s32.totalorder %s236, 31
        %s240 = scalar_select %p239, %s236, 31
        %s241 = smul.addr %s238, 32
        %s242 = sadd.s32 %s240, %s241
        %s243 = smul.addr %s242, 4
        %s244 = scalar_lea.vmem %s3, %s243
        %s245 = smul.u32 16, %s21
        %v247 = vld [vmem:[%s234] sm:$0xf]
        %v248 = vld [vmem:[%s234 + $0x4] sm:$0xf]
        %v249 = vld [vmem:[%s234 + $0x8] sm:$0xf]
        %v250 = vld [vmem:[%s234 + $0xc] sm:$0xf]
        %v251 = vld [vmem:[%s234 + $0x10] sm:$0xf]
        %v252 = vld [vmem:[%s234 + $0x14] sm:$0xf]
        %v253 = vld [vmem:[%s234 + $0x18] sm:$0xf]
        %v254 = vld [vmem:[%s234 + $0x1c] sm:$0xf]
        %v255 = vld [vmem:[%s234 + $0x20] sm:$0xf]
        %v256 = vld [vmem:[%s234 + $0x24] sm:$0xf]
        %v257 = vld [vmem:[%s234 + $0x28] sm:$0xf]
        %v258 = vld [vmem:[%s234 + $0x2c] sm:$0xf]
        %v259 = vld [vmem:[%s234 + $0x30] sm:$0xf]
        %v260 = vld [vmem:[%s234 + $0x34] sm:$0xf]
        %v261 = vld [vmem:[%s234 + $0x38] sm:$0xf]
        %v262 = vld [vmem:[%s234 + $0x3c] sm:$0xf]
        %v263 = vld [vmem:[%s1] sm:$0xf]
        %v264 = vld [vmem:[%s1 + $0x4] sm:$0xf]
        %v265 = vld [vmem:[%s1 + $0x8] sm:$0xf]
        %v266 = vld [vmem:[%s1 + $0xc] sm:$0xf]
        %v267 = vld [vmem:[%s1 + $0x10] sm:$0x3]
        %v268 = vld [vmem:[%s2] sm:$0x1]
        %v270 = vlaneseq
        %v271 = vshrl.u32 %v270, 7
        %v272 = vsub.s32 0, %v271
        %v273 = vrot.slane %v268, %v272
        %v291 = vunpack.c.l.b16 %v247
        %v292 = vunpack.c.l.b16 %v248
        %v293 = vunpack.c.l.b16 %v249
        %v294 = vunpack.c.l.b16 %v250
        %v295 = vunpack.c.l.b16 %v251
        %v296 = vunpack.c.l.b16 %v252
        %v297 = vunpack.c.l.b16 %v253
        %v298 = vunpack.c.l.b16 %v254
        %v299 = vunpack.c.l.b16 %v255
        %v300 = vunpack.c.l.b16 %v256
        %v301 = vunpack.c.l.b16 %v257
        %v302 = vunpack.c.l.b16 %v258
        %v303 = vunpack.c.l.b16 %v259
        %v304 = vunpack.c.l.b16 %v260
        %v305 = vunpack.c.l.b16 %v261
        %v306 = vunpack.c.l.b16 %v262
        %v307 = vpack.c.b16 %v292, %v291
        %v308 = vpack.c.b16 %v294, %v293
        %v309 = vpack.c.b16 %v296, %v295
        %v310 = vpack.c.b16 %v298, %v297
        %v311 = vpack.c.b16 %v300, %v299
        %v312 = vpack.c.b16 %v302, %v301
        %v313 = vpack.c.b16 %v304, %v303
        %v314 = vpack.c.b16 %v306, %v305
        %v320 = vunpack.c.l.b16 %v263
        %v321 = vunpack.c.l.b16 %v264
        %v322 = vunpack.c.l.b16 %v265
        %v323 = vunpack.c.l.b16 %v266
        %v324 = vunpack.c.l.b16 %v267
        %v325 = vpack.c.b16 %v321, %v320
        %v326 = vpack.c.b16 %v323, %v322
        %v327 = vpack.c.b16 %v324, %v324
        %vm330 = vcmask 293888
        %v332 = vsel %vm330, %v307, 0
        %v335 = vsel %vm330, %v308, 0
        %v338 = vsel %vm330, %v309, 0
        %v341 = vsel %vm330, %v310, 0
        %v344 = vsel %vm330, %v311, 0
        %v347 = vsel %vm330, %v312, 0
        %v350 = vsel %vm330, %v313, 0
        %v353 = vsel %vm330, %v314, 0
        %vm355 = vcmask 1041408
        %v357 = vsel %vm355, %v327, 0
        %359 = vmatprep.subr.bf16.mxu0 0
        %360 = vmatpush1.bf16.msra.mxu0 %v325
        %361 = vmatprep.subr.bf16.mxu0 0
        %362 = vmatpush1.bf16.msra.mxu0 %v326
        %363 = vmatprep.subr.bf16.mxu0 0
        %364 = vmatpush1.bf16.msra.mxu0 %v357
        %365 = vmatprep.subr.bf16.mxu0 0
        %366 = vmatpush1.bf16.msra.mxu0 0
        %367 = vmatprep.subr.bf16.mxu0 0
        %368 = vmatpush1.bf16.msra.mxu0 0
        %369 = vmatprep.subr.bf16.mxu0 0
        %370 = vmatpush1.bf16.msra.mxu0 0
        %371 = vmatprep.subr.bf16.mxu0 0
        %372 = vmatpush1.bf16.msra.mxu0 0
        %373 = vmatprep.subr.bf16.mxu0 0
        %374 = vmatpush1.bf16.msra.mxu0 0
        %375 = vmatprep.subr.bf16.mxu0 0
        %376 = vmatpush1.bf16.msra.mxu0 0
        %377 = vmatprep.subr.bf16.mxu0 0
        %378 = vmatpush1.bf16.msra.mxu0 0
        %379 = vmatprep.subr.bf16.mxu0 0
        %380 = vmatpush1.bf16.msra.mxu0 0
        %381 = vmatprep.subr.bf16.mxu0 0
        %382 = vmatpush1.bf16.msra.mxu0 0
        %383 = vmatprep.subr.bf16.mxu0 0
        %384 = vmatpush1.bf16.msra.mxu0 0
        %385 = vmatprep.subr.bf16.mxu0 0
        %386 = vmatpush1.bf16.msra.mxu0 0
        %387 = vmatprep.subr.bf16.mxu0 0
        %388 = vmatpush1.bf16.msra.mxu0 0
        %389 = vmatprep.subr.bf16.mxu0 0
        %390 = vmatpush1.bf16.msra.mxu0 0
        %391 = vmatprep.mubr.bf16.mxu0 0
        %392 = vmatmul.mubr.bf16.gmra.mrb[0].mxu0 %v332
        %v393 = vpop.f32.mrb[0].mxu0
        %v394 = vadd.f32 %v273, %v393
        %v395 = vpop.f32.mrb[0].mxu0
        %v396 = vpop.f32.mrb[0].mxu0
        %v397 = vadd.f32 %v273, %v396
        %v398 = vpop.f32.mrb[0].mxu0
        %399 = vmatprep.mubr.bf16.mxu0 0
        %400 = vmatmul.mubr.bf16.gmra.mrb[0].mxu0 %v335
        %v401 = vpop.f32.mrb[0].mxu0
        %v402 = vadd.f32 %v273, %v401
        %v403 = vpop.f32.mrb[0].mxu0
        %v404 = vpop.f32.mrb[0].mxu0
        %v405 = vadd.f32 %v273, %v404
        %v406 = vpop.f32.mrb[0].mxu0
        %407 = vmatprep.mubr.bf16.mxu0 0
        %408 = vmatmul.mubr.bf16.gmra.mrb[0].mxu0 %v338
        %v409 = vpop.f32.mrb[0].mxu0
        %v410 = vadd.f32 %v273, %v409
        %v411 = vpop.f32.mrb[0].mxu0
        %v412 = vpop.f32.mrb[0].mxu0
        %v413 = vadd.f32 %v273, %v412
        %v414 = vpop.f32.mrb[0].mxu0
        %415 = vmatprep.mubr.bf16.mxu0 0
        %416 = vmatmul.mubr.bf16.gmra.mrb[0].mxu0 %v341
        %v417 = vpop.f32.mrb[0].mxu0
        %v418 = vadd.f32 %v273, %v417
        %v419 = vpop.f32.mrb[0].mxu0
        %v420 = vpop.f32.mrb[0].mxu0
        %v421 = vadd.f32 %v273, %v420
        %v422 = vpop.f32.mrb[0].mxu0
        %423 = vmatprep.mubr.bf16.mxu0 0
        %424 = vmatmul.mubr.bf16.gmra.mrb[0].mxu0 %v344
        %v425 = vpop.f32.mrb[0].mxu0
        %v426 = vadd.f32 %v273, %v425
        %v427 = vpop.f32.mrb[0].mxu0
        %v428 = vpop.f32.mrb[0].mxu0
        %v429 = vadd.f32 %v273, %v428
        %v430 = vpop.f32.mrb[0].mxu0
        %431 = vmatprep.mubr.bf16.mxu0 0
        %432 = vmatmul.mubr.bf16.gmra.mrb[0].mxu0 %v347
        %v433 = vpop.f32.mrb[0].mxu0
        %v434 = vadd.f32 %v273, %v433
        %v435 = vpop.f32.mrb[0].mxu0
        %v436 = vpop.f32.mrb[0].mxu0
        %v437 = vadd.f32 %v273, %v436
        %v438 = vpop.f32.mrb[0].mxu0
        %439 = vmatprep.mubr.bf16.mxu0 0
        %440 = vmatmul.mubr.bf16.gmra.mrb[0].mxu0 %v350
        %v441 = vpop.f32.mrb[0].mxu0
        %v442 = vadd.f32 %v273, %v441
        %v443 = vpop.f32.mrb[0].mxu0
        %v444 = vpop.f32.mrb[0].mxu0
        %v445 = vadd.f32 %v273, %v444
        %v446 = vpop.f32.mrb[0].mxu0
        %447 = vmatprep.mubr.bf16.mxu0 0
        %448 = vmatmul.mubr.bf16.gmra.mrb[0].mxu0 %v353
        %v449 = vpop.f32.mrb[0].mxu0
        %v450 = vadd.f32 %v273, %v449
        %v451 = vpop.f32.mrb[0].mxu0
        %v452 = vpop.f32.mrb[0].mxu0
        %v453 = vadd.f32 %v273, %v452
        %v454 = vpop.f32.mrb[0].mxu0
        %455 = vdwg.mxu0
        %v456 = vmax.f32 %v394, 0.0
        %v457 = vmax.f32 %v397, 0.0
        %v458 = vmax.f32 %v402, 0.0
        %v459 = vmax.f32 %v405, 0.0
        %v460 = vmax.f32 %v410, 0.0
        %v461 = vmax.f32 %v413, 0.0
        %v462 = vmax.f32 %v418, 0.0
        %v463 = vmax.f32 %v421, 0.0
        %v464 = vmax.f32 %v426, 0.0
        %v465 = vmax.f32 %v429, 0.0
        %v466 = vmax.f32 %v434, 0.0
        %v467 = vmax.f32 %v437, 0.0
        %v468 = vmax.f32 %v442, 0.0
        %v469 = vmax.f32 %v445, 0.0
        %v470 = vmax.f32 %v450, 0.0
        %v471 = vmax.f32 %v453, 0.0
        %v472 = vpack.c.bf16 %v457, %v456
        %v473 = vpack.c.bf16 %v459, %v458
        %v474 = vpack.c.bf16 %v461, %v460
        %v475 = vpack.c.bf16 %v463, %v462
        %v476 = vpack.c.bf16 %v465, %v464
        %v477 = vpack.c.bf16 %v467, %v466
        %v478 = vpack.c.bf16 %v469, %v468
        %v479 = vpack.c.bf16 %v471, %v470
        %v488 = vunpack.c.l.b16 %v472
        %v489 = vunpack.c.h.b16 %v472
        %v490 = vunpack.c.l.b16 %v473
        %v491 = vunpack.c.h.b16 %v473
        %v492 = vunpack.c.l.b16 %v474
        %v493 = vunpack.c.h.b16 %v474
        %v494 = vunpack.c.l.b16 %v475
        %v495 = vunpack.c.h.b16 %v475
        %v496 = vunpack.c.l.b16 %v476
        %v497 = vunpack.c.h.b16 %v476
        %v498 = vunpack.c.l.b16 %v477
        %v499 = vunpack.c.h.b16 %v477
        %v500 = vunpack.c.l.b16 %v478
        %v501 = vunpack.c.h.b16 %v478
        %v502 = vunpack.c.l.b16 %v479
        %v503 = vunpack.c.h.b16 %v479
        %v504 = vpack.c.b16 %v488, %v488
        %v505 = vpack.c.b16 %v489, %v489
        %v506 = vpack.c.b16 %v490, %v490
        %v507 = vpack.c.b16 %v491, %v491
        %v508 = vpack.c.b16 %v492, %v492
        %v509 = vpack.c.b16 %v493, %v493
        %v510 = vpack.c.b16 %v494, %v494
        %v511 = vpack.c.b16 %v495, %v495
        %v512 = vpack.c.b16 %v496, %v496
        %v513 = vpack.c.b16 %v497, %v497
        %v514 = vpack.c.b16 %v498, %v498
        %v515 = vpack.c.b16 %v499, %v499
        %v516 = vpack.c.b16 %v500, %v500
        %v517 = vpack.c.b16 %v501, %v501
        %v518 = vpack.c.b16 %v502, %v502
        %v519 = vpack.c.b16 %v503, %v503
        %vm536 = vcmask 519168
        %537 = vst.msk [vmem:[%s244] sm:$0xf] %vm536, %v504
        %538 = vst.msk [vmem:[%s244 + $0x4] sm:$0xf] %vm536, %v505
        %539 = vst.msk [vmem:[%s244 + $0x8] sm:$0xf] %vm536, %v506
        %540 = vst.msk [vmem:[%s244 + $0xc] sm:$0xf] %vm536, %v507
        %541 = vst.msk [vmem:[%s244 + $0x10] sm:$0xf] %vm536, %v508
        %542 = vst.msk [vmem:[%s244 + $0x14] sm:$0xf] %vm536, %v509
        %543 = vst.msk [vmem:[%s244 + $0x18] sm:$0xf] %vm536, %v510
        %544 = vst.msk [vmem:[%s244 + $0x1c] sm:$0xf] %vm536, %v511
        %545 = vst.msk [vmem:[%s244 + $0x20] sm:$0xf] %vm536, %v512
        %546 = vst.msk [vmem:[%s244 + $0x24] sm:$0xf] %vm536, %v513
        %547 = vst.msk [vmem:[%s244 + $0x28] sm:$0xf] %vm536, %v514
        %548 = vst.msk [vmem:[%s244 + $0x2c] sm:$0xf] %vm536, %v515
        %549 = vst.msk [vmem:[%s244 + $0x30] sm:$0xf] %vm536, %v516
        %550 = vst.msk [vmem:[%s244 + $0x34] sm:$0xf] %vm536, %v517
        %551 = vst.msk [vmem:[%s244 + $0x38] sm:$0xf] %vm536, %v518
        %552 = vst.msk [vmem:[%s244 + $0x3c] sm:$0xf] %vm536, %v519
        %553 = vxpose.xlu0.b32.start [1/16] %v456, 128
        %554 = vxpose.xlu0.b32.cont [2/16] %v457, 128
        %555 = vxpose.xlu0.b32.cont [3/16] %v458, 128
        %556 = vxpose.xlu0.b32.cont [4/16] %v459, 128
        %557 = vxpose.xlu0.b32.cont [5/16] %v460, 128
        %558 = vxpose.xlu0.b32.cont [6/16] %v461, 128
        %559 = vxpose.xlu0.b32.cont [7/16] %v462, 128
        %560 = vxpose.xlu0.b32.cont [8/16] %v463, 128
        %561 = vxpose.xlu0.b32.cont [9/16] %v464, 128
        %562 = vxpose.xlu0.b32.cont [10/16] %v465, 128
        %563 = vxpose.xlu0.b32.cont [11/16] %v466, 128
        %564 = vxpose.xlu0.b32.cont [12/16] %v467, 128
        %565 = vxpose.xlu0.b32.cont [13/16] %v468, 128
        %566 = vxpose.xlu0.b32.cont [14/16] %v469, 128
        %567 = vxpose.xlu0.b32.cont [15/16] %v470, 128
        %568 = vxpose.xlu0.b32.end [16/16] %v471, 128
        %v569 = vpop.trf.xlu0
        %v570 = vpop.trf.xlu0
        %v571 = vpop.trf.xlu0
        %v572 = vpop.trf.xlu0
        %v573 = vpop.trf.xlu0
        %v574 = vpop.trf.xlu0
        %v575 = vpop.trf.xlu0
        %v576 = vpop.trf.xlu0
        %v577 = vpop.trf.xlu0
        %v578 = vpop.trf.xlu0
        %v579 = vpop.trf.xlu0
        %v580 = vpop.trf.xlu0
        %v581 = vpop.trf.xlu0
        %v582 = vpop.trf.xlu0
        %v583 = vpop.trf.xlu0
        %v584 = vpop.trf.xlu0
        %585 = vst [vmem:[%s225] sm:$0xff] %v569
        %586 = vst [vmem:[%s225 + $0x8] sm:$0xff] %v570
        %587 = vst [vmem:[%s225 + $0x10] sm:$0xff] %v571
        %588 = vst [vmem:[%s225 + $0x18] sm:$0xff] %v572
        %589 = vst [vmem:[%s225 + $0x20] sm:$0xff] %v573
        %590 = vst [vmem:[%s225 + $0x28] sm:$0xff] %v574
        %591 = vst [vmem:[%s225 + $0x30] sm:$0xff] %v575
        %592 = vst [vmem:[%s225 + $0x38] sm:$0xff] %v576
        %s593 = smul.u32 16, %s21
        %p594 = scmp.lt.s32.totalorder %s20, 1
        %s595 = scalar_select %p594, %s20, 1
        %p596 = scmp.lt.s32.totalorder %s593, 31
        %s597 = scalar_select %p596, %s593, 31
        %s598 = smul.addr %s595, 32
        %s599 = sadd.s32 %s597, %s598
        %s600 = smul.addr %s599, 4
        %s601 = scalar_lea.vmem %s3, %s600
        %s602 = sand.u32 %s136, 1
        %s603 = sand.u32 %s136, 1
        %s604 = smul.addr %s603, 64
        %s605 = scalar_lea.vmem [#allocation2], %s604
        // Predicated region
        $region33: #{forward.5} parent=31 // pred_check
          %p606 = pneg %p118
        $region34: #{forward.5} parent=31 // pred_check_branch
          %608 = sbr.rel (%p606) target = $region36
        $region35: #{forward.5} parent=31 // pred_region
          %s609 = smul.u32 16, %s21
        $region36: #{forward.5} parent=31 // pred_fallthru
          _
        // Predicated region
        $region37: #{forward.5} parent=31 // pred_check
          %p610 = pneg %p146
        $region38: #{forward.5} parent=31 // pred_check_branch
          %612 = sbr.rel (%p610) target = $region40
        $region39: #{forward.5} parent=31 // pred_region
          %s613 = smul.addr %s20, 16
          %s614 = sadd.s32 %s21, %s613
          %s615 = smul.addr %s614, 8
          %s616 = scalar_lea.vmem %s4, %s615
          // Predicated region
          $region41: #{forward.5} parent=39 // pred_check
            _
          $region42: #{forward.5} parent=39 // pred_check_branch
            %618 = sbr.rel (0) target = $region44
          $region43: #{forward.5} parent=39 // pred_region
            // Predicated region
            $region45: #{forward.5} parent=43 // pred_check
              _
            $region46: #{forward.5} parent=43 // pred_check_branch
              %620 = sbr.rel (0) target = $region48
            $region47: #{forward.5} parent=43 // pred_region
              // Predicated region
              $region60: #{forward.5} parent=47 // pred_check
                _
              $region61: #{forward.5} parent=47 // pred_check_branch
                %649 = sbr.rel (0) target = $region63
              $region62: #{forward.5} parent=47 // pred_region
                loop: start=0, step=1, limit=1
                $region64: #{forward.5} parent=62 // loop_pre_header
                  _
                $region65: #{forward.5} parent=62 // loop_header
                  %s651 = sphi 0, %s655
                  %p652 = scmp.ge.s32.totalorder %s651, 1
                  %s656 = sphi %s605, %s605
                  %s657 = sphi %s616, %s616
                $region66: #{forward.5} parent=62 // loop_header_branch
                  %654 = sbr.rel (%p652) target = $region70
                $region67: #{forward.5} parent=62 // loop_body
                  %v658 = vld [vmem:[%s656] sm:$0xff]
                  %659 = vst [vmem:[%s657] sm:$0xff] %v658
                  %v660 = vld [vmem:[%s656 + $0x8] sm:$0xff]
                  %661 = vst [vmem:[%s657 + $0x10] sm:$0xff] %v660
                  %v662 = vld [vmem:[%s656 + $0x10] sm:$0xff]
                  %663 = vst [vmem:[%s657 + $0x20] sm:$0xff] %v662
                  %v664 = vld [vmem:[%s656 + $0x18] sm:$0xff]
                  %665 = vst [vmem:[%s657 + $0x30] sm:$0xff] %v664
                  %v666 = vld [vmem:[%s656 + $0x20] sm:$0xff]
                  %667 = vst [vmem:[%s657 + $0x40] sm:$0xff] %v666
                  %v668 = vld [vmem:[%s656 + $0x28] sm:$0xff]
                  %669 = vst [vmem:[%s657 + $0x50] sm:$0xff] %v668
                  %v670 = vld [vmem:[%s656 + $0x30] sm:$0xff]
                  %671 = vst [vmem:[%s657 + $0x60] sm:$0xff] %v670
                  %v672 = vld [vmem:[%s656 + $0x38] sm:$0xff]
                  %673 = vst [vmem:[%s657 + $0x70] sm:$0xff] %v672
                $region68: #{forward.5} parent=62 // loop_footer
                  %s655 = sadd.s32 1, %s651
                $region69: #{forward.5} parent=62 // loop_footer_branch
                  %650 = sbr.rel target = $region65
                $region70: #{forward.5} parent=62 // loop_exit
                  _
              $region63: #{forward.5} parent=47 // pred_fallthru
                _
              // Predicated region
              $region71: #{forward.5} parent=47 // pred_check
                _
              $region72: #{forward.5} parent=47 // pred_check_branch
                %675 = sbr.rel target = $region74
              $region73: #{forward.5} parent=47 // pred_region
                _
              $region74: #{forward.5} parent=47 // pred_fallthru
                _
            $region48: #{forward.5} parent=43 // pred_fallthru
              _
            // Predicated region
            $region49: #{forward.5} parent=43 // pred_check
              _
            $region50: #{forward.5} parent=43 // pred_check_branch
              %622 = sbr.rel target = $region52
            $region51: #{forward.5} parent=43 // pred_region
              loop: start=0, step=1, limit=1
              $region53: #{forward.5} parent=51 // loop_pre_header
                _
              $region54: #{forward.5} parent=51 // loop_header
                %s625 = sphi 0, %s629
                %p626 = scmp.ge.s32.totalorder %s625, 1
                %s630 = sphi %s605, %s605
                %s631 = sphi %s616, %s616
              $region55: #{forward.5} parent=51 // loop_header_branch
                %628 = sbr.rel (%p626) target = $region59
              $region56: #{forward.5} parent=51 // loop_body
                %v632 = vld [vmem:[%s630] sm:$0xff]
                %633 = vst [vmem:[%s631] sm:$0xff] %v632
                %v634 = vld [vmem:[%s630 + $0x8] sm:$0xff]
                %635 = vst [vmem:[%s631 + $0x10] sm:$0xff] %v634
                %v636 = vld [vmem:[%s630 + $0x10] sm:$0xff]
                %637 = vst [vmem:[%s631 + $0x20] sm:$0xff] %v636
                %v638 = vld [vmem:[%s630 + $0x18] sm:$0xff]
                %639 = vst [vmem:[%s631 + $0x30] sm:$0xff] %v638
                %v640 = vld [vmem:[%s630 + $0x20] sm:$0xff]
                %641 = vst [vmem:[%s631 + $0x40] sm:$0xff] %v640
                %v642 = vld [vmem:[%s630 + $0x28] sm:$0xff]
                %643 = vst [vmem:[%s631 + $0x50] sm:$0xff] %v642
                %v644 = vld [vmem:[%s630 + $0x30] sm:$0xff]
                %645 = vst [vmem:[%s631 + $0x60] sm:$0xff] %v644
                %v646 = vld [vmem:[%s630 + $0x38] sm:$0xff]
                %647 = vst [vmem:[%s631 + $0x70] sm:$0xff] %v646
              $region57: #{forward.5} parent=51 // loop_footer
                %s629 = sadd.s32 1, %s625
              $region58: #{forward.5} parent=51 // loop_footer_branch
                %624 = sbr.rel target = $region54
              $region59: #{forward.5} parent=51 // loop_exit
                _
            $region52: #{forward.5} parent=43 // pred_fallthru
              _
          $region44: #{forward.5} parent=39 // pred_fallthru
            _
          %676 = vnop
        $region40: #{forward.5} parent=31 // pred_fallthru
          _
      $region32: #{forward.5} parent=5 // pred_fallthru
        _
      %p677 = scmp.le.s32.totalorder 2, %s11
      // Predicated region
      $region75: #{forward.5} parent=5 // pred_check
        %p678 = pneg %p677
      $region76: #{forward.5} parent=5 // pred_check_branch
        %680 = sbr.rel (%p678) target = $region78
      $region77: #{forward.5} parent=5 // pred_region
        %s681 = ssub.s32 %s11, 2
        // Predicated region
        $region79: #{forward.5} parent=77 // pred_check
          %p682 = pneg %p124
        $region80: #{forward.5} parent=77 // pred_check_branch
          %684 = sbr.rel (%p682) target = $region82
        $region81: #{forward.5} parent=77 // pred_region
          %s685 = smul.u32 16, %s23
          %p686 = scmp.lt.s32.totalorder %s22, 1
          %s687 = scalar_select %p686, %s22, 1
          %p688 = scmp.lt.s32.totalorder %s685, 31
          %s689 = scalar_select %p688, %s685, 31
          %s690 = smul.addr %s687, 32
          %s691 = sadd.s32 %s689, %s690
          %s692 = smul.addr %s691, 4
          %s693 = scalar_lea.vmem %s3, %s692
        $region82: #{forward.5} parent=77 // pred_fallthru
          _
        // Predicated region
        $region83: #{forward.5} parent=77 // pred_check
          %p694 = pneg %p152
        $region84: #{forward.5} parent=77 // pred_check_branch
          %696 = sbr.rel (%p694) target = $region86
        $region85: #{forward.5} parent=77 // pred_region
          %s697 = sand.u32 %s137, 1
          %s698 = sand.u32 %s137, 1
          %s699 = smul.addr %s698, 64
          %s700 = scalar_lea.vmem [#allocation2], %s699
        $region86: #{forward.5} parent=77 // pred_fallthru
          _
      $region78: #{forward.5} parent=5 // pred_fallthru
        _
    $region6: #{forward.5} parent=1 // loop_footer
      %s15 = sadd.s32 1, %s11
    $region7: #{forward.5} parent=1 // loop_footer_branch
      %10 = sbr.rel target = $region3
    $region8: #{forward.5} parent=1 // loop_exit
      _

// kernel: forward.9
$region0: #{forward.9}
  #allocation0 [shape = 'u32[]', space=smem, size = 0x4, offset = 0x4, fixed_abs, tag = 'smem constant byte address 0x4 - core index']
  #allocation1 [shape = 'u32[144,128]{1,0:T(1,128)}', space=vmem, size = 0x12000, scoped, tag = 'internal scratch']
  %s0 = inlined_call_operand.vmem [shape: bf16[2,32,32], index: 0, kind: input, shape index: {}]
  %s1 = inlined_call_operand.vmem [shape: bf16[16,32], index: 1, kind: input, shape index: {}]
  %s2 = inlined_call_operand.vmem [shape: bf16[8,32], index: 2, kind: input, shape index: {}]
  %s3 = inlined_call_operand.vmem [shape: bf16[4,32], index: 3, kind: input, shape index: {}]
  %s4 = inlined_call_operand.vmem [shape: bf16[2,32], index: 4, kind: input, shape index: {}]
  %s5 = inlined_call_operand.vmem [shape: bf16[32,16], index: 5, kind: input, shape index: {}]
  %s6 = inlined_call_operand.vmem [shape: bf16[32,8], index: 6, kind: input, shape index: {}]
  %s7 = inlined_call_operand.vmem [shape: bf16[32,4], index: 7, kind: input, shape index: {}]
  %s8 = inlined_call_operand.vmem [shape: bf16[32,2], index: 8, kind: input, shape index: {}]
  %s9 = inlined_call_operand.vmem [shape: s8[2,16,16], index: 9, kind: output, shape index: {0}]
  %s10 = inlined_call_operand.vmem [shape: s8[2,8,8], index: 10, kind: output, shape index: {1}]
  %s11 = inlined_call_operand.vmem [shape: s8[2,4,4], index: 11, kind: output, shape index: {2}]
  %s12 = inlined_call_operand.vmem [shape: s8[2,2,2], index: 12, kind: output, shape index: {3}]
  %13 = xla_tuple %s9, %s10, %s11, %s12
  %s14 = sld [smem:[#allocation0]]
  $region93: #{forward.9} parent=0
    _
  %s16 = ssub.s32 1, %s14
  %s17 = scalar_select 0, %s16, %s14
  loop: start=0, step=1, limit=4
  $region2: #{forward.9} parent=0 // loop_pre_header
    _
  $region3: #{forward.9} parent=0 // loop_header
    %s19 = sphi 0, %s23
    %p20 = scmp.ge.s32.totalorder %s19, 4
    %s29 = sphi 0, %s31
    %s32 = sphi 0, %s29
    %s33 = sphi 0, %s32
    %s49 = sphi 0, %s33
    %s53 = sphi 0, %s53
    %s55 = sphi 0, %s53
    %s56 = sphi 0, %s55
    %s70 = sphi 0, %s56
    %s74 = sphi 0, %s74
    %s76 = sphi 0, %s74
    %s77 = sphi 0, %s76
    %s91 = sphi 0, %s77
    %s95 = sphi 0, %s95
    %s97 = sphi 0, %s95
    %s98 = sphi 0, %s97
    %s112 = sphi 0, %s98
    %s116 = sphi 0, %s116
    %s118 = sphi 0, %s116
    %s119 = sphi 0, %s118
    %s133 = sphi 0, %s119
    %s137 = sphi 0, %s137
    %s139 = sphi 0, %s137
    %s140 = sphi 0, %s139
    %s154 = sphi 0, %s140
    %s158 = sphi 0, %s158
    %s160 = sphi 0, %s158
    %s161 = sphi 0, %s160
    %s175 = sphi 0, %s161
    %s179 = sphi 0, %s179
    %s181 = sphi 0, %s179
    %s182 = sphi 0, %s181
    %s196 = sphi 0, %s182
    %s200 = sphi 0, %s200
    %s202 = sphi 0, %s200
    %s203 = sphi 0, %s202
    %s217 = sphi 0, %s203
    %s223 = sphi 0, %s225
    %s226 = sphi 0, %s223
    %s227 = sphi 0, %s226
    %s243 = sphi 0, %s227
    %s249 = sphi 0, %s251
    %s252 = sphi 0, %s249
    %s253 = sphi 0, %s252
    %s269 = sphi 0, %s253
    %s275 = sphi 0, %s277
    %s278 = sphi 0, %s275
    %s279 = sphi 0, %s278
    %s295 = sphi 0, %s279
    %s301 = sphi 0, %s303
    %s304 = sphi 0, %s301
    %s305 = sphi 0, %s304
    %s321 = sphi 0, %s305
  $region4: #{forward.9} parent=0 // loop_header_branch
    %22 = sbr.rel (%p20) target = $region8
  $region5: #{forward.9} parent=0 // loop_body
    %s24 = ssub.s32 %s19, 1
    %s25 = ssub.s32 %s19, 2
    %s26 = sadd.s32 %s19, 1
    %s27 = ssub.s32 %s19, %s26
    %p28 = scmp.eq.s32.totalorder %s27, 0
    %s30 = sadd.s32 %s29, 1
    %s31 = scalar_select %p28, %s29, %s30
    %p34 = pneg %p28
    %p35 = scmp.eq.s32.totalorder %s19, 1
    %p36 = por %p34, %p35
    %p37 = scmp.ne.s32.totalorder %s29, %s32
    %p38 = scmp.eq.s32.totalorder %s19, 0
    %p39 = por %p37, %p38
    %p40 = scmp.ne.s32.totalorder %s29, %s32
    %p41 = scmp.eq.s32.totalorder %s24, 1
    %p42 = por %p40, %p41
    %p43 = scmp.ne.s32.totalorder %s32, %s33
    %p44 = scmp.eq.s32.totalorder %s24, 0
    %p45 = por %p43, %p44
    %p46 = scmp.ne.s32.totalorder %s32, %s33
    %p47 = scmp.eq.s32.totalorder %s25, 1
    %p48 = por %p46, %p47
    %p50 = scmp.ne.s32.totalorder %s33, %s49
    %p51 = scmp.eq.s32.totalorder %s25, 0
    %p52 = por %p50, %p51
    %s54 = sadd.s32 %s53, 1
    %p57 = scmp.eq.s32.totalorder %s19, 1
    %p58 = scmp.ne.s32.totalorder %s53, %s55
    %p59 = scmp.eq.s32.totalorder %s19, 0
    %p60 = por %p58, %p59
    %p61 = scmp.ne.s32.totalorder %s53, %s55
    %p62 = scmp.eq.s32.totalorder %s24, 1
    %p63 = por %p61, %p62
    %p64 = scmp.ne.s32.totalorder %s55, %s56
    %p65 = scmp.eq.s32.totalorder %s24, 0
    %p66 = por %p64, %p65
    %p67 = scmp.ne.s32.totalorder %s55, %s56
    %p68 = scmp.eq.s32.totalorder %s25, 1
    %p69 = por %p67, %p68
    %p71 = scmp.ne.s32.totalorder %s56, %s70
    %p72 = scmp.eq.s32.totalorder %s25, 0
    %p73 = por %p71, %p72
    %s75 = sadd.s32 %s74, 1
    %p78 = scmp.eq.s32.totalorder %s19, 1
    %p79 = scmp.ne.s32.totalorder %s74, %s76
    %p80 = scmp.eq.s32.totalorder %s19, 0
    %p81 = por %p79, %p80
    %p82 = scmp.ne.s32.totalorder %s74, %s76
    %p83 = scmp.eq.s32.totalorder %s24, 1
    %p84 = por %p82, %p83
    %p85 = scmp.ne.s32.totalorder %s76, %s77
    %p86 = scmp.eq.s32.totalorder %s24, 0
    %p87 = por %p85, %p86
    %p88 = scmp.ne.s32.totalorder %s76, %s77
    %p89 = scmp.eq.s32.totalorder %s25, 1
    %p90 = por %p88, %p89
    %p92 = scmp.ne.s32.totalorder %s77, %s91
    %p93 = scmp.eq.s32.totalorder %s25, 0
    %p94 = por %p92, %p93
    %s96 = sadd.s32 %s95, 1
    %p99 = scmp.eq.s32.totalorder %s19, 1
    %p100 = scmp.ne.s32.totalorder %s95, %s97
    %p101 = scmp.eq.s32.totalorder %s19, 0
    %p102 = por %p100, %p101
    %p103 = scmp.ne.s32.totalorder %s95, %s97
    %p104 = scmp.eq.s32.totalorder %s24, 1
    %p105 = por %p103, %p104
    %p106 = scmp.ne.s32.totalorder %s97, %s98
    %p107 = scmp.eq.s32.totalorder %s24, 0
    %p108 = por %p106, %p107
    %p109 = scmp.ne.s32.totalorder %s97, %s98
    %p110 = scmp.eq.s32.totalorder %s25, 1
    %p111 = por %p109, %p110
    %p113 = scmp.ne.s32.totalorder %s98, %s112
    %p114 = scmp.eq.s32.totalorder %s25, 0
    %p115 = por %p113, %p114
    %s117 = sadd.s32 %s116, 1
    %p120 = scmp.eq.s32.totalorder %s19, 1
    %p121 = scmp.ne.s32.totalorder %s116, %s118
    %p122 = scmp.eq.s32.totalorder %s19, 0
    %p123 = por %p121, %p122
    %p124 = scmp.ne.s32.totalorder %s116, %s118
    %p125 = scmp.eq.s32.totalorder %s24, 1
    %p126 = por %p124, %p125
    %p127 = scmp.ne.s32.totalorder %s118, %s119
    %p128 = scmp.eq.s32.totalorder %s24, 0
    %p129 = por %p127, %p128
    %p130 = scmp.ne.s32.totalorder %s118, %s119
    %p131 = scmp.eq.s32.totalorder %s25, 1
    %p132 = por %p130, %p131
    %p134 = scmp.ne.s32.totalorder %s119, %s133
    %p135 = scmp.eq.s32.totalorder %s25, 0
    %p136 = por %p134, %p135
    %s138 = sadd.s32 %s137, 1
    %p141 = scmp.eq.s32.totalorder %s19, 1
    %p142 = scmp.ne.s32.totalorder %s137, %s139
    %p143 = scmp.eq.s32.totalorder %s19, 0
    %p144 = por %p142, %p143
    %p145 = scmp.ne.s32.totalorder %s137, %s139
    %p146 = scmp.eq.s32.totalorder %s24, 1
    %p147 = por %p145, %p146
    %p148 = scmp.ne.s32.totalorder %s139, %s140
    %p149 = scmp.eq.s32.totalorder %s24, 0
    %p150 = por %p148, %p149
    %p151 = scmp.ne.s32.totalorder %s139, %s140
    %p152 = scmp.eq.s32.totalorder %s25, 1
    %p153 = por %p151, %p152
    %p155 = scmp.ne.s32.totalorder %s140, %s154
    %p156 = scmp.eq.s32.totalorder %s25, 0
    %p157 = por %p155, %p156
    %s159 = sadd.s32 %s158, 1
    %p162 = scmp.eq.s32.totalorder %s19, 1
    %p163 = scmp.ne.s32.totalorder %s158, %s160
    %p164 = scmp.eq.s32.totalorder %s19, 0
    %p165 = por %p163, %p164
    %p166 = scmp.ne.s32.totalorder %s158, %s160
    %p167 = scmp.eq.s32.totalorder %s24, 1
    %p168 = por %p166, %p167
    %p169 = scmp.ne.s32.totalorder %s160, %s161
    %p170 = scmp.eq.s32.totalorder %s24, 0
    %p171 = por %p169, %p170
    %p172 = scmp.ne.s32.totalorder %s160, %s161
    %p173 = scmp.eq.s32.totalorder %s25, 1
    %p174 = por %p172, %p173
    %p176 = scmp.ne.s32.totalorder %s161, %s175
    %p177 = scmp.eq.s32.totalorder %s25, 0
    %p178 = por %p176, %p177
    %s180 = sadd.s32 %s179, 1
    %p183 = scmp.eq.s32.totalorder %s19, 1
    %p184 = scmp.ne.s32.totalorder %s179, %s181
    %p185 = scmp.eq.s32.totalorder %s19, 0
    %p186 = por %p184, %p185
    %p187 = scmp.ne.s32.totalorder %s179, %s181
    %p188 = scmp.eq.s32.totalorder %s24, 1
    %p189 = por %p187, %p188
    %p190 = scmp.ne.s32.totalorder %s181, %s182
    %p191 = scmp.eq.s32.totalorder %s24, 0
    %p192 = por %p190, %p191
    %p193 = scmp.ne.s32.totalorder %s181, %s182
    %p194 = scmp.eq.s32.totalorder %s25, 1
    %p195 = por %p193, %p194
    %p197 = scmp.ne.s32.totalorder %s182, %s196
    %p198 = scmp.eq.s32.totalorder %s25, 0
    %p199 = por %p197, %p198
    %s201 = sadd.s32 %s200, 1
    %p204 = scmp.eq.s32.totalorder %s19, 1
    %p205 = scmp.ne.s32.totalorder %s200, %s202
    %p206 = scmp.eq.s32.totalorder %s19, 0
    %p207 = por %p205, %p206
    %p208 = scmp.ne.s32.totalorder %s200, %s202
    %p209 = scmp.eq.s32.totalorder %s24, 1
    %p210 = por %p208, %p209
    %p211 = scmp.ne.s32.totalorder %s202, %s203
    %p212 = scmp.eq.s32.totalorder %s24, 0
    %p213 = por %p211, %p212
    %p214 = scmp.ne.s32.totalorder %s202, %s203
    %p215 = scmp.eq.s32.totalorder %s25, 1
    %p216 = por %p214, %p215
    %p218 = scmp.ne.s32.totalorder %s203, %s217
    %p219 = scmp.eq.s32.totalorder %s25, 0
    %p220 = por %p218, %p219
    %s221 = ssub.s32 %s19, %s26
    %p222 = scmp.eq.s32.totalorder %s221, 0
    %s224 = sadd.s32 %s223, 1
    %s225 = scalar_select %p222, %s223, %s224
    %p228 = pneg %p222
    %p229 = scmp.eq.s32.totalorder %s19, 1
    %p230 = por %p228, %p229
    %p231 = scmp.ne.s32.totalorder %s223, %s226
    %p232 = scmp.eq.s32.totalorder %s19, 0
    %p233 = por %p231, %p232
    %p234 = scmp.ne.s32.totalorder %s223, %s226
    %p235 = scmp.eq.s32.totalorder %s24, 1
    %p236 = por %p234, %p235
    %p237 = scmp.ne.s32.totalorder %s226, %s227
    %p238 = scmp.eq.s32.totalorder %s24, 0
    %p239 = por %p237, %p238
    %p240 = scmp.ne.s32.totalorder %s226, %s227
    %p241 = scmp.eq.s32.totalorder %s25, 1
    %p242 = por %p240, %p241
    %p244 = scmp.ne.s32.totalorder %s227, %s243
    %p245 = scmp.eq.s32.totalorder %s25, 0
    %p246 = por %p244, %p245
    %s247 = ssub.s32 %s19, %s26
    %p248 = scmp.eq.s32.totalorder %s247, 0
    %s250 = sadd.s32 %s249, 1
    %s251 = scalar_select %p248, %s249, %s250
    %p254 = pneg %p248
    %p255 = scmp.eq.s32.totalorder %s19, 1
    %p256 = por %p254, %p255
    %p257 = scmp.ne.s32.totalorder %s249, %s252
    %p258 = scmp.eq.s32.totalorder %s19, 0
    %p259 = por %p257, %p258
    %p260 = scmp.ne.s32.totalorder %s249, %s252
    %p261 = scmp.eq.s32.totalorder %s24, 1
    %p262 = por %p260, %p261
    %p263 = scmp.ne.s32.totalorder %s252, %s253
    %p264 = scmp.eq.s32.totalorder %s24, 0
    %p265 = por %p263, %p264
    %p266 = scmp.ne.s32.totalorder %s252, %s253
    %p267 = scmp.eq.s32.totalorder %s25, 1
    %p268 = por %p266, %p267
    %p270 = scmp.ne.s32.totalorder %s253, %s269
    %p271 = scmp.eq.s32.totalorder %s25, 0
    %p272 = por %p270, %p271
    %s273 = ssub.s32 %s19, %s26
    %p274 = scmp.eq.s32.totalorder %s273, 0
    %s276 = sadd.s32 %s275, 1
    %s277 = scalar_select %p274, %s275, %s276
    %p280 = pneg %p274
    %p281 = scmp.eq.s32.totalorder %s19, 1
    %p282 = por %p280, %p281
    %p283 = scmp.ne.s32.totalorder %s275, %s278
    %p284 = scmp.eq.s32.totalorder %s19, 0
    %p285 = por %p283, %p284
    %p286 = scmp.ne.s32.totalorder %s275, %s278
    %p287 = scmp.eq.s32.totalorder %s24, 1
    %p288 = por %p286, %p287
    %p289 = scmp.ne.s32.totalorder %s278, %s279
    %p290 = scmp.eq.s32.totalorder %s24, 0
    %p291 = por %p289, %p290
    %p292 = scmp.ne.s32.totalorder %s278, %s279
    %p293 = scmp.eq.s32.totalorder %s25, 1
    %p294 = por %p292, %p293
    %p296 = scmp.ne.s32.totalorder %s279, %s295
    %p297 = scmp.eq.s32.totalorder %s25, 0
    %p298 = por %p296, %p297
    %s299 = ssub.s32 %s19, %s26
    %p300 = scmp.eq.s32.totalorder %s299, 0
    %s302 = sadd.s32 %s301, 1
    %s303 = scalar_select %p300, %s301, %s302
    %p306 = pneg %p300
    %p307 = scmp.eq.s32.totalorder %s19, 1
    %p308 = por %p306, %p307
    %p309 = scmp.ne.s32.totalorder %s301, %s304
    %p310 = scmp.eq.s32.totalorder %s19, 0
    %p311 = por %p309, %p310
    %p312 = scmp.ne.s32.totalorder %s301, %s304
    %p313 = scmp.eq.s32.totalorder %s24, 1
    %p314 = por %p312, %p313
    %p315 = scmp.ne.s32.totalorder %s304, %s305
    %p316 = scmp.eq.s32.totalorder %s24, 0
    %p317 = por %p315, %p316
    %p318 = scmp.ne.s32.totalorder %s304, %s305
    %p319 = scmp.eq.s32.totalorder %s25, 1
    %p320 = por %p318, %p319
    %p322 = scmp.ne.s32.totalorder %s305, %s321
    %p323 = scmp.eq.s32.totalorder %s25, 0
    %p324 = por %p322, %p323
    %p325 = scmp.le.s32.totalorder 1, %s19
    %p326 = scmp.lt.s32.totalorder %s19, 3
    %p327 = pnand %p325, %p326
    %p328 = pneg %p327
    // Predicated region
    $region9: #{forward.9} parent=5 // pred_check
      _
    $region10: #{forward.9} parent=5 // pred_check_branch
      %330 = sbr.rel (%p327) target = $region12
    $region11: #{forward.9} parent=5 // pred_region
      %s331 = ssub.s32 %s19, 1
      // Predicated region
      $region13: #{forward.9} parent=11 // pred_check
        %p332 = pneg %p66
      $region14: #{forward.9} parent=11 // pred_check_branch
        %334 = sbr.rel (%p332) target = $region16
      $region15: #{forward.9} parent=11 // pred_region
        _
      $region16: #{forward.9} parent=11 // pred_fallthru
        _
      // Predicated region
      $region17: #{forward.9} parent=11 // pred_check
        %p335 = pneg %p87
      $region18: #{forward.9} parent=11 // pred_check_branch
        %337 = sbr.rel (%p335) target = $region20
      $region19: #{forward.9} parent=11 // pred_region
        _
      $region20: #{forward.9} parent=11 // pred_fallthru
        _
      // Predicated region
      $region21: #{forward.9} parent=11 // pred_check
        %p338 = pneg %p108
      $region22: #{forward.9} parent=11 // pred_check_branch
        %340 = sbr.rel (%p338) target = $region24
      $region23: #{forward.9} parent=11 // pred_region
        _
      $region24: #{forward.9} parent=11 // pred_fallthru
        _
      // Predicated region
      $region25: #{forward.9} parent=11 // pred_check
        %p341 = pneg %p129
      $region26: #{forward.9} parent=11 // pred_check_branch
        %343 = sbr.rel (%p341) target = $region28
      $region27: #{forward.9} parent=11 // pred_region
        _
      $region28: #{forward.9} parent=11 // pred_fallthru
        _
      // Predicated region
      $region29: #{forward.9} parent=11 // pred_check
        %p344 = pneg %p150
      $region30: #{forward.9} parent=11 // pred_check_branch
        %346 = sbr.rel (%p344) target = $region32
      $region31: #{forward.9} parent=11 // pred_region
        _
      $region32: #{forward.9} parent=11 // pred_fallthru
        _
      // Predicated region
      $region33: #{forward.9} parent=11 // pred_check
        %p347 = pneg %p171
      $region34: #{forward.9} parent=11 // pred_check_branch
        %349 = sbr.rel (%p347) target = $region36
      $region35: #{forward.9} parent=11 // pred_region
        _
      $region36: #{forward.9} parent=11 // pred_fallthru
        _
      // Predicated region
      $region37: #{forward.9} parent=11 // pred_check
        %p350 = pneg %p192
      $region38: #{forward.9} parent=11 // pred_check_branch
        %352 = sbr.rel (%p350) target = $region40
      $region39: #{forward.9} parent=11 // pred_region
        _
      $region40: #{forward.9} parent=11 // pred_fallthru
        _
      // Predicated region
      $region41: #{forward.9} parent=11 // pred_check
        %p353 = pneg %p213
      $region42: #{forward.9} parent=11 // pred_check_branch
        %355 = sbr.rel (%p353) target = $region44
      $region43: #{forward.9} parent=11 // pred_region
        _
      $region44: #{forward.9} parent=11 // pred_fallthru
        _
    $region12: #{forward.9} parent=5 // pred_fallthru
      _
    %p356 = scmp.lt.s32.totalorder %s19, 2
    // Predicated region
    $region45: #{forward.9} parent=5 // pred_check
      %p357 = pneg %p356
    $region46: #{forward.9} parent=5 // pred_check_branch
      %359 = sbr.rel (%p357) target = $region48
    $region47: #{forward.9} parent=5 // pred_region
      // Predicated region
      $region49: #{forward.9} parent=47 // pred_check
        %p360 = pneg %p39
      $region50: #{forward.9} parent=47 // pred_check_branch
        %362 = sbr.rel (%p360) target = $region52
      $region51: #{forward.9} parent=47 // pred_region
        %p363 = scmp.lt.s32.totalorder %s19, 1
        %s364 = scalar_select %p363, %s19, 1
        %s365 = smul.addr %s364, 4
        %s366 = smul.addr %s365, 4
        %s367 = scalar_lea.vmem %s0, %s366
      $region52: #{forward.9} parent=47 // pred_fallthru
        _
    $region48: #{forward.9} parent=5 // pred_fallthru
      _
    %p368 = scmp.le.s32.totalorder 1, %s19
    %p369 = scmp.lt.s32.totalorder %s19, 3
    %p370 = pnand %p368, %p369
    %p371 = pneg %p370
    // Predicated region
    $region53: #{forward.9} parent=5 // pred_check
      _
    $region54: #{forward.9} parent=5 // pred_check_branch
      %373 = sbr.rel (%p370) target = $region56
    $region55: #{forward.9} parent=5 // pred_region
      %s374 = ssub.s32 %s19, 1
      %p375 = scmp.lt.s32.totalorder %s24, 1
      %s376 = scalar_select %p375, %s24, 1
      %s377 = smul.addr %s376, 4
      %s378 = smul.addr %s377, 4
      %s379 = scalar_lea.vmem %s0, %s378
      %p380 = pneg %p45
      %p381 = pneg %p42
      %p382 = pneg %p66
      %p383 = pneg %p63
      %p384 = pneg %p87
      %p385 = pneg %p84
      %p386 = pneg %p108
      %p387 = pneg %p105
      %p388 = pneg %p129
      %p389 = pneg %p126
      %p390 = pneg %p150
      %p391 = pneg %p147
      %p392 = pneg %p171
      %p393 = pneg %p168
      %p394 = pneg %p192
      %p395 = pneg %p189
      %p396 = pneg %p213
      %p397 = pneg %p210
      %p398 = pneg %p239
      %p399 = pneg %p236
      %p400 = scmp.lt.s32.totalorder %s24, 1
      %s401 = scalar_select %p400, %s24, 1
      %s402 = smul.addr %s401, 2
      %s403 = smul.addr %s402, 2
      %s404 = scalar_lea.vmem %s9, %s403
      %p405 = pneg %p265
      %p406 = pneg %p262
      %p407 = scmp.lt.s32.totalorder %s24, 1
      %s408 = scalar_select %p407, %s24, 1
      %s409 = smul.addr %s408, 2
      %s410 = scalar_lea.vmem %s10, %s409
      %p411 = pneg %p291
      %p412 = pneg %p288
      %p413 = scmp.lt.s32.totalorder %s24, 1
      %s414 = scalar_select %p413, %s24, 1
      %s415 = scalar_lea.vmem %s11, %s414
      %p416 = pneg %p317
      %p417 = pneg %p314
      %p418 = scmp.lt.s32.totalorder %s24, 1
      %s419 = scalar_select %p418, %s24, 1
      %s420 = scalar_lea.vmem %s12, %s419
      %p421 = scmp.lt.s32.totalorder %s24, 1
      %s422 = scalar_select %p421, %s24, 1
      %s423 = smul.addr %s422, 4
      %s424 = smul.addr %s423, 4
      %s425 = scalar_lea.vmem %s0, %s424
      %p426 = scmp.lt.s32.totalorder %s24, 1
      %s427 = scalar_select %p426, %s24, 1
      %s428 = smul.addr %s427, 2
      %s429 = smul.addr %s428, 2
      %s430 = scalar_lea.vmem %s9, %s429
      %p431 = scmp.lt.s32.totalorder %s24, 1
      %s432 = scalar_select %p431, %s24, 1
      %s433 = smul.addr %s432, 2
      %s434 = scalar_lea.vmem %s10, %s433
      %p435 = scmp.lt.s32.totalorder %s24, 1
      %s436 = scalar_select %p435, %s24, 1
      %s437 = scalar_lea.vmem %s11, %s436
      %p438 = scmp.lt.s32.totalorder %s24, 1
      %s439 = scalar_select %p438, %s24, 1
      %s440 = scalar_lea.vmem %s12, %s439
      %v444 = vld [vmem:[%s425] sm:$0xf]
      %v445 = vld [vmem:[%s425 + $0x4] sm:$0xf]
      %v446 = vld [vmem:[%s425 + $0x8] sm:$0xf]
      %v447 = vld [vmem:[%s425 + $0xc] sm:$0xf]
      %v448 = vld [vmem:[%s1] sm:$0xf]
      %v449 = vld [vmem:[%s1 + $0x4] sm:$0xf]
      %v452 = vunpack.c.l.b16 %v448
      %v453 = vunpack.c.l.b16 %v449
      %v454 = vpack.c.b16 %v453, %v452
      %v459 = vunpack.c.l.b16 %v444
      %v460 = vunpack.c.l.b16 %v445
      %v461 = vunpack.c.l.b16 %v446
      %v462 = vunpack.c.l.b16 %v447
      %v463 = vpack.c.b16 %v460, %v459
      %v464 = vpack.c.b16 %v462, %v461
      %vm467 = vcmask 261120
      %v469 = vsel %vm467, %v454, 0
      %471 = vmatprep.subr.bf16.mxu0 0
      %472 = vmatpush1.bf16.msra.mxu0 %v463
      %473 = vmatprep.subr.bf16.mxu0 0
      %474 = vmatpush1.bf16.msra.mxu0 %v464
      %475 = vmatprep.subr.bf16.mxu0 0
      %476 = vmatpush1.bf16.msra.mxu0 0
      %477 = vmatprep.subr.bf16.mxu0 0
      %478 = vmatpush1.bf16.msra.mxu0 0
      %479 = vmatprep.subr.bf16.mxu0 0
      %480 = vmatpush1.bf16.msra.mxu0 0
      %481 = vmatprep.subr.bf16.mxu0 0
      %482 = vmatpush1.bf16.msra.mxu0 0
      %483 = vmatprep.subr.bf16.mxu0 0
      %484 = vmatpush1.bf16.msra.mxu0 0
      %485 = vmatprep.subr.bf16.mxu0 0
      %486 = vmatpush1.bf16.msra.mxu0 0
      %487 = vmatprep.subr.bf16.mxu0 0
      %488 = vmatpush1.bf16.msra.mxu0 0
      %489 = vmatprep.subr.bf16.mxu0 0
      %490 = vmatpush1.bf16.msra.mxu0 0
      %491 = vmatprep.subr.bf16.mxu0 0
      %492 = vmatpush1.bf16.msra.mxu0 0
      %493 = vmatprep.subr.bf16.mxu0 0
      %494 = vmatpush1.bf16.msra.mxu0 0
      %495 = vmatprep.subr.bf16.mxu0 0
      %496 = vmatpush1.bf16.msra.mxu0 0
      %497 = vmatprep.subr.bf16.mxu0 0
      %498 = vmatpush1.bf16.msra.mxu0 0
      %499 = vmatprep.subr.bf16.mxu0 0
      %500 = vmatpush1.bf16.msra.mxu0 0
      %501 = vmatprep.subr.bf16.mxu0 0
      %502 = vmatpush1.bf16.msra.mxu0 0
      %503 = vmatprep.mubr.bf16.mxu0 0
      %504 = vmatmul.mubr.bf16.gmra.mrb[0].mxu0 %v469
      %v505 = vpop.f32.mrb[0].mxu0
      %v506 = vadd.f32 0.0, %v505
      %v507 = vpop.f32.mrb[0].mxu0
      %v508 = vpop.f32.mrb[0].mxu0
      %v509 = vadd.f32 0.0, %v508
      %v510 = vpop.f32.mrb[0].mxu0
      %511 = vdwg.mxu0
      %v512 = vpack.c.bf16 %v509, %v506
      %v513 = vld [vmem:[%s5] sm:$0xf]
      %v514 = vld [vmem:[%s5 + $0x4] sm:$0xf]
      %v515 = vld [vmem:[%s5 + $0x8] sm:$0xf]
      %v516 = vld [vmem:[%s5 + $0xc] sm:$0xf]
      %v521 = vunpack.c.l.b16 %v513
      %v522 = vunpack.c.l.b16 %v514
      %v523 = vunpack.c.l.b16 %v515
      %v524 = vunpack.c.l.b16 %v516
      %v525 = vpack.c.b16 %v522, %v521
      %v526 = vpack.c.b16 %v524, %v523
      %v530 = vsel %vm467, %v512, 0
      %532 = vmatprep.subr.bf16.mxu0 0
      %533 = vmatpush1.bf16.msra.mxu0 %v525
      %534 = vmatprep.subr.bf16.mxu0 0
      %535 = vmatpush1.bf16.msra.mxu0 %v526
      %536 = vmatprep.subr.bf16.mxu0 0
      %537 = vmatpush1.bf16.msra.mxu0 0
      %538 = vmatprep.subr.bf16.mxu0 0
      %539 = vmatpush1.bf16.msra.mxu0 0
      %540 = vmatprep.subr.bf16.mxu0 0
      %541 = vmatpush1.bf16.msra.mxu0 0
      %542 = vmatprep.subr.bf16.mxu0 0
      %543 = vmatpush1.bf16.msra.mxu0 0
      %544 = vmatprep.subr.bf16.mxu0 0
      %545 = vmatpush1.bf16.msra.mxu0 0
      %546 = vmatprep.subr.bf16.mxu0 0
      %547 = vmatpush1.bf16.msra.mxu0 0
      %548 = vmatprep.subr.bf16.mxu0 0
      %549 = vmatpush1.bf16.msra.mxu0 0
      %550 = vmatprep.subr.bf16.mxu0 0
      %551 = vmatpush1.bf16.msra.mxu0 0
      %552 = vmatprep.subr.bf16.mxu0 0
      %553 = vmatpush1.bf16.msra.mxu0 0
      %554 = vmatprep.subr.bf16.mxu0 0
      %555 = vmatpush1.bf16.msra.mxu0 0
      %556 = vmatprep.subr.bf16.mxu0 0
      %557 = vmatpush1.bf16.msra.mxu0 0
      %558 = vmatprep.subr.bf16.mxu0 0
      %559 = vmatpush1.bf16.msra.mxu0 0
      %560 = vmatprep.subr.bf16.mxu0 0
      %561 = vmatpush1.bf16.msra.mxu0 0
      %562 = vmatprep.subr.bf16.mxu0 0
      %563 = vmatpush1.bf16.msra.mxu0 0
      %564 = vmatprep.mubr.bf16.mxu0 0
      %565 = vmatmul.mubr.bf16.gmra.mrb[0].mxu0 %v530
      %v566 = vpop.f32.mrb[0].mxu0
      %v567 = vadd.f32 0.0, %v566
      %v568 = vpop.f32.mrb[0].mxu0
      %v569 = vpop.f32.mrb[0].mxu0
      %v570 = vadd.f32 0.0, %v569
      %v571 = vpop.f32.mrb[0].mxu0
      %572 = vdwg.mxu0
      %vm573 = vcmp.gt.f32.partialorder %v567, 0.5
      %vm574 = vcmp.gt.f32.partialorder %v570, 0.5
      %vm575 = vmpackc.low %vm574, %vm573
      %vm576 = vmpackc.even %vm575, %vm575
      %v577 = vsel %vm576, 16843009, 0
      %v578 = vunpack.c.0.s8 %v577
      %v579 = vunpack.c.1.s8 %v577
      %v580 = vpack.c.b16 %v578, %v578
      %v581 = vpack.c.b8 %v580, %v580
      %v582 = vpack.c.b16 %v579, %v579
      %v583 = vpack.c.b8 %v582, %v582
      %vm584 = vcmask 123904
      %585 = vst.msk [vmem:[%s430] sm:$0x3] %vm584, %v581
      %586 = vst.msk [vmem:[%s430 + $0x2] sm:$0x3] %vm584, %v583
      %v587 = vld [vmem:[%s2] sm:$0xf]
      %v589 = vsel %vm467, %v587, 0
      %591 = vmatprep.subr.bf16.mxu0 0
      %592 = vmatpush1.bf16.msra.mxu0 %v463
      %593 = vmatprep.subr.bf16.mxu0 0
      %594 = vmatpush1.bf16.msra.mxu0 %v464
      %595 = vmatprep.subr.bf16.mxu0 0
      %596 = vmatpush1.bf16.msra.mxu0 0
      %597 = vmatprep.subr.bf16.mxu0 0
      %598 = vmatpush1.bf16.msra.mxu0 0
      %599 = vmatprep.subr.bf16.mxu0 0
      %600 = vmatpush1.bf16.msra.mxu0 0
      %601 = vmatprep.subr.bf16.mxu0 0
      %602 = vmatpush1.bf16.msra.mxu0 0
      %603 = vmatprep.subr.bf16.mxu0 0
      %604 = vmatpush1.bf16.msra.mxu0 0
      %605 = vmatprep.subr.bf16.mxu0 0
      %606 = vmatpush1.bf16.msra.mxu0 0
      %607 = vmatprep.subr.bf16.mxu0 0
      %608 = vmatpush1.bf16.msra.mxu0 0
      %609 = vmatprep.subr.bf16.mxu0 0
      %610 = vmatpush1.bf16.msra.mxu0 0
      %611 = vmatprep.subr.bf16.mxu0 0
      %612 = vmatpush1.bf16.msra.mxu0 0
      %613 = vmatprep.subr.bf16.mxu0 0
      %614 = vmatpush1.bf16.msra.mxu0 0
      %615 = vmatprep.subr.bf16.mxu0 0
      %616 = vmatpush1.bf16.msra.mxu0 0
      %617 = vmatprep.subr.bf16.mxu0 0
      %618 = vmatpush1.bf16.msra.mxu0 0
      %619 = vmatprep.subr.bf16.mxu0 0
      %620 = vmatpush1.bf16.msra.mxu0 0
      %621 = vmatprep.subr.bf16.mxu0 0
      %622 = vmatpush1.bf16.msra.mxu0 0
      %623 = vmatprep.mubr.bf16.mxu0 0
      %624 = vmatmul.mubr.bf16.gmra.mrb[0].mxu0 %v589
      %v625 = vpop.f32.mrb[0].mxu0
      %v626 = vadd.f32 0.0, %v625
      %v627 = vpop.f32.mrb[0].mxu0
      %v628 = vpop.f32.mrb[0].mxu0
      %v629 = vpop.f32.mrb[0].mxu0
      %630 = vdwg.mxu0
      %v631 = vpack.c.bf16 %v626, %v626
      %v632 = vld [vmem:[%s6] sm:$0xf]
      %v633 = vld [vmem:[%s6 + $0x4] sm:$0xf]
      %v634 = vld [vmem:[%s6 + $0x8] sm:$0xf]
      %v635 = vld [vmem:[%s6 + $0xc] sm:$0xf]
      %v640 = vunpack.c.l.b16 %v632
      %v641 = vunpack.c.l.b16 %v633
      %v642 = vunpack.c.l.b16 %v634
      %v643 = vunpack.c.l.b16 %v635
      %v644 = vpack.c.b16 %v641, %v640
      %v645 = vpack.c.b16 %v643, %v642
      %v649 = vsel %vm467, %v631, 0
      %651 = vmatprep.subr.bf16.mxu0 0
      %652 = vmatpush1.bf16.msra.mxu0 %v644
      %653 = vmatprep.subr.bf16.mxu0 0
      %654 = vmatpush1.bf16.msra.mxu0 %v645
      %655 = vmatprep.subr.bf16.mxu0 0
      %656 = vmatpush1.bf16.msra.mxu0 0
      %657 = vmatprep.subr.bf16.mxu0 0
      %658 = vmatpush1.bf16.msra.mxu0 0
      %659 = vmatprep.subr.bf16.mxu0 0
      %660 = vmatpush1.bf16.msra.mxu0 0
      %661 = vmatprep.subr.bf16.mxu0 0
      %662 = vmatpush1.bf16.msra.mxu0 0
      %663 = vmatprep.subr.bf16.mxu0 0
      %664 = vmatpush1.bf16.msra.mxu0 0
      %665 = vmatprep.subr.bf16.mxu0 0
      %666 = vmatpush1.bf16.msra.mxu0 0
      %667 = vmatprep.subr.bf16.mxu0 0
      %668 = vmatpush1.bf16.msra.mxu0 0
      %669 = vmatprep.subr.bf16.mxu0 0
      %670 = vmatpush1.bf16.msra.mxu0 0
      %671 = vmatprep.subr.bf16.mxu0 0
      %672 = vmatpush1.bf16.msra.mxu0 0
      %673 = vmatprep.subr.bf16.mxu0 0
      %674 = vmatpush1.bf16.msra.mxu0 0
      %675 = vmatprep.subr.bf16.mxu0 0
      %676 = vmatpush1.bf16.msra.mxu0 0
      %677 = vmatprep.subr.bf16.mxu0 0
      %678 = vmatpush1.bf16.msra.mxu0 0
      %679 = vmatprep.subr.bf16.mxu0 0
      %680 = vmatpush1.bf16.msra.mxu0 0
      %681 = vmatprep.subr.bf16.mxu0 0
      %682 = vmatpush1.bf16.msra.mxu0 0
      %683 = vmatprep.mubr.bf16.mxu0 0
      %684 = vmatmul.mubr.bf16.gmra.mrb[0].mxu0 %v649
      %v685 = vpop.f32.mrb[0].mxu0
      %v686 = vadd.f32 0.0, %v685
      %v687 = vpop.f32.mrb[0].mxu0
      %v688 = vpop.f32.mrb[0].mxu0
      %v689 = vpop.f32.mrb[0].mxu0
      %690 = vdwg.mxu0
      %vm691 = vcmp.gt.f32.partialorder %v686, 0.5
      %vm692 = vmpackc.low %vm691, %vm691
      %vm693 = vmpackc.even %vm692, %vm692
      %v694 = vsel %vm693, 16843009, 0
      %vm695 = vcmask 58368
      %696 = vst.msk [vmem:[%s434] sm:$0x3] %vm695, %v694
      %v697 = vld [vmem:[%s3] sm:$0x3]
      %v699 = vsel %vm467, %v697, 0
      %701 = vmatprep.subr.bf16.mxu0 0
      %702 = vmatpush1.bf16.msra.mxu0 %v463
      %703 = vmatprep.subr.bf16.mxu0 0
      %704 = vmatpush1.bf16.msra.mxu0 %v464
      %705 = vmatprep.subr.bf16.mxu0 0
      %706 = vmatpush1.bf16.msra.mxu0 0
      %707 = vmatprep.subr.bf16.mxu0 0
      %708 = vmatpush1.bf16.msra.mxu0 0
      %709 = vmatprep.subr.bf16.mxu0 0
      %710 = vmatpush1.bf16.msra.mxu0 0
      %711 = vmatprep.subr.bf16.mxu0 0
      %712 = vmatpush1.bf16.msra.mxu0 0
      %713 = vmatprep.subr.bf16.mxu0 0
      %714 = vmatpush1.bf16.msra.mxu0 0
      %715 = vmatprep.subr.bf16.mxu0 0
      %716 = vmatpush1.bf16.msra.mxu0 0
      %717 = vmatprep.subr.bf16.mxu0 0
      %718 = vmatpush1.bf16.msra.mxu0 0
      %719 = vmatprep.subr.bf16.mxu0 0
      %720 = vmatpush1.bf16.msra.mxu0 0
      %721 = vmatprep.subr.bf16.mxu0 0
      %722 = vmatpush1.bf16.msra.mxu0 0
      %723 = vmatprep.subr.bf16.mxu0 0
      %724 = vmatpush1.bf16.msra.mxu0 0
      %725 = vmatprep.subr.bf16.mxu0 0
      %726 = vmatpush1.bf16.msra.mxu0 0
      %727 = vmatprep.subr.bf16.mxu0 0
      %728 = vmatpush1.bf16.msra.mxu0 0
      %729 = vmatprep.subr.bf16.mxu0 0
      %730 = vmatpush1.bf16.msra.mxu0 0
      %731 = vmatprep.subr.bf16.mxu0 0
      %732 = vmatpush1.bf16.msra.mxu0 0
      %733 = vmatprep.mubr.bf16.mxu0 0
      %734 = vmatmul.mubr.bf16.gmra.mrb[0].mxu0 %v699
      %v735 = vpop.f32.mrb[0].mxu0
      %v736 = vadd.f32 0.0, %v735
      %v737 = vpop.f32.mrb[0].mxu0
      %v738 = vpop.f32.mrb[0].mxu0
      %v739 = vpop.f32.mrb[0].mxu0
      %740 = vdwg.mxu0
      %v741 = vpack.c.bf16 %v736, %v736
      %v742 = vld [vmem:[%s7] sm:$0xf]
      %v743 = vld [vmem:[%s7 + $0x4] sm:$0xf]
      %v744 = vld [vmem:[%s7 + $0x8] sm:$0xf]
      %v745 = vld [vmem:[%s7 + $0xc] sm:$0xf]
      %v750 = vunpack.c.l.b16 %v742
      %v751 = vunpack.c.l.b16 %v743
      %v752 = vunpack.c.l.b16 %v744
      %v753 = vunpack.c.l.b16 %v745
      %v754 = vpack.c.b16 %v751, %v750
      %v755 = vpack.c.b16 %v753, %v752
      %v759 = vsel %vm467, %v741, 0
      %761 = vmatprep.subr.bf16.mxu0 0
      %762 = vmatpush1.bf16.msra.mxu0 %v754
      %763 = vmatprep.subr.bf16.mxu0 0
      %764 = vmatpush1.bf16.msra.mxu0 %v755
      %765 = vmatprep.subr.bf16.mxu0 0
      %766 = vmatpush1.bf16.msra.mxu0 0
      %767 = vmatprep.subr.bf16.mxu0 0
      %768 = vmatpush1.bf16.msra.mxu0 0
      %769 = vmatprep.subr.bf16.mxu0 0
      %770 = vmatpush1.bf16.msra.mxu0 0
      %771 = vmatprep.subr.bf16.mxu0 0
      %772 = vmatpush1.bf16.msra.mxu0 0
      %773 = vmatprep.subr.bf16.mxu0 0
      %774 = vmatpush1.bf16.msra.mxu0 0
      %775 = vmatprep.subr.bf16.mxu0 0
      %776 = vmatpush1.bf16.msra.mxu0 0
      %777 = vmatprep.subr.bf16.mxu0 0
      %778 = vmatpush1.bf16.msra.mxu0 0
      %779 = vmatprep.subr.bf16.mxu0 0
      %780 = vmatpush1.bf16.msra.mxu0 0
      %781 = vmatprep.subr.bf16.mxu0 0
      %782 = vmatpush1.bf16.msra.mxu0 0
      %783 = vmatprep.subr.bf16.mxu0 0
      %784 = vmatpush1.bf16.msra.mxu0 0
      %785 = vmatprep.subr.bf16.mxu0 0
      %786 = vmatpush1.bf16.msra.mxu0 0
      %787 = vmatprep.subr.bf16.mxu0 0
      %788 = vmatpush1.bf16.msra.mxu0 0
      %789 = vmatprep.subr.bf16.mxu0 0
      %790 = vmatpush1.bf16.msra.mxu0 0
      %791 = vmatprep.subr.bf16.mxu0 0
      %792 = vmatpush1.bf16.msra.mxu0 0
      %793 = vmatprep.mubr.bf16.mxu0 0
      %794 = vmatmul.mubr.bf16.gmra.mrb[0].mxu0 %v759
      %v795 = vpop.f32.mrb[0].mxu0
      %v796 = vadd.f32 0.0, %v795
      %v797 = vpop.f32.mrb[0].mxu0
      %v798 = vpop.f32.mrb[0].mxu0
      %v799 = vpop.f32.mrb[0].mxu0
      %800 = vdwg.mxu0
      %vm801 = vcmp.gt.f32.partialorder %v796, 0.5
      %vm802 = vmpackc.low %vm801, %vm801
      %vm803 = vmpackc.even %vm802, %vm802
      %v804 = vsel %vm803, 16843009, 0
      %vm805 = vcmask 24576
      %806 = vst.msk [vmem:[%s437] sm:$0x1] %vm805, %v804
      %v807 = vld [vmem:[%s4] sm:$0x1]
      %v809 = vsel %vm467, %v807, 0
      %811 = vmatprep.subr.bf16.mxu0 0
      %812 = vmatpush1.bf16.msra.mxu0 %v463
      %813 = vmatprep.subr.bf16.mxu0 0
      %814 = vmatpush1.bf16.msra.mxu0 %v464
      %815 = vmatprep.subr.bf16.mxu0 0
      %816 = vmatpush1.bf16.msra.mxu0 0
      %817 = vmatprep.subr.bf16.mxu0 0
      %818 = vmatpush1.bf16.msra.mxu0 0
      %819 = vmatprep.subr.bf16.mxu0 0
      %820 = vmatpush1.bf16.msra.mxu0 0
      %821 = vmatprep.subr.bf16.mxu0 0
      %822 = vmatpush1.bf16.msra.mxu0 0
      %823 = vmatprep.subr.bf16.mxu0 0
      %824 = vmatpush1.bf16.msra.mxu0 0
      %825 = vmatprep.subr.bf16.mxu0 0
      %826 = vmatpush1.bf16.msra.mxu0 0
      %827 = vmatprep.subr.bf16.mxu0 0
      %828 = vmatpush1.bf16.msra.mxu0 0
      %829 = vmatprep.subr.bf16.mxu0 0
      %830 = vmatpush1.bf16.msra.mxu0 0
      %831 = vmatprep.subr.bf16.mxu0 0
      %832 = vmatpush1.bf16.msra.mxu0 0
      %833 = vmatprep.subr.bf16.mxu0 0
      %834 = vmatpush1.bf16.msra.mxu0 0
      %835 = vmatprep.subr.bf16.mxu0 0
      %836 = vmatpush1.bf16.msra.mxu0 0
      %837 = vmatprep.subr.bf16.mxu0 0
      %838 = vmatpush1.bf16.msra.mxu0 0
      %839 = vmatprep.subr.bf16.mxu0 0
      %840 = vmatpush1.bf16.msra.mxu0 0
      %841 = vmatprep.subr.bf16.mxu0 0
      %842 = vmatpush1.bf16.msra.mxu0 0
      %843 = vmatprep.mubr.bf16.mxu0 0
      %844 = vmatmul.mubr.bf16.gmra.mrb[0].mxu0 %v809
      %v845 = vpop.f32.mrb[0].mxu0
      %v846 = vadd.f32 0.0, %v845
      %v847 = vpop.f32.mrb[0].mxu0
      %v848 = vpop.f32.mrb[0].mxu0
      %v849 = vpop.f32.mrb[0].mxu0
      %850 = vdwg.mxu0
      %v851 = vpack.c.bf16 %v846, %v846
      %v852 = vld [vmem:[%s8] sm:$0xf]
      %v853 = vld [vmem:[%s8 + $0x4] sm:$0xf]
      %v854 = vld [vmem:[%s8 + $0x8] sm:$0xf]
      %v855 = vld [vmem:[%s8 + $0xc] sm:$0xf]
      %v860 = vunpack.c.l.b16 %v852
      %v861 = vunpack.c.l.b16 %v853
      %v862 = vunpack.c.l.b16 %v854
      %v863 = vunpack.c.l.b16 %v855
      %v864 = vpack.c.b16 %v861, %v860
      %v865 = vpack.c.b16 %v863, %v862
      %v869 = vsel %vm467, %v851, 0
      %871 = vmatprep.subr.bf16.mxu0 0
      %872 = vmatpush1.bf16.msra.mxu0 %v864
      %873 = vmatprep.subr.bf16.mxu0 0
      %874 = vmatpush1.bf16.msra.mxu0 %v865
      %875 = vmatprep.subr.bf16.mxu0 0
      %876 = vmatpush1.bf16.msra.mxu0 0
      %877 = vmatprep.subr.bf16.mxu0 0
      %878 = vmatpush1.bf16.msra.mxu0 0
      %879 = vmatprep.subr.bf16.mxu0 0
      %880 = vmatpush1.bf16.msra.mxu0 0
      %881 = vmatprep.subr.bf16.mxu0 0
      %882 = vmatpush1.bf16.msra.mxu0 0
      %883 = vmatprep.subr.bf16.mxu0 0
      %884 = vmatpush1.bf16.msra.mxu0 0
      %885 = vmatprep.subr.bf16.mxu0 0
      %886 = vmatpush1.bf16.msra.mxu0 0
      %887 = vmatprep.subr.bf16.mxu0 0
      %888 = vmatpush1.bf16.msra.mxu0 0
      %889 = vmatprep.subr.bf16.mxu0 0
      %890 = vmatpush1.bf16.msra.mxu0 0
      %891 = vmatprep.subr.bf16.mxu0 0
      %892 = vmatpush1.bf16.msra.mxu0 0
      %893 = vmatprep.subr.bf16.mxu0 0
      %894 = vmatpush1.bf16.msra.mxu0 0
      %895 = vmatprep.subr.bf16.mxu0 0
      %896 = vmatpush1.bf16.msra.mxu0 0
      %897 = vmatprep.subr.bf16.mxu0 0
      %898 = vmatpush1.bf16.msra.mxu0 0
      %899 = vmatprep.subr.bf16.mxu0 0
      %900 = vmatpush1.bf16.msra.mxu0 0
      %901 = vmatprep.subr.bf16.mxu0 0
      %902 = vmatpush1.bf16.msra.mxu0 0
      %903 = vmatprep.mubr.bf16.mxu0 0
      %904 = vmatmul.mubr.bf16.gmra.mrb[0].mxu0 %v869
      %v905 = vpop.f32.mrb[0].mxu0
      %v906 = vadd.f32 0.0, %v905
      %v907 = vpop.f32.mrb[0].mxu0
      %v908 = vpop.f32.mrb[0].mxu0
      %v909 = vpop.f32.mrb[0].mxu0
      %910 = vdwg.mxu0
      %vm911 = vcmp.gt.f32.partialorder %v906, 0.5
      %vm912 = vmpackc.low %vm911, %vm911
      %vm913 = vmpackc.even %vm912, %vm912
      %v914 = vsel %vm913, 16843009, 0
      %vm915 = vcmask 8192
      %vm916 = vsmask.f32 256
      %vm917 = vmand %vm915, %vm916
      %v918 = vld [vmem:[%s440] sm:$0x1]
      %v919 = vsel %vm917, %v914, %v918
      %920 = vst [vmem:[%s440] sm:$0x1] %v919
      %p921 = scmp.lt.s32.totalorder %s24, 1
      %s922 = scalar_select %p921, %s24, 1
      %s923 = smul.addr %s922, 2
      %s924 = smul.addr %s923, 2
      %s925 = scalar_lea.vmem %s9, %s924
      %p926 = scmp.lt.s32.totalorder %s24, 1
      %s927 = scalar_select %p926, %s24, 1
      %s928 = smul.addr %s927, 2
      %s929 = scalar_lea.vmem %s10, %s928
      %p930 = scmp.lt.s32.totalorder %s24, 1
      %s931 = scalar_select %p930, %s24, 1
      %s932 = scalar_lea.vmem %s11, %s931
      %p933 = scmp.lt.s32.totalorder %s24, 1
      %s934 = scalar_select %p933, %s24, 1
      %s935 = scalar_lea.vmem %s12, %s934
      // Predicated region
      $region57: #{forward.9} parent=55 // pred_check
        %p936 = pneg %p236
      $region58: #{forward.9} parent=55 // pred_check_branch
        %938 = sbr.rel (%p936) target = $region60
      $region59: #{forward.9} parent=55 // pred_region
        _
      $region60: #{forward.9} parent=55 // pred_fallthru
        _
      // Predicated region
      $region61: #{forward.9} parent=55 // pred_check
        %p939 = pneg %p262
      $region62: #{forward.9} parent=55 // pred_check_branch
        %941 = sbr.rel (%p939) target = $region64
      $region63: #{forward.9} parent=55 // pred_region
        _
      $region64: #{forward.9} parent=55 // pred_fallthru
        _
      // Predicated region
      $region65: #{forward.9} parent=55 // pred_check
        %p942 = pneg %p288
      $region66: #{forward.9} parent=55 // pred_check_branch
        %944 = sbr.rel (%p942) target = $region68
      $region67: #{forward.9} parent=55 // pred_region
        _
      $region68: #{forward.9} parent=55 // pred_fallthru
        _
      // Predicated region
      $region69: #{forward.9} parent=55 // pred_check
        %p945 = pneg %p314
      $region70: #{forward.9} parent=55 // pred_check_branch
        %947 = sbr.rel (%p945) target = $region72
      $region71: #{forward.9} parent=55 // pred_region
        _
      $region72: #{forward.9} parent=55 // pred_fallthru
        _
    $region56: #{forward.9} parent=5 // pred_fallthru
      _
    %p948 = scmp.le.s32.totalorder 2, %s19
    // Predicated region
    $region73: #{forward.9} parent=5 // pred_check
      %p949 = pneg %p948
    $region74: #{forward.9} parent=5 // pred_check_branch
      %951 = sbr.rel (%p949) target = $region76
    $region75: #{forward.9} parent=5 // pred_region
      %s952 = ssub.s32 %s19, 2
      // Predicated region
      $region77: #{forward.9} parent=75 // pred_check
        %p953 = pneg %p242
      $region78: #{forward.9} parent=75 // pred_check_branch
        %955 = sbr.rel (%p953) target = $region80
      $region79: #{forward.9} parent=75 // pred_region
        %p956 = scmp.lt.s32.totalorder %s25, 1
        %s957 = scalar_select %p956, %s25, 1
        %s958 = smul.addr %s957, 2
        %s959 = smul.addr %s958, 2
        %s960 = scalar_lea.vmem %s9, %s959
      $region80: #{forward.9} parent=75 // pred_fallthru
        _
      // Predicated region
      $region81: #{forward.9} parent=75 // pred_check
        %p961 = pneg %p268
      $region82: #{forward.9} parent=75 // pred_check_branch
        %963 = sbr.rel (%p961) target = $region84
      $region83: #{forward.9} parent=75 // pred_region
        %p964 = scmp.lt.s32.totalorder %s25, 1
        %s965 = scalar_select %p964, %s25, 1
        %s966 = smul.addr %s965, 2
        %s967 = scalar_lea.vmem %s10, %s966
      $region84: #{forward.9} parent=75 // pred_fallthru
        _
      // Predicated region
      $region85: #{forward.9} parent=75 // pred_check
        %p968 = pneg %p294
      $region86: #{forward.9} parent=75 // pred_check_branch
        %970 = sbr.rel (%p968) target = $region88
      $region87: #{forward.9} parent=75 // pred_region
        %p971 = scmp.lt.s32.totalorder %s25, 1
        %s972 = scalar_select %p971, %s25, 1
        %s973 = scalar_lea.vmem %s11, %s972
      $region88: #{forward.9} parent=75 // pred_fallthru
        _
      // Predicated region
      $region89: #{forward.9} parent=75 // pred_check
        %p974 = pneg %p320
      $region90: #{forward.9} parent=75 // pred_check_branch
        %976 = sbr.rel (%p974) target = $region92
      $region91: #{forward.9} parent=75 // pred_region
        %p977 = scmp.lt.s32.totalorder %s25, 1
        %s978 = scalar_select %p977, %s25, 1
        %s979 = scalar_lea.vmem %s12, %s978
      $region92: #{forward.9} parent=75 // pred_fallthru
        _
    $region76: #{forward.9} parent=5 // pred_fallthru
      _
  $region6: #{forward.9} parent=0 // loop_footer
    %s23 = sadd.s32 1, %s19
  $region7: #{forward.9} parent=0 // loop_footer_branch
    %18 = sbr.rel target = $region3
  $region8: #{forward.9} parent=0 // loop_exit
    _

// kernel: forward.6
$region0: #{forward.6}
  #allocation0 [shape = 'u32[]', space=smem, size = 0x4, offset = 0x4, fixed_abs, tag = 'smem constant byte address 0x4 - core index']
  #allocation1 [shape = 'u32[144,128]{1,0:T(1,128)}', space=vmem, size = 0x12000, scoped, tag = 'internal scratch']
  %s0 = inlined_call_operand.vmem [shape: bf16[2,64,576], index: 0, kind: input, shape index: {}]
  %s1 = inlined_call_operand.vmem [shape: bf16[576,128], index: 1, kind: input, shape index: {}]
  %s2 = inlined_call_operand.vmem [shape: f32[1,128], index: 2, kind: input, shape index: {}]
  %s3 = inlined_call_operand.vmem [shape: bf16[2,64,128], index: 3, kind: output, shape index: {0}]
  %s4 = inlined_call_operand.vmem [shape: f32[2,128,64], index: 4, kind: output, shape index: {1}]
  %5 = xla_tuple %s3, %s4
  %s6 = sld [smem:[#allocation0]]
  $region53: #{forward.6} parent=0
    _
  %s8 = ssub.s32 1, %s6
  %s9 = scalar_select 0, %s8, %s6
  loop: start=0, step=1, limit=4
  $region2: #{forward.6} parent=0 // loop_pre_header
    _
  $region3: #{forward.6} parent=0 // loop_header
    %s11 = sphi 0, %s15
    %p12 = scmp.ge.s32.totalorder %s11, 4
    %s18 = sphi 0, %s30
    %s19 = sphi 0, %s26
    %s20 = sphi 0, %s18
    %s21 = sphi 0, %s19
    %s22 = sphi 0, %s20
    %s23 = sphi 0, %s21
    %s35 = sphi 0, %s37
    %s38 = sphi 0, %s35
    %s39 = sphi 0, %s38
    %s55 = sphi 0, %s39
    %s59 = sphi 0, %s59
    %s61 = sphi 0, %s59
    %s62 = sphi 0, %s61
    %s76 = sphi 0, %s62
    %s80 = sphi 0, %s80
    %s82 = sphi 0, %s80
    %s83 = sphi 0, %s82
    %s97 = sphi 0, %s83
    %s105 = sphi 0, %s107
    %s108 = sphi 0, %s105
    %s109 = sphi 0, %s108
    %s125 = sphi 0, %s109
    %s133 = sphi 0, %s135
    %s136 = sphi 0, %s133
    %s137 = sphi 0, %s136
    %s153 = sphi 0, %s137
  $region4: #{forward.6} parent=0 // loop_header_branch
    %14 = sbr.rel (%p12) target = $region8
  $region5: #{forward.6} parent=0 // loop_body
    %s16 = ssub.s32 %s11, 1
    %s17 = ssub.s32 %s11, 2
    %s24 = sadd.s32 1, %s19
    %p25 = scmp.ge.s32.totalorder %s24, 1
    %s26 = scalar_select %p25, 0, %s24
    %s27 = sadd.s32 1, %s18
    %s28 = scalar_select %p25, %s27, %s18
    %p29 = scmp.ge.s32.totalorder %s28, 2
    %s30 = scalar_select %p29, 0, %s28
    %s31 = ssub.s32 %s18, %s30
    %s32 = ssub.s32 %s19, %s26
    %s33 = sor.u32 %s31, %s32
    %p34 = scmp.eq.s32.totalorder %s33, 0
    %s36 = sadd.s32 %s35, 1
    %s37 = scalar_select %p34, %s35, %s36
    %p40 = pneg %p34
    %p41 = scmp.eq.s32.totalorder %s11, 1
    %p42 = por %p40, %p41
    %p43 = scmp.ne.s32.totalorder %s35, %s38
    %p44 = scmp.eq.s32.totalorder %s11, 0
    %p45 = por %p43, %p44
    %p46 = scmp.ne.s32.totalorder %s35, %s38
    %p47 = scmp.eq.s32.totalorder %s16, 1
    %p48 = por %p46, %p47
    %p49 = scmp.ne.s32.totalorder %s38, %s39
    %p50 = scmp.eq.s32.totalorder %s16, 0
    %p51 = por %p49, %p50
    %p52 = scmp.ne.s32.totalorder %s38, %s39
    %p53 = scmp.eq.s32.totalorder %s17, 1
    %p54 = por %p52, %p53
    %p56 = scmp.ne.s32.totalorder %s39, %s55
    %p57 = scmp.eq.s32.totalorder %s17, 0
    %p58 = por %p56, %p57
    %s60 = sadd.s32 %s59, 1
    %p63 = scmp.eq.s32.totalorder %s11, 1
    %p64 = scmp.ne.s32.totalorder %s59, %s61
    %p65 = scmp.eq.s32.totalorder %s11, 0
    %p66 = por %p64, %p65
    %p67 = scmp.ne.s32.totalorder %s59, %s61
    %p68 = scmp.eq.s32.totalorder %s16, 1
    %p69 = por %p67, %p68
    %p70 = scmp.ne.s32.totalorder %s61, %s62
    %p71 = scmp.eq.s32.totalorder %s16, 0
    %p72 = por %p70, %p71
    %p73 = scmp.ne.s32.totalorder %s61, %s62
    %p74 = scmp.eq.s32.totalorder %s17, 1
    %p75 = por %p73, %p74
    %p77 = scmp.ne.s32.totalorder %s62, %s76
    %p78 = scmp.eq.s32.totalorder %s17, 0
    %p79 = por %p77, %p78
    %s81 = sadd.s32 %s80, 1
    %p84 = scmp.eq.s32.totalorder %s11, 1
    %p85 = scmp.ne.s32.totalorder %s80, %s82
    %p86 = scmp.eq.s32.totalorder %s11, 0
    %p87 = por %p85, %p86
    %p88 = scmp.ne.s32.totalorder %s80, %s82
    %p89 = scmp.eq.s32.totalorder %s16, 1
    %p90 = por %p88, %p89
    %p91 = scmp.ne.s32.totalorder %s82, %s83
    %p92 = scmp.eq.s32.totalorder %s16, 0
    %p93 = por %p91, %p92
    %p94 = scmp.ne.s32.totalorder %s82, %s83
    %p95 = scmp.eq.s32.totalorder %s17, 1
    %p96 = por %p94, %p95
    %p98 = scmp.ne.s32.totalorder %s83, %s97
    %p99 = scmp.eq.s32.totalorder %s17, 0
    %p100 = por %p98, %p99
    %s101 = ssub.s32 %s18, %s30
    %s102 = ssub.s32 %s19, %s26
    %s103 = sor.u32 %s101, %s102
    %p104 = scmp.eq.s32.totalorder %s103, 0
    %s106 = sadd.s32 %s105, 1
    %s107 = scalar_select %p104, %s105, %s106
    %p110 = pneg %p104
    %p111 = scmp.eq.s32.totalorder %s11, 1
    %p112 = por %p110, %p111
    %p113 = scmp.ne.s32.totalorder %s105, %s108
    %p114 = scmp.eq.s32.totalorder %s11, 0
    %p115 = por %p113, %p114
    %p116 = scmp.ne.s32.totalorder %s105, %s108
    %p117 = scmp.eq.s32.totalorder %s16, 1
    %p118 = por %p116, %p117
    %p119 = scmp.ne.s32.totalorder %s108, %s109
    %p120 = scmp.eq.s32.totalorder %s16, 0
    %p121 = por %p119, %p120
    %p122 = scmp.ne.s32.totalorder %s108, %s109
    %p123 = scmp.eq.s32.totalorder %s17, 1
    %p124 = por %p122, %p123
    %p126 = scmp.ne.s32.totalorder %s109, %s125
    %p127 = scmp.eq.s32.totalorder %s17, 0
    %p128 = por %p126, %p127
    %s129 = ssub.s32 %s18, %s30
    %s130 = ssub.s32 %s19, %s26
    %s131 = sor.u32 %s129, %s130
    %p132 = scmp.eq.s32.totalorder %s131, 0
    %s134 = sadd.s32 %s133, 1
    %s135 = scalar_select %p132, %s133, %s134
    %p138 = pneg %p132
    %p139 = scmp.eq.s32.totalorder %s11, 1
    %p140 = por %p138, %p139
    %p141 = scmp.ne.s32.totalorder %s133, %s136
    %p142 = scmp.eq.s32.totalorder %s11, 0
    %p143 = por %p141, %p142
    %p144 = scmp.ne.s32.totalorder %s133, %s136
    %p145 = scmp.eq.s32.totalorder %s16, 1
    %p146 = por %p144, %p145
    %p147 = scmp.ne.s32.totalorder %s136, %s137
    %p148 = scmp.eq.s32.totalorder %s16, 0
    %p149 = por %p147, %p148
    %p150 = scmp.ne.s32.totalorder %s136, %s137
    %p151 = scmp.eq.s32.totalorder %s17, 1
    %p152 = por %p150, %p151
    %p154 = scmp.ne.s32.totalorder %s137, %s153
    %p155 = scmp.eq.s32.totalorder %s17, 0
    %p156 = por %p154, %p155
    %p157 = scmp.le.s32.totalorder 1, %s11
    %p158 = scmp.lt.s32.totalorder %s11, 3
    %p159 = pnand %p157, %p158
    %p160 = pneg %p159
    // Predicated region
    $region9: #{forward.6} parent=5 // pred_check
      _
    $region10: #{forward.6} parent=5 // pred_check_branch
      %162 = sbr.rel (%p159) target = $region12
    $region11: #{forward.6} parent=5 // pred_region
      %s163 = ssub.s32 %s11, 1
      // Predicated region
      $region13: #{forward.6} parent=11 // pred_check
        %p164 = pneg %p72
      $region14: #{forward.6} parent=11 // pred_check_branch
        %166 = sbr.rel (%p164) target = $region16
      $region15: #{forward.6} parent=11 // pred_region
        _
      $region16: #{forward.6} parent=11 // pred_fallthru
        _
      // Predicated region
      $region17: #{forward.6} parent=11 // pred_check
        %p167 = pneg %p93
      $region18: #{forward.6} parent=11 // pred_check_branch
        %169 = sbr.rel (%p167) target = $region20
      $region19: #{forward.6} parent=11 // pred_region
        _
      $region20: #{forward.6} parent=11 // pred_fallthru
        _
    $region12: #{forward.6} parent=5 // pred_fallthru
      _
    %p170 = scmp.lt.s32.totalorder %s11, 2
    // Predicated region
    $region21: #{forward.6} parent=5 // pred_check
      %p171 = pneg %p170
    $region22: #{forward.6} parent=5 // pred_check_branch
      %173 = sbr.rel (%p171) target = $region24
    $region23: #{forward.6} parent=5 // pred_region
      // Predicated region
      $region25: #{forward.6} parent=23 // pred_check
        %p174 = pneg %p45
      $region26: #{forward.6} parent=23 // pred_check_branch
        %176 = sbr.rel (%p174) target = $region28
      $region27: #{forward.6} parent=23 // pred_region
        %s177 = smul.u32 8, %s19
        %p178 = scmp.lt.s32.totalorder %s18, 1
        %s179 = scalar_select %p178, %s18, 1
        %p180 = scmp.lt.s32.totalorder %s177, 7
        %s181 = scalar_select %p180, %s177, 7
        %s182 = smul.addr %s181, 5
        %s183 = smul.addr %s179, 40
        %s184 = sadd.s32 %s182, %s183
        %s185 = smul.addr %s184, 4
        %s186 = scalar_lea.vmem %s0, %s185
        %s187 = smul.u32 8, %s19
      $region28: #{forward.6} parent=23 // pred_fallthru
        _
    $region24: #{forward.6} parent=5 // pred_fallthru
      _
    %p188 = scmp.le.s32.totalorder 1, %s11
    %p189 = scmp.lt.s32.totalorder %s11, 3
    %p190 = pnand %p188, %p189
    %p191 = pneg %p190
    // Predicated region
    $region29: #{forward.6} parent=5 // pred_check
      _
    $region30: #{forward.6} parent=5 // pred_check_branch
      %193 = sbr.rel (%p190) target = $region32
    $region31: #{forward.6} parent=5 // pred_region
      %s194 = ssub.s32 %s11, 1
      %s195 = smul.u32 8, %s21
      %p196 = scmp.lt.s32.totalorder %s20, 1
      %s197 = scalar_select %p196, %s20, 1
      %p198 = scmp.lt.s32.totalorder %s195, 7
      %s199 = scalar_select %p198, %s195, 7
      %s200 = smul.addr %s199, 5
      %s201 = smul.addr %s197, 40
      %s202 = sadd.s32 %s200, %s201
      %s203 = smul.addr %s202, 4
      %s204 = scalar_lea.vmem %s0, %s203
      %p205 = pneg %p51
      %p206 = pneg %p48
      %p207 = pneg %p72
      %p208 = pneg %p69
      %p209 = pneg %p93
      %p210 = pneg %p90
      %p211 = pneg %p121
      %p212 = pneg %p118
      %s213 = smul.u32 8, %s21
      %p214 = scmp.lt.s32.totalorder %s20, 1
      %s215 = scalar_select %p214, %s20, 1
      %p216 = scmp.lt.s32.totalorder %s213, 7
      %s217 = scalar_select %p216, %s213, 7
      %s218 = smul.addr %s215, 8
      %s219 = sadd.s32 %s217, %s218
      %s220 = smul.addr %s219, 4
      %s221 = scalar_lea.vmem %s3, %s220
      %p222 = pneg %p149
      %p223 = pneg %p146
      %p224 = scmp.lt.s32.totalorder %s20, 1
      %s225 = scalar_select %p224, %s20, 1
      %p226 = scmp.lt.s32.totalorder %s21, 0
      %s227 = scalar_select %p226, %s21, 0
      %s228 = smul.addr %s225, 16
      %s229 = sadd.s32 %s227, %s228
      %s230 = smul.addr %s229, 8
      %s231 = scalar_lea.vmem %s4, %s230
      %s232 = smul.u32 8, %s21
      %p233 = scmp.lt.s32.totalorder %s20, 1
      %s234 = scalar_select %p233, %s20, 1
      %p235 = scmp.lt.s32.totalorder %s232, 7
      %s236 = scalar_select %p235, %s232, 7
      %s237 = smul.addr %s236, 5
      %s238 = smul.addr %s234, 40
      %s239 = sadd.s32 %s237, %s238
      %s240 = smul.addr %s239, 4
      %s241 = scalar_lea.vmem %s0, %s240
      %s242 = smul.u32 8, %s21
      %s243 = smul.u32 8, %s21
      %p244 = scmp.lt.s32.totalorder %s20, 1
      %s245 = scalar_select %p244, %s20, 1
      %p246 = scmp.lt.s32.totalorder %s243, 7
      %s247 = scalar_select %p246, %s243, 7
      %s248 = smul.addr %s245, 8
      %s249 = sadd.s32 %s247, %s248
      %s250 = smul.addr %s249, 4
      %s251 = scalar_lea.vmem %s3, %s250
      %s252 = smul.u32 8, %s21
      %p253 = scmp.lt.s32.totalorder %s20, 1
      %s254 = scalar_select %p253, %s20, 1
      %p255 = scmp.lt.s32.totalorder %s21, 0
      %s256 = scalar_select %p255, %s21, 0
      %s257 = smul.addr %s254, 16
      %s258 = sadd.s32 %s256, %s257
      %s259 = smul.addr %s258, 8
      %s260 = scalar_lea.vmem %s4, %s259
      %v262 = vld [vmem:[%s241] sm:$0xff]
      %v263 = vld [vmem:[%s241 + $0x8] sm:$0xff]
      %v264 = vld [vmem:[%s241 + $0x10] sm:$0xf]
      %v265 = vld [vmem:[%s241 + $0x14] sm:$0xff]
      %v266 = vld [vmem:[%s241 + $0x1c] sm:$0xff]
      %v267 = vld [vmem:[%s241 + $0x24] sm:$0xf]
      %v268 = vld [vmem:[%s241 + $0x28] sm:$0xff]
      %v269 = vld [vmem:[%s241 + $0x30] sm:$0xff]
      %v270 = vld [vmem:[%s241 + $0x38] sm:$0xf]
      %v271 = vld [vmem:[%s241 + $0x3c] sm:$0xff]
      %v272 = vld [vmem:[%s241 + $0x44] sm:$0xff]
      %v273 = vld [vmem:[%s241 + $0x4c] sm:$0xf]
      %v274 = vld [vmem:[%s241 + $0x50] sm:$0xff]
      %v275 = vld [vmem:[%s241 + $0x58] sm:$0xff]
      %v276 = vld [vmem:[%s241 + $0x60] sm:$0xf]
      %v277 = vld [vmem:[%s241 + $0x64] sm:$0xff]
      %v278 = vld [vmem:[%s241 + $0x6c] sm:$0xff]
      %v279 = vld [vmem:[%s241 + $0x74] sm:$0xf]
      %v280 = vld [vmem:[%s241 + $0x78] sm:$0xff]
      %v281 = vld [vmem:[%s241 + $0x80] sm:$0xff]
      %v282 = vld [vmem:[%s241 + $0x88] sm:$0xf]
      %v283 = vld [vmem:[%s241 + $0x8c] sm:$0xff]
      %v284 = vld [vmem:[%s241 + $0x94] sm:$0xff]
      %v285 = vld [vmem:[%s241 + $0x9c] sm:$0xf]
      %v286 = vld [vmem:[%s1] sm:$0xf]
      %v287 = vld [vmem:[%s1 + $0x4] sm:$0xf]
      %v288 = vld [vmem:[%s1 + $0x8] sm:$0xf]
      %v289 = vld [vmem:[%s1 + $0xc] sm:$0xf]
      %v290 = vld [vmem:[%s1 + $0x10] sm:$0xf]
      %v291 = vld [vmem:[%s1 + $0x14] sm:$0xf]
      %v292 = vld [vmem:[%s1 + $0x18] sm:$0xf]
      %v293 = vld [vmem:[%s1 + $0x1c] sm:$0xf]
      %v294 = vld [vmem:[%s1 + $0x20] sm:$0xf]
      %v295 = vld [vmem:[%s1 + $0x24] sm:$0xf]
      %v296 = vld [vmem:[%s1 + $0x28] sm:$0xf]
      %v297 = vld [vmem:[%s1 + $0x2c] sm:$0xf]
      %v298 = vld [vmem:[%s1 + $0x30] sm:$0xf]
      %v299 = vld [vmem:[%s1 + $0x34] sm:$0xf]
      %v300 = vld [vmem:[%s1 + $0x38] sm:$0xf]
      %v301 = vld [vmem:[%s1 + $0x3c] sm:$0xf]
      %v302 = vld [vmem:[%s1 + $0x40] sm:$0xf]
      %v303 = vld [vmem:[%s1 + $0x44] sm:$0xf]
      %v304 = vld [vmem:[%s1 + $0x48] sm:$0xf]
      %v305 = vld [vmem:[%s1 + $0x4c] sm:$0xf]
      %v306 = vld [vmem:[%s1 + $0x50] sm:$0xf]
      %v307 = vld [vmem:[%s1 + $0x54] sm:$0xf]
      %v308 = vld [vmem:[%s1 + $0x58] sm:$0xf]
      %v309 = vld [vmem:[%s1 + $0x5c] sm:$0xf]
      %v310 = vld [vmem:[%s1 + $0x60] sm:$0xf]
      %v311 = vld [vmem:[%s1 + $0x64] sm:$0xf]
      %v312 = vld [vmem:[%s1 + $0x68] sm:$0xf]
      %v313 = vld [vmem:[%s1 + $0x6c] sm:$0xf]
      %v314 = vld [vmem:[%s1 + $0x70] sm:$0xf]
      %v315 = vld [vmem:[%s1 + $0x74] sm:$0xf]
      %v316 = vld [vmem:[%s1 + $0x78] sm:$0xf]
      %v317 = vld [vmem:[%s1 + $0x7c] sm:$0xf]
      %v318 = vld [vmem:[%s1 + $0x80] sm:$0xf]
      %v319 = vld [vmem:[%s1 + $0x84] sm:$0xf]
      %v320 = vld [vmem:[%s1 + $0x88] sm:$0xf]
      %v321 = vld [vmem:[%s1 + $0x8c] sm:$0xf]
      %v322 = vld [vmem:[%s1 + $0x90] sm:$0xf]
      %v323 = vld [vmem:[%s1 + $0x94] sm:$0xf]
      %v324 = vld [vmem:[%s1 + $0x98] sm:$0xf]
      %v325 = vld [vmem:[%s1 + $0x9c] sm:$0xf]
      %v326 = vld [vmem:[%s1 + $0xa0] sm:$0xf]
      %v327 = vld [vmem:[%s1 + $0xa4] sm:$0xf]
      %v328 = vld [vmem:[%s1 + $0xa8] sm:$0xf]
      %v329 = vld [vmem:[%s1 + $0xac] sm:$0xf]
      %v330 = vld [vmem:[%s1 + $0xb0] sm:$0xf]
      %v331 = vld [vmem:[%s1 + $0xb4] sm:$0xf]
      %v332 = vld [vmem:[%s1 + $0xb8] sm:$0xf]
      %v333 = vld [vmem:[%s1 + $0xbc] sm:$0xf]
      %v334 = vld [vmem:[%s1 + $0xc0] sm:$0xf]
      %v335 = vld [vmem:[%s1 + $0xc4] sm:$0xf]
      %v336 = vld [vmem:[%s1 + $0xc8] sm:$0xf]
      %v337 = vld [vmem:[%s1 + $0xcc] sm:$0xf]
      %v338 = vld [vmem:[%s1 + $0xd0] sm:$0xf]
      %v339 = vld [vmem:[%s1 + $0xd4] sm:$0xf]
      %v340 = vld [vmem:[%s1 + $0xd8] sm:$0xf]
      %v341 = vld [vmem:[%s1 + $0xdc] sm:$0xf]
      %v342 = vld [vmem:[%s1 + $0xe0] sm:$0xf]
      %v343 = vld [vmem:[%s1 + $0xe4] sm:$0xf]
      %v344 = vld [vmem:[%s1 + $0xe8] sm:$0xf]
      %v345 = vld [vmem:[%s1 + $0xec] sm:$0xf]
      %v346 = vld [vmem:[%s1 + $0xf0] sm:$0xf]
      %v347 = vld [vmem:[%s1 + $0xf4] sm:$0xf]
      %v348 = vld [vmem:[%s1 + $0xf8] sm:$0xf]
      %v349 = vld [vmem:[%s1 + $0xfc] sm:$0xf]
      %v350 = vld [vmem:[%s1 + $0x100] sm:$0xf]
      %v351 = vld [vmem:[%s1 + $0x104] sm:$0xf]
      %v352 = vld [vmem:[%s1 + $0x108] sm:$0xf]
      %v353 = vld [vmem:[%s1 + $0x10c] sm:$0xf]
      %v354 = vld [vmem:[%s1 + $0x110] sm:$0xf]
      %v355 = vld [vmem:[%s1 + $0x114] sm:$0xf]
      %v356 = vld [vmem:[%s1 + $0x118] sm:$0xf]
      %v357 = vld [vmem:[%s1 + $0x11c] sm:$0xf]
      %v358 = vld [vmem:[%s2] sm:$0x1]
      %v360 = vlaneseq
      %v361 = vshrl.u32 %v360, 7
      %v362 = vsub.s32 0, %v361
      %v363 = vrot.slane %v358, %v362
      %v389 = vunpack.c.l.b16 %v262
      %v390 = vunpack.c.h.b16 %v262
      %v391 = vunpack.c.l.b16 %v263
      %v392 = vunpack.c.h.b16 %v263
      %v393 = vunpack.c.l.b16 %v264
      %v394 = vunpack.c.l.b16 %v265
      %v395 = vunpack.c.h.b16 %v265
      %v396 = vunpack.c.l.b16 %v266
      %v397 = vunpack.c.h.b16 %v266
      %v398 = vunpack.c.l.b16 %v267
      %v399 = vunpack.c.l.b16 %v268
      %v400 = vunpack.c.h.b16 %v268
      %v401 = vunpack.c.l.b16 %v269
      %v402 = vunpack.c.h.b16 %v269
      %v403 = vunpack.c.l.b16 %v270
      %v404 = vunpack.c.l.b16 %v271
      %v405 = vunpack.c.h.b16 %v271
      %v406 = vunpack.c.l.b16 %v272
      %v407 = vunpack.c.h.b16 %v272
      %v408 = vunpack.c.l.b16 %v273
      %v409 = vunpack.c.l.b16 %v274
      %v410 = vunpack.c.h.b16 %v274
      %v411 = vunpack.c.l.b16 %v275
      %v412 = vunpack.c.h.b16 %v275
      %v413 = vunpack.c.l.b16 %v276
      %v414 = vunpack.c.l.b16 %v277
      %v415 = vunpack.c.h.b16 %v277
      %v416 = vunpack.c.l.b16 %v278
      %v417 = vunpack.c.h.b16 %v278
      %v418 = vunpack.c.l.b16 %v279
      %v419 = vunpack.c.l.b16 %v280
      %v420 = vunpack.c.h.b16 %v280
      %v421 = vunpack.c.l.b16 %v281
      %v422 = vunpack.c.h.b16 %v281
      %v423 = vunpack.c.l.b16 %v282
      %v424 = vunpack.c.l.b16 %v283
      %v425 = vunpack.c.h.b16 %v283
      %v426 = vunpack.c.l.b16 %v284
      %v427 = vunpack.c.h.b16 %v284
      %v428 = vunpack.c.l.b16 %v285
      %v429 = vpack.c.b16 %v394, %v389
      %v430 = vpack.c.b16 %v395, %v390
      %v431 = vpack.c.b16 %v396, %v391
      %v432 = vpack.c.b16 %v397, %v392
      %v433 = vpack.c.b16 %v398, %v393
      %v434 = vpack.c.b16 %v404, %v399
      %v435 = vpack.c.b16 %v405, %v400
      %v436 = vpack.c.b16 %v406, %v401
      %v437 = vpack.c.b16 %v407, %v402
      %v438 = vpack.c.b16 %v408, %v403
      %v439 = vpack.c.b16 %v414, %v409
      %v440 = vpack.c.b16 %v415, %v410
      %v441 = vpack.c.b16 %v416, %v411
      %v442 = vpack.c.b16 %v417, %v412
      %v443 = vpack.c.b16 %v418, %v413
      %v444 = vpack.c.b16 %v424, %v419
      %v445 = vpack.c.b16 %v425, %v420
      %v446 = vpack.c.b16 %v426, %v421
      %v447 = vpack.c.b16 %v427, %v422
      %v448 = vpack.c.b16 %v428, %v423
      %v537 = vunpack.c.l.b16 %v286
      %v538 = vunpack.c.l.b16 %v287
      %v539 = vunpack.c.l.b16 %v288
      %v540 = vunpack.c.l.b16 %v289
      %v541 = vunpack.c.l.b16 %v290
      %v542 = vunpack.c.l.b16 %v291
      %v543 = vunpack.c.l.b16 %v292
      %v544 = vunpack.c.l.b16 %v293
      %v545 = vunpack.c.l.b16 %v294
      %v546 = vunpack.c.l.b16 %v295
      %v547 = vunpack.c.l.b16 %v296
      %v548 = vunpack.c.l.b16 %v297
      %v549 = vunpack.c.l.b16 %v298
      %v550 = vunpack.c.l.b16 %v299
      %v551 = vunpack.c.l.b16 %v300
      %v552 = vunpack.c.l.b16 %v301
      %v553 = vunpack.c.l.b16 %v302
      %v554 = vunpack.c.l.b16 %v303
      %v555 = vunpack.c.l.b16 %v304
      %v556 = vunpack.c.l.b16 %v305
      %v557 = vunpack.c.l.b16 %v306
      %v558 = vunpack.c.l.b16 %v307
      %v559 = vunpack.c.l.b16 %v308
      %v560 = vunpack.c.l.b16 %v309
      %v561 = vunpack.c.l.b16 %v310
      %v562 = vunpack.c.l.b16 %v311
      %v563 = vunpack.c.l.b16 %v312
      %v564 = vunpack.c.l.b16 %v313
      %v565 = vunpack.c.l.b16 %v314
      %v566 = vunpack.c.l.b16 %v315
      %v567 = vunpack.c.l.b16 %v316
      %v568 = vunpack.c.l.b16 %v317
      %v569 = vunpack.c.l.b16 %v318
      %v570 = vunpack.c.l.b16 %v319
      %v571 = vunpack.c.l.b16 %v320
      %v572 = vunpack.c.l.b16 %v321
      %v573 = vunpack.c.l.b16 %v322
      %v574 = vunpack.c.l.b16 %v323
      %v575 = vunpack.c.l.b16 %v324
      %v576 = vunpack.c.l.b16 %v325
      %v577 = vunpack.c.l.b16 %v326
      %v578 = vunpack.c.l.b16 %v327
      %v579 = vunpack.c.l.b16 %v328
      %v580 = vunpack.c.l.b16 %v329
      %v581 = vunpack.c.l.b16 %v330
      %v582 = vunpack.c.l.b16 %v331
      %v583 = vunpack.c.l.b16 %v332
      %v584 = vunpack.c.l.b16 %v333
      %v585 = vunpack.c.l.b16 %v334
      %v586 = vunpack.c.l.b16 %v335
      %v587 = vunpack.c.l.b16 %v336
      %v588 = vunpack.c.l.b16 %v337
      %v589 = vunpack.c.l.b16 %v338
      %v590 = vunpack.c.l.b16 %v339
      %v591 = vunpack.c.l.b16 %v340
      %v592 = vunpack.c.l.b16 %v341
      %v593 = vunpack.c.l.b16 %v342
      %v594 = vunpack.c.l.b16 %v343
      %v595 = vunpack.c.l.b16 %v344
      %v596 = vunpack.c.l.b16 %v345
      %v597 = vunpack.c.l.b16 %v346
      %v598 = vunpack.c.l.b16 %v347
      %v599 = vunpack.c.l.b16 %v348
      %v600 = vunpack.c.l.b16 %v349
      %v601 = vunpack.c.l.b16 %v350
      %v602 = vunpack.c.l.b16 %v351
      %v603 = vunpack.c.l.b16 %v352
      %v604 = vunpack.c.l.b16 %v353
      %v605 = vunpack.c.l.b16 %v354
      %v606 = vunpack.c.l.b16 %v355
      %v607 = vunpack.c.l.b16 %v356
      %v608 = vunpack.c.l.b16 %v357
      %v609 = vpack.c.b16 %v538, %v537
      %v610 = vpack.c.b16 %v540, %v539
      %v611 = vpack.c.b16 %v542, %v541
      %v612 = vpack.c.b16 %v544, %v543
      %v613 = vpack.c.b16 %v546, %v545
      %v614 = vpack.c.b16 %v548, %v547
      %v615 = vpack.c.b16 %v550, %v549
      %v616 = vpack.c.b16 %v552, %v551
      %v617 = vpack.c.b16 %v554, %v553
      %v618 = vpack.c.b16 %v556, %v555
      %v619 = vpack.c.b16 %v558, %v557
      %v620 = vpack.c.b16 %v560, %v559
      %v621 = vpack.c.b16 %v562, %v561
      %v622 = vpack.c.b16 %v564, %v563
      %v623 = vpack.c.b16 %v566, %v565
      %v624 = vpack.c.b16 %v568, %v567
      %v625 = vpack.c.b16 %v570, %v569
      %v626 = vpack.c.b16 %v572, %v571
      %v627 = vpack.c.b16 %v574, %v573
      %v628 = vpack.c.b16 %v576, %v575
      %v629 = vpack.c.b16 %v578, %v577
      %v630 = vpack.c.b16 %v580, %v579
      %v631 = vpack.c.b16 %v582, %v581
      %v632 = vpack.c.b16 %v584, %v583
      %v633 = vpack.c.b16 %v586, %v585
      %v634 = vpack.c.b16 %v588, %v587
      %v635 = vpack.c.b16 %v590, %v589
      %v636 = vpack.c.b16 %v592, %v591
      %v637 = vpack.c.b16 %v594, %v593
      %v638 = vpack.c.b16 %v596, %v595
      %v639 = vpack.c.b16 %v598, %v597
      %v640 = vpack.c.b16 %v600, %v599
      %v641 = vpack.c.b16 %v602, %v601
      %v642 = vpack.c.b16 %v604, %v603
      %v643 = vpack.c.b16 %v606, %v605
      %v644 = vpack.c.b16 %v608, %v607
      %vm681 = vcmask 523264
      %v683 = vsel %vm681, %v433, 0
      %v686 = vsel %vm681, %v438, 0
      %v689 = vsel %vm681, %v443, 0
      %v692 = vsel %vm681, %v448, 0
      %694 = vmatprep.subr.bf16.mxu0 0
      %695 = vmatpush1.bf16.msra.mxu0 %v609
      %696 = vmatprep.subr.bf16.mxu0 0
      %697 = vmatpush1.bf16.msra.mxu0 %v610
      %698 = vmatprep.subr.bf16.mxu0 0
      %699 = vmatpush1.bf16.msra.mxu0 %v611
      %700 = vmatprep.subr.bf16.mxu0 0
      %701 = vmatpush1.bf16.msra.mxu0 %v612
      %702 = vmatprep.subr.bf16.mxu0 0
      %703 = vmatpush1.bf16.msra.mxu0 %v613
      %704 = vmatprep.subr.bf16.mxu0 0
      %705 = vmatpush1.bf16.msra.mxu0 %v614
      %706 = vmatprep.subr.bf16.mxu0 0
      %707 = vmatpush1.bf16.msra.mxu0 %v615
      %708 = vmatprep.subr.bf16.mxu0 0
      %709 = vmatpush1.bf16.msra.mxu0 %v616
      %710 = vmatprep.subr.bf16.mxu0 0
      %711 = vmatpush1.bf16.msra.mxu0 %v617
      %712 = vmatprep.subr.bf16.mxu0 0
      %713 = vmatpush1.bf16.msra.mxu0 %v618
      %714 = vmatprep.subr.bf16.mxu0 0
      %715 = vmatpush1.bf16.msra.mxu0 %v619
      %716 = vmatprep.subr.bf16.mxu0 0
      %717 = vmatpush1.bf16.msra.mxu0 %v620
      %718 = vmatprep.subr.bf16.mxu0 0
      %719 = vmatpush1.bf16.msra.mxu0 %v621
      %720 = vmatprep.subr.bf16.mxu0 0
      %721 = vmatpush1.bf16.msra.mxu0 %v622
      %722 = vmatprep.subr.bf16.mxu0 0
      %723 = vmatpush1.bf16.msra.mxu0 %v623
      %724 = vmatprep.subr.bf16.mxu0 0
      %725 = vmatpush1.bf16.msra.mxu0 %v624
      %726 = vmatprep.mubr.bf16.mxu0 %v430
      %727 = vmatmul.mubr.bf16.gmra.mrb[0].mxu0 %v429
      %v728 = vpop.f32.mrb[0].mxu0
      %v729 = vadd.f32 %v363, %v728
      %v730 = vpop.f32.mrb[0].mxu0
      %v731 = vpop.f32.mrb[0].mxu0
      %v732 = vadd.f32 %v363, %v731
      %v733 = vpop.f32.mrb[0].mxu0
      %734 = vmatprep.mubr.bf16.mxu0 %v435
      %735 = vmatmul.mubr.bf16.gmra.mrb[0].mxu0 %v434
      %v736 = vpop.f32.mrb[0].mxu0
      %v737 = vadd.f32 %v363, %v736
      %v738 = vpop.f32.mrb[0].mxu0
      %v739 = vpop.f32.mrb[0].mxu0
      %v740 = vadd.f32 %v363, %v739
      %v741 = vpop.f32.mrb[0].mxu0
      %742 = vmatprep.mubr.bf16.mxu0 %v440
      %743 = vmatmul.mubr.bf16.gmra.mrb[0].mxu0 %v439
      %v744 = vpop.f32.mrb[0].mxu0
      %v745 = vadd.f32 %v363, %v744
      %v746 = vpop.f32.mrb[0].mxu0
      %v747 = vpop.f32.mrb[0].mxu0
      %v748 = vadd.f32 %v363, %v747
      %v749 = vpop.f32.mrb[0].mxu0
      %750 = vmatprep.mubr.bf16.mxu0 %v445
      %751 = vmatmul.mubr.bf16.gmra.mrb[0].mxu0 %v444
      %v752 = vpop.f32.mrb[0].mxu0
      %v753 = vadd.f32 %v363, %v752
      %v754 = vpop.f32.mrb[0].mxu0
      %v755 = vpop.f32.mrb[0].mxu0
      %v756 = vadd.f32 %v363, %v755
      %v757 = vpop.f32.mrb[0].mxu0
      %758 = vdwg.mxu0
      %759 = vmatprep.subr.bf16.mxu0 0
      %760 = vmatpush1.bf16.msra.mxu0 %v625
      %761 = vmatprep.subr.bf16.mxu0 0
      %762 = vmatpush1.bf16.msra.mxu0 %v626
      %763 = vmatprep.subr.bf16.mxu0 0
      %764 = vmatpush1.bf16.msra.mxu0 %v627
      %765 = vmatprep.subr.bf16.mxu0 0
      %766 = vmatpush1.bf16.msra.mxu0 %v628
      %767 = vmatprep.subr.bf16.mxu0 0
      %768 = vmatpush1.bf16.msra.mxu0 %v629
      %769 = vmatprep.subr.bf16.mxu0 0
      %770 = vmatpush1.bf16.msra.mxu0 %v630
      %771 = vmatprep.subr.bf16.mxu0 0
      %772 = vmatpush1.bf16.msra.mxu0 %v631
      %773 = vmatprep.subr.bf16.mxu0 0
      %774 = vmatpush1.bf16.msra.mxu0 %v632
      %775 = vmatprep.subr.bf16.mxu0 0
      %776 = vmatpush1.bf16.msra.mxu0 %v633
      %777 = vmatprep.subr.bf16.mxu0 0
      %778 = vmatpush1.bf16.msra.mxu0 %v634
      %779 = vmatprep.subr.bf16.mxu0 0
      %780 = vmatpush1.bf16.msra.mxu0 %v635
      %781 = vmatprep.subr.bf16.mxu0 0
      %782 = vmatpush1.bf16.msra.mxu0 %v636
      %783 = vmatprep.subr.bf16.mxu0 0
      %784 = vmatpush1.bf16.msra.mxu0 %v637
      %785 = vmatprep.subr.bf16.mxu0 0
      %786 = vmatpush1.bf16.msra.mxu0 %v638
      %787 = vmatprep.subr.bf16.mxu0 0
      %788 = vmatpush1.bf16.msra.mxu0 %v639
      %789 = vmatprep.subr.bf16.mxu0 0
      %790 = vmatpush1.bf16.msra.mxu0 %v640
      %791 = vmatprep.mubr.bf16.mxu0 %v432
      %792 = vmatmul.mubr.bf16.gmra.mrb[0].mxu0 %v431
      %v793 = vpop.f32.mrb[0].mxu0
      %v794 = vadd.f32 %v729, %v793
      %v795 = vpop.f32.mrb[0].mxu0
      %v796 = vpop.f32.mrb[0].mxu0
      %v797 = vadd.f32 %v732, %v796
      %v798 = vpop.f32.mrb[0].mxu0
      %799 = vmatprep.mubr.bf16.mxu0 %v437
      %800 = vmatmul.mubr.bf16.gmra.mrb[0].mxu0 %v436
      %v801 = vpop.f32.mrb[0].mxu0
      %v802 = vadd.f32 %v737, %v801
      %v803 = vpop.f32.mrb[0].mxu0
      %v804 = vpop.f32.mrb[0].mxu0
      %v805 = vadd.f32 %v740, %v804
      %v806 = vpop.f32.mrb[0].mxu0
      %807 = vmatprep.mubr.bf16.mxu0 %v442
      %808 = vmatmul.mubr.bf16.gmra.mrb[0].mxu0 %v441
      %v809 = vpop.f32.mrb[0].mxu0
      %v810 = vadd.f32 %v745, %v809
      %v811 = vpop.f32.mrb[0].mxu0
      %v812 = vpop.f32.mrb[0].mxu0
      %v813 = vadd.f32 %v748, %v812
      %v814 = vpop.f32.mrb[0].mxu0
      %815 = vmatprep.mubr.bf16.mxu0 %v447
      %816 = vmatmul.mubr.bf16.gmra.mrb[0].mxu0 %v446
      %v817 = vpop.f32.mrb[0].mxu0
      %v818 = vadd.f32 %v753, %v817
      %v819 = vpop.f32.mrb[0].mxu0
      %v820 = vpop.f32.mrb[0].mxu0
      %v821 = vadd.f32 %v756, %v820
      %v822 = vpop.f32.mrb[0].mxu0
      %823 = vdwg.mxu0
      %824 = vmatprep.subr.bf16.mxu0 0
      %825 = vmatpush1.bf16.msra.mxu0 %v641
      %826 = vmatprep.subr.bf16.mxu0 0
      %827 = vmatpush1.bf16.msra.mxu0 %v642
      %828 = vmatprep.subr.bf16.mxu0 0
      %829 = vmatpush1.bf16.msra.mxu0 %v643
      %830 = vmatprep.subr.bf16.mxu0 0
      %831 = vmatpush1.bf16.msra.mxu0 %v644
      %832 = vmatprep.subr.bf16.mxu0 0
      %833 = vmatpush1.bf16.msra.mxu0 0
      %834 = vmatprep.subr.bf16.mxu0 0
      %835 = vmatpush1.bf16.msra.mxu0 0
      %836 = vmatprep.subr.bf16.mxu0 0
      %837 = vmatpush1.bf16.msra.mxu0 0
      %838 = vmatprep.subr.bf16.mxu0 0
      %839 = vmatpush1.bf16.msra.mxu0 0
      %840 = vmatprep.subr.bf16.mxu0 0
      %841 = vmatpush1.bf16.msra.mxu0 0
      %842 = vmatprep.subr.bf16.mxu0 0
      %843 = vmatpush1.bf16.msra.mxu0 0
      %844 = vmatprep.subr.bf16.mxu0 0
      %845 = vmatpush1.bf16.msra.mxu0 0
      %846 = vmatprep.subr.bf16.mxu0 0
      %847 = vmatpush1.bf16.msra.mxu0 0
      %848 = vmatprep.subr.bf16.mxu0 0
      %849 = vmatpush1.bf16.msra.mxu0 0
      %850 = vmatprep.subr.bf16.mxu0 0
      %851 = vmatpush1.bf16.msra.mxu0 0
      %852 = vmatprep.subr.bf16.mxu0 0
      %853 = vmatpush1.bf16.msra.mxu0 0
      %854 = vmatprep.subr.bf16.mxu0 0
      %855 = vmatpush1.bf16.msra.mxu0 0
      %856 = vmatprep.mubr.bf16.mxu0 0
      %857 = vmatmul.mubr.bf16.gmra.mrb[0].mxu0 %v683
      %v858 = vpop.f32.mrb[0].mxu0
      %v859 = vadd.f32 %v794, %v858
      %v860 = vpop.f32.mrb[0].mxu0
      %v861 = vpop.f32.mrb[0].mxu0
      %v862 = vadd.f32 %v797, %v861
      %v863 = vpop.f32.mrb[0].mxu0
      %864 = vmatprep.mubr.bf16.mxu0 0
      %865 = vmatmul.mubr.bf16.gmra.mrb[0].mxu0 %v686
      %v866 = vpop.f32.mrb[0].mxu0
      %v867 = vadd.f32 %v802, %v866
      %v868 = vpop.f32.mrb[0].mxu0
      %v869 = vpop.f32.mrb[0].mxu0
      %v870 = vadd.f32 %v805, %v869
      %v871 = vpop.f32.mrb[0].mxu0
      %872 = vmatprep.mubr.bf16.mxu0 0
      %873 = vmatmul.mubr.bf16.gmra.mrb[0].mxu0 %v689
      %v874 = vpop.f32.mrb[0].mxu0
      %v875 = vadd.f32 %v810, %v874
      %v876 = vpop.f32.mrb[0].mxu0
      %v877 = vpop.f32.mrb[0].mxu0
      %v878 = vadd.f32 %v813, %v877
      %v879 = vpop.f32.mrb[0].mxu0
      %880 = vmatprep.mubr.bf16.mxu0 0
      %881 = vmatmul.mubr.bf16.gmra.mrb[0].mxu0 %v692
      %v882 = vpop.f32.mrb[0].mxu0
      %v883 = vadd.f32 %v818, %v882
      %v884 = vpop.f32.mrb[0].mxu0
      %v885 = vpop.f32.mrb[0].mxu0
      %v886 = vadd.f32 %v821, %v885
      %v887 = vpop.f32.mrb[0].mxu0
      %888 = vdwg.mxu0
      %v889 = vmax.f32 %v859, 0.0
      %v890 = vmax.f32 %v862, 0.0
      %v891 = vmax.f32 %v867, 0.0
      %v892 = vmax.f32 %v870, 0.0
      %v893 = vmax.f32 %v875, 0.0
      %v894 = vmax.f32 %v878, 0.0
      %v895 = vmax.f32 %v883, 0.0
      %v896 = vmax.f32 %v886, 0.0
      %v897 = vpack.c.bf16 %v890, %v889
      %v898 = vpack.c.bf16 %v892, %v891
      %v899 = vpack.c.bf16 %v894, %v893
      %v900 = vpack.c.bf16 %v896, %v895
      %v905 = vunpack.c.l.b16 %v897
      %v906 = vunpack.c.h.b16 %v897
      %v907 = vunpack.c.l.b16 %v898
      %v908 = vunpack.c.h.b16 %v898
      %v909 = vunpack.c.l.b16 %v899
      %v910 = vunpack.c.h.b16 %v899
      %v911 = vunpack.c.l.b16 %v900
      %v912 = vunpack.c.h.b16 %v900
      %v913 = vpack.c.b16 %v905, %v905
      %v914 = vpack.c.b16 %v906, %v906
      %v915 = vpack.c.b16 %v907, %v907
      %v916 = vpack.c.b16 %v908, %v908
      %v917 = vpack.c.b16 %v909, %v909
      %v918 = vpack.c.b16 %v910, %v910
      %v919 = vpack.c.b16 %v911, %v911
      %v920 = vpack.c.b16 %v912, %v912
      %929 = vst [vmem:[%s251] sm:$0xf] %v913
      %930 = vst [vmem:[%s251 + $0x4] sm:$0xf] %v914
      %931 = vst [vmem:[%s251 + $0x8] sm:$0xf] %v915
      %932 = vst [vmem:[%s251 + $0xc] sm:$0xf] %v916
      %933 = vst [vmem:[%s251 + $0x10] sm:$0xf] %v917
      %934 = vst [vmem:[%s251 + $0x14] sm:$0xf] %v918
      %935 = vst [vmem:[%s251 + $0x18] sm:$0xf] %v919
      %936 = vst [vmem:[%s251 + $0x1c] sm:$0xf] %v920
      %937 = vxpose.xlu0.b32.start [1/16] %v889, 128
      %938 = vxpose.xlu0.b32.cont [2/16] %v890, 128
      %939 = vxpose.xlu0.b32.cont [3/16] %v891, 128
      %940 = vxpose.xlu0.b32.cont [4/16] %v892, 128
      %941 = vxpose.xlu0.b32.cont [5/16] %v893, 128
      %942 = vxpose.xlu0.b32.cont [6/16] %v894, 128
      %943 = vxpose.xlu0.b32.cont [7/16] %v895, 128
      %944 = vxpose.xlu0.b32.cont [8/16] %v896, 128
      %945 = vxpose.xlu0.b32.cont [9/16] 0.0, 128
      %946 = vxpose.xlu0.b32.cont [10/16] 0.0, 128
      %947 = vxpose.xlu0.b32.cont [11/16] 0.0, 128
      %948 = vxpose.xlu0.b32.cont [12/16] 0.0, 128
      %949 = vxpose.xlu0.b32.cont [13/16] 0.0, 128
      %950 = vxpose.xlu0.b32.cont [14/16] 0.0, 128
      %951 = vxpose.xlu0.b32.cont [15/16] 0.0, 128
      %952 = vxpose.xlu0.b32.end [16/16] 0.0, 128
      %v953 = vpop.trf.xlu0
      %v954 = vpop.trf.xlu0
      %v955 = vpop.trf.xlu0
      %v956 = vpop.trf.xlu0
      %v957 = vpop.trf.xlu0
      %v958 = vpop.trf.xlu0
      %v959 = vpop.trf.xlu0
      %v960 = vpop.trf.xlu0
      %v961 = vpop.trf.xlu0
      %v962 = vpop.trf.xlu0
      %v963 = vpop.trf.xlu0
      %v964 = vpop.trf.xlu0
      %v965 = vpop.trf.xlu0
      %v966 = vpop.trf.xlu0
      %v967 = vpop.trf.xlu0
      %v968 = vpop.trf.xlu0
      %969 = vst.msk [vmem:[%s260] sm:$0xff] %vm681, %v953
      %970 = vst.msk [vmem:[%s260 + $0x8] sm:$0xff] %vm681, %v954
      %971 = vst.msk [vmem:[%s260 + $0x10] sm:$0xff] %vm681, %v955
      %972 = vst.msk [vmem:[%s260 + $0x18] sm:$0xff] %vm681, %v956
      %973 = vst.msk [vmem:[%s260 + $0x20] sm:$0xff] %vm681, %v957
      %974 = vst.msk [vmem:[%s260 + $0x28] sm:$0xff] %vm681, %v958
      %975 = vst.msk [vmem:[%s260 + $0x30] sm:$0xff] %vm681, %v959
      %976 = vst.msk [vmem:[%s260 + $0x38] sm:$0xff] %vm681, %v960
      %977 = vst.msk [vmem:[%s260 + $0x40] sm:$0xff] %vm681, %v961
      %978 = vst.msk [vmem:[%s260 + $0x48] sm:$0xff] %vm681, %v962
      %979 = vst.msk [vmem:[%s260 + $0x50] sm:$0xff] %vm681, %v963
      %980 = vst.msk [vmem:[%s260 + $0x58] sm:$0xff] %vm681, %v964
      %981 = vst.msk [vmem:[%s260 + $0x60] sm:$0xff] %vm681, %v965
      %982 = vst.msk [vmem:[%s260 + $0x68] sm:$0xff] %vm681, %v966
      %983 = vst.msk [vmem:[%s260 + $0x70] sm:$0xff] %vm681, %v967
      %984 = vst.msk [vmem:[%s260 + $0x78] sm:$0xff] %vm681, %v968
      %s985 = smul.u32 8, %s21
      %p986 = scmp.lt.s32.totalorder %s20, 1
      %s987 = scalar_select %p986, %s20, 1
      %p988 = scmp.lt.s32.totalorder %s985, 7
      %s989 = scalar_select %p988, %s985, 7
      %s990 = smul.addr %s987, 8
      %s991 = sadd.s32 %s989, %s990
      %s992 = smul.addr %s991, 4
      %s993 = scalar_lea.vmem %s3, %s992
      %p994 = scmp.lt.s32.totalorder %s20, 1
      %s995 = scalar_select %p994, %s20, 1
      %p996 = scmp.lt.s32.totalorder %s21, 0
      %s997 = scalar_select %p996, %s21, 0
      %s998 = smul.addr %s995, 16
      %s999 = sadd.s32 %s997, %s998
      %s1000 = smul.addr %s999, 8
      %s1001 = scalar_lea.vmem %s4, %s1000
      // Predicated region
      $region33: #{forward.6} parent=31 // pred_check
        %p1002 = pneg %p118
      $region34: #{forward.6} parent=31 // pred_check_branch
        %1004 = sbr.rel (%p1002) target = $region36
      $region35: #{forward.6} parent=31 // pred_region
        %s1005 = smul.u32 8, %s21
      $region36: #{forward.6} parent=31 // pred_fallthru
        _
      // Predicated region
      $region37: #{forward.6} parent=31 // pred_check
        %p1006 = pneg %p146
      $region38: #{forward.6} parent=31 // pred_check_branch
        %1008 = sbr.rel (%p1006) target = $region40
      $region39: #{forward.6} parent=31 // pred_region
        _
      $region40: #{forward.6} parent=31 // pred_fallthru
        _
    $region32: #{forward.6} parent=5 // pred_fallthru
      _
    %p1009 = scmp.le.s32.totalorder 2, %s11
    // Predicated region
    $region41: #{forward.6} parent=5 // pred_check
      %p1010 = pneg %p1009
    $region42: #{forward.6} parent=5 // pred_check_branch
      %1012 = sbr.rel (%p1010) target = $region44
    $region43: #{forward.6} parent=5 // pred_region
      %s1013 = ssub.s32 %s11, 2
      // Predicated region
      $region45: #{forward.6} parent=43 // pred_check
        %p1014 = pneg %p124
      $region46: #{forward.6} parent=43 // pred_check_branch
        %1016 = sbr.rel (%p1014) target = $region48
      $region47: #{forward.6} parent=43 // pred_region
        %s1017 = smul.u32 8, %s23
        %p1018 = scmp.lt.s32.totalorder %s22, 1
        %s1019 = scalar_select %p1018, %s22, 1
        %p1020 = scmp.lt.s32.totalorder %s1017, 7
        %s1021 = scalar_select %p1020, %s1017, 7
        %s1022 = smul.addr %s1019, 8
        %s1023 = sadd.s32 %s1021, %s1022
        %s1024 = smul.addr %s1023, 4
        %s1025 = scalar_lea.vmem %s3, %s1024
      $region48: #{forward.6} parent=43 // pred_fallthru
        _
      // Predicated region
      $region49: #{forward.6} parent=43 // pred_check
        %p1026 = pneg %p152
      $region50: #{forward.6} parent=43 // pred_check_branch
        %1028 = sbr.rel (%p1026) target = $region52
      $region51: #{forward.6} parent=43 // pred_region
        %p1029 = scmp.lt.s32.totalorder %s22, 1
        %s1030 = scalar_select %p1029, %s22, 1
        %p1031 = scmp.lt.s32.totalorder %s23, 0
        %s1032 = scalar_select %p1031, %s23, 0
        %s1033 = smul.addr %s1030, 16
        %s1034 = sadd.s32 %s1032, %s1033
        %s1035 = smul.addr %s1034, 8
        %s1036 = scalar_lea.vmem %s4, %s1035
      $region52: #{forward.6} parent=43 // pred_fallthru
        _
    $region44: #{forward.6} parent=5 // pred_fallthru
      _
  $region6: #{forward.6} parent=0 // loop_footer
    %s15 = sadd.s32 1, %s11
  $region7: #{forward.6} parent=0 // loop_footer_branch
    %10 = sbr.rel target = $region3
  $region8: #{forward.6} parent=0 // loop_exit
    _

// kernel: forward.7
$region0: #{forward.7}
  #allocation0 [shape = 'u32[]', space=smem, size = 0x4, offset = 0x4, fixed_abs, tag = 'smem constant byte address 0x4 - core index']
  #allocation1 [shape = 'u32[144,128]{1,0:T(1,128)}', space=vmem, size = 0x12000, scoped, tag = 'internal scratch']
  %s0 = inlined_call_operand.vmem [shape: bf16[2,16,1152], index: 0, kind: input, shape index: {}]
  %s1 = inlined_call_operand.vmem [shape: bf16[1152,256], index: 1, kind: input, shape index: {}]
  %s2 = inlined_call_operand.vmem [shape: f32[1,256], index: 2, kind: input, shape index: {}]
  %s3 = inlined_call_operand.vmem [shape: bf16[2,16,256], index: 3, kind: output, shape index: {0}]
  %s4 = inlined_call_operand.vmem [shape: f32[2,256,16], index: 4, kind: output, shape index: {1}]
  %5 = xla_tuple %s3, %s4
  %s6 = sld [smem:[#allocation0]]
  $region53: #{forward.7} parent=0
    _
  %s8 = ssub.s32 1, %s6
  %s9 = scalar_select 0, %s8, %s6
  loop: start=0, step=1, limit=4
  $region2: #{forward.7} parent=0 // loop_pre_header
    _
  $region3: #{forward.7} parent=0 // loop_header
    %s11 = sphi 0, %s15
    %p12 = scmp.ge.s32.totalorder %s11, 4
    %s18 = sphi 0, %s30
    %s19 = sphi 0, %s26
    %s20 = sphi 0, %s18
    %s21 = sphi 0, %s19
    %s22 = sphi 0, %s20
    %s23 = sphi 0, %s21
    %s35 = sphi 0, %s37
    %s38 = sphi 0, %s35
    %s39 = sphi 0, %s38
    %s55 = sphi 0, %s39
    %s59 = sphi 0, %s59
    %s61 = sphi 0, %s59
    %s62 = sphi 0, %s61
    %s76 = sphi 0, %s62
    %s80 = sphi 0, %s80
    %s82 = sphi 0, %s80
    %s83 = sphi 0, %s82
    %s97 = sphi 0, %s83
    %s105 = sphi 0, %s107
    %s108 = sphi 0, %s105
    %s109 = sphi 0, %s108
    %s125 = sphi 0, %s109
    %s133 = sphi 0, %s135
    %s136 = sphi 0, %s133
    %s137 = sphi 0, %s136
    %s153 = sphi 0, %s137
  $region4: #{forward.7} parent=0 // loop_header_branch
    %14 = sbr.rel (%p12) target = $region8
  $region5: #{forward.7} parent=0 // loop_body
    %s16 = ssub.s32 %s11, 1
    %s17 = ssub.s32 %s11, 2
    %s24 = sadd.s32 1, %s19
    %p25 = scmp.ge.s32.totalorder %s24, 1
    %s26 = scalar_select %p25, 0, %s24
    %s27 = sadd.s32 1, %s18
    %s28 = scalar_select %p25, %s27, %s18
    %p29 = scmp.ge.s32.totalorder %s28, 2
    %s30 = scalar_select %p29, 0, %s28
    %s31 = ssub.s32 %s18, %s30
    %s32 = ssub.s32 %s19, %s26
    %s33 = sor.u32 %s31, %s32
    %p34 = scmp.eq.s32.totalorder %s33, 0
    %s36 = sadd.s32 %s35, 1
    %s37 = scalar_select %p34, %s35, %s36
    %p40 = pneg %p34
    %p41 = scmp.eq.s32.totalorder %s11, 1
    %p42 = por %p40, %p41
    %p43 = scmp.ne.s32.totalorder %s35, %s38
    %p44 = scmp.eq.s32.totalorder %s11, 0
    %p45 = por %p43, %p44
    %p46 = scmp.ne.s32.totalorder %s35, %s38
    %p47 = scmp.eq.s32.totalorder %s16, 1
    %p48 = por %p46, %p47
    %p49 = scmp.ne.s32.totalorder %s38, %s39
    %p50 = scmp.eq.s32.totalorder %s16, 0
    %p51 = por %p49, %p50
    %p52 = scmp.ne.s32.totalorder %s38, %s39
    %p53 = scmp.eq.s32.totalorder %s17, 1
    %p54 = por %p52, %p53
    %p56 = scmp.ne.s32.totalorder %s39, %s55
    %p57 = scmp.eq.s32.totalorder %s17, 0
    %p58 = por %p56, %p57
    %s60 = sadd.s32 %s59, 1
    %p63 = scmp.eq.s32.totalorder %s11, 1
    %p64 = scmp.ne.s32.totalorder %s59, %s61
    %p65 = scmp.eq.s32.totalorder %s11, 0
    %p66 = por %p64, %p65
    %p67 = scmp.ne.s32.totalorder %s59, %s61
    %p68 = scmp.eq.s32.totalorder %s16, 1
    %p69 = por %p67, %p68
    %p70 = scmp.ne.s32.totalorder %s61, %s62
    %p71 = scmp.eq.s32.totalorder %s16, 0
    %p72 = por %p70, %p71
    %p73 = scmp.ne.s32.totalorder %s61, %s62
    %p74 = scmp.eq.s32.totalorder %s17, 1
    %p75 = por %p73, %p74
    %p77 = scmp.ne.s32.totalorder %s62, %s76
    %p78 = scmp.eq.s32.totalorder %s17, 0
    %p79 = por %p77, %p78
    %s81 = sadd.s32 %s80, 1
    %p84 = scmp.eq.s32.totalorder %s11, 1
    %p85 = scmp.ne.s32.totalorder %s80, %s82
    %p86 = scmp.eq.s32.totalorder %s11, 0
    %p87 = por %p85, %p86
    %p88 = scmp.ne.s32.totalorder %s80, %s82
    %p89 = scmp.eq.s32.totalorder %s16, 1
    %p90 = por %p88, %p89
    %p91 = scmp.ne.s32.totalorder %s82, %s83
    %p92 = scmp.eq.s32.totalorder %s16, 0
    %p93 = por %p91, %p92
    %p94 = scmp.ne.s32.totalorder %s82, %s83
    %p95 = scmp.eq.s32.totalorder %s17, 1
    %p96 = por %p94, %p95
    %p98 = scmp.ne.s32.totalorder %s83, %s97
    %p99 = scmp.eq.s32.totalorder %s17, 0
    %p100 = por %p98, %p99
    %s101 = ssub.s32 %s18, %s30
    %s102 = ssub.s32 %s19, %s26
    %s103 = sor.u32 %s101, %s102
    %p104 = scmp.eq.s32.totalorder %s103, 0
    %s106 = sadd.s32 %s105, 1
    %s107 = scalar_select %p104, %s105, %s106
    %p110 = pneg %p104
    %p111 = scmp.eq.s32.totalorder %s11, 1
    %p112 = por %p110, %p111
    %p113 = scmp.ne.s32.totalorder %s105, %s108
    %p114 = scmp.eq.s32.totalorder %s11, 0
    %p115 = por %p113, %p114
    %p116 = scmp.ne.s32.totalorder %s105, %s108
    %p117 = scmp.eq.s32.totalorder %s16, 1
    %p118 = por %p116, %p117
    %p119 = scmp.ne.s32.totalorder %s108, %s109
    %p120 = scmp.eq.s32.totalorder %s16, 0
    %p121 = por %p119, %p120
    %p122 = scmp.ne.s32.totalorder %s108, %s109
    %p123 = scmp.eq.s32.totalorder %s17, 1
    %p124 = por %p122, %p123
    %p126 = scmp.ne.s32.totalorder %s109, %s125
    %p127 = scmp.eq.s32.totalorder %s17, 0
    %p128 = por %p126, %p127
    %s129 = ssub.s32 %s18, %s30
    %s130 = ssub.s32 %s19, %s26
    %s131 = sor.u32 %s129, %s130
    %p132 = scmp.eq.s32.totalorder %s131, 0
    %s134 = sadd.s32 %s133, 1
    %s135 = scalar_select %p132, %s133, %s134
    %p138 = pneg %p132
    %p139 = scmp.eq.s32.totalorder %s11, 1
    %p140 = por %p138, %p139
    %p141 = scmp.ne.s32.totalorder %s133, %s136
    %p142 = scmp.eq.s32.totalorder %s11, 0
    %p143 = por %p141, %p142
    %p144 = scmp.ne.s32.totalorder %s133, %s136
    %p145 = scmp.eq.s32.totalorder %s16, 1
    %p146 = por %p144, %p145
    %p147 = scmp.ne.s32.totalorder %s136, %s137
    %p148 = scmp.eq.s32.totalorder %s16, 0
    %p149 = por %p147, %p148
    %p150 = scmp.ne.s32.totalorder %s136, %s137
    %p151 = scmp.eq.s32.totalorder %s17, 1
    %p152 = por %p150, %p151
    %p154 = scmp.ne.s32.totalorder %s137, %s153
    %p155 = scmp.eq.s32.totalorder %s17, 0
    %p156 = por %p154, %p155
    %p157 = scmp.le.s32.totalorder 1, %s11
    %p158 = scmp.lt.s32.totalorder %s11, 3
    %p159 = pnand %p157, %p158
    %p160 = pneg %p159
    // Predicated region
    $region9: #{forward.7} parent=5 // pred_check
      _
    $region10: #{forward.7} parent=5 // pred_check_branch
      %162 = sbr.rel (%p159) target = $region12
    $region11: #{forward.7} parent=5 // pred_region
      %s163 = ssub.s32 %s11, 1
      // Predicated region
      $region13: #{forward.7} parent=11 // pred_check
        %p164 = pneg %p72
      $region14: #{forward.7} parent=11 // pred_check_branch
        %166 = sbr.rel (%p164) target = $region16
      $region15: #{forward.7} parent=11 // pred_region
        _
      $region16: #{forward.7} parent=11 // pred_fallthru
        _
      // Predicated region
      $region17: #{forward.7} parent=11 // pred_check
        %p167 = pneg %p93
      $region18: #{forward.7} parent=11 // pred_check_branch
        %169 = sbr.rel (%p167) target = $region20
      $region19: #{forward.7} parent=11 // pred_region
        _
      $region20: #{forward.7} parent=11 // pred_fallthru
        _
    $region12: #{forward.7} parent=5 // pred_fallthru
      _
    %p170 = scmp.lt.s32.totalorder %s11, 2
    // Predicated region
    $region21: #{forward.7} parent=5 // pred_check
      %p171 = pneg %p170
    $region22: #{forward.7} parent=5 // pred_check_branch
      %173 = sbr.rel (%p171) target = $region24
    $region23: #{forward.7} parent=5 // pred_region
      // Predicated region
      $region25: #{forward.7} parent=23 // pred_check
        %p174 = pneg %p45
      $region26: #{forward.7} parent=23 // pred_check_branch
        %176 = sbr.rel (%p174) target = $region28
      $region27: #{forward.7} parent=23 // pred_region
        %s177 = smul.u32 2, %s19
        %p178 = scmp.lt.s32.totalorder %s18, 1
        %s179 = scalar_select %p178, %s18, 1
        %p180 = scmp.lt.s32.totalorder %s177, 1
        %s181 = scalar_select %p180, %s177, 1
        %s182 = smul.addr %s181, 9
        %s183 = smul.addr %s179, 18
        %s184 = sadd.s32 %s182, %s183
        %s185 = smul.addr %s184, 4
        %s186 = scalar_lea.vmem %s0, %s185
        %s187 = smul.u32 2, %s19
      $region28: #{forward.7} parent=23 // pred_fallthru
        _
    $region24: #{forward.7} parent=5 // pred_fallthru
      _
    %p188 = scmp.le.s32.totalorder 1, %s11
    %p189 = scmp.lt.s32.totalorder %s11, 3
    %p190 = pnand %p188, %p189
    %p191 = pneg %p190
    // Predicated region
    $region29: #{forward.7} parent=5 // pred_check
      _
    $region30: #{forward.7} parent=5 // pred_check_branch
      %193 = sbr.rel (%p190) target = $region32
    $region31: #{forward.7} parent=5 // pred_region
      %s194 = ssub.s32 %s11, 1
      %s195 = smul.u32 2, %s21
      %p196 = scmp.lt.s32.totalorder %s20, 1
      %s197 = scalar_select %p196, %s20, 1
      %p198 = scmp.lt.s32.totalorder %s195, 1
      %s199 = scalar_select %p198, %s195, 1
      %s200 = smul.addr %s199, 9
      %s201 = smul.addr %s197, 18
      %s202 = sadd.s32 %s200, %s201
      %s203 = smul.addr %s202, 4
      %s204 = scalar_lea.vmem %s0, %s203
      %p205 = pneg %p51
      %p206 = pneg %p48
      %p207 = pneg %p72
      %p208 = pneg %p69
      %p209 = pneg %p93
      %p210 = pneg %p90
      %p211 = pneg %p121
      %p212 = pneg %p118
      %s213 = smul.u32 2, %s21
      %p214 = scmp.lt.s32.totalorder %s20, 1
      %s215 = scalar_select %p214, %s20, 1
      %p216 = scmp.lt.s32.totalorder %s213, 1
      %s217 = scalar_select %p216, %s213, 1
      %s218 = smul.addr %s217, 2
      %s219 = smul.addr %s215, 4
      %s220 = sadd.s32 %s218, %s219
      %s221 = smul.addr %s220, 4
      %s222 = scalar_lea.vmem %s3, %s221
      %p223 = pneg %p149
      %p224 = pneg %p146
      %p225 = scmp.lt.s32.totalorder %s20, 1
      %s226 = scalar_select %p225, %s20, 1
      %p227 = scmp.lt.s32.totalorder %s21, 0
      %s228 = scalar_select %p227, %s21, 0
      %s229 = smul.addr %s226, 32
      %s230 = sadd.s32 %s228, %s229
      %s231 = smul.addr %s230, 8
      %s232 = scalar_lea.vmem %s4, %s231
      %s233 = smul.u32 2, %s21
      %p234 = scmp.lt.s32.totalorder %s20, 1
      %s235 = scalar_select %p234, %s20, 1
      %p236 = scmp.lt.s32.totalorder %s233, 1
      %s237 = scalar_select %p236, %s233, 1
      %s238 = smul.addr %s237, 9
      %s239 = smul.addr %s235, 18
      %s240 = sadd.s32 %s238, %s239
      %s241 = smul.addr %s240, 4
      %s242 = scalar_lea.vmem %s0, %s241
      %s243 = smul.u32 2, %s21
      %s244 = smul.u32 2, %s21
      %p245 = scmp.lt.s32.totalorder %s20, 1
      %s246 = scalar_select %p245, %s20, 1
      %p247 = scmp.lt.s32.totalorder %s244, 1
      %s248 = scalar_select %p247, %s244, 1
      %s249 = smul.addr %s248, 2
      %s250 = smul.addr %s246, 4
      %s251 = sadd.s32 %s249, %s250
      %s252 = smul.addr %s251, 4
      %s253 = scalar_lea.vmem %s3, %s252
      %s254 = smul.u32 2, %s21
      %p255 = scmp.lt.s32.totalorder %s20, 1
      %s256 = scalar_select %p255, %s20, 1
      %p257 = scmp.lt.s32.totalorder %s21, 0
      %s258 = scalar_select %p257, %s21, 0
      %s259 = smul.addr %s256, 32
      %s260 = sadd.s32 %s258, %s259
      %s261 = smul.addr %s260, 8
      %s262 = scalar_lea.vmem %s4, %s261
      %v264 = vld [vmem:[%s242] sm:$0xff]
      %v265 = vld [vmem:[%s242 + $0x8] sm:$0xff]
      %v266 = vld [vmem:[%s242 + $0x10] sm:$0xff]
      %v267 = vld [vmem:[%s242 + $0x18] sm:$0xff]
      %v268 = vld [vmem:[%s242 + $0x20] sm:$0xf]
      %v269 = vld [vmem:[%s242 + $0x24] sm:$0xff]
      %v270 = vld [vmem:[%s242 + $0x2c] sm:$0xff]
      %v271 = vld [vmem:[%s242 + $0x34] sm:$0xff]
      %v272 = vld [vmem:[%s242 + $0x3c] sm:$0xff]
      %v273 = vld [vmem:[%s242 + $0x44] sm:$0xf]
      %v274 = vld [vmem:[%s1] sm:$0xff]
      %v275 = vld [vmem:[%s1 + $0x8] sm:$0xff]
      %v276 = vld [vmem:[%s1 + $0x10] sm:$0xff]
      %v277 = vld [vmem:[%s1 + $0x18] sm:$0xff]
      %v278 = vld [vmem:[%s1 + $0x20] sm:$0xff]
      %v279 = vld [vmem:[%s1 + $0x28] sm:$0xff]
      %v280 = vld [vmem:[%s1 + $0x30] sm:$0xff]
      %v281 = vld [vmem:[%s1 + $0x38] sm:$0xff]
      %v282 = vld [vmem:[%s1 + $0x40] sm:$0xff]
      %v283 = vld [vmem:[%s1 + $0x48] sm:$0xff]
      %v284 = vld [vmem:[%s1 + $0x50] sm:$0xff]
      %v285 = vld [vmem:[%s1 + $0x58] sm:$0xff]
      %v286 = vld [vmem:[%s1 + $0x60] sm:$0xff]
      %v287 = vld [vmem:[%s1 + $0x68] sm:$0xff]
      %v288 = vld [vmem:[%s1 + $0x70] sm:$0xff]
      %v289 = vld [vmem:[%s1 + $0x78] sm:$0xff]
      %v290 = vld [vmem:[%s1 + $0x80] sm:$0xff]
      %v291 = vld [vmem:[%s1 + $0x88] sm:$0xff]
      %v292 = vld [vmem:[%s1 + $0x90] sm:$0xff]
      %v293 = vld [vmem:[%s1 + $0x98] sm:$0xff]
      %v294 = vld [vmem:[%s1 + $0xa0] sm:$0xff]
      %v295 = vld [vmem:[%s1 + $0xa8] sm:$0xff]
      %v296 = vld [vmem:[%s1 + $0xb0] sm:$0xff]
      %v297 = vld [vmem:[%s1 + $0xb8] sm:$0xff]
      %v298 = vld [vmem:[%s1 + $0xc0] sm:$0xff]
      %v299 = vld [vmem:[%s1 + $0xc8] sm:$0xff]
      %v300 = vld [vmem:[%s1 + $0xd0] sm:$0xff]
      %v301 = vld [vmem:[%s1 + $0xd8] sm:$0xff]
      %v302 = vld [vmem:[%s1 + $0xe0] sm:$0xff]
      %v303 = vld [vmem:[%s1 + $0xe8] sm:$0xff]
      %v304 = vld [vmem:[%s1 + $0xf0] sm:$0xff]
      %v305 = vld [vmem:[%s1 + $0xf8] sm:$0xff]
      %v306 = vld [vmem:[%s1 + $0x100] sm:$0xff]
      %v307 = vld [vmem:[%s1 + $0x108] sm:$0xff]
      %v308 = vld [vmem:[%s1 + $0x110] sm:$0xff]
      %v309 = vld [vmem:[%s1 + $0x118] sm:$0xff]
      %v310 = vld [vmem:[%s1 + $0x120] sm:$0xff]
      %v311 = vld [vmem:[%s1 + $0x128] sm:$0xff]
      %v312 = vld [vmem:[%s1 + $0x130] sm:$0xff]
      %v313 = vld [vmem:[%s1 + $0x138] sm:$0xff]
      %v314 = vld [vmem:[%s1 + $0x140] sm:$0xff]
      %v315 = vld [vmem:[%s1 + $0x148] sm:$0xff]
      %v316 = vld [vmem:[%s1 + $0x150] sm:$0xff]
      %v317 = vld [vmem:[%s1 + $0x158] sm:$0xff]
      %v318 = vld [vmem:[%s1 + $0x160] sm:$0xff]
      %v319 = vld [vmem:[%s1 + $0x168] sm:$0xff]
      %v320 = vld [vmem:[%s1 + $0x170] sm:$0xff]
      %v321 = vld [vmem:[%s1 + $0x178] sm:$0xff]
      %v322 = vld [vmem:[%s1 + $0x180] sm:$0xff]
      %v323 = vld [vmem:[%s1 + $0x188] sm:$0xff]
      %v324 = vld [vmem:[%s1 + $0x190] sm:$0xff]
      %v325 = vld [vmem:[%s1 + $0x198] sm:$0xff]
      %v326 = vld [vmem:[%s1 + $0x1a0] sm:$0xff]
      %v327 = vld [vmem:[%s1 + $0x1a8] sm:$0xff]
      %v328 = vld [vmem:[%s1 + $0x1b0] sm:$0xff]
      %v329 = vld [vmem:[%s1 + $0x1b8] sm:$0xff]
      %v330 = vld [vmem:[%s1 + $0x1c0] sm:$0xff]
      %v331 = vld [vmem:[%s1 + $0x1c8] sm:$0xff]
      %v332 = vld [vmem:[%s1 + $0x1d0] sm:$0xff]
      %v333 = vld [vmem:[%s1 + $0x1d8] sm:$0xff]
      %v334 = vld [vmem:[%s1 + $0x1e0] sm:$0xff]
      %v335 = vld [vmem:[%s1 + $0x1e8] sm:$0xff]
      %v336 = vld [vmem:[%s1 + $0x1f0] sm:$0xff]
      %v337 = vld [vmem:[%s1 + $0x1f8] sm:$0xff]
      %v338 = vld [vmem:[%s1 + $0x200] sm:$0xff]
      %v339 = vld [vmem:[%s1 + $0x208] sm:$0xff]
      %v340 = vld [vmem:[%s1 + $0x210] sm:$0xff]
      %v341 = vld [vmem:[%s1 + $0x218] sm:$0xff]
      %v342 = vld [vmem:[%s1 + $0x220] sm:$0xff]
      %v343 = vld [vmem:[%s1 + $0x228] sm:$0xff]
      %v344 = vld [vmem:[%s1 + $0x230] sm:$0xff]
      %v345 = vld [vmem:[%s1 + $0x238] sm:$0xff]
      %v346 = vld [vmem:[%s1 + $0x240] sm:$0xff]
      %v347 = vld [vmem:[%s1 + $0x248] sm:$0xff]
      %v348 = vld [vmem:[%s1 + $0x250] sm:$0xff]
      %v349 = vld [vmem:[%s1 + $0x258] sm:$0xff]
      %v350 = vld [vmem:[%s1 + $0x260] sm:$0xff]
      %v351 = vld [vmem:[%s1 + $0x268] sm:$0xff]
      %v352 = vld [vmem:[%s1 + $0x270] sm:$0xff]
      %v353 = vld [vmem:[%s1 + $0x278] sm:$0xff]
      %v354 = vld [vmem:[%s1 + $0x280] sm:$0xff]
      %v355 = vld [vmem:[%s1 + $0x288] sm:$0xff]
      %v356 = vld [vmem:[%s1 + $0x290] sm:$0xff]
      %v357 = vld [vmem:[%s1 + $0x298] sm:$0xff]
      %v358 = vld [vmem:[%s1 + $0x2a0] sm:$0xff]
      %v359 = vld [vmem:[%s1 + $0x2a8] sm:$0xff]
      %v360 = vld [vmem:[%s1 + $0x2b0] sm:$0xff]
      %v361 = vld [vmem:[%s1 + $0x2b8] sm:$0xff]
      %v362 = vld [vmem:[%s1 + $0x2c0] sm:$0xff]
      %v363 = vld [vmem:[%s1 + $0x2c8] sm:$0xff]
      %v364 = vld [vmem:[%s1 + $0x2d0] sm:$0xff]
      %v365 = vld [vmem:[%s1 + $0x2d8] sm:$0xff]
      %v366 = vld [vmem:[%s1 + $0x2e0] sm:$0xff]
      %v367 = vld [vmem:[%s1 + $0x2e8] sm:$0xff]
      %v368 = vld [vmem:[%s1 + $0x2f0] sm:$0xff]
      %v369 = vld [vmem:[%s1 + $0x2f8] sm:$0xff]
      %v370 = vld [vmem:[%s1 + $0x300] sm:$0xff]
      %v371 = vld [vmem:[%s1 + $0x308] sm:$0xff]
      %v372 = vld [vmem:[%s1 + $0x310] sm:$0xff]
      %v373 = vld [vmem:[%s1 + $0x318] sm:$0xff]
      %v374 = vld [vmem:[%s1 + $0x320] sm:$0xff]
      %v375 = vld [vmem:[%s1 + $0x328] sm:$0xff]
      %v376 = vld [vmem:[%s1 + $0x330] sm:$0xff]
      %v377 = vld [vmem:[%s1 + $0x338] sm:$0xff]
      %v378 = vld [vmem:[%s1 + $0x340] sm:$0xff]
      %v379 = vld [vmem:[%s1 + $0x348] sm:$0xff]
      %v380 = vld [vmem:[%s1 + $0x350] sm:$0xff]
      %v381 = vld [vmem:[%s1 + $0x358] sm:$0xff]
      %v382 = vld [vmem:[%s1 + $0x360] sm:$0xff]
      %v383 = vld [vmem:[%s1 + $0x368] sm:$0xff]
      %v384 = vld [vmem:[%s1 + $0x370] sm:$0xff]
      %v385 = vld [vmem:[%s1 + $0x378] sm:$0xff]
      %v386 = vld [vmem:[%s1 + $0x380] sm:$0xff]
      %v387 = vld [vmem:[%s1 + $0x388] sm:$0xff]
      %v388 = vld [vmem:[%s1 + $0x390] sm:$0xff]
      %v389 = vld [vmem:[%s1 + $0x398] sm:$0xff]
      %v390 = vld [vmem:[%s1 + $0x3a0] sm:$0xff]
      %v391 = vld [vmem:[%s1 + $0x3a8] sm:$0xff]
      %v392 = vld [vmem:[%s1 + $0x3b0] sm:$0xff]
      %v393 = vld [vmem:[%s1 + $0x3b8] sm:$0xff]
      %v394 = vld [vmem:[%s1 + $0x3c0] sm:$0xff]
      %v395 = vld [vmem:[%s1 + $0x3c8] sm:$0xff]
      %v396 = vld [vmem:[%s1 + $0x3d0] sm:$0xff]
      %v397 = vld [vmem:[%s1 + $0x3d8] sm:$0xff]
      %v398 = vld [vmem:[%s1 + $0x3e0] sm:$0xff]
      %v399 = vld [vmem:[%s1 + $0x3e8] sm:$0xff]
      %v400 = vld [vmem:[%s1 + $0x3f0] sm:$0xff]
      %v401 = vld [vmem:[%s1 + $0x3f8] sm:$0xff]
      %v402 = vld [vmem:[%s1 + $0x400] sm:$0xff]
      %v403 = vld [vmem:[%s1 + $0x408] sm:$0xff]
      %v404 = vld [vmem:[%s1 + $0x410] sm:$0xff]
      %v405 = vld [vmem:[%s1 + $0x418] sm:$0xff]
      %v406 = vld [vmem:[%s1 + $0x420] sm:$0xff]
      %v407 = vld [vmem:[%s1 + $0x428] sm:$0xff]
      %v408 = vld [vmem:[%s1 + $0x430] sm:$0xff]
      %v409 = vld [vmem:[%s1 + $0x438] sm:$0xff]
      %v410 = vld [vmem:[%s1 + $0x440] sm:$0xff]
      %v411 = vld [vmem:[%s1 + $0x448] sm:$0xff]
      %v412 = vld [vmem:[%s1 + $0x450] sm:$0xff]
      %v413 = vld [vmem:[%s1 + $0x458] sm:$0xff]
      %v414 = vld [vmem:[%s1 + $0x460] sm:$0xff]
      %v415 = vld [vmem:[%s1 + $0x468] sm:$0xff]
      %v416 = vld [vmem:[%s1 + $0x470] sm:$0xff]
      %v417 = vld [vmem:[%s1 + $0x478] sm:$0xff]
      %v418 = vld [vmem:[%s2] sm:$0x3]
      %v420 = vlaneseq
      %v421 = vshrl.u32 %v420, 7
      %v422 = vsub.s32 0, %v421
      %v423 = vrot.slane %v418, %v422
      %v424 = vlaneseq
      %v425 = vshrl.u32 %v424, 7
      %v426 = vsub.s32 1, %v425
      %v427 = vrot.slane %v418, %v426
      %v440 = vunpack.c.l.b16 %v264
      %v441 = vunpack.c.h.b16 %v264
      %v442 = vunpack.c.l.b16 %v265
      %v443 = vunpack.c.h.b16 %v265
      %v444 = vunpack.c.l.b16 %v266
      %v445 = vunpack.c.h.b16 %v266
      %v446 = vunpack.c.l.b16 %v267
      %v447 = vunpack.c.h.b16 %v267
      %v448 = vunpack.c.l.b16 %v268
      %v449 = vunpack.c.l.b16 %v269
      %v450 = vunpack.c.h.b16 %v269
      %v451 = vunpack.c.l.b16 %v270
      %v452 = vunpack.c.h.b16 %v270
      %v453 = vunpack.c.l.b16 %v271
      %v454 = vunpack.c.h.b16 %v271
      %v455 = vunpack.c.l.b16 %v272
      %v456 = vunpack.c.h.b16 %v272
      %v457 = vunpack.c.l.b16 %v273
      %v458 = vpack.c.b16 %v449, %v440
      %v459 = vpack.c.b16 %v450, %v441
      %v460 = vpack.c.b16 %v451, %v442
      %v461 = vpack.c.b16 %v452, %v443
      %v462 = vpack.c.b16 %v453, %v444
      %v463 = vpack.c.b16 %v454, %v445
      %v464 = vpack.c.b16 %v455, %v446
      %v465 = vpack.c.b16 %v456, %v447
      %v466 = vpack.c.b16 %v457, %v448
      %v620 = vunpack.c.l.b16 %v274
      %v621 = vunpack.c.h.b16 %v274
      %v622 = vunpack.c.l.b16 %v275
      %v623 = vunpack.c.h.b16 %v275
      %v624 = vunpack.c.l.b16 %v276
      %v625 = vunpack.c.h.b16 %v276
      %v626 = vunpack.c.l.b16 %v277
      %v627 = vunpack.c.h.b16 %v277
      %v628 = vunpack.c.l.b16 %v278
      %v629 = vunpack.c.h.b16 %v278
      %v630 = vunpack.c.l.b16 %v279
      %v631 = vunpack.c.h.b16 %v279
      %v632 = vunpack.c.l.b16 %v280
      %v633 = vunpack.c.h.b16 %v280
      %v634 = vunpack.c.l.b16 %v281
      %v635 = vunpack.c.h.b16 %v281
      %v636 = vunpack.c.l.b16 %v282
      %v637 = vunpack.c.h.b16 %v282
      %v638 = vunpack.c.l.b16 %v283
      %v639 = vunpack.c.h.b16 %v283
      %v640 = vunpack.c.l.b16 %v284
      %v641 = vunpack.c.h.b16 %v284
      %v642 = vunpack.c.l.b16 %v285
      %v643 = vunpack.c.h.b16 %v285
      %v644 = vunpack.c.l.b16 %v286
      %v645 = vunpack.c.h.b16 %v286
      %v646 = vunpack.c.l.b16 %v287
      %v647 = vunpack.c.h.b16 %v287
      %v648 = vunpack.c.l.b16 %v288
      %v649 = vunpack.c.h.b16 %v288
      %v650 = vunpack.c.l.b16 %v289
      %v651 = vunpack.c.h.b16 %v289
      %v652 = vunpack.c.l.b16 %v290
      %v653 = vunpack.c.h.b16 %v290
      %v654 = vunpack.c.l.b16 %v291
      %v655 = vunpack.c.h.b16 %v291
      %v656 = vunpack.c.l.b16 %v292
      %v657 = vunpack.c.h.b16 %v292
      %v658 = vunpack.c.l.b16 %v293
      %v659 = vunpack.c.h.b16 %v293
      %v660 = vunpack.c.l.b16 %v294
      %v661 = vunpack.c.h.b16 %v294
      %v662 = vunpack.c.l.b16 %v295
      %v663 = vunpack.c.h.b16 %v295
      %v664 = vunpack.c.l.b16 %v296
      %v665 = vunpack.c.h.b16 %v296
      %v666 = vunpack.c.l.b16 %v297
      %v667 = vunpack.c.h.b16 %v297
      %v668 = vunpack.c.l.b16 %v298
      %v669 = vunpack.c.h.b16 %v298
      %v670 = vunpack.c.l.b16 %v299
      %v671 = vunpack.c.h.b16 %v299
      %v672 = vunpack.c.l.b16 %v300
      %v673 = vunpack.c.h.b16 %v300
      %v674 = vunpack.c.l.b16 %v301
      %v675 = vunpack.c.h.b16 %v301
      %v676 = vunpack.c.l.b16 %v302
      %v677 = vunpack.c.h.b16 %v302
      %v678 = vunpack.c.l.b16 %v303
      %v679 = vunpack.c.h.b16 %v303
      %v680 = vunpack.c.l.b16 %v304
      %v681 = vunpack.c.h.b16 %v304
      %v682 = vunpack.c.l.b16 %v305
      %v683 = vunpack.c.h.b16 %v305
      %v684 = vunpack.c.l.b16 %v306
      %v685 = vunpack.c.h.b16 %v306
      %v686 = vunpack.c.l.b16 %v307
      %v687 = vunpack.c.h.b16 %v307
      %v688 = vunpack.c.l.b16 %v308
      %v689 = vunpack.c.h.b16 %v308
      %v690 = vunpack.c.l.b16 %v309
      %v691 = vunpack.c.h.b16 %v309
      %v692 = vunpack.c.l.b16 %v310
      %v693 = vunpack.c.h.b16 %v310
      %v694 = vunpack.c.l.b16 %v311
      %v695 = vunpack.c.h.b16 %v311
      %v696 = vunpack.c.l.b16 %v312
      %v697 = vunpack.c.h.b16 %v312
      %v698 = vunpack.c.l.b16 %v313
      %v699 = vunpack.c.h.b16 %v313
      %v700 = vunpack.c.l.b16 %v314
      %v701 = vunpack.c.h.b16 %v314
      %v702 = vunpack.c.l.b16 %v315
      %v703 = vunpack.c.h.b16 %v315
      %v704 = vunpack.c.l.b16 %v316
      %v705 = vunpack.c.h.b16 %v316
      %v706 = vunpack.c.l.b16 %v317
      %v707 = vunpack.c.h.b16 %v317
      %v708 = vunpack.c.l.b16 %v318
      %v709 = vunpack.c.h.b16 %v318
      %v710 = vunpack.c.l.b16 %v319
      %v711 = vunpack.c.h.b16 %v319
      %v712 = vunpack.c.l.b16 %v320
      %v713 = vunpack.c.h.b16 %v320
      %v714 = vunpack.c.l.b16 %v321
      %v715 = vunpack.c.h.b16 %v321
      %v716 = vunpack.c.l.b16 %v322
      %v717 = vunpack.c.h.b16 %v322
      %v718 = vunpack.c.l.b16 %v323
      %v719 = vunpack.c.h.b16 %v323
      %v720 = vunpack.c.l.b16 %v324
      %v721 = vunpack.c.h.b16 %v324
      %v722 = vunpack.c.l.b16 %v325
      %v723 = vunpack.c.h.b16 %v325
      %v724 = vunpack.c.l.b16 %v326
      %v725 = vunpack.c.h.b16 %v326
      %v726 = vunpack.c.l.b16 %v327
      %v727 = vunpack.c.h.b16 %v327
      %v728 = vunpack.c.l.b16 %v328
      %v729 = vunpack.c.h.b16 %v328
      %v730 = vunpack.c.l.b16 %v329
      %v731 = vunpack.c.h.b16 %v329
      %v732 = vunpack.c.l.b16 %v330
      %v733 = vunpack.c.h.b16 %v330
      %v734 = vunpack.c.l.b16 %v331
      %v735 = vunpack.c.h.b16 %v331
      %v736 = vunpack.c.l.b16 %v332
      %v737 = vunpack.c.h.b16 %v332
      %v738 = vunpack.c.l.b16 %v333
      %v739 = vunpack.c.h.b16 %v333
      %v740 = vunpack.c.l.b16 %v334
      %v741 = vunpack.c.h.b16 %v334
      %v742 = vunpack.c.l.b16 %v335
      %v743 = vunpack.c.h.b16 %v335
      %v744 = vunpack.c.l.b16 %v336
      %v745 = vunpack.c.h.b16 %v336
      %v746 = vunpack.c.l.b16 %v337
      %v747 = vunpack.c.h.b16 %v337
      %v748 = vunpack.c.l.b16 %v338
      %v749 = vunpack.c.h.b16 %v338
      %v750 = vunpack.c.l.b16 %v339
      %v751 = vunpack.c.h.b16 %v339
      %v752 = vunpack.c.l.b16 %v340
      %v753 = vunpack.c.h.b16 %v340
      %v754 = vunpack.c.l.b16 %v341
      %v755 = vunpack.c.h.b16 %v341
      %v756 = vunpack.c.l.b16 %v342
      %v757 = vunpack.c.h.b16 %v342
      %v758 = vunpack.c.l.b16 %v343
      %v759 = vunpack.c.h.b16 %v343
      %v760 = vunpack.c.l.b16 %v344
      %v761 = vunpack.c.h.b16 %v344
      %v762 = vunpack.c.l.b16 %v345
      %v763 = vunpack.c.h.b16 %v345
      %v764 = vunpack.c.l.b16 %v346
      %v765 = vunpack.c.h.b16 %v346
      %v766 = vunpack.c.l.b16 %v347
      %v767 = vunpack.c.h.b16 %v347
      %v768 = vunpack.c.l.b16 %v348
      %v769 = vunpack.c.h.b16 %v348
      %v770 = vunpack.c.l.b16 %v349
      %v771 = vunpack.c.h.b16 %v349
      %v772 = vunpack.c.l.b16 %v350
      %v773 = vunpack.c.h.b16 %v350
      %v774 = vunpack.c.l.b16 %v351
      %v775 = vunpack.c.h.b16 %v351
      %v776 = vunpack.c.l.b16 %v352
      %v777 = vunpack.c.h.b16 %v352
      %v778 = vunpack.c.l.b16 %v353
      %v779 = vunpack.c.h.b16 %v353
      %v780 = vunpack.c.l.b16 %v354
      %v781 = vunpack.c.h.b16 %v354
      %v782 = vunpack.c.l.b16 %v355
      %v783 = vunpack.c.h.b16 %v355
      %v784 = vunpack.c.l.b16 %v356
      %v785 = vunpack.c.h.b16 %v356
      %v786 = vunpack.c.l.b16 %v357
      %v787 = vunpack.c.h.b16 %v357
      %v788 = vunpack.c.l.b16 %v358
      %v789 = vunpack.c.h.b16 %v358
      %v790 = vunpack.c.l.b16 %v359
      %v791 = vunpack.c.h.b16 %v359
      %v792 = vunpack.c.l.b16 %v360
      %v793 = vunpack.c.h.b16 %v360
      %v794 = vunpack.c.l.b16 %v361
      %v795 = vunpack.c.h.b16 %v361
      %v796 = vunpack.c.l.b16 %v362
      %v797 = vunpack.c.h.b16 %v362
      %v798 = vunpack.c.l.b16 %v363
      %v799 = vunpack.c.h.b16 %v363
      %v800 = vunpack.c.l.b16 %v364
      %v801 = vunpack.c.h.b16 %v364
      %v802 = vunpack.c.l.b16 %v365
      %v803 = vunpack.c.h.b16 %v365
      %v804 = vunpack.c.l.b16 %v366
      %v805 = vunpack.c.h.b16 %v366
      %v806 = vunpack.c.l.b16 %v367
      %v807 = vunpack.c.h.b16 %v367
      %v808 = vunpack.c.l.b16 %v368
      %v809 = vunpack.c.h.b16 %v368
      %v810 = vunpack.c.l.b16 %v369
      %v811 = vunpack.c.h.b16 %v369
      %v812 = vunpack.c.l.b16 %v370
      %v813 = vunpack.c.h.b16 %v370
      %v814 = vunpack.c.l.b16 %v371
      %v815 = vunpack.c.h.b16 %v371
      %v816 = vunpack.c.l.b16 %v372
      %v817 = vunpack.c.h.b16 %v372
      %v818 = vunpack.c.l.b16 %v373
      %v819 = vunpack.c.h.b16 %v373
      %v820 = vunpack.c.l.b16 %v374
      %v821 = vunpack.c.h.b16 %v374
      %v822 = vunpack.c.l.b16 %v375
      %v823 = vunpack.c.h.b16 %v375
      %v824 = vunpack.c.l.b16 %v376
      %v825 = vunpack.c.h.b16 %v376
      %v826 = vunpack.c.l.b16 %v377
      %v827 = vunpack.c.h.b16 %v377
      %v828 = vunpack.c.l.b16 %v378
      %v829 = vunpack.c.h.b16 %v378
      %v830 = vunpack.c.l.b16 %v379
      %v831 = vunpack.c.h.b16 %v379
      %v832 = vunpack.c.l.b16 %v380
      %v833 = vunpack.c.h.b16 %v380
      %v834 = vunpack.c.l.b16 %v381
      %v835 = vunpack.c.h.b16 %v381
      %v836 = vunpack.c.l.b16 %v382
      %v837 = vunpack.c.h.b16 %v382
      %v838 = vunpack.c.l.b16 %v383
      %v839 = vunpack.c.h.b16 %v383
      %v840 = vunpack.c.l.b16 %v384
      %v841 = vunpack.c.h.b16 %v384
      %v842 = vunpack.c.l.b16 %v385
      %v843 = vunpack.c.h.b16 %v385
      %v844 = vunpack.c.l.b16 %v386
      %v845 = vunpack.c.h.b16 %v386
      %v846 = vunpack.c.l.b16 %v387
      %v847 = vunpack.c.h.b16 %v387
      %v848 = vunpack.c.l.b16 %v388
      %v849 = vunpack.c.h.b16 %v388
      %v850 = vunpack.c.l.b16 %v389
      %v851 = vunpack.c.h.b16 %v389
      %v852 = vunpack.c.l.b16 %v390
      %v853 = vunpack.c.h.b16 %v390
      %v854 = vunpack.c.l.b16 %v391
      %v855 = vunpack.c.h.b16 %v391
      %v856 = vunpack.c.l.b16 %v392
      %v857 = vunpack.c.h.b16 %v392
      %v858 = vunpack.c.l.b16 %v393
      %v859 = vunpack.c.h.b16 %v393
      %v860 = vunpack.c.l.b16 %v394
      %v861 = vunpack.c.h.b16 %v394
      %v862 = vunpack.c.l.b16 %v395
      %v863 = vunpack.c.h.b16 %v395
      %v864 = vunpack.c.l.b16 %v396
      %v865 = vunpack.c.h.b16 %v396
      %v866 = vunpack.c.l.b16 %v397
      %v867 = vunpack.c.h.b16 %v397
      %v868 = vunpack.c.l.b16 %v398
      %v869 = vunpack.c.h.b16 %v398
      %v870 = vunpack.c.l.b16 %v399
      %v871 = vunpack.c.h.b16 %v399
      %v872 = vunpack.c.l.b16 %v400
      %v873 = vunpack.c.h.b16 %v400
      %v874 = vunpack.c.l.b16 %v401
      %v875 = vunpack.c.h.b16 %v401
      %v876 = vunpack.c.l.b16 %v402
      %v877 = vunpack.c.h.b16 %v402
      %v878 = vunpack.c.l.b16 %v403
      %v879 = vunpack.c.h.b16 %v403
      %v880 = vunpack.c.l.b16 %v404
      %v881 = vunpack.c.h.b16 %v404
      %v882 = vunpack.c.l.b16 %v405
      %v883 = vunpack.c.h.b16 %v405
      %v884 = vunpack.c.l.b16 %v406
      %v885 = vunpack.c.h.b16 %v406
      %v886 = vunpack.c.l.b16 %v407
      %v887 = vunpack.c.h.b16 %v407
      %v888 = vunpack.c.l.b16 %v408
      %v889 = vunpack.c.h.b16 %v408
      %v890 = vunpack.c.l.b16 %v409
      %v891 = vunpack.c.h.b16 %v409
      %v892 = vunpack.c.l.b16 %v410
      %v893 = vunpack.c.h.b16 %v410
      %v894 = vunpack.c.l.b16 %v411
      %v895 = vunpack.c.h.b16 %v411
      %v896 = vunpack.c.l.b16 %v412
      %v897 = vunpack.c.h.b16 %v412
      %v898 = vunpack.c.l.b16 %v413
      %v899 = vunpack.c.h.b16 %v413
      %v900 = vunpack.c.l.b16 %v414
      %v901 = vunpack.c.h.b16 %v414
      %v902 = vunpack.c.l.b16 %v415
      %v903 = vunpack.c.h.b16 %v415
      %v904 = vunpack.c.l.b16 %v416
      %v905 = vunpack.c.h.b16 %v416
      %v906 = vunpack.c.l.b16 %v417
      %v907 = vunpack.c.h.b16 %v417
      %v908 = vpack.c.b16 %v622, %v620
      %v909 = vpack.c.b16 %v623, %v621
      %v910 = vpack.c.b16 %v626, %v624
      %v911 = vpack.c.b16 %v627, %v625
      %v912 = vpack.c.b16 %v630, %v628
      %v913 = vpack.c.b16 %v631, %v629
      %v914 = vpack.c.b16 %v634, %v632
      %v915 = vpack.c.b16 %v635, %v633
      %v916 = vpack.c.b16 %v638, %v636
      %v917 = vpack.c.b16 %v639, %v637
      %v918 = vpack.c.b16 %v642, %v640
      %v919 = vpack.c.b16 %v643, %v641
      %v920 = vpack.c.b16 %v646, %v644
      %v921 = vpack.c.b16 %v647, %v645
      %v922 = vpack.c.b16 %v650, %v648
      %v923 = vpack.c.b16 %v651, %v649
      %v924 = vpack.c.b16 %v654, %v652
      %v925 = vpack.c.b16 %v655, %v653
      %v926 = vpack.c.b16 %v658, %v656
      %v927 = vpack.c.b16 %v659, %v657
      %v928 = vpack.c.b16 %v662, %v660
      %v929 = vpack.c.b16 %v663, %v661
      %v930 = vpack.c.b16 %v666, %v664
      %v931 = vpack.c.b16 %v667, %v665
      %v932 = vpack.c.b16 %v670, %v668
      %v933 = vpack.c.b16 %v671, %v669
      %v934 = vpack.c.b16 %v674, %v672
      %v935 = vpack.c.b16 %v675, %v673
      %v936 = vpack.c.b16 %v678, %v676
      %v937 = vpack.c.b16 %v679, %v677
      %v938 = vpack.c.b16 %v682, %v680
      %v939 = vpack.c.b16 %v683, %v681
      %v940 = vpack.c.b16 %v686, %v684
      %v941 = vpack.c.b16 %v687, %v685
      %v942 = vpack.c.b16 %v690, %v688
      %v943 = vpack.c.b16 %v691, %v689
      %v944 = vpack.c.b16 %v694, %v692
      %v945 = vpack.c.b16 %v695, %v693
      %v946 = vpack.c.b16 %v698, %v696
      %v947 = vpack.c.b16 %v699, %v697
      %v948 = vpack.c.b16 %v702, %v700
      %v949 = vpack.c.b16 %v703, %v701
      %v950 = vpack.c.b16 %v706, %v704
      %v951 = vpack.c.b16 %v707, %v705
      %v952 = vpack.c.b16 %v710, %v708
      %v953 = vpack.c.b16 %v711, %v709
      %v954 = vpack.c.b16 %v714, %v712
      %v955 = vpack.c.b16 %v715, %v713
      %v956 = vpack.c.b16 %v718, %v716
      %v957 = vpack.c.b16 %v719, %v717
      %v958 = vpack.c.b16 %v722, %v720
      %v959 = vpack.c.b16 %v723, %v721
      %v960 = vpack.c.b16 %v726, %v724
      %v961 = vpack.c.b16 %v727, %v725
      %v962 = vpack.c.b16 %v730, %v728
      %v963 = vpack.c.b16 %v731, %v729
      %v964 = vpack.c.b16 %v734, %v732
      %v965 = vpack.c.b16 %v735, %v733
      %v966 = vpack.c.b16 %v738, %v736
      %v967 = vpack.c.b16 %v739, %v737
      %v968 = vpack.c.b16 %v742, %v740
      %v969 = vpack.c.b16 %v743, %v741
      %v970 = vpack.c.b16 %v746, %v744
      %v971 = vpack.c.b16 %v747, %v745
      %v972 = vpack.c.b16 %v750, %v748
      %v973 = vpack.c.b16 %v751, %v749
      %v974 = vpack.c.b16 %v754, %v752
      %v975 = vpack.c.b16 %v755, %v753
      %v976 = vpack.c.b16 %v758, %v756
      %v977 = vpack.c.b16 %v759, %v757
      %v978 = vpack.c.b16 %v762, %v760
      %v979 = vpack.c.b16 %v763, %v761
      %v980 = vpack.c.b16 %v766, %v764
      %v981 = vpack.c.b16 %v767, %v765
      %v982 = vpack.c.b16 %v770, %v768
      %v983 = vpack.c.b16 %v771, %v769
      %v984 = vpack.c.b16 %v774, %v772
      %v985 = vpack.c.b16 %v775, %v773
      %v986 = vpack.c.b16 %v778, %v776
      %v987 = vpack.c.b16 %v779, %v777
      %v988 = vpack.c.b16 %v782, %v780
      %v989 = vpack.c.b16 %v783, %v781
      %v990 = vpack.c.b16 %v786, %v784
      %v991 = vpack.c.b16 %v787, %v785
      %v992 = vpack.c.b16 %v790, %v788
      %v993 = vpack.c.b16 %v791, %v789
      %v994 = vpack.c.b16 %v794, %v792
      %v995 = vpack.c.b16 %v795, %v793
      %v996 = vpack.c.b16 %v798, %v796
      %v997 = vpack.c.b16 %v799, %v797
      %v998 = vpack.c.b16 %v802, %v800
      %v999 = vpack.c.b16 %v803, %v801
      %v1000 = vpack.c.b16 %v806, %v804
      %v1001 = vpack.c.b16 %v807, %v805
      %v1002 = vpack.c.b16 %v810, %v808
      %v1003 = vpack.c.b16 %v811, %v809
      %v1004 = vpack.c.b16 %v814, %v812
      %v1005 = vpack.c.b16 %v815, %v813
      %v1006 = vpack.c.b16 %v818, %v816
      %v1007 = vpack.c.b16 %v819, %v817
      %v1008 = vpack.c.b16 %v822, %v820
      %v1009 = vpack.c.b16 %v823, %v821
      %v1010 = vpack.c.b16 %v826, %v824
      %v1011 = vpack.c.b16 %v827, %v825
      %v1012 = vpack.c.b16 %v830, %v828
      %v1013 = vpack.c.b16 %v831, %v829
      %v1014 = vpack.c.b16 %v834, %v832
      %v1015 = vpack.c.b16 %v835, %v833
      %v1016 = vpack.c.b16 %v838, %v836
      %v1017 = vpack.c.b16 %v839, %v837
      %v1018 = vpack.c.b16 %v842, %v840
      %v1019 = vpack.c.b16 %v843, %v841
      %v1020 = vpack.c.b16 %v846, %v844
      %v1021 = vpack.c.b16 %v847, %v845
      %v1022 = vpack.c.b16 %v850, %v848
      %v1023 = vpack.c.b16 %v851, %v849
      %v1024 = vpack.c.b16 %v854, %v852
      %v1025 = vpack.c.b16 %v855, %v853
      %v1026 = vpack.c.b16 %v858, %v856
      %v1027 = vpack.c.b16 %v859, %v857
      %v1028 = vpack.c.b16 %v862, %v860
      %v1029 = vpack.c.b16 %v863, %v861
      %v1030 = vpack.c.b16 %v866, %v864
      %v1031 = vpack.c.b16 %v867, %v865
      %v1032 = vpack.c.b16 %v870, %v868
      %v1033 = vpack.c.b16 %v871, %v869
      %v1034 = vpack.c.b16 %v874, %v872
      %v1035 = vpack.c.b16 %v875, %v873
      %v1036 = vpack.c.b16 %v878, %v876
      %v1037 = vpack.c.b16 %v879, %v877
      %v1038 = vpack.c.b16 %v882, %v880
      %v1039 = vpack.c.b16 %v883, %v881
      %v1040 = vpack.c.b16 %v886, %v884
      %v1041 = vpack.c.b16 %v887, %v885
      %v1042 = vpack.c.b16 %v890, %v888
      %v1043 = vpack.c.b16 %v891, %v889
      %v1044 = vpack.c.b16 %v894, %v892
      %v1045 = vpack.c.b16 %v895, %v893
      %v1046 = vpack.c.b16 %v898, %v896
      %v1047 = vpack.c.b16 %v899, %v897
      %v1048 = vpack.c.b16 %v902, %v900
      %v1049 = vpack.c.b16 %v903, %v901
      %v1050 = vpack.c.b16 %v906, %v904
      %v1051 = vpack.c.b16 %v907, %v905
      %1196 = vmatprep.subr.bf16.mxu0 %v909
      %1197 = vmatpush1.bf16.msra.mxu0 %v908
      %1198 = vmatprep.subr.bf16.mxu0 %v911
      %1199 = vmatpush1.bf16.msra.mxu0 %v910
      %1200 = vmatprep.subr.bf16.mxu0 %v913
      %1201 = vmatpush1.bf16.msra.mxu0 %v912
      %1202 = vmatprep.subr.bf16.mxu0 %v915
      %1203 = vmatpush1.bf16.msra.mxu0 %v914
      %1204 = vmatprep.subr.bf16.mxu0 %v917
      %1205 = vmatpush1.bf16.msra.mxu0 %v916
      %1206 = vmatprep.subr.bf16.mxu0 %v919
      %1207 = vmatpush1.bf16.msra.mxu0 %v918
      %1208 = vmatprep.subr.bf16.mxu0 %v921
      %1209 = vmatpush1.bf16.msra.mxu0 %v920
      %1210 = vmatprep.subr.bf16.mxu0 %v923
      %1211 = vmatpush1.bf16.msra.mxu0 %v922
      %1212 = vmatprep.subr.bf16.mxu0 %v925
      %1213 = vmatpush1.bf16.msra.mxu0 %v924
      %1214 = vmatprep.subr.bf16.mxu0 %v927
      %1215 = vmatpush1.bf16.msra.mxu0 %v926
      %1216 = vmatprep.subr.bf16.mxu0 %v929
      %1217 = vmatpush1.bf16.msra.mxu0 %v928
      %1218 = vmatprep.subr.bf16.mxu0 %v931
      %1219 = vmatpush1.bf16.msra.mxu0 %v930
      %1220 = vmatprep.subr.bf16.mxu0 %v933
      %1221 = vmatpush1.bf16.msra.mxu0 %v932
      %1222 = vmatprep.subr.bf16.mxu0 %v935
      %1223 = vmatpush1.bf16.msra.mxu0 %v934
      %1224 = vmatprep.subr.bf16.mxu0 %v937
      %1225 = vmatpush1.bf16.msra.mxu0 %v936
      %1226 = vmatprep.subr.bf16.mxu0 %v939
      %1227 = vmatpush1.bf16.msra.mxu0 %v938
      %1228 = vmatprep.mubr.bf16.mxu0 %v459
      %1229 = vmatmul.mubr.bf16.gmra.mrb[0].mxu0 %v458
      %v1230 = vpop.f32.mrb[0].mxu0
      %v1231 = vadd.f32 %v423, %v1230
      %v1232 = vpop.f32.mrb[0].mxu0
      %v1233 = vadd.f32 %v427, %v1232
      %v1234 = vpop.f32.mrb[0].mxu0
      %v1235 = vadd.f32 %v423, %v1234
      %v1236 = vpop.f32.mrb[0].mxu0
      %v1237 = vadd.f32 %v427, %v1236
      %1238 = vdwg.mxu0
      %1239 = vmatprep.subr.bf16.mxu0 %v941
      %1240 = vmatpush1.bf16.msra.mxu0 %v940
      %1241 = vmatprep.subr.bf16.mxu0 %v943
      %1242 = vmatpush1.bf16.msra.mxu0 %v942
      %1243 = vmatprep.subr.bf16.mxu0 %v945
      %1244 = vmatpush1.bf16.msra.mxu0 %v944
      %1245 = vmatprep.subr.bf16.mxu0 %v947
      %1246 = vmatpush1.bf16.msra.mxu0 %v946
      %1247 = vmatprep.subr.bf16.mxu0 %v949
      %1248 = vmatpush1.bf16.msra.mxu0 %v948
      %1249 = vmatprep.subr.bf16.mxu0 %v951
      %1250 = vmatpush1.bf16.msra.mxu0 %v950
      %1251 = vmatprep.subr.bf16.mxu0 %v953
      %1252 = vmatpush1.bf16.msra.mxu0 %v952
      %1253 = vmatprep.subr.bf16.mxu0 %v955
      %1254 = vmatpush1.bf16.msra.mxu0 %v954
      %1255 = vmatprep.subr.bf16.mxu0 %v957
      %1256 = vmatpush1.bf16.msra.mxu0 %v956
      %1257 = vmatprep.subr.bf16.mxu0 %v959
      %1258 = vmatpush1.bf16.msra.mxu0 %v958
      %1259 = vmatprep.subr.bf16.mxu0 %v961
      %1260 = vmatpush1.bf16.msra.mxu0 %v960
      %1261 = vmatprep.subr.bf16.mxu0 %v963
      %1262 = vmatpush1.bf16.msra.mxu0 %v962
      %1263 = vmatprep.subr.bf16.mxu0 %v965
      %1264 = vmatpush1.bf16.msra.mxu0 %v964
      %1265 = vmatprep.subr.bf16.mxu0 %v967
      %1266 = vmatpush1.bf16.msra.mxu0 %v966
      %1267 = vmatprep.subr.bf16.mxu0 %v969
      %1268 = vmatpush1.bf16.msra.mxu0 %v968
      %1269 = vmatprep.subr.bf16.mxu0 %v971
      %1270 = vmatpush1.bf16.msra.mxu0 %v970
      %1271 = vmatprep.mubr.bf16.mxu0 %v461
      %1272 = vmatmul.mubr.bf16.gmra.mrb[0].mxu0 %v460
      %v1273 = vpop.f32.mrb[0].mxu0
      %v1274 = vadd.f32 %v1231, %v1273
      %v1275 = vpop.f32.mrb[0].mxu0
      %v1276 = vadd.f32 %v1233, %v1275
      %v1277 = vpop.f32.mrb[0].mxu0
      %v1278 = vadd.f32 %v1235, %v1277
      %v1279 = vpop.f32.mrb[0].mxu0
      %v1280 = vadd.f32 %v1237, %v1279
      %1281 = vdwg.mxu0
      %1282 = vmatprep.subr.bf16.mxu0 %v973
      %1283 = vmatpush1.bf16.msra.mxu0 %v972
      %1284 = vmatprep.subr.bf16.mxu0 %v975
      %1285 = vmatpush1.bf16.msra.mxu0 %v974
      %1286 = vmatprep.subr.bf16.mxu0 %v977
      %1287 = vmatpush1.bf16.msra.mxu0 %v976
      %1288 = vmatprep.subr.bf16.mxu0 %v979
      %1289 = vmatpush1.bf16.msra.mxu0 %v978
      %1290 = vmatprep.subr.bf16.mxu0 %v981
      %1291 = vmatpush1.bf16.msra.mxu0 %v980
      %1292 = vmatprep.subr.bf16.mxu0 %v983
      %1293 = vmatpush1.bf16.msra.mxu0 %v982
      %1294 = vmatprep.subr.bf16.mxu0 %v985
      %1295 = vmatpush1.bf16.msra.mxu0 %v984
      %1296 = vmatprep.subr.bf16.mxu0 %v987
      %1297 = vmatpush1.bf16.msra.mxu0 %v986
      %1298 = vmatprep.subr.bf16.mxu0 %v989
      %1299 = vmatpush1.bf16.msra.mxu0 %v988
      %1300 = vmatprep.subr.bf16.mxu0 %v991
      %1301 = vmatpush1.bf16.msra.mxu0 %v990
      %1302 = vmatprep.subr.bf16.mxu0 %v993
      %1303 = vmatpush1.bf16.msra.mxu0 %v992
      %1304 = vmatprep.subr.bf16.mxu0 %v995
      %1305 = vmatpush1.bf16.msra.mxu0 %v994
      %1306 = vmatprep.subr.bf16.mxu0 %v997
      %1307 = vmatpush1.bf16.msra.mxu0 %v996
      %1308 = vmatprep.subr.bf16.mxu0 %v999
      %1309 = vmatpush1.bf16.msra.mxu0 %v998
      %1310 = vmatprep.subr.bf16.mxu0 %v1001
      %1311 = vmatpush1.bf16.msra.mxu0 %v1000
      %1312 = vmatprep.subr.bf16.mxu0 %v1003
      %1313 = vmatpush1.bf16.msra.mxu0 %v1002
      %1314 = vmatprep.mubr.bf16.mxu0 %v463
      %1315 = vmatmul.mubr.bf16.gmra.mrb[0].mxu0 %v462
      %v1316 = vpop.f32.mrb[0].mxu0
      %v1317 = vadd.f32 %v1274, %v1316
      %v1318 = vpop.f32.mrb[0].mxu0
      %v1319 = vadd.f32 %v1276, %v1318
      %v1320 = vpop.f32.mrb[0].mxu0
      %v1321 = vadd.f32 %v1278, %v1320
      %v1322 = vpop.f32.mrb[0].mxu0
      %v1323 = vadd.f32 %v1280, %v1322
      %1324 = vdwg.mxu0
      %1325 = vmatprep.subr.bf16.mxu0 %v1005
      %1326 = vmatpush1.bf16.msra.mxu0 %v1004
      %1327 = vmatprep.subr.bf16.mxu0 %v1007
      %1328 = vmatpush1.bf16.msra.mxu0 %v1006
      %1329 = vmatprep.subr.bf16.mxu0 %v1009
      %1330 = vmatpush1.bf16.msra.mxu0 %v1008
      %1331 = vmatprep.subr.bf16.mxu0 %v1011
      %1332 = vmatpush1.bf16.msra.mxu0 %v1010
      %1333 = vmatprep.subr.bf16.mxu0 %v1013
      %1334 = vmatpush1.bf16.msra.mxu0 %v1012
      %1335 = vmatprep.subr.bf16.mxu0 %v1015
      %1336 = vmatpush1.bf16.msra.mxu0 %v1014
      %1337 = vmatprep.subr.bf16.mxu0 %v1017
      %1338 = vmatpush1.bf16.msra.mxu0 %v1016
      %1339 = vmatprep.subr.bf16.mxu0 %v1019
      %1340 = vmatpush1.bf16.msra.mxu0 %v1018
      %1341 = vmatprep.subr.bf16.mxu0 %v1021
      %1342 = vmatpush1.bf16.msra.mxu0 %v1020
      %1343 = vmatprep.subr.bf16.mxu0 %v1023
      %1344 = vmatpush1.bf16.msra.mxu0 %v1022
      %1345 = vmatprep.subr.bf16.mxu0 %v1025
      %1346 = vmatpush1.bf16.msra.mxu0 %v1024
      %1347 = vmatprep.subr.bf16.mxu0 %v1027
      %1348 = vmatpush1.bf16.msra.mxu0 %v1026
      %1349 = vmatprep.subr.bf16.mxu0 %v1029
      %1350 = vmatpush1.bf16.msra.mxu0 %v1028
      %1351 = vmatprep.subr.bf16.mxu0 %v1031
      %1352 = vmatpush1.bf16.msra.mxu0 %v1030
      %1353 = vmatprep.subr.bf16.mxu0 %v1033
      %1354 = vmatpush1.bf16.msra.mxu0 %v1032
      %1355 = vmatprep.subr.bf16.mxu0 %v1035
      %1356 = vmatpush1.bf16.msra.mxu0 %v1034
      %1357 = vmatprep.mubr.bf16.mxu0 %v465
      %1358 = vmatmul.mubr.bf16.gmra.mrb[0].mxu0 %v464
      %v1359 = vpop.f32.mrb[0].mxu0
      %v1360 = vadd.f32 %v1317, %v1359
      %v1361 = vpop.f32.mrb[0].mxu0
      %v1362 = vadd.f32 %v1319, %v1361
      %v1363 = vpop.f32.mrb[0].mxu0
      %v1364 = vadd.f32 %v1321, %v1363
      %v1365 = vpop.f32.mrb[0].mxu0
      %v1366 = vadd.f32 %v1323, %v1365
      %1367 = vdwg.mxu0
      %1368 = vmatprep.subr.bf16.mxu0 %v1037
      %1369 = vmatpush1.bf16.msra.mxu0 %v1036
      %1370 = vmatprep.subr.bf16.mxu0 %v1039
      %1371 = vmatpush1.bf16.msra.mxu0 %v1038
      %1372 = vmatprep.subr.bf16.mxu0 %v1041
      %1373 = vmatpush1.bf16.msra.mxu0 %v1040
      %1374 = vmatprep.subr.bf16.mxu0 %v1043
      %1375 = vmatpush1.bf16.msra.mxu0 %v1042
      %1376 = vmatprep.subr.bf16.mxu0 %v1045
      %1377 = vmatpush1.bf16.msra.mxu0 %v1044
      %1378 = vmatprep.subr.bf16.mxu0 %v1047
      %1379 = vmatpush1.bf16.msra.mxu0 %v1046
      %1380 = vmatprep.subr.bf16.mxu0 %v1049
      %1381 = vmatpush1.bf16.msra.mxu0 %v1048
      %1382 = vmatprep.subr.bf16.mxu0 %v1051
      %1383 = vmatpush1.bf16.msra.mxu0 %v1050
      %1384 = vmatprep.subr.bf16.mxu0 0
      %1385 = vmatpush1.bf16.msra.mxu0 0
      %1386 = vmatprep.subr.bf16.mxu0 0
      %1387 = vmatpush1.bf16.msra.mxu0 0
      %1388 = vmatprep.subr.bf16.mxu0 0
      %1389 = vmatpush1.bf16.msra.mxu0 0
      %1390 = vmatprep.subr.bf16.mxu0 0
      %1391 = vmatpush1.bf16.msra.mxu0 0
      %1392 = vmatprep.subr.bf16.mxu0 0
      %1393 = vmatpush1.bf16.msra.mxu0 0
      %1394 = vmatprep.subr.bf16.mxu0 0
      %1395 = vmatpush1.bf16.msra.mxu0 0
      %1396 = vmatprep.subr.bf16.mxu0 0
      %1397 = vmatpush1.bf16.msra.mxu0 0
      %1398 = vmatprep.subr.bf16.mxu0 0
      %1399 = vmatpush1.bf16.msra.mxu0 0
      %1400 = vmatprep.mubr.bf16.mxu0 0
      %1401 = vmatmul.mubr.bf16.gmra.mrb[0].mxu0 %v466
      %v1402 = vpop.f32.mrb[0].mxu0
      %v1403 = vadd.f32 %v1360, %v1402
      %v1404 = vpop.f32.mrb[0].mxu0
      %v1405 = vadd.f32 %v1362, %v1404
      %v1406 = vpop.f32.mrb[0].mxu0
      %v1407 = vadd.f32 %v1364, %v1406
      %v1408 = vpop.f32.mrb[0].mxu0
      %v1409 = vadd.f32 %v1366, %v1408
      %1410 = vdwg.mxu0
      %v1411 = vmax.f32 %v1403, 0.0
      %v1412 = vmax.f32 %v1405, 0.0
      %v1413 = vmax.f32 %v1407, 0.0
      %v1414 = vmax.f32 %v1409, 0.0
      %v1415 = vpack.c.bf16 %v1413, %v1411
      %v1416 = vpack.c.bf16 %v1414, %v1412
      %v1419 = vunpack.c.l.b16 %v1415
      %v1420 = vunpack.c.l.b16 %v1416
      %v1421 = vunpack.c.h.b16 %v1415
      %v1422 = vunpack.c.h.b16 %v1416
      %v1423 = vpack.c.b16 %v1420, %v1419
      %v1424 = vpack.c.b16 %v1422, %v1421
      %1427 = vst [vmem:[%s253] sm:$0xff] %v1423
      %1428 = vst [vmem:[%s253 + $0x8] sm:$0xff] %v1424
      %1429 = vxpose.xlu0.b32.start [1/16] %v1411, 128
      %1430 = vxpose.xlu0.b32.cont [2/16] %v1413, 128
      %1431 = vxpose.xlu0.b32.cont [3/16] 0.0, 128
      %1432 = vxpose.xlu0.b32.cont [4/16] 0.0, 128
      %1433 = vxpose.xlu0.b32.cont [5/16] 0.0, 128
      %1434 = vxpose.xlu0.b32.cont [6/16] 0.0, 128
      %1435 = vxpose.xlu0.b32.cont [7/16] 0.0, 128
      %1436 = vxpose.xlu0.b32.cont [8/16] 0.0, 128
      %1437 = vxpose.xlu0.b32.cont [9/16] 0.0, 128
      %1438 = vxpose.xlu0.b32.cont [10/16] 0.0, 128
      %1439 = vxpose.xlu0.b32.cont [11/16] 0.0, 128
      %1440 = vxpose.xlu0.b32.cont [12/16] 0.0, 128
      %1441 = vxpose.xlu0.b32.cont [13/16] 0.0, 128
      %1442 = vxpose.xlu0.b32.cont [14/16] 0.0, 128
      %1443 = vxpose.xlu0.b32.cont [15/16] 0.0, 128
      %1444 = vxpose.xlu0.b32.end [16/16] 0.0, 128
      %v1445 = vpop.trf.xlu0
      %v1446 = vpop.trf.xlu0
      %v1447 = vpop.trf.xlu0
      %v1448 = vpop.trf.xlu0
      %v1449 = vpop.trf.xlu0
      %v1450 = vpop.trf.xlu0
      %v1451 = vpop.trf.xlu0
      %v1452 = vpop.trf.xlu0
      %v1453 = vpop.trf.xlu0
      %v1454 = vpop.trf.xlu0
      %v1455 = vpop.trf.xlu0
      %v1456 = vpop.trf.xlu0
      %v1457 = vpop.trf.xlu0
      %v1458 = vpop.trf.xlu0
      %v1459 = vpop.trf.xlu0
      %v1460 = vpop.trf.xlu0
      %1461 = vxpose.xlu0.b32.start [1/16] %v1412, 128
      %1462 = vxpose.xlu0.b32.cont [2/16] %v1414, 128
      %1463 = vxpose.xlu0.b32.cont [3/16] 0.0, 128
      %1464 = vxpose.xlu0.b32.cont [4/16] 0.0, 128
      %1465 = vxpose.xlu0.b32.cont [5/16] 0.0, 128
      %1466 = vxpose.xlu0.b32.cont [6/16] 0.0, 128
      %1467 = vxpose.xlu0.b32.cont [7/16] 0.0, 128
      %1468 = vxpose.xlu0.b32.cont [8/16] 0.0, 128
      %1469 = vxpose.xlu0.b32.cont [9/16] 0.0, 128
      %1470 = vxpose.xlu0.b32.cont [10/16] 0.0, 128
      %1471 = vxpose.xlu0.b32.cont [11/16] 0.0, 128
      %1472 = vxpose.xlu0.b32.cont [12/16] 0.0, 128
      %1473 = vxpose.xlu0.b32.cont [13/16] 0.0, 128
      %1474 = vxpose.xlu0.b32.cont [14/16] 0.0, 128
      %1475 = vxpose.xlu0.b32.cont [15/16] 0.0, 128
      %1476 = vxpose.xlu0.b32.end [16/16] 0.0, 128
      %v1477 = vpop.trf.xlu0
      %v1478 = vpop.trf.xlu0
      %v1479 = vpop.trf.xlu0
      %v1480 = vpop.trf.xlu0
      %v1481 = vpop.trf.xlu0
      %v1482 = vpop.trf.xlu0
      %v1483 = vpop.trf.xlu0
      %v1484 = vpop.trf.xlu0
      %v1485 = vpop.trf.xlu0
      %v1486 = vpop.trf.xlu0
      %v1487 = vpop.trf.xlu0
      %v1488 = vpop.trf.xlu0
      %v1489 = vpop.trf.xlu0
      %v1490 = vpop.trf.xlu0
      %v1491 = vpop.trf.xlu0
      %v1492 = vpop.trf.xlu0
      %vm1493 = vcmask 130048
      %1494 = vst.msk [vmem:[%s262] sm:$0xff] %vm1493, %v1445
      %1495 = vst.msk [vmem:[%s262 + $0x8] sm:$0xff] %vm1493, %v1446
      %1496 = vst.msk [vmem:[%s262 + $0x10] sm:$0xff] %vm1493, %v1447
      %1497 = vst.msk [vmem:[%s262 + $0x18] sm:$0xff] %vm1493, %v1448
      %1498 = vst.msk [vmem:[%s262 + $0x20] sm:$0xff] %vm1493, %v1449
      %1499 = vst.msk [vmem:[%s262 + $0x28] sm:$0xff] %vm1493, %v1450
      %1500 = vst.msk [vmem:[%s262 + $0x30] sm:$0xff] %vm1493, %v1451
      %1501 = vst.msk [vmem:[%s262 + $0x38] sm:$0xff] %vm1493, %v1452
      %1502 = vst.msk [vmem:[%s262 + $0x40] sm:$0xff] %vm1493, %v1453
      %1503 = vst.msk [vmem:[%s262 + $0x48] sm:$0xff] %vm1493, %v1454
      %1504 = vst.msk [vmem:[%s262 + $0x50] sm:$0xff] %vm1493, %v1455
      %1505 = vst.msk [vmem:[%s262 + $0x58] sm:$0xff] %vm1493, %v1456
      %1506 = vst.msk [vmem:[%s262 + $0x60] sm:$0xff] %vm1493, %v1457
      %1507 = vst.msk [vmem:[%s262 + $0x68] sm:$0xff] %vm1493, %v1458
      %1508 = vst.msk [vmem:[%s262 + $0x70] sm:$0xff] %vm1493, %v1459
      %1509 = vst.msk [vmem:[%s262 + $0x78] sm:$0xff] %vm1493, %v1460
      %1510 = vst.msk [vmem:[%s262 + $0x80] sm:$0xff] %vm1493, %v1477
      %1511 = vst.msk [vmem:[%s262 + $0x88] sm:$0xff] %vm1493, %v1478
      %1512 = vst.msk [vmem:[%s262 + $0x90] sm:$0xff] %vm1493, %v1479
      %1513 = vst.msk [vmem:[%s262 + $0x98] sm:$0xff] %vm1493, %v1480
      %1514 = vst.msk [vmem:[%s262 + $0xa0] sm:$0xff] %vm1493, %v1481
      %1515 = vst.msk [vmem:[%s262 + $0xa8] sm:$0xff] %vm1493, %v1482
      %1516 = vst.msk [vmem:[%s262 + $0xb0] sm:$0xff] %vm1493, %v1483
      %1517 = vst.msk [vmem:[%s262 + $0xb8] sm:$0xff] %vm1493, %v1484
      %1518 = vst.msk [vmem:[%s262 + $0xc0] sm:$0xff] %vm1493, %v1485
      %1519 = vst.msk [vmem:[%s262 + $0xc8] sm:$0xff] %vm1493, %v1486
      %1520 = vst.msk [vmem:[%s262 + $0xd0] sm:$0xff] %vm1493, %v1487
      %1521 = vst.msk [vmem:[%s262 + $0xd8] sm:$0xff] %vm1493, %v1488
      %1522 = vst.msk [vmem:[%s262 + $0xe0] sm:$0xff] %vm1493, %v1489
      %1523 = vst.msk [vmem:[%s262 + $0xe8] sm:$0xff] %vm1493, %v1490
      %1524 = vst.msk [vmem:[%s262 + $0xf0] sm:$0xff] %vm1493, %v1491
      %1525 = vst.msk [vmem:[%s262 + $0xf8] sm:$0xff] %vm1493, %v1492
      %s1526 = smul.u32 2, %s21
      %p1527 = scmp.lt.s32.totalorder %s20, 1
      %s1528 = scalar_select %p1527, %s20, 1
      %p1529 = scmp.lt.s32.totalorder %s1526, 1
      %s1530 = scalar_select %p1529, %s1526, 1
      %s1531 = smul.addr %s1530, 2
      %s1532 = smul.addr %s1528, 4
      %s1533 = sadd.s32 %s1531, %s1532
      %s1534 = smul.addr %s1533, 4
      %s1535 = scalar_lea.vmem %s3, %s1534
      %p1536 = scmp.lt.s32.totalorder %s20, 1
      %s1537 = scalar_select %p1536, %s20, 1
      %p1538 = scmp.lt.s32.totalorder %s21, 0
      %s1539 = scalar_select %p1538, %s21, 0
      %s1540 = smul.addr %s1537, 32
      %s1541 = sadd.s32 %s1539, %s1540
      %s1542 = smul.addr %s1541, 8
      %s1543 = scalar_lea.vmem %s4, %s1542
      // Predicated region
      $region33: #{forward.7} parent=31 // pred_check
        %p1544 = pneg %p118
      $region34: #{forward.7} parent=31 // pred_check_branch
        %1546 = sbr.rel (%p1544) target = $region36
      $region35: #{forward.7} parent=31 // pred_region
        %s1547 = smul.u32 2, %s21
      $region36: #{forward.7} parent=31 // pred_fallthru
        _
      // Predicated region
      $region37: #{forward.7} parent=31 // pred_check
        %p1548 = pneg %p146
      $region38: #{forward.7} parent=31 // pred_check_branch
        %1550 = sbr.rel (%p1548) target = $region40
      $region39: #{forward.7} parent=31 // pred_region
        _
      $region40: #{forward.7} parent=31 // pred_fallthru
        _
    $region32: #{forward.7} parent=5 // pred_fallthru
      _
    %p1551 = scmp.le.s32.totalorder 2, %s11
    // Predicated region
    $region41: #{forward.7} parent=5 // pred_check
      %p1552 = pneg %p1551
    $region42: #{forward.7} parent=5 // pred_check_branch
      %1554 = sbr.rel (%p1552) target = $region44
    $region43: #{forward.7} parent=5 // pred_region
      %s1555 = ssub.s32 %s11, 2
      // Predicated region
      $region45: #{forward.7} parent=43 // pred_check
        %p1556 = pneg %p124
      $region46: #{forward.7} parent=43 // pred_check_branch
        %1558 = sbr.rel (%p1556) target = $region48
      $region47: #{forward.7} parent=43 // pred_region
        %s1559 = smul.u32 2, %s23
        %p1560 = scmp.lt.s32.totalorder %s22, 1
        %s1561 = scalar_select %p1560, %s22, 1
        %p1562 = scmp.lt.s32.totalorder %s1559, 1
        %s1563 = scalar_select %p1562, %s1559, 1
        %s1564 = smul.addr %s1563, 2
        %s1565 = smul.addr %s1561, 4
        %s1566 = sadd.s32 %s1564, %s1565
        %s1567 = smul.addr %s1566, 4
        %s1568 = scalar_lea.vmem %s3, %s1567
      $region48: #{forward.7} parent=43 // pred_fallthru
        _
      // Predicated region
      $region49: #{forward.7} parent=43 // pred_check
        %p1569 = pneg %p152
      $region50: #{forward.7} parent=43 // pred_check_branch
        %1571 = sbr.rel (%p1569) target = $region52
      $region51: #{forward.7} parent=43 // pred_region
        %p1572 = scmp.lt.s32.totalorder %s22, 1
        %s1573 = scalar_select %p1572, %s22, 1
        %p1574 = scmp.lt.s32.totalorder %s23, 0
        %s1575 = scalar_select %p1574, %s23, 0
        %s1576 = smul.addr %s1573, 32
        %s1577 = sadd.s32 %s1575, %s1576
        %s1578 = smul.addr %s1577, 8
        %s1579 = scalar_lea.vmem %s4, %s1578
      $region52: #{forward.7} parent=43 // pred_fallthru
        _
    $region44: #{forward.7} parent=5 // pred_fallthru
      _
  $region6: #{forward.7} parent=0 // loop_footer
    %s15 = sadd.s32 1, %s11
  $region7: #{forward.7} parent=0 // loop_footer_branch
    %10 = sbr.rel target = $region3
  $region8: #{forward.7} parent=0 // loop_exit
    _

// kernel: forward.8
$region0: #{forward.8}
  #allocation0 [shape = 'u32[]', space=smem, size = 0x4, offset = 0x4, fixed_abs, tag = 'smem constant byte address 0x4 - core index']
  #allocation1 [shape = 'u32[144,128]{1,0:T(1,128)}', space=vmem, size = 0x12000, scoped, tag = 'internal scratch']
  %s0 = inlined_call_operand.vmem [shape: bf16[2,4,2304], index: 0, kind: input, shape index: {}]
  %s1 = inlined_call_operand.vmem [shape: bf16[2304,256], index: 1, kind: input, shape index: {}]
  %s2 = inlined_call_operand.vmem [shape: f32[1,256], index: 2, kind: input, shape index: {}]
  %s3 = inlined_call_operand.vmem [shape: f32[2,256,4], index: 3, kind: output, shape index: {}]
  %s4 = sld [smem:[#allocation0]]
  $region45: #{forward.8} parent=0
    _
  %s6 = ssub.s32 1, %s4
  %s7 = scalar_select 0, %s6, %s4
  loop: start=0, step=1, limit=4
  $region2: #{forward.8} parent=0 // loop_pre_header
    _
  $region3: #{forward.8} parent=0 // loop_header
    %s9 = sphi 0, %s13
    %p10 = scmp.ge.s32.totalorder %s9, 4
    %s16 = sphi 0, %s28
    %s17 = sphi 0, %s24
    %s18 = sphi 0, %s16
    %s19 = sphi 0, %s17
    %s20 = sphi 0, %s18
    %s21 = sphi 0, %s19
    %s33 = sphi 0, %s35
    %s36 = sphi 0, %s33
    %s37 = sphi 0, %s36
    %s53 = sphi 0, %s37
    %s57 = sphi 0, %s57
    %s59 = sphi 0, %s57
    %s60 = sphi 0, %s59
    %s74 = sphi 0, %s60
    %s78 = sphi 0, %s78
    %s80 = sphi 0, %s78
    %s81 = sphi 0, %s80
    %s95 = sphi 0, %s81
    %s103 = sphi 0, %s105
    %s106 = sphi 0, %s103
    %s107 = sphi 0, %s106
    %s123 = sphi 0, %s107
  $region4: #{forward.8} parent=0 // loop_header_branch
    %12 = sbr.rel (%p10) target = $region8
  $region5: #{forward.8} parent=0 // loop_body
    %s14 = ssub.s32 %s9, 1
    %s15 = ssub.s32 %s9, 2
    %s22 = sadd.s32 1, %s17
    %p23 = scmp.ge.s32.totalorder %s22, 1
    %s24 = scalar_select %p23, 0, %s22
    %s25 = sadd.s32 1, %s16
    %s26 = scalar_select %p23, %s25, %s16
    %p27 = scmp.ge.s32.totalorder %s26, 2
    %s28 = scalar_select %p27, 0, %s26
    %s29 = ssub.s32 %s16, %s28
    %s30 = ssub.s32 %s17, %s24
    %s31 = sor.u32 %s29, %s30
    %p32 = scmp.eq.s32.totalorder %s31, 0
    %s34 = sadd.s32 %s33, 1
    %s35 = scalar_select %p32, %s33, %s34
    %p38 = pneg %p32
    %p39 = scmp.eq.s32.totalorder %s9, 1
    %p40 = por %p38, %p39
    %p41 = scmp.ne.s32.totalorder %s33, %s36
    %p42 = scmp.eq.s32.totalorder %s9, 0
    %p43 = por %p41, %p42
    %p44 = scmp.ne.s32.totalorder %s33, %s36
    %p45 = scmp.eq.s32.totalorder %s14, 1
    %p46 = por %p44, %p45
    %p47 = scmp.ne.s32.totalorder %s36, %s37
    %p48 = scmp.eq.s32.totalorder %s14, 0
    %p49 = por %p47, %p48
    %p50 = scmp.ne.s32.totalorder %s36, %s37
    %p51 = scmp.eq.s32.totalorder %s15, 1
    %p52 = por %p50, %p51
    %p54 = scmp.ne.s32.totalorder %s37, %s53
    %p55 = scmp.eq.s32.totalorder %s15, 0
    %p56 = por %p54, %p55
    %s58 = sadd.s32 %s57, 1
    %p61 = scmp.eq.s32.totalorder %s9, 1
    %p62 = scmp.ne.s32.totalorder %s57, %s59
    %p63 = scmp.eq.s32.totalorder %s9, 0
    %p64 = por %p62, %p63
    %p65 = scmp.ne.s32.totalorder %s57, %s59
    %p66 = scmp.eq.s32.totalorder %s14, 1
    %p67 = por %p65, %p66
    %p68 = scmp.ne.s32.totalorder %s59, %s60
    %p69 = scmp.eq.s32.totalorder %s14, 0
    %p70 = por %p68, %p69
    %p71 = scmp.ne.s32.totalorder %s59, %s60
    %p72 = scmp.eq.s32.totalorder %s15, 1
    %p73 = por %p71, %p72
    %p75 = scmp.ne.s32.totalorder %s60, %s74
    %p76 = scmp.eq.s32.totalorder %s15, 0
    %p77 = por %p75, %p76
    %s79 = sadd.s32 %s78, 1
    %p82 = scmp.eq.s32.totalorder %s9, 1
    %p83 = scmp.ne.s32.totalorder %s78, %s80
    %p84 = scmp.eq.s32.totalorder %s9, 0
    %p85 = por %p83, %p84
    %p86 = scmp.ne.s32.totalorder %s78, %s80
    %p87 = scmp.eq.s32.totalorder %s14, 1
    %p88 = por %p86, %p87
    %p89 = scmp.ne.s32.totalorder %s80, %s81
    %p90 = scmp.eq.s32.totalorder %s14, 0
    %p91 = por %p89, %p90
    %p92 = scmp.ne.s32.totalorder %s80, %s81
    %p93 = scmp.eq.s32.totalorder %s15, 1
    %p94 = por %p92, %p93
    %p96 = scmp.ne.s32.totalorder %s81, %s95
    %p97 = scmp.eq.s32.totalorder %s15, 0
    %p98 = por %p96, %p97
    %s99 = ssub.s32 %s16, %s28
    %s100 = ssub.s32 %s17, %s24
    %s101 = sor.u32 %s99, %s100
    %p102 = scmp.eq.s32.totalorder %s101, 0
    %s104 = sadd.s32 %s103, 1
    %s105 = scalar_select %p102, %s103, %s104
    %p108 = pneg %p102
    %p109 = scmp.eq.s32.totalorder %s9, 1
    %p110 = por %p108, %p109
    %p111 = scmp.ne.s32.totalorder %s103, %s106
    %p112 = scmp.eq.s32.totalorder %s9, 0
    %p113 = por %p111, %p112
    %p114 = scmp.ne.s32.totalorder %s103, %s106
    %p115 = scmp.eq.s32.totalorder %s14, 1
    %p116 = por %p114, %p115
    %p117 = scmp.ne.s32.totalorder %s106, %s107
    %p118 = scmp.eq.s32.totalorder %s14, 0
    %p119 = por %p117, %p118
    %p120 = scmp.ne.s32.totalorder %s106, %s107
    %p121 = scmp.eq.s32.totalorder %s15, 1
    %p122 = por %p120, %p121
    %p124 = scmp.ne.s32.totalorder %s107, %s123
    %p125 = scmp.eq.s32.totalorder %s15, 0
    %p126 = por %p124, %p125
    %p127 = scmp.le.s32.totalorder 1, %s9
    %p128 = scmp.lt.s32.totalorder %s9, 3
    %p129 = pnand %p127, %p128
    %p130 = pneg %p129
    // Predicated region
    $region9: #{forward.8} parent=5 // pred_check
      _
    $region10: #{forward.8} parent=5 // pred_check_branch
      %132 = sbr.rel (%p129) target = $region12
    $region11: #{forward.8} parent=5 // pred_region
      %s133 = ssub.s32 %s9, 1
      // Predicated region
      $region13: #{forward.8} parent=11 // pred_check
        %p134 = pneg %p70
      $region14: #{forward.8} parent=11 // pred_check_branch
        %136 = sbr.rel (%p134) target = $region16
      $region15: #{forward.8} parent=11 // pred_region
        _
      $region16: #{forward.8} parent=11 // pred_fallthru
        _
      // Predicated region
      $region17: #{forward.8} parent=11 // pred_check
        %p137 = pneg %p91
      $region18: #{forward.8} parent=11 // pred_check_branch
        %139 = sbr.rel (%p137) target = $region20
      $region19: #{forward.8} parent=11 // pred_region
        _
      $region20: #{forward.8} parent=11 // pred_fallthru
        _
    $region12: #{forward.8} parent=5 // pred_fallthru
      _
    %p140 = scmp.lt.s32.totalorder %s9, 2
    // Predicated region
    $region21: #{forward.8} parent=5 // pred_check
      %p141 = pneg %p140
    $region22: #{forward.8} parent=5 // pred_check_branch
      %143 = sbr.rel (%p141) target = $region24
    $region23: #{forward.8} parent=5 // pred_region
      // Predicated region
      $region25: #{forward.8} parent=23 // pred_check
        %p144 = pneg %p43
      $region26: #{forward.8} parent=23 // pred_check_branch
        %146 = sbr.rel (%p144) target = $region28
      $region27: #{forward.8} parent=23 // pred_region
        %p147 = scmp.lt.s32.totalorder %s16, 1
        %s148 = scalar_select %p147, %s16, 1
        %p149 = scmp.lt.s32.totalorder %s17, 0
        %s150 = scalar_select %p149, %s17, 0
        %s151 = smul.addr %s150, 18
        %s152 = smul.addr %s148, 18
        %s153 = sadd.s32 %s151, %s152
        %s154 = smul.addr %s153, 2
        %s155 = scalar_lea.vmem %s0, %s154
      $region28: #{forward.8} parent=23 // pred_fallthru
        _
    $region24: #{forward.8} parent=5 // pred_fallthru
      _
    %p156 = scmp.le.s32.totalorder 1, %s9
    %p157 = scmp.lt.s32.totalorder %s9, 3
    %p158 = pnand %p156, %p157
    %p159 = pneg %p158
    // Predicated region
    $region29: #{forward.8} parent=5 // pred_check
      _
    $region30: #{forward.8} parent=5 // pred_check_branch
      %161 = sbr.rel (%p158) target = $region32
    $region31: #{forward.8} parent=5 // pred_region
      %s162 = ssub.s32 %s9, 1
      %p163 = scmp.lt.s32.totalorder %s18, 1
      %s164 = scalar_select %p163, %s18, 1
      %p165 = scmp.lt.s32.totalorder %s19, 0
      %s166 = scalar_select %p165, %s19, 0
      %s167 = smul.addr %s166, 18
      %s168 = smul.addr %s164, 18
      %s169 = sadd.s32 %s167, %s168
      %s170 = smul.addr %s169, 2
      %s171 = scalar_lea.vmem %s0, %s170
      %p172 = pneg %p49
      %p173 = pneg %p46
      %p174 = pneg %p70
      %p175 = pneg %p67
      %p176 = pneg %p91
      %p177 = pneg %p88
      %p178 = pneg %p119
      %p179 = pneg %p116
      %p180 = scmp.lt.s32.totalorder %s18, 1
      %s181 = scalar_select %p180, %s18, 1
      %p182 = scmp.lt.s32.totalorder %s19, 0
      %s183 = scalar_select %p182, %s19, 0
      %s184 = smul.addr %s181, 32
      %s185 = sadd.s32 %s183, %s184
      %s186 = smul.addr %s185, 8
      %s187 = scalar_lea.vmem %s3, %s186
      %p188 = scmp.lt.s32.totalorder %s18, 1
      %s189 = scalar_select %p188, %s18, 1
      %p190 = scmp.lt.s32.totalorder %s19, 0
      %s191 = scalar_select %p190, %s19, 0
      %s192 = smul.addr %s191, 18
      %s193 = smul.addr %s189, 18
      %s194 = sadd.s32 %s192, %s193
      %s195 = smul.addr %s194, 2
      %s196 = scalar_lea.vmem %s0, %s195
      %p197 = scmp.lt.s32.totalorder %s18, 1
      %s198 = scalar_select %p197, %s18, 1
      %p199 = scmp.lt.s32.totalorder %s19, 0
      %s200 = scalar_select %p199, %s19, 0
      %s201 = smul.addr %s198, 32
      %s202 = sadd.s32 %s200, %s201
      %s203 = smul.addr %s202, 8
      %s204 = scalar_lea.vmem %s3, %s203
      %v205 = vld [vmem:[%s196] sm:$0xff]
      %v206 = vld [vmem:[%s196 + $0x8] sm:$0xff]
      %v207 = vld [vmem:[%s196 + $0x10] sm:$0xff]
      %v208 = vld [vmem:[%s196 + $0x18] sm:$0xff]
      %v209 = vld [vmem:[%s196 + $0x20] sm:$0xf]
      %v210 = vld [vmem:[%s1] sm:$0xff]
      %v211 = vld [vmem:[%s1 + $0x8] sm:$0xff]
      %v212 = vld [vmem:[%s1 + $0x10] sm:$0xff]
      %v213 = vld [vmem:[%s1 + $0x18] sm:$0xff]
      %v214 = vld [vmem:[%s1 + $0x20] sm:$0xff]
      %v215 = vld [vmem:[%s1 + $0x28] sm:$0xff]
      %v216 = vld [vmem:[%s1 + $0x30] sm:$0xff]
      %v217 = vld [vmem:[%s1 + $0x38] sm:$0xff]
      %v218 = vld [vmem:[%s1 + $0x40] sm:$0xff]
      %v219 = vld [vmem:[%s1 + $0x48] sm:$0xff]
      %v220 = vld [vmem:[%s1 + $0x50] sm:$0xff]
      %v221 = vld [vmem:[%s1 + $0x58] sm:$0xff]
      %v222 = vld [vmem:[%s1 + $0x60] sm:$0xff]
      %v223 = vld [vmem:[%s1 + $0x68] sm:$0xff]
      %v224 = vld [vmem:[%s1 + $0x70] sm:$0xff]
      %v225 = vld [vmem:[%s1 + $0x78] sm:$0xff]
      %v226 = vld [vmem:[%s1 + $0x80] sm:$0xff]
      %v227 = vld [vmem:[%s1 + $0x88] sm:$0xff]
      %v228 = vld [vmem:[%s1 + $0x90] sm:$0xff]
      %v229 = vld [vmem:[%s1 + $0x98] sm:$0xff]
      %v230 = vld [vmem:[%s1 + $0xa0] sm:$0xff]
      %v231 = vld [vmem:[%s1 + $0xa8] sm:$0xff]
      %v232 = vld [vmem:[%s1 + $0xb0] sm:$0xff]
      %v233 = vld [vmem:[%s1 + $0xb8] sm:$0xff]
      %v234 = vld [vmem:[%s1 + $0xc0] sm:$0xff]
      %v235 = vld [vmem:[%s1 + $0xc8] sm:$0xff]
      %v236 = vld [vmem:[%s1 + $0xd0] sm:$0xff]
      %v237 = vld [vmem:[%s1 + $0xd8] sm:$0xff]
      %v238 = vld [vmem:[%s1 + $0xe0] sm:$0xff]
      %v239 = vld [vmem:[%s1 + $0xe8] sm:$0xff]
      %v240 = vld [vmem:[%s1 + $0xf0] sm:$0xff]
      %v241 = vld [vmem:[%s1 + $0xf8] sm:$0xff]
      %v242 = vld [vmem:[%s1 + $0x100] sm:$0xff]
      %v243 = vld [vmem:[%s1 + $0x108] sm:$0xff]
      %v244 = vld [vmem:[%s1 + $0x110] sm:$0xff]
      %v245 = vld [vmem:[%s1 + $0x118] sm:$0xff]
      %v246 = vld [vmem:[%s1 + $0x120] sm:$0xff]
      %v247 = vld [vmem:[%s1 + $0x128] sm:$0xff]
      %v248 = vld [vmem:[%s1 + $0x130] sm:$0xff]
      %v249 = vld [vmem:[%s1 + $0x138] sm:$0xff]
      %v250 = vld [vmem:[%s1 + $0x140] sm:$0xff]
      %v251 = vld [vmem:[%s1 + $0x148] sm:$0xff]
      %v252 = vld [vmem:[%s1 + $0x150] sm:$0xff]
      %v253 = vld [vmem:[%s1 + $0x158] sm:$0xff]
      %v254 = vld [vmem:[%s1 + $0x160] sm:$0xff]
      %v255 = vld [vmem:[%s1 + $0x168] sm:$0xff]
      %v256 = vld [vmem:[%s1 + $0x170] sm:$0xff]
      %v257 = vld [vmem:[%s1 + $0x178] sm:$0xff]
      %v258 = vld [vmem:[%s1 + $0x180] sm:$0xff]
      %v259 = vld [vmem:[%s1 + $0x188] sm:$0xff]
      %v260 = vld [vmem:[%s1 + $0x190] sm:$0xff]
      %v261 = vld [vmem:[%s1 + $0x198] sm:$0xff]
      %v262 = vld [vmem:[%s1 + $0x1a0] sm:$0xff]
      %v263 = vld [vmem:[%s1 + $0x1a8] sm:$0xff]
      %v264 = vld [vmem:[%s1 + $0x1b0] sm:$0xff]
      %v265 = vld [vmem:[%s1 + $0x1b8] sm:$0xff]
      %v266 = vld [vmem:[%s1 + $0x1c0] sm:$0xff]
      %v267 = vld [vmem:[%s1 + $0x1c8] sm:$0xff]
      %v268 = vld [vmem:[%s1 + $0x1d0] sm:$0xff]
      %v269 = vld [vmem:[%s1 + $0x1d8] sm:$0xff]
      %v270 = vld [vmem:[%s1 + $0x1e0] sm:$0xff]
      %v271 = vld [vmem:[%s1 + $0x1e8] sm:$0xff]
      %v272 = vld [vmem:[%s1 + $0x1f0] sm:$0xff]
      %v273 = vld [vmem:[%s1 + $0x1f8] sm:$0xff]
      %v274 = vld [vmem:[%s1 + $0x200] sm:$0xff]
      %v275 = vld [vmem:[%s1 + $0x208] sm:$0xff]
      %v276 = vld [vmem:[%s1 + $0x210] sm:$0xff]
      %v277 = vld [vmem:[%s1 + $0x218] sm:$0xff]
      %v278 = vld [vmem:[%s1 + $0x220] sm:$0xff]
      %v279 = vld [vmem:[%s1 + $0x228] sm:$0xff]
      %v280 = vld [vmem:[%s1 + $0x230] sm:$0xff]
      %v281 = vld [vmem:[%s1 + $0x238] sm:$0xff]
      %v282 = vld [vmem:[%s1 + $0x240] sm:$0xff]
      %v283 = vld [vmem:[%s1 + $0x248] sm:$0xff]
      %v284 = vld [vmem:[%s1 + $0x250] sm:$0xff]
      %v285 = vld [vmem:[%s1 + $0x258] sm:$0xff]
      %v286 = vld [vmem:[%s1 + $0x260] sm:$0xff]
      %v287 = vld [vmem:[%s1 + $0x268] sm:$0xff]
      %v288 = vld [vmem:[%s1 + $0x270] sm:$0xff]
      %v289 = vld [vmem:[%s1 + $0x278] sm:$0xff]
      %v290 = vld [vmem:[%s1 + $0x280] sm:$0xff]
      %v291 = vld [vmem:[%s1 + $0x288] sm:$0xff]
      %v292 = vld [vmem:[%s1 + $0x290] sm:$0xff]
      %v293 = vld [vmem:[%s1 + $0x298] sm:$0xff]
      %v294 = vld [vmem:[%s1 + $0x2a0] sm:$0xff]
      %v295 = vld [vmem:[%s1 + $0x2a8] sm:$0xff]
      %v296 = vld [vmem:[%s1 + $0x2b0] sm:$0xff]
      %v297 = vld [vmem:[%s1 + $0x2b8] sm:$0xff]
      %v298 = vld [vmem:[%s1 + $0x2c0] sm:$0xff]
      %v299 = vld [vmem:[%s1 + $0x2c8] sm:$0xff]
      %v300 = vld [vmem:[%s1 + $0x2d0] sm:$0xff]
      %v301 = vld [vmem:[%s1 + $0x2d8] sm:$0xff]
      %v302 = vld [vmem:[%s1 + $0x2e0] sm:$0xff]
      %v303 = vld [vmem:[%s1 + $0x2e8] sm:$0xff]
      %v304 = vld [vmem:[%s1 + $0x2f0] sm:$0xff]
      %v305 = vld [vmem:[%s1 + $0x2f8] sm:$0xff]
      %v306 = vld [vmem:[%s1 + $0x300] sm:$0xff]
      %v307 = vld [vmem:[%s1 + $0x308] sm:$0xff]
      %v308 = vld [vmem:[%s1 + $0x310] sm:$0xff]
      %v309 = vld [vmem:[%s1 + $0x318] sm:$0xff]
      %v310 = vld [vmem:[%s1 + $0x320] sm:$0xff]
      %v311 = vld [vmem:[%s1 + $0x328] sm:$0xff]
      %v312 = vld [vmem:[%s1 + $0x330] sm:$0xff]
      %v313 = vld [vmem:[%s1 + $0x338] sm:$0xff]
      %v314 = vld [vmem:[%s1 + $0x340] sm:$0xff]
      %v315 = vld [vmem:[%s1 + $0x348] sm:$0xff]
      %v316 = vld [vmem:[%s1 + $0x350] sm:$0xff]
      %v317 = vld [vmem:[%s1 + $0x358] sm:$0xff]
      %v318 = vld [vmem:[%s1 + $0x360] sm:$0xff]
      %v319 = vld [vmem:[%s1 + $0x368] sm:$0xff]
      %v320 = vld [vmem:[%s1 + $0x370] sm:$0xff]
      %v321 = vld [vmem:[%s1 + $0x378] sm:$0xff]
      %v322 = vld [vmem:[%s1 + $0x380] sm:$0xff]
      %v323 = vld [vmem:[%s1 + $0x388] sm:$0xff]
      %v324 = vld [vmem:[%s1 + $0x390] sm:$0xff]
      %v325 = vld [vmem:[%s1 + $0x398] sm:$0xff]
      %v326 = vld [vmem:[%s1 + $0x3a0] sm:$0xff]
      %v327 = vld [vmem:[%s1 + $0x3a8] sm:$0xff]
      %v328 = vld [vmem:[%s1 + $0x3b0] sm:$0xff]
      %v329 = vld [vmem:[%s1 + $0x3b8] sm:$0xff]
      %v330 = vld [vmem:[%s1 + $0x3c0] sm:$0xff]
      %v331 = vld [vmem:[%s1 + $0x3c8] sm:$0xff]
      %v332 = vld [vmem:[%s1 + $0x3d0] sm:$0xff]
      %v333 = vld [vmem:[%s1 + $0x3d8] sm:$0xff]
      %v334 = vld [vmem:[%s1 + $0x3e0] sm:$0xff]
      %v335 = vld [vmem:[%s1 + $0x3e8] sm:$0xff]
      %v336 = vld [vmem:[%s1 + $0x3f0] sm:$0xff]
      %v337 = vld [vmem:[%s1 + $0x3f8] sm:$0xff]
      %v338 = vld [vmem:[%s1 + $0x400] sm:$0xff]
      %v339 = vld [vmem:[%s1 + $0x408] sm:$0xff]
      %v340 = vld [vmem:[%s1 + $0x410] sm:$0xff]
      %v341 = vld [vmem:[%s1 + $0x418] sm:$0xff]
      %v342 = vld [vmem:[%s1 + $0x420] sm:$0xff]
      %v343 = vld [vmem:[%s1 + $0x428] sm:$0xff]
      %v344 = vld [vmem:[%s1 + $0x430] sm:$0xff]
      %v345 = vld [vmem:[%s1 + $0x438] sm:$0xff]
      %v346 = vld [vmem:[%s1 + $0x440] sm:$0xff]
      %v347 = vld [vmem:[%s1 + $0x448] sm:$0xff]
      %v348 = vld [vmem:[%s1 + $0x450] sm:$0xff]
      %v349 = vld [vmem:[%s1 + $0x458] sm:$0xff]
      %v350 = vld [vmem:[%s1 + $0x460] sm:$0xff]
      %v351 = vld [vmem:[%s1 + $0x468] sm:$0xff]
      %v352 = vld [vmem:[%s1 + $0x470] sm:$0xff]
      %v353 = vld [vmem:[%s1 + $0x478] sm:$0xff]
      %v354 = vld [vmem:[%s1 + $0x480] sm:$0xff]
      %v355 = vld [vmem:[%s1 + $0x488] sm:$0xff]
      %v356 = vld [vmem:[%s1 + $0x490] sm:$0xff]
      %v357 = vld [vmem:[%s1 + $0x498] sm:$0xff]
      %v358 = vld [vmem:[%s1 + $0x4a0] sm:$0xff]
      %v359 = vld [vmem:[%s1 + $0x4a8] sm:$0xff]
      %v360 = vld [vmem:[%s1 + $0x4b0] sm:$0xff]
      %v361 = vld [vmem:[%s1 + $0x4b8] sm:$0xff]
      %v362 = vld [vmem:[%s1 + $0x4c0] sm:$0xff]
      %v363 = vld [vmem:[%s1 + $0x4c8] sm:$0xff]
      %v364 = vld [vmem:[%s1 + $0x4d0] sm:$0xff]
      %v365 = vld [vmem:[%s1 + $0x4d8] sm:$0xff]
      %v366 = vld [vmem:[%s1 + $0x4e0] sm:$0xff]
      %v367 = vld [vmem:[%s1 + $0x4e8] sm:$0xff]
      %v368 = vld [vmem:[%s1 + $0x4f0] sm:$0xff]
      %v369 = vld [vmem:[%s1 + $0x4f8] sm:$0xff]
      %v370 = vld [vmem:[%s1 + $0x500] sm:$0xff]
      %v371 = vld [vmem:[%s1 + $0x508] sm:$0xff]
      %v372 = vld [vmem:[%s1 + $0x510] sm:$0xff]
      %v373 = vld [vmem:[%s1 + $0x518] sm:$0xff]
      %v374 = vld [vmem:[%s1 + $0x520] sm:$0xff]
      %v375 = vld [vmem:[%s1 + $0x528] sm:$0xff]
      %v376 = vld [vmem:[%s1 + $0x530] sm:$0xff]
      %v377 = vld [vmem:[%s1 + $0x538] sm:$0xff]
      %v378 = vld [vmem:[%s1 + $0x540] sm:$0xff]
      %v379 = vld [vmem:[%s1 + $0x548] sm:$0xff]
      %v380 = vld [vmem:[%s1 + $0x550] sm:$0xff]
      %v381 = vld [vmem:[%s1 + $0x558] sm:$0xff]
      %v382 = vld [vmem:[%s1 + $0x560] sm:$0xff]
      %v383 = vld [vmem:[%s1 + $0x568] sm:$0xff]
      %v384 = vld [vmem:[%s1 + $0x570] sm:$0xff]
      %v385 = vld [vmem:[%s1 + $0x578] sm:$0xff]
      %v386 = vld [vmem:[%s1 + $0x580] sm:$0xff]
      %v387 = vld [vmem:[%s1 + $0x588] sm:$0xff]
      %v388 = vld [vmem:[%s1 + $0x590] sm:$0xff]
      %v389 = vld [vmem:[%s1 + $0x598] sm:$0xff]
      %v390 = vld [vmem:[%s1 + $0x5a0] sm:$0xff]
      %v391 = vld [vmem:[%s1 + $0x5a8] sm:$0xff]
      %v392 = vld [vmem:[%s1 + $0x5b0] sm:$0xff]
      %v393 = vld [vmem:[%s1 + $0x5b8] sm:$0xff]
      %v394 = vld [vmem:[%s1 + $0x5c0] sm:$0xff]
      %v395 = vld [vmem:[%s1 + $0x5c8] sm:$0xff]
      %v396 = vld [vmem:[%s1 + $0x5d0] sm:$0xff]
      %v397 = vld [vmem:[%s1 + $0x5d8] sm:$0xff]
      %v398 = vld [vmem:[%s1 + $0x5e0] sm:$0xff]
      %v399 = vld [vmem:[%s1 + $0x5e8] sm:$0xff]
      %v400 = vld [vmem:[%s1 + $0x5f0] sm:$0xff]
      %v401 = vld [vmem:[%s1 + $0x5f8] sm:$0xff]
      %v402 = vld [vmem:[%s1 + $0x600] sm:$0xff]
      %v403 = vld [vmem:[%s1 + $0x608] sm:$0xff]
      %v404 = vld [vmem:[%s1 + $0x610] sm:$0xff]
      %v405 = vld [vmem:[%s1 + $0x618] sm:$0xff]
      %v406 = vld [vmem:[%s1 + $0x620] sm:$0xff]
      %v407 = vld [vmem:[%s1 + $0x628] sm:$0xff]
      %v408 = vld [vmem:[%s1 + $0x630] sm:$0xff]
      %v409 = vld [vmem:[%s1 + $0x638] sm:$0xff]
      %v410 = vld [vmem:[%s1 + $0x640] sm:$0xff]
      %v411 = vld [vmem:[%s1 + $0x648] sm:$0xff]
      %v412 = vld [vmem:[%s1 + $0x650] sm:$0xff]
      %v413 = vld [vmem:[%s1 + $0x658] sm:$0xff]
      %v414 = vld [vmem:[%s1 + $0x660] sm:$0xff]
      %v415 = vld [vmem:[%s1 + $0x668] sm:$0xff]
      %v416 = vld [vmem:[%s1 + $0x670] sm:$0xff]
      %v417 = vld [vmem:[%s1 + $0x678] sm:$0xff]
      %v418 = vld [vmem:[%s1 + $0x680] sm:$0xff]
      %v419 = vld [vmem:[%s1 + $0x688] sm:$0xff]
      %v420 = vld [vmem:[%s1 + $0x690] sm:$0xff]
      %v421 = vld [vmem:[%s1 + $0x698] sm:$0xff]
      %v422 = vld [vmem:[%s1 + $0x6a0] sm:$0xff]
      %v423 = vld [vmem:[%s1 + $0x6a8] sm:$0xff]
      %v424 = vld [vmem:[%s1 + $0x6b0] sm:$0xff]
      %v425 = vld [vmem:[%s1 + $0x6b8] sm:$0xff]
      %v426 = vld [vmem:[%s1 + $0x6c0] sm:$0xff]
      %v427 = vld [vmem:[%s1 + $0x6c8] sm:$0xff]
      %v428 = vld [vmem:[%s1 + $0x6d0] sm:$0xff]
      %v429 = vld [vmem:[%s1 + $0x6d8] sm:$0xff]
      %v430 = vld [vmem:[%s1 + $0x6e0] sm:$0xff]
      %v431 = vld [vmem:[%s1 + $0x6e8] sm:$0xff]
      %v432 = vld [vmem:[%s1 + $0x6f0] sm:$0xff]
      %v433 = vld [vmem:[%s1 + $0x6f8] sm:$0xff]
      %v434 = vld [vmem:[%s1 + $0x700] sm:$0xff]
      %v435 = vld [vmem:[%s1 + $0x708] sm:$0xff]
      %v436 = vld [vmem:[%s1 + $0x710] sm:$0xff]
      %v437 = vld [vmem:[%s1 + $0x718] sm:$0xff]
      %v438 = vld [vmem:[%s1 + $0x720] sm:$0xff]
      %v439 = vld [vmem:[%s1 + $0x728] sm:$0xff]
      %v440 = vld [vmem:[%s1 + $0x730] sm:$0xff]
      %v441 = vld [vmem:[%s1 + $0x738] sm:$0xff]
      %v442 = vld [vmem:[%s1 + $0x740] sm:$0xff]
      %v443 = vld [vmem:[%s1 + $0x748] sm:$0xff]
      %v444 = vld [vmem:[%s1 + $0x750] sm:$0xff]
      %v445 = vld [vmem:[%s1 + $0x758] sm:$0xff]
      %v446 = vld [vmem:[%s1 + $0x760] sm:$0xff]
      %v447 = vld [vmem:[%s1 + $0x768] sm:$0xff]
      %v448 = vld [vmem:[%s1 + $0x770] sm:$0xff]
      %v449 = vld [vmem:[%s1 + $0x778] sm:$0xff]
      %v450 = vld [vmem:[%s1 + $0x780] sm:$0xff]
      %v451 = vld [vmem:[%s1 + $0x788] sm:$0xff]
      %v452 = vld [vmem:[%s1 + $0x790] sm:$0xff]
      %v453 = vld [vmem:[%s1 + $0x798] sm:$0xff]
      %v454 = vld [vmem:[%s1 + $0x7a0] sm:$0xff]
      %v455 = vld [vmem:[%s1 + $0x7a8] sm:$0xff]
      %v456 = vld [vmem:[%s1 + $0x7b0] sm:$0xff]
      %v457 = vld [vmem:[%s1 + $0x7b8] sm:$0xff]
      %v458 = vld [vmem:[%s1 + $0x7c0] sm:$0xff]
      %v459 = vld [vmem:[%s1 + $0x7c8] sm:$0xff]
      %v460 = vld [vmem:[%s1 + $0x7d0] sm:$0xff]
      %v461 = vld [vmem:[%s1 + $0x7d8] sm:$0xff]
      %v462 = vld [vmem:[%s1 + $0x7e0] sm:$0xff]
      %v463 = vld [vmem:[%s1 + $0x7e8] sm:$0xff]
      %v464 = vld [vmem:[%s1 + $0x7f0] sm:$0xff]
      %v465 = vld [vmem:[%s1 + $0x7f8] sm:$0xff]
      %v466 = vld [vmem:[%s1 + $0x800] sm:$0xff]
      %v467 = vld [vmem:[%s1 + $0x808] sm:$0xff]
      %v468 = vld [vmem:[%s1 + $0x810] sm:$0xff]
      %v469 = vld [vmem:[%s1 + $0x818] sm:$0xff]
      %v470 = vld [vmem:[%s1 + $0x820] sm:$0xff]
      %v471 = vld [vmem:[%s1 + $0x828] sm:$0xff]
      %v472 = vld [vmem:[%s1 + $0x830] sm:$0xff]
      %v473 = vld [vmem:[%s1 + $0x838] sm:$0xff]
      %v474 = vld [vmem:[%s1 + $0x840] sm:$0xff]
      %v475 = vld [vmem:[%s1 + $0x848] sm:$0xff]
      %v476 = vld [vmem:[%s1 + $0x850] sm:$0xff]
      %v477 = vld [vmem:[%s1 + $0x858] sm:$0xff]
      %v478 = vld [vmem:[%s1 + $0x860] sm:$0xff]
      %v479 = vld [vmem:[%s1 + $0x868] sm:$0xff]
      %v480 = vld [vmem:[%s1 + $0x870] sm:$0xff]
      %v481 = vld [vmem:[%s1 + $0x878] sm:$0xff]
      %v482 = vld [vmem:[%s1 + $0x880] sm:$0xff]
      %v483 = vld [vmem:[%s1 + $0x888] sm:$0xff]
      %v484 = vld [vmem:[%s1 + $0x890] sm:$0xff]
      %v485 = vld [vmem:[%s1 + $0x898] sm:$0xff]
      %v486 = vld [vmem:[%s1 + $0x8a0] sm:$0xff]
      %v487 = vld [vmem:[%s1 + $0x8a8] sm:$0xff]
      %v488 = vld [vmem:[%s1 + $0x8b0] sm:$0xff]
      %v489 = vld [vmem:[%s1 + $0x8b8] sm:$0xff]
      %v490 = vld [vmem:[%s1 + $0x8c0] sm:$0xff]
      %v491 = vld [vmem:[%s1 + $0x8c8] sm:$0xff]
      %v492 = vld [vmem:[%s1 + $0x8d0] sm:$0xff]
      %v493 = vld [vmem:[%s1 + $0x8d8] sm:$0xff]
      %v494 = vld [vmem:[%s1 + $0x8e0] sm:$0xff]
      %v495 = vld [vmem:[%s1 + $0x8e8] sm:$0xff]
      %v496 = vld [vmem:[%s1 + $0x8f0] sm:$0xff]
      %v497 = vld [vmem:[%s1 + $0x8f8] sm:$0xff]
      %v498 = vld [vmem:[%s2] sm:$0x3]
      %v500 = vlaneseq
      %v501 = vshrl.u32 %v500, 7
      %v502 = vsub.s32 0, %v501
      %v503 = vrot.slane %v498, %v502
      %v504 = vlaneseq
      %v505 = vshrl.u32 %v504, 7
      %v506 = vsub.s32 1, %v505
      %v507 = vrot.slane %v498, %v506
      %v515 = vcombine.high %v205, %v205
      %v517 = vunpack.c.l.s4 1983009808
      %v518 = vunpack.c.0.s8 %v517
      %v519 = vlaneseq
      %v520 = vshrl.u32 %v519, 7
      %v521 = vsub.s32 %v518, %v520
      %v522 = vrot.slane %v205, %v521
      %v524 = vunpack.c.l.s4 1983009808
      %v525 = vunpack.c.0.s8 %v524
      %v526 = vlaneseq
      %v527 = vshrl.u32 %v526, 7
      %v528 = vsub.s32 %v525, %v527
      %v529 = vrot.slane %v515, %v528
      %v530 = vcombine.high %v522, %v522
      %v531 = vcombine.high %v529, %v529
      %v532 = vcombine.high %v206, %v206
      %v534 = vunpack.c.l.s4 1983009808
      %v535 = vunpack.c.0.s8 %v534
      %v536 = vlaneseq
      %v537 = vshrl.u32 %v536, 7
      %v538 = vsub.s32 %v535, %v537
      %v539 = vrot.slane %v206, %v538
      %v541 = vunpack.c.l.s4 1983009808
      %v542 = vunpack.c.0.s8 %v541
      %v543 = vlaneseq
      %v544 = vshrl.u32 %v543, 7
      %v545 = vsub.s32 %v542, %v544
      %v546 = vrot.slane %v532, %v545
      %v547 = vcombine.high %v539, %v539
      %v548 = vcombine.high %v546, %v546
      %v549 = vcombine.high %v207, %v207
      %v551 = vunpack.c.l.s4 1983009808
      %v552 = vunpack.c.0.s8 %v551
      %v553 = vlaneseq
      %v554 = vshrl.u32 %v553, 7
      %v555 = vsub.s32 %v552, %v554
      %v556 = vrot.slane %v207, %v555
      %v558 = vunpack.c.l.s4 1983009808
      %v559 = vunpack.c.0.s8 %v558
      %v560 = vlaneseq
      %v561 = vshrl.u32 %v560, 7
      %v562 = vsub.s32 %v559, %v561
      %v563 = vrot.slane %v549, %v562
      %v564 = vcombine.high %v556, %v556
      %v565 = vcombine.high %v563, %v563
      %v566 = vcombine.high %v208, %v208
      %v568 = vunpack.c.l.s4 1983009808
      %v569 = vunpack.c.0.s8 %v568
      %v570 = vlaneseq
      %v571 = vshrl.u32 %v570, 7
      %v572 = vsub.s32 %v569, %v571
      %v573 = vrot.slane %v208, %v572
      %v575 = vunpack.c.l.s4 1983009808
      %v576 = vunpack.c.0.s8 %v575
      %v577 = vlaneseq
      %v578 = vshrl.u32 %v577, 7
      %v579 = vsub.s32 %v576, %v578
      %v580 = vrot.slane %v566, %v579
      %v581 = vcombine.high %v573, %v573
      %v582 = vcombine.high %v580, %v580
      %v584 = vunpack.c.l.s4 1983009808
      %v585 = vunpack.c.0.s8 %v584
      %v586 = vlaneseq
      %v587 = vshrl.u32 %v586, 7
      %v588 = vsub.s32 %v585, %v587
      %v589 = vrot.slane %v209, %v588
      %v590 = vcombine.high %v589, %v589
      %v897 = vunpack.c.l.b16 %v210
      %v898 = vunpack.c.h.b16 %v210
      %v899 = vunpack.c.l.b16 %v211
      %v900 = vunpack.c.h.b16 %v211
      %v901 = vunpack.c.l.b16 %v212
      %v902 = vunpack.c.h.b16 %v212
      %v903 = vunpack.c.l.b16 %v213
      %v904 = vunpack.c.h.b16 %v213
      %v905 = vunpack.c.l.b16 %v214
      %v906 = vunpack.c.h.b16 %v214
      %v907 = vunpack.c.l.b16 %v215
      %v908 = vunpack.c.h.b16 %v215
      %v909 = vunpack.c.l.b16 %v216
      %v910 = vunpack.c.h.b16 %v216
      %v911 = vunpack.c.l.b16 %v217
      %v912 = vunpack.c.h.b16 %v217
      %v913 = vunpack.c.l.b16 %v218
      %v914 = vunpack.c.h.b16 %v218
      %v915 = vunpack.c.l.b16 %v219
      %v916 = vunpack.c.h.b16 %v219
      %v917 = vunpack.c.l.b16 %v220
      %v918 = vunpack.c.h.b16 %v220
      %v919 = vunpack.c.l.b16 %v221
      %v920 = vunpack.c.h.b16 %v221
      %v921 = vunpack.c.l.b16 %v222
      %v922 = vunpack.c.h.b16 %v222
      %v923 = vunpack.c.l.b16 %v223
      %v924 = vunpack.c.h.b16 %v223
      %v925 = vunpack.c.l.b16 %v224
      %v926 = vunpack.c.h.b16 %v224
      %v927 = vunpack.c.l.b16 %v225
      %v928 = vunpack.c.h.b16 %v225
      %v929 = vunpack.c.l.b16 %v226
      %v930 = vunpack.c.h.b16 %v226
      %v931 = vunpack.c.l.b16 %v227
      %v932 = vunpack.c.h.b16 %v227
      %v933 = vunpack.c.l.b16 %v228
      %v934 = vunpack.c.h.b16 %v228
      %v935 = vunpack.c.l.b16 %v229
      %v936 = vunpack.c.h.b16 %v229
      %v937 = vunpack.c.l.b16 %v230
      %v938 = vunpack.c.h.b16 %v230
      %v939 = vunpack.c.l.b16 %v231
      %v940 = vunpack.c.h.b16 %v231
      %v941 = vunpack.c.l.b16 %v232
      %v942 = vunpack.c.h.b16 %v232
      %v943 = vunpack.c.l.b16 %v233
      %v944 = vunpack.c.h.b16 %v233
      %v945 = vunpack.c.l.b16 %v234
      %v946 = vunpack.c.h.b16 %v234
      %v947 = vunpack.c.l.b16 %v235
      %v948 = vunpack.c.h.b16 %v235
      %v949 = vunpack.c.l.b16 %v236
      %v950 = vunpack.c.h.b16 %v236
      %v951 = vunpack.c.l.b16 %v237
      %v952 = vunpack.c.h.b16 %v237
      %v953 = vunpack.c.l.b16 %v238
      %v954 = vunpack.c.h.b16 %v238
      %v955 = vunpack.c.l.b16 %v239
      %v956 = vunpack.c.h.b16 %v239
      %v957 = vunpack.c.l.b16 %v240
      %v958 = vunpack.c.h.b16 %v240
      %v959 = vunpack.c.l.b16 %v241
      %v960 = vunpack.c.h.b16 %v241
      %v961 = vunpack.c.l.b16 %v242
      %v962 = vunpack.c.h.b16 %v242
      %v963 = vunpack.c.l.b16 %v243
      %v964 = vunpack.c.h.b16 %v243
      %v965 = vunpack.c.l.b16 %v244
      %v966 = vunpack.c.h.b16 %v244
      %v967 = vunpack.c.l.b16 %v245
      %v968 = vunpack.c.h.b16 %v245
      %v969 = vunpack.c.l.b16 %v246
      %v970 = vunpack.c.h.b16 %v246
      %v971 = vunpack.c.l.b16 %v247
      %v972 = vunpack.c.h.b16 %v247
      %v973 = vunpack.c.l.b16 %v248
      %v974 = vunpack.c.h.b16 %v248
      %v975 = vunpack.c.l.b16 %v249
      %v976 = vunpack.c.h.b16 %v249
      %v977 = vunpack.c.l.b16 %v250
      %v978 = vunpack.c.h.b16 %v250
      %v979 = vunpack.c.l.b16 %v251
      %v980 = vunpack.c.h.b16 %v251
      %v981 = vunpack.c.l.b16 %v252
      %v982 = vunpack.c.h.b16 %v252
      %v983 = vunpack.c.l.b16 %v253
      %v984 = vunpack.c.h.b16 %v253
      %v985 = vunpack.c.l.b16 %v254
      %v986 = vunpack.c.h.b16 %v254
      %v987 = vunpack.c.l.b16 %v255
      %v988 = vunpack.c.h.b16 %v255
      %v989 = vunpack.c.l.b16 %v256
      %v990 = vunpack.c.h.b16 %v256
      %v991 = vunpack.c.l.b16 %v257
      %v992 = vunpack.c.h.b16 %v257
      %v993 = vunpack.c.l.b16 %v258
      %v994 = vunpack.c.h.b16 %v258
      %v995 = vunpack.c.l.b16 %v259
      %v996 = vunpack.c.h.b16 %v259
      %v997 = vunpack.c.l.b16 %v260
      %v998 = vunpack.c.h.b16 %v260
      %v999 = vunpack.c.l.b16 %v261
      %v1000 = vunpack.c.h.b16 %v261
      %v1001 = vunpack.c.l.b16 %v262
      %v1002 = vunpack.c.h.b16 %v262
      %v1003 = vunpack.c.l.b16 %v263
      %v1004 = vunpack.c.h.b16 %v263
      %v1005 = vunpack.c.l.b16 %v264
      %v1006 = vunpack.c.h.b16 %v264
      %v1007 = vunpack.c.l.b16 %v265
      %v1008 = vunpack.c.h.b16 %v265
      %v1009 = vunpack.c.l.b16 %v266
      %v1010 = vunpack.c.h.b16 %v266
      %v1011 = vunpack.c.l.b16 %v267
      %v1012 = vunpack.c.h.b16 %v267
      %v1013 = vunpack.c.l.b16 %v268
      %v1014 = vunpack.c.h.b16 %v268
      %v1015 = vunpack.c.l.b16 %v269
      %v1016 = vunpack.c.h.b16 %v269
      %v1017 = vunpack.c.l.b16 %v270
      %v1018 = vunpack.c.h.b16 %v270
      %v1019 = vunpack.c.l.b16 %v271
      %v1020 = vunpack.c.h.b16 %v271
      %v1021 = vunpack.c.l.b16 %v272
      %v1022 = vunpack.c.h.b16 %v272
      %v1023 = vunpack.c.l.b16 %v273
      %v1024 = vunpack.c.h.b16 %v273
      %v1025 = vunpack.c.l.b16 %v274
      %v1026 = vunpack.c.h.b16 %v274
      %v1027 = vunpack.c.l.b16 %v275
      %v1028 = vunpack.c.h.b16 %v275
      %v1029 = vunpack.c.l.b16 %v276
      %v1030 = vunpack.c.h.b16 %v276
      %v1031 = vunpack.c.l.b16 %v277
      %v1032 = vunpack.c.h.b16 %v277
      %v1033 = vunpack.c.l.b16 %v278
      %v1034 = vunpack.c.h.b16 %v278
      %v1035 = vunpack.c.l.b16 %v279
      %v1036 = vunpack.c.h.b16 %v279
      %v1037 = vunpack.c.l.b16 %v280
      %v1038 = vunpack.c.h.b16 %v280
      %v1039 = vunpack.c.l.b16 %v281
      %v1040 = vunpack.c.h.b16 %v281
      %v1041 = vunpack.c.l.b16 %v282
      %v1042 = vunpack.c.h.b16 %v282
      %v1043 = vunpack.c.l.b16 %v283
      %v1044 = vunpack.c.h.b16 %v283
      %v1045 = vunpack.c.l.b16 %v284
      %v1046 = vunpack.c.h.b16 %v284
      %v1047 = vunpack.c.l.b16 %v285
      %v1048 = vunpack.c.h.b16 %v285
      %v1049 = vunpack.c.l.b16 %v286
      %v1050 = vunpack.c.h.b16 %v286
      %v1051 = vunpack.c.l.b16 %v287
      %v1052 = vunpack.c.h.b16 %v287
      %v1053 = vunpack.c.l.b16 %v288
      %v1054 = vunpack.c.h.b16 %v288
      %v1055 = vunpack.c.l.b16 %v289
      %v1056 = vunpack.c.h.b16 %v289
      %v1057 = vunpack.c.l.b16 %v290
      %v1058 = vunpack.c.h.b16 %v290
      %v1059 = vunpack.c.l.b16 %v291
      %v1060 = vunpack.c.h.b16 %v291
      %v1061 = vunpack.c.l.b16 %v292
      %v1062 = vunpack.c.h.b16 %v292
      %v1063 = vunpack.c.l.b16 %v293
      %v1064 = vunpack.c.h.b16 %v293
      %v1065 = vunpack.c.l.b16 %v294
      %v1066 = vunpack.c.h.b16 %v294
      %v1067 = vunpack.c.l.b16 %v295
      %v1068 = vunpack.c.h.b16 %v295
      %v1069 = vunpack.c.l.b16 %v296
      %v1070 = vunpack.c.h.b16 %v296
      %v1071 = vunpack.c.l.b16 %v297
      %v1072 = vunpack.c.h.b16 %v297
      %v1073 = vunpack.c.l.b16 %v298
      %v1074 = vunpack.c.h.b16 %v298
      %v1075 = vunpack.c.l.b16 %v299
      %v1076 = vunpack.c.h.b16 %v299
      %v1077 = vunpack.c.l.b16 %v300
      %v1078 = vunpack.c.h.b16 %v300
      %v1079 = vunpack.c.l.b16 %v301
      %v1080 = vunpack.c.h.b16 %v301
      %v1081 = vunpack.c.l.b16 %v302
      %v1082 = vunpack.c.h.b16 %v302
      %v1083 = vunpack.c.l.b16 %v303
      %v1084 = vunpack.c.h.b16 %v303
      %v1085 = vunpack.c.l.b16 %v304
      %v1086 = vunpack.c.h.b16 %v304
      %v1087 = vunpack.c.l.b16 %v305
      %v1088 = vunpack.c.h.b16 %v305
      %v1089 = vunpack.c.l.b16 %v306
      %v1090 = vunpack.c.h.b16 %v306
      %v1091 = vunpack.c.l.b16 %v307
      %v1092 = vunpack.c.h.b16 %v307
      %v1093 = vunpack.c.l.b16 %v308
      %v1094 = vunpack.c.h.b16 %v308
      %v1095 = vunpack.c.l.b16 %v309
      %v1096 = vunpack.c.h.b16 %v309
      %v1097 = vunpack.c.l.b16 %v310
      %v1098 = vunpack.c.h.b16 %v310
      %v1099 = vunpack.c.l.b16 %v311
      %v1100 = vunpack.c.h.b16 %v311
      %v1101 = vunpack.c.l.b16 %v312
      %v1102 = vunpack.c.h.b16 %v312
      %v1103 = vunpack.c.l.b16 %v313
      %v1104 = vunpack.c.h.b16 %v313
      %v1105 = vunpack.c.l.b16 %v314
      %v1106 = vunpack.c.h.b16 %v314
      %v1107 = vunpack.c.l.b16 %v315
      %v1108 = vunpack.c.h.b16 %v315
      %v1109 = vunpack.c.l.b16 %v316
      %v1110 = vunpack.c.h.b16 %v316
      %v1111 = vunpack.c.l.b16 %v317
      %v1112 = vunpack.c.h.b16 %v317
      %v1113 = vunpack.c.l.b16 %v318
      %v1114 = vunpack.c.h.b16 %v318
      %v1115 = vunpack.c.l.b16 %v319
      %v1116 = vunpack.c.h.b16 %v319
      %v1117 = vunpack.c.l.b16 %v320
      %v1118 = vunpack.c.h.b16 %v320
      %v1119 = vunpack.c.l.b16 %v321
      %v1120 = vunpack.c.h.b16 %v321
      %v1121 = vunpack.c.l.b16 %v322
      %v1122 = vunpack.c.h.b16 %v322
      %v1123 = vunpack.c.l.b16 %v323
      %v1124 = vunpack.c.h.b16 %v323
      %v1125 = vunpack.c.l.b16 %v324
      %v1126 = vunpack.c.h.b16 %v324
      %v1127 = vunpack.c.l.b16 %v325
      %v1128 = vunpack.c.h.b16 %v325
      %v1129 = vunpack.c.l.b16 %v326
      %v1130 = vunpack.c.h.b16 %v326
      %v1131 = vunpack.c.l.b16 %v327
      %v1132 = vunpack.c.h.b16 %v327
      %v1133 = vunpack.c.l.b16 %v328
      %v1134 = vunpack.c.h.b16 %v328
      %v1135 = vunpack.c.l.b16 %v329
      %v1136 = vunpack.c.h.b16 %v329
      %v1137 = vunpack.c.l.b16 %v330
      %v1138 = vunpack.c.h.b16 %v330
      %v1139 = vunpack.c.l.b16 %v331
      %v1140 = vunpack.c.h.b16 %v331
      %v1141 = vunpack.c.l.b16 %v332
      %v1142 = vunpack.c.h.b16 %v332
      %v1143 = vunpack.c.l.b16 %v333
      %v1144 = vunpack.c.h.b16 %v333
      %v1145 = vunpack.c.l.b16 %v334
      %v1146 = vunpack.c.h.b16 %v334
      %v1147 = vunpack.c.l.b16 %v335
      %v1148 = vunpack.c.h.b16 %v335
      %v1149 = vunpack.c.l.b16 %v336
      %v1150 = vunpack.c.h.b16 %v336
      %v1151 = vunpack.c.l.b16 %v337
      %v1152 = vunpack.c.h.b16 %v337
      %v1153 = vunpack.c.l.b16 %v338
      %v1154 = vunpack.c.h.b16 %v338
      %v1155 = vunpack.c.l.b16 %v339
      %v1156 = vunpack.c.h.b16 %v339
      %v1157 = vunpack.c.l.b16 %v340
      %v1158 = vunpack.c.h.b16 %v340
      %v1159 = vunpack.c.l.b16 %v341
      %v1160 = vunpack.c.h.b16 %v341
      %v1161 = vunpack.c.l.b16 %v342
      %v1162 = vunpack.c.h.b16 %v342
      %v1163 = vunpack.c.l.b16 %v343
      %v1164 = vunpack.c.h.b16 %v343
      %v1165 = vunpack.c.l.b16 %v344
      %v1166 = vunpack.c.h.b16 %v344
      %v1167 = vunpack.c.l.b16 %v345
      %v1168 = vunpack.c.h.b16 %v345
      %v1169 = vunpack.c.l.b16 %v346
      %v1170 = vunpack.c.h.b16 %v346
      %v1171 = vunpack.c.l.b16 %v347
      %v1172 = vunpack.c.h.b16 %v347
      %v1173 = vunpack.c.l.b16 %v348
      %v1174 = vunpack.c.h.b16 %v348
      %v1175 = vunpack.c.l.b16 %v349
      %v1176 = vunpack.c.h.b16 %v349
      %v1177 = vunpack.c.l.b16 %v350
      %v1178 = vunpack.c.h.b16 %v350
      %v1179 = vunpack.c.l.b16 %v351
      %v1180 = vunpack.c.h.b16 %v351
      %v1181 = vunpack.c.l.b16 %v352
      %v1182 = vunpack.c.h.b16 %v352
      %v1183 = vunpack.c.l.b16 %v353
      %v1184 = vunpack.c.h.b16 %v353
      %v1185 = vunpack.c.l.b16 %v354
      %v1186 = vunpack.c.h.b16 %v354
      %v1187 = vunpack.c.l.b16 %v355
      %v1188 = vunpack.c.h.b16 %v355
      %v1189 = vunpack.c.l.b16 %v356
      %v1190 = vunpack.c.h.b16 %v356
      %v1191 = vunpack.c.l.b16 %v357
      %v1192 = vunpack.c.h.b16 %v357
      %v1193 = vunpack.c.l.b16 %v358
      %v1194 = vunpack.c.h.b16 %v358
      %v1195 = vunpack.c.l.b16 %v359
      %v1196 = vunpack.c.h.b16 %v359
      %v1197 = vunpack.c.l.b16 %v360
      %v1198 = vunpack.c.h.b16 %v360
      %v1199 = vunpack.c.l.b16 %v361
      %v1200 = vunpack.c.h.b16 %v361
      %v1201 = vunpack.c.l.b16 %v362
      %v1202 = vunpack.c.h.b16 %v362
      %v1203 = vunpack.c.l.b16 %v363
      %v1204 = vunpack.c.h.b16 %v363
      %v1205 = vunpack.c.l.b16 %v364
      %v1206 = vunpack.c.h.b16 %v364
      %v1207 = vunpack.c.l.b16 %v365
      %v1208 = vunpack.c.h.b16 %v365
      %v1209 = vunpack.c.l.b16 %v366
      %v1210 = vunpack.c.h.b16 %v366
      %v1211 = vunpack.c.l.b16 %v367
      %v1212 = vunpack.c.h.b16 %v367
      %v1213 = vunpack.c.l.b16 %v368
      %v1214 = vunpack.c.h.b16 %v368
      %v1215 = vunpack.c.l.b16 %v369
      %v1216 = vunpack.c.h.b16 %v369
      %v1217 = vunpack.c.l.b16 %v370
      %v1218 = vunpack.c.h.b16 %v370
      %v1219 = vunpack.c.l.b16 %v371
      %v1220 = vunpack.c.h.b16 %v371
      %v1221 = vunpack.c.l.b16 %v372
      %v1222 = vunpack.c.h.b16 %v372
      %v1223 = vunpack.c.l.b16 %v373
      %v1224 = vunpack.c.h.b16 %v373
      %v1225 = vunpack.c.l.b16 %v374
      %v1226 = vunpack.c.h.b16 %v374
      %v1227 = vunpack.c.l.b16 %v375
      %v1228 = vunpack.c.h.b16 %v375
      %v1229 = vunpack.c.l.b16 %v376
      %v1230 = vunpack.c.h.b16 %v376
      %v1231 = vunpack.c.l.b16 %v377
      %v1232 = vunpack.c.h.b16 %v377
      %v1233 = vunpack.c.l.b16 %v378
      %v1234 = vunpack.c.h.b16 %v378
      %v1235 = vunpack.c.l.b16 %v379
      %v1236 = vunpack.c.h.b16 %v379
      %v1237 = vunpack.c.l.b16 %v380
      %v1238 = vunpack.c.h.b16 %v380
      %v1239 = vunpack.c.l.b16 %v381
      %v1240 = vunpack.c.h.b16 %v381
      %v1241 = vunpack.c.l.b16 %v382
      %v1242 = vunpack.c.h.b16 %v382
      %v1243 = vunpack.c.l.b16 %v383
      %v1244 = vunpack.c.h.b16 %v383
      %v1245 = vunpack.c.l.b16 %v384
      %v1246 = vunpack.c.h.b16 %v384
      %v1247 = vunpack.c.l.b16 %v385
      %v1248 = vunpack.c.h.b16 %v385
      %v1249 = vunpack.c.l.b16 %v386
      %v1250 = vunpack.c.h.b16 %v386
      %v1251 = vunpack.c.l.b16 %v387
      %v1252 = vunpack.c.h.b16 %v387
      %v1253 = vunpack.c.l.b16 %v388
      %v1254 = vunpack.c.h.b16 %v388
      %v1255 = vunpack.c.l.b16 %v389
      %v1256 = vunpack.c.h.b16 %v389
      %v1257 = vunpack.c.l.b16 %v390
      %v1258 = vunpack.c.h.b16 %v390
      %v1259 = vunpack.c.l.b16 %v391
      %v1260 = vunpack.c.h.b16 %v391
      %v1261 = vunpack.c.l.b16 %v392
      %v1262 = vunpack.c.h.b16 %v392
      %v1263 = vunpack.c.l.b16 %v393
      %v1264 = vunpack.c.h.b16 %v393
      %v1265 = vunpack.c.l.b16 %v394
      %v1266 = vunpack.c.h.b16 %v394
      %v1267 = vunpack.c.l.b16 %v395
      %v1268 = vunpack.c.h.b16 %v395
      %v1269 = vunpack.c.l.b16 %v396
      %v1270 = vunpack.c.h.b16 %v396
      %v1271 = vunpack.c.l.b16 %v397
      %v1272 = vunpack.c.h.b16 %v397
      %v1273 = vunpack.c.l.b16 %v398
      %v1274 = vunpack.c.h.b16 %v398
      %v1275 = vunpack.c.l.b16 %v399
      %v1276 = vunpack.c.h.b16 %v399
      %v1277 = vunpack.c.l.b16 %v400
      %v1278 = vunpack.c.h.b16 %v400
      %v1279 = vunpack.c.l.b16 %v401
      %v1280 = vunpack.c.h.b16 %v401
      %v1281 = vunpack.c.l.b16 %v402
      %v1282 = vunpack.c.h.b16 %v402
      %v1283 = vunpack.c.l.b16 %v403
      %v1284 = vunpack.c.h.b16 %v403
      %v1285 = vunpack.c.l.b16 %v404
      %v1286 = vunpack.c.h.b16 %v404
      %v1287 = vunpack.c.l.b16 %v405
      %v1288 = vunpack.c.h.b16 %v405
      %v1289 = vunpack.c.l.b16 %v406
      %v1290 = vunpack.c.h.b16 %v406
      %v1291 = vunpack.c.l.b16 %v407
      %v1292 = vunpack.c.h.b16 %v407
      %v1293 = vunpack.c.l.b16 %v408
      %v1294 = vunpack.c.h.b16 %v408
      %v1295 = vunpack.c.l.b16 %v409
      %v1296 = vunpack.c.h.b16 %v409
      %v1297 = vunpack.c.l.b16 %v410
      %v1298 = vunpack.c.h.b16 %v410
      %v1299 = vunpack.c.l.b16 %v411
      %v1300 = vunpack.c.h.b16 %v411
      %v1301 = vunpack.c.l.b16 %v412
      %v1302 = vunpack.c.h.b16 %v412
      %v1303 = vunpack.c.l.b16 %v413
      %v1304 = vunpack.c.h.b16 %v413
      %v1305 = vunpack.c.l.b16 %v414
      %v1306 = vunpack.c.h.b16 %v414
      %v1307 = vunpack.c.l.b16 %v415
      %v1308 = vunpack.c.h.b16 %v415
      %v1309 = vunpack.c.l.b16 %v416
      %v1310 = vunpack.c.h.b16 %v416
      %v1311 = vunpack.c.l.b16 %v417
      %v1312 = vunpack.c.h.b16 %v417
      %v1313 = vunpack.c.l.b16 %v418
      %v1314 = vunpack.c.h.b16 %v418
      %v1315 = vunpack.c.l.b16 %v419
      %v1316 = vunpack.c.h.b16 %v419
      %v1317 = vunpack.c.l.b16 %v420
      %v1318 = vunpack.c.h.b16 %v420
      %v1319 = vunpack.c.l.b16 %v421
      %v1320 = vunpack.c.h.b16 %v421
      %v1321 = vunpack.c.l.b16 %v422
      %v1322 = vunpack.c.h.b16 %v422
      %v1323 = vunpack.c.l.b16 %v423
      %v1324 = vunpack.c.h.b16 %v423
      %v1325 = vunpack.c.l.b16 %v424
      %v1326 = vunpack.c.h.b16 %v424
      %v1327 = vunpack.c.l.b16 %v425
      %v1328 = vunpack.c.h.b16 %v425
      %v1329 = vunpack.c.l.b16 %v426
      %v1330 = vunpack.c.h.b16 %v426
      %v1331 = vunpack.c.l.b16 %v427
      %v1332 = vunpack.c.h.b16 %v427
      %v1333 = vunpack.c.l.b16 %v428
      %v1334 = vunpack.c.h.b16 %v428
      %v1335 = vunpack.c.l.b16 %v429
      %v1336 = vunpack.c.h.b16 %v429
      %v1337 = vunpack.c.l.b16 %v430
      %v1338 = vunpack.c.h.b16 %v430
      %v1339 = vunpack.c.l.b16 %v431
      %v1340 = vunpack.c.h.b16 %v431
      %v1341 = vunpack.c.l.b16 %v432
      %v1342 = vunpack.c.h.b16 %v432
      %v1343 = vunpack.c.l.b16 %v433
      %v1344 = vunpack.c.h.b16 %v433
      %v1345 = vunpack.c.l.b16 %v434
      %v1346 = vunpack.c.h.b16 %v434
      %v1347 = vunpack.c.l.b16 %v435
      %v1348 = vunpack.c.h.b16 %v435
      %v1349 = vunpack.c.l.b16 %v436
      %v1350 = vunpack.c.h.b16 %v436
      %v1351 = vunpack.c.l.b16 %v437
      %v1352 = vunpack.c.h.b16 %v437
      %v1353 = vunpack.c.l.b16 %v438
      %v1354 = vunpack.c.h.b16 %v438
      %v1355 = vunpack.c.l.b16 %v439
      %v1356 = vunpack.c.h.b16 %v439
      %v1357 = vunpack.c.l.b16 %v440
      %v1358 = vunpack.c.h.b16 %v440
      %v1359 = vunpack.c.l.b16 %v441
      %v1360 = vunpack.c.h.b16 %v441
      %v1361 = vunpack.c.l.b16 %v442
      %v1362 = vunpack.c.h.b16 %v442
      %v1363 = vunpack.c.l.b16 %v443
      %v1364 = vunpack.c.h.b16 %v443
      %v1365 = vunpack.c.l.b16 %v444
      %v1366 = vunpack.c.h.b16 %v444
      %v1367 = vunpack.c.l.b16 %v445
      %v1368 = vunpack.c.h.b16 %v445
      %v1369 = vunpack.c.l.b16 %v446
      %v1370 = vunpack.c.h.b16 %v446
      %v1371 = vunpack.c.l.b16 %v447
      %v1372 = vunpack.c.h.b16 %v447
      %v1373 = vunpack.c.l.b16 %v448
      %v1374 = vunpack.c.h.b16 %v448
      %v1375 = vunpack.c.l.b16 %v449
      %v1376 = vunpack.c.h.b16 %v449
      %v1377 = vunpack.c.l.b16 %v450
      %v1378 = vunpack.c.h.b16 %v450
      %v1379 = vunpack.c.l.b16 %v451
      %v1380 = vunpack.c.h.b16 %v451
      %v1381 = vunpack.c.l.b16 %v452
      %v1382 = vunpack.c.h.b16 %v452
      %v1383 = vunpack.c.l.b16 %v453
      %v1384 = vunpack.c.h.b16 %v453
      %v1385 = vunpack.c.l.b16 %v454
      %v1386 = vunpack.c.h.b16 %v454
      %v1387 = vunpack.c.l.b16 %v455
      %v1388 = vunpack.c.h.b16 %v455
      %v1389 = vunpack.c.l.b16 %v456
      %v1390 = vunpack.c.h.b16 %v456
      %v1391 = vunpack.c.l.b16 %v457
      %v1392 = vunpack.c.h.b16 %v457
      %v1393 = vunpack.c.l.b16 %v458
      %v1394 = vunpack.c.h.b16 %v458
      %v1395 = vunpack.c.l.b16 %v459
      %v1396 = vunpack.c.h.b16 %v459
      %v1397 = vunpack.c.l.b16 %v460
      %v1398 = vunpack.c.h.b16 %v460
      %v1399 = vunpack.c.l.b16 %v461
      %v1400 = vunpack.c.h.b16 %v461
      %v1401 = vunpack.c.l.b16 %v462
      %v1402 = vunpack.c.h.b16 %v462
      %v1403 = vunpack.c.l.b16 %v463
      %v1404 = vunpack.c.h.b16 %v463
      %v1405 = vunpack.c.l.b16 %v464
      %v1406 = vunpack.c.h.b16 %v464
      %v1407 = vunpack.c.l.b16 %v465
      %v1408 = vunpack.c.h.b16 %v465
      %v1409 = vunpack.c.l.b16 %v466
      %v1410 = vunpack.c.h.b16 %v466
      %v1411 = vunpack.c.l.b16 %v467
      %v1412 = vunpack.c.h.b16 %v467
      %v1413 = vunpack.c.l.b16 %v468
      %v1414 = vunpack.c.h.b16 %v468
      %v1415 = vunpack.c.l.b16 %v469
      %v1416 = vunpack.c.h.b16 %v469
      %v1417 = vunpack.c.l.b16 %v470
      %v1418 = vunpack.c.h.b16 %v470
      %v1419 = vunpack.c.l.b16 %v471
      %v1420 = vunpack.c.h.b16 %v471
      %v1421 = vunpack.c.l.b16 %v472
      %v1422 = vunpack.c.h.b16 %v472
      %v1423 = vunpack.c.l.b16 %v473
      %v1424 = vunpack.c.h.b16 %v473
      %v1425 = vunpack.c.l.b16 %v474
      %v1426 = vunpack.c.h.b16 %v474
      %v1427 = vunpack.c.l.b16 %v475
      %v1428 = vunpack.c.h.b16 %v475
      %v1429 = vunpack.c.l.b16 %v476
      %v1430 = vunpack.c.h.b16 %v476
      %v1431 = vunpack.c.l.b16 %v477
      %v1432 = vunpack.c.h.b16 %v477
      %v1433 = vunpack.c.l.b16 %v478
      %v1434 = vunpack.c.h.b16 %v478
      %v1435 = vunpack.c.l.b16 %v479
      %v1436 = vunpack.c.h.b16 %v479
      %v1437 = vunpack.c.l.b16 %v480
      %v1438 = vunpack.c.h.b16 %v480
      %v1439 = vunpack.c.l.b16 %v481
      %v1440 = vunpack.c.h.b16 %v481
      %v1441 = vunpack.c.l.b16 %v482
      %v1442 = vunpack.c.h.b16 %v482
      %v1443 = vunpack.c.l.b16 %v483
      %v1444 = vunpack.c.h.b16 %v483
      %v1445 = vunpack.c.l.b16 %v484
      %v1446 = vunpack.c.h.b16 %v484
      %v1447 = vunpack.c.l.b16 %v485
      %v1448 = vunpack.c.h.b16 %v485
      %v1449 = vunpack.c.l.b16 %v486
      %v1450 = vunpack.c.h.b16 %v486
      %v1451 = vunpack.c.l.b16 %v487
      %v1452 = vunpack.c.h.b16 %v487
      %v1453 = vunpack.c.l.b16 %v488
      %v1454 = vunpack.c.h.b16 %v488
      %v1455 = vunpack.c.l.b16 %v489
      %v1456 = vunpack.c.h.b16 %v489
      %v1457 = vunpack.c.l.b16 %v490
      %v1458 = vunpack.c.h.b16 %v490
      %v1459 = vunpack.c.l.b16 %v491
      %v1460 = vunpack.c.h.b16 %v491
      %v1461 = vunpack.c.l.b16 %v492
      %v1462 = vunpack.c.h.b16 %v492
      %v1463 = vunpack.c.l.b16 %v493
      %v1464 = vunpack.c.h.b16 %v493
      %v1465 = vunpack.c.l.b16 %v494
      %v1466 = vunpack.c.h.b16 %v494
      %v1467 = vunpack.c.l.b16 %v495
      %v1468 = vunpack.c.h.b16 %v495
      %v1469 = vunpack.c.l.b16 %v496
      %v1470 = vunpack.c.h.b16 %v496
      %v1471 = vunpack.c.l.b16 %v497
      %v1472 = vunpack.c.h.b16 %v497
      %v1473 = vpack.c.b16 %v899, %v897
      %v1474 = vpack.c.b16 %v900, %v898
      %v1475 = vpack.c.b16 %v903, %v901
      %v1476 = vpack.c.b16 %v904, %v902
      %v1477 = vpack.c.b16 %v907, %v905
      %v1478 = vpack.c.b16 %v908, %v906
      %v1479 = vpack.c.b16 %v911, %v909
      %v1480 = vpack.c.b16 %v912, %v910
      %v1481 = vpack.c.b16 %v915, %v913
      %v1482 = vpack.c.b16 %v916, %v914
      %v1483 = vpack.c.b16 %v919, %v917
      %v1484 = vpack.c.b16 %v920, %v918
      %v1485 = vpack.c.b16 %v923, %v921
      %v1486 = vpack.c.b16 %v924, %v922
      %v1487 = vpack.c.b16 %v927, %v925
      %v1488 = vpack.c.b16 %v928, %v926
      %v1489 = vpack.c.b16 %v931, %v929
      %v1490 = vpack.c.b16 %v932, %v930
      %v1491 = vpack.c.b16 %v935, %v933
      %v1492 = vpack.c.b16 %v936, %v934
      %v1493 = vpack.c.b16 %v939, %v937
      %v1494 = vpack.c.b16 %v940, %v938
      %v1495 = vpack.c.b16 %v943, %v941
      %v1496 = vpack.c.b16 %v944, %v942
      %v1497 = vpack.c.b16 %v947, %v945
      %v1498 = vpack.c.b16 %v948, %v946
      %v1499 = vpack.c.b16 %v951, %v949
      %v1500 = vpack.c.b16 %v952, %v950
      %v1501 = vpack.c.b16 %v955, %v953
      %v1502 = vpack.c.b16 %v956, %v954
      %v1503 = vpack.c.b16 %v959, %v957
      %v1504 = vpack.c.b16 %v960, %v958
      %v1505 = vpack.c.b16 %v963, %v961
      %v1506 = vpack.c.b16 %v964, %v962
      %v1507 = vpack.c.b16 %v967, %v965
      %v1508 = vpack.c.b16 %v968, %v966
      %v1509 = vpack.c.b16 %v971, %v969
      %v1510 = vpack.c.b16 %v972, %v970
      %v1511 = vpack.c.b16 %v975, %v973
      %v1512 = vpack.c.b16 %v976, %v974
      %v1513 = vpack.c.b16 %v979, %v977
      %v1514 = vpack.c.b16 %v980, %v978
      %v1515 = vpack.c.b16 %v983, %v981
      %v1516 = vpack.c.b16 %v984, %v982
      %v1517 = vpack.c.b16 %v987, %v985
      %v1518 = vpack.c.b16 %v988, %v986
      %v1519 = vpack.c.b16 %v991, %v989
      %v1520 = vpack.c.b16 %v992, %v990
      %v1521 = vpack.c.b16 %v995, %v993
      %v1522 = vpack.c.b16 %v996, %v994
      %v1523 = vpack.c.b16 %v999, %v997
      %v1524 = vpack.c.b16 %v1000, %v998
      %v1525 = vpack.c.b16 %v1003, %v1001
      %v1526 = vpack.c.b16 %v1004, %v1002
      %v1527 = vpack.c.b16 %v1007, %v1005
      %v1528 = vpack.c.b16 %v1008, %v1006
      %v1529 = vpack.c.b16 %v1011, %v1009
      %v1530 = vpack.c.b16 %v1012, %v1010
      %v1531 = vpack.c.b16 %v1015, %v1013
      %v1532 = vpack.c.b16 %v1016, %v1014
      %v1533 = vpack.c.b16 %v1019, %v1017
      %v1534 = vpack.c.b16 %v1020, %v1018
      %v1535 = vpack.c.b16 %v1023, %v1021
      %v1536 = vpack.c.b16 %v1024, %v1022
      %v1537 = vpack.c.b16 %v1027, %v1025
      %v1538 = vpack.c.b16 %v1028, %v1026
      %v1539 = vpack.c.b16 %v1031, %v1029
      %v1540 = vpack.c.b16 %v1032, %v1030
      %v1541 = vpack.c.b16 %v1035, %v1033
      %v1542 = vpack.c.b16 %v1036, %v1034
      %v1543 = vpack.c.b16 %v1039, %v1037
      %v1544 = vpack.c.b16 %v1040, %v1038
      %v1545 = vpack.c.b16 %v1043, %v1041
      %v1546 = vpack.c.b16 %v1044, %v1042
      %v1547 = vpack.c.b16 %v1047, %v1045
      %v1548 = vpack.c.b16 %v1048, %v1046
      %v1549 = vpack.c.b16 %v1051, %v1049
      %v1550 = vpack.c.b16 %v1052, %v1050
      %v1551 = vpack.c.b16 %v1055, %v1053
      %v1552 = vpack.c.b16 %v1056, %v1054
      %v1553 = vpack.c.b16 %v1059, %v1057
      %v1554 = vpack.c.b16 %v1060, %v1058
      %v1555 = vpack.c.b16 %v1063, %v1061
      %v1556 = vpack.c.b16 %v1064, %v1062
      %v1557 = vpack.c.b16 %v1067, %v1065
      %v1558 = vpack.c.b16 %v1068, %v1066
      %v1559 = vpack.c.b16 %v1071, %v1069
      %v1560 = vpack.c.b16 %v1072, %v1070
      %v1561 = vpack.c.b16 %v1075, %v1073
      %v1562 = vpack.c.b16 %v1076, %v1074
      %v1563 = vpack.c.b16 %v1079, %v1077
      %v1564 = vpack.c.b16 %v1080, %v1078
      %v1565 = vpack.c.b16 %v1083, %v1081
      %v1566 = vpack.c.b16 %v1084, %v1082
      %v1567 = vpack.c.b16 %v1087, %v1085
      %v1568 = vpack.c.b16 %v1088, %v1086
      %v1569 = vpack.c.b16 %v1091, %v1089
      %v1570 = vpack.c.b16 %v1092, %v1090
      %v1571 = vpack.c.b16 %v1095, %v1093
      %v1572 = vpack.c.b16 %v1096, %v1094
      %v1573 = vpack.c.b16 %v1099, %v1097
      %v1574 = vpack.c.b16 %v1100, %v1098
      %v1575 = vpack.c.b16 %v1103, %v1101
      %v1576 = vpack.c.b16 %v1104, %v1102
      %v1577 = vpack.c.b16 %v1107, %v1105
      %v1578 = vpack.c.b16 %v1108, %v1106
      %v1579 = vpack.c.b16 %v1111, %v1109
      %v1580 = vpack.c.b16 %v1112, %v1110
      %v1581 = vpack.c.b16 %v1115, %v1113
      %v1582 = vpack.c.b16 %v1116, %v1114
      %v1583 = vpack.c.b16 %v1119, %v1117
      %v1584 = vpack.c.b16 %v1120, %v1118
      %v1585 = vpack.c.b16 %v1123, %v1121
      %v1586 = vpack.c.b16 %v1124, %v1122
      %v1587 = vpack.c.b16 %v1127, %v1125
      %v1588 = vpack.c.b16 %v1128, %v1126
      %v1589 = vpack.c.b16 %v1131, %v1129
      %v1590 = vpack.c.b16 %v1132, %v1130
      %v1591 = vpack.c.b16 %v1135, %v1133
      %v1592 = vpack.c.b16 %v1136, %v1134
      %v1593 = vpack.c.b16 %v1139, %v1137
      %v1594 = vpack.c.b16 %v1140, %v1138
      %v1595 = vpack.c.b16 %v1143, %v1141
      %v1596 = vpack.c.b16 %v1144, %v1142
      %v1597 = vpack.c.b16 %v1147, %v1145
      %v1598 = vpack.c.b16 %v1148, %v1146
      %v1599 = vpack.c.b16 %v1151, %v1149
      %v1600 = vpack.c.b16 %v1152, %v1150
      %v1601 = vpack.c.b16 %v1155, %v1153
      %v1602 = vpack.c.b16 %v1156, %v1154
      %v1603 = vpack.c.b16 %v1159, %v1157
      %v1604 = vpack.c.b16 %v1160, %v1158
      %v1605 = vpack.c.b16 %v1163, %v1161
      %v1606 = vpack.c.b16 %v1164, %v1162
      %v1607 = vpack.c.b16 %v1167, %v1165
      %v1608 = vpack.c.b16 %v1168, %v1166
      %v1609 = vpack.c.b16 %v1171, %v1169
      %v1610 = vpack.c.b16 %v1172, %v1170
      %v1611 = vpack.c.b16 %v1175, %v1173
      %v1612 = vpack.c.b16 %v1176, %v1174
      %v1613 = vpack.c.b16 %v1179, %v1177
      %v1614 = vpack.c.b16 %v1180, %v1178
      %v1615 = vpack.c.b16 %v1183, %v1181
      %v1616 = vpack.c.b16 %v1184, %v1182
      %v1617 = vpack.c.b16 %v1187, %v1185
      %v1618 = vpack.c.b16 %v1188, %v1186
      %v1619 = vpack.c.b16 %v1191, %v1189
      %v1620 = vpack.c.b16 %v1192, %v1190
      %v1621 = vpack.c.b16 %v1195, %v1193
      %v1622 = vpack.c.b16 %v1196, %v1194
      %v1623 = vpack.c.b16 %v1199, %v1197
      %v1624 = vpack.c.b16 %v1200, %v1198
      %v1625 = vpack.c.b16 %v1203, %v1201
      %v1626 = vpack.c.b16 %v1204, %v1202
      %v1627 = vpack.c.b16 %v1207, %v1205
      %v1628 = vpack.c.b16 %v1208, %v1206
      %v1629 = vpack.c.b16 %v1211, %v1209
      %v1630 = vpack.c.b16 %v1212, %v1210
      %v1631 = vpack.c.b16 %v1215, %v1213
      %v1632 = vpack.c.b16 %v1216, %v1214
      %v1633 = vpack.c.b16 %v1219, %v1217
      %v1634 = vpack.c.b16 %v1220, %v1218
      %v1635 = vpack.c.b16 %v1223, %v1221
      %v1636 = vpack.c.b16 %v1224, %v1222
      %v1637 = vpack.c.b16 %v1227, %v1225
      %v1638 = vpack.c.b16 %v1228, %v1226
      %v1639 = vpack.c.b16 %v1231, %v1229
      %v1640 = vpack.c.b16 %v1232, %v1230
      %v1641 = vpack.c.b16 %v1235, %v1233
      %v1642 = vpack.c.b16 %v1236, %v1234
      %v1643 = vpack.c.b16 %v1239, %v1237
      %v1644 = vpack.c.b16 %v1240, %v1238
      %v1645 = vpack.c.b16 %v1243, %v1241
      %v1646 = vpack.c.b16 %v1244, %v1242
      %v1647 = vpack.c.b16 %v1247, %v1245
      %v1648 = vpack.c.b16 %v1248, %v1246
      %v1649 = vpack.c.b16 %v1251, %v1249
      %v1650 = vpack.c.b16 %v1252, %v1250
      %v1651 = vpack.c.b16 %v1255, %v1253
      %v1652 = vpack.c.b16 %v1256, %v1254
      %v1653 = vpack.c.b16 %v1259, %v1257
      %v1654 = vpack.c.b16 %v1260, %v1258
      %v1655 = vpack.c.b16 %v1263, %v1261
      %v1656 = vpack.c.b16 %v1264, %v1262
      %v1657 = vpack.c.b16 %v1267, %v1265
      %v1658 = vpack.c.b16 %v1268, %v1266
      %v1659 = vpack.c.b16 %v1271, %v1269
      %v1660 = vpack.c.b16 %v1272, %v1270
      %v1661 = vpack.c.b16 %v1275, %v1273
      %v1662 = vpack.c.b16 %v1276, %v1274
      %v1663 = vpack.c.b16 %v1279, %v1277
      %v1664 = vpack.c.b16 %v1280, %v1278
      %v1665 = vpack.c.b16 %v1283, %v1281
      %v1666 = vpack.c.b16 %v1284, %v1282
      %v1667 = vpack.c.b16 %v1287, %v1285
      %v1668 = vpack.c.b16 %v1288, %v1286
      %v1669 = vpack.c.b16 %v1291, %v1289
      %v1670 = vpack.c.b16 %v1292, %v1290
      %v1671 = vpack.c.b16 %v1295, %v1293
      %v1672 = vpack.c.b16 %v1296, %v1294
      %v1673 = vpack.c.b16 %v1299, %v1297
      %v1674 = vpack.c.b16 %v1300, %v1298
      %v1675 = vpack.c.b16 %v1303, %v1301
      %v1676 = vpack.c.b16 %v1304, %v1302
      %v1677 = vpack.c.b16 %v1307, %v1305
      %v1678 = vpack.c.b16 %v1308, %v1306
      %v1679 = vpack.c.b16 %v1311, %v1309
      %v1680 = vpack.c.b16 %v1312, %v1310
      %v1681 = vpack.c.b16 %v1315, %v1313
      %v1682 = vpack.c.b16 %v1316, %v1314
      %v1683 = vpack.c.b16 %v1319, %v1317
      %v1684 = vpack.c.b16 %v1320, %v1318
      %v1685 = vpack.c.b16 %v1323, %v1321
      %v1686 = vpack.c.b16 %v1324, %v1322
      %v1687 = vpack.c.b16 %v1327, %v1325
      %v1688 = vpack.c.b16 %v1328, %v1326
      %v1689 = vpack.c.b16 %v1331, %v1329
      %v1690 = vpack.c.b16 %v1332, %v1330
      %v1691 = vpack.c.b16 %v1335, %v1333
      %v1692 = vpack.c.b16 %v1336, %v1334
      %v1693 = vpack.c.b16 %v1339, %v1337
      %v1694 = vpack.c.b16 %v1340, %v1338
      %v1695 = vpack.c.b16 %v1343, %v1341
      %v1696 = vpack.c.b16 %v1344, %v1342
      %v1697 = vpack.c.b16 %v1347, %v1345
      %v1698 = vpack.c.b16 %v1348, %v1346
      %v1699 = vpack.c.b16 %v1351, %v1349
      %v1700 = vpack.c.b16 %v1352, %v1350
      %v1701 = vpack.c.b16 %v1355, %v1353
      %v1702 = vpack.c.b16 %v1356, %v1354
      %v1703 = vpack.c.b16 %v1359, %v1357
      %v1704 = vpack.c.b16 %v1360, %v1358
      %v1705 = vpack.c.b16 %v1363, %v1361
      %v1706 = vpack.c.b16 %v1364, %v1362
      %v1707 = vpack.c.b16 %v1367, %v1365
      %v1708 = vpack.c.b16 %v1368, %v1366
      %v1709 = vpack.c.b16 %v1371, %v1369
      %v1710 = vpack.c.b16 %v1372, %v1370
      %v1711 = vpack.c.b16 %v1375, %v1373
      %v1712 = vpack.c.b16 %v1376, %v1374
      %v1713 = vpack.c.b16 %v1379, %v1377
      %v1714 = vpack.c.b16 %v1380, %v1378
      %v1715 = vpack.c.b16 %v1383, %v1381
      %v1716 = vpack.c.b16 %v1384, %v1382
      %v1717 = vpack.c.b16 %v1387, %v1385
      %v1718 = vpack.c.b16 %v1388, %v1386
      %v1719 = vpack.c.b16 %v1391, %v1389
      %v1720 = vpack.c.b16 %v1392, %v1390
      %v1721 = vpack.c.b16 %v1395, %v1393
      %v1722 = vpack.c.b16 %v1396, %v1394
      %v1723 = vpack.c.b16 %v1399, %v1397
      %v1724 = vpack.c.b16 %v1400, %v1398
      %v1725 = vpack.c.b16 %v1403, %v1401
      %v1726 = vpack.c.b16 %v1404, %v1402
      %v1727 = vpack.c.b16 %v1407, %v1405
      %v1728 = vpack.c.b16 %v1408, %v1406
      %v1729 = vpack.c.b16 %v1411, %v1409
      %v1730 = vpack.c.b16 %v1412, %v1410
      %v1731 = vpack.c.b16 %v1415, %v1413
      %v1732 = vpack.c.b16 %v1416, %v1414
      %v1733 = vpack.c.b16 %v1419, %v1417
      %v1734 = vpack.c.b16 %v1420, %v1418
      %v1735 = vpack.c.b16 %v1423, %v1421
      %v1736 = vpack.c.b16 %v1424, %v1422
      %v1737 = vpack.c.b16 %v1427, %v1425
      %v1738 = vpack.c.b16 %v1428, %v1426
      %v1739 = vpack.c.b16 %v1431, %v1429
      %v1740 = vpack.c.b16 %v1432, %v1430
      %v1741 = vpack.c.b16 %v1435, %v1433
      %v1742 = vpack.c.b16 %v1436, %v1434
      %v1743 = vpack.c.b16 %v1439, %v1437
      %v1744 = vpack.c.b16 %v1440, %v1438
      %v1745 = vpack.c.b16 %v1443, %v1441
      %v1746 = vpack.c.b16 %v1444, %v1442
      %v1747 = vpack.c.b16 %v1447, %v1445
      %v1748 = vpack.c.b16 %v1448, %v1446
      %v1749 = vpack.c.b16 %v1451, %v1449
      %v1750 = vpack.c.b16 %v1452, %v1450
      %v1751 = vpack.c.b16 %v1455, %v1453
      %v1752 = vpack.c.b16 %v1456, %v1454
      %v1753 = vpack.c.b16 %v1459, %v1457
      %v1754 = vpack.c.b16 %v1460, %v1458
      %v1755 = vpack.c.b16 %v1463, %v1461
      %v1756 = vpack.c.b16 %v1464, %v1462
      %v1757 = vpack.c.b16 %v1467, %v1465
      %v1758 = vpack.c.b16 %v1468, %v1466
      %v1759 = vpack.c.b16 %v1471, %v1469
      %v1760 = vpack.c.b16 %v1472, %v1470
      %2049 = vmatprep.subr.bf16.mxu0 %v1474
      %2050 = vmatpush1.bf16.msra.mxu0 %v1473
      %2051 = vmatprep.subr.bf16.mxu0 %v1476
      %2052 = vmatpush1.bf16.msra.mxu0 %v1475
      %2053 = vmatprep.subr.bf16.mxu0 %v1478
      %2054 = vmatpush1.bf16.msra.mxu0 %v1477
      %2055 = vmatprep.subr.bf16.mxu0 %v1480
      %2056 = vmatpush1.bf16.msra.mxu0 %v1479
      %2057 = vmatprep.subr.bf16.mxu0 %v1482
      %2058 = vmatpush1.bf16.msra.mxu0 %v1481
      %2059 = vmatprep.subr.bf16.mxu0 %v1484
      %2060 = vmatpush1.bf16.msra.mxu0 %v1483
      %2061 = vmatprep.subr.bf16.mxu0 %v1486
      %2062 = vmatpush1.bf16.msra.mxu0 %v1485
      %2063 = vmatprep.subr.bf16.mxu0 %v1488
      %2064 = vmatpush1.bf16.msra.mxu0 %v1487
      %2065 = vmatprep.subr.bf16.mxu0 %v1490
      %2066 = vmatpush1.bf16.msra.mxu0 %v1489
      %2067 = vmatprep.subr.bf16.mxu0 %v1492
      %2068 = vmatpush1.bf16.msra.mxu0 %v1491
      %2069 = vmatprep.subr.bf16.mxu0 %v1494
      %2070 = vmatpush1.bf16.msra.mxu0 %v1493
      %2071 = vmatprep.subr.bf16.mxu0 %v1496
      %2072 = vmatpush1.bf16.msra.mxu0 %v1495
      %2073 = vmatprep.subr.bf16.mxu0 %v1498
      %2074 = vmatpush1.bf16.msra.mxu0 %v1497
      %2075 = vmatprep.subr.bf16.mxu0 %v1500
      %2076 = vmatpush1.bf16.msra.mxu0 %v1499
      %2077 = vmatprep.subr.bf16.mxu0 %v1502
      %2078 = vmatpush1.bf16.msra.mxu0 %v1501
      %2079 = vmatprep.subr.bf16.mxu0 %v1504
      %2080 = vmatpush1.bf16.msra.mxu0 %v1503
      %2081 = vmatprep.mubr.bf16.mxu0 %v530
      %2082 = vmatmul.mubr.bf16.gmra.mrb[0].mxu0 %v522
      %v2083 = vpop.f32.mrb[0].mxu0
      %v2084 = vadd.f32 %v503, %v2083
      %v2085 = vpop.f32.mrb[0].mxu0
      %v2086 = vadd.f32 %v507, %v2085
      %v2087 = vpop.f32.mrb[0].mxu0
      %v2088 = vpop.f32.mrb[0].mxu0
      %2089 = vdwg.mxu0
      %2090 = vmatprep.subr.bf16.mxu0 %v1506
      %2091 = vmatpush1.bf16.msra.mxu0 %v1505
      %2092 = vmatprep.subr.bf16.mxu0 %v1508
      %2093 = vmatpush1.bf16.msra.mxu0 %v1507
      %2094 = vmatprep.subr.bf16.mxu0 %v1510
      %2095 = vmatpush1.bf16.msra.mxu0 %v1509
      %2096 = vmatprep.subr.bf16.mxu0 %v1512
      %2097 = vmatpush1.bf16.msra.mxu0 %v1511
      %2098 = vmatprep.subr.bf16.mxu0 %v1514
      %2099 = vmatpush1.bf16.msra.mxu0 %v1513
      %2100 = vmatprep.subr.bf16.mxu0 %v1516
      %2101 = vmatpush1.bf16.msra.mxu0 %v1515
      %2102 = vmatprep.subr.bf16.mxu0 %v1518
      %2103 = vmatpush1.bf16.msra.mxu0 %v1517
      %2104 = vmatprep.subr.bf16.mxu0 %v1520
      %2105 = vmatpush1.bf16.msra.mxu0 %v1519
      %2106 = vmatprep.subr.bf16.mxu0 %v1522
      %2107 = vmatpush1.bf16.msra.mxu0 %v1521
      %2108 = vmatprep.subr.bf16.mxu0 %v1524
      %2109 = vmatpush1.bf16.msra.mxu0 %v1523
      %2110 = vmatprep.subr.bf16.mxu0 %v1526
      %2111 = vmatpush1.bf16.msra.mxu0 %v1525
      %2112 = vmatprep.subr.bf16.mxu0 %v1528
      %2113 = vmatpush1.bf16.msra.mxu0 %v1527
      %2114 = vmatprep.subr.bf16.mxu0 %v1530
      %2115 = vmatpush1.bf16.msra.mxu0 %v1529
      %2116 = vmatprep.subr.bf16.mxu0 %v1532
      %2117 = vmatpush1.bf16.msra.mxu0 %v1531
      %2118 = vmatprep.subr.bf16.mxu0 %v1534
      %2119 = vmatpush1.bf16.msra.mxu0 %v1533
      %2120 = vmatprep.subr.bf16.mxu0 %v1536
      %2121 = vmatpush1.bf16.msra.mxu0 %v1535
      %2122 = vmatprep.mubr.bf16.mxu0 %v531
      %2123 = vmatmul.mubr.bf16.gmra.mrb[0].mxu0 %v529
      %v2124 = vpop.f32.mrb[0].mxu0
      %v2125 = vadd.f32 %v2084, %v2124
      %v2126 = vpop.f32.mrb[0].mxu0
      %v2127 = vadd.f32 %v2086, %v2126
      %v2128 = vpop.f32.mrb[0].mxu0
      %v2129 = vpop.f32.mrb[0].mxu0
      %2130 = vdwg.mxu0
      %2131 = vmatprep.subr.bf16.mxu0 %v1538
      %2132 = vmatpush1.bf16.msra.mxu0 %v1537
      %2133 = vmatprep.subr.bf16.mxu0 %v1540
      %2134 = vmatpush1.bf16.msra.mxu0 %v1539
      %2135 = vmatprep.subr.bf16.mxu0 %v1542
      %2136 = vmatpush1.bf16.msra.mxu0 %v1541
      %2137 = vmatprep.subr.bf16.mxu0 %v1544
      %2138 = vmatpush1.bf16.msra.mxu0 %v1543
      %2139 = vmatprep.subr.bf16.mxu0 %v1546
      %2140 = vmatpush1.bf16.msra.mxu0 %v1545
      %2141 = vmatprep.subr.bf16.mxu0 %v1548
      %2142 = vmatpush1.bf16.msra.mxu0 %v1547
      %2143 = vmatprep.subr.bf16.mxu0 %v1550
      %2144 = vmatpush1.bf16.msra.mxu0 %v1549
      %2145 = vmatprep.subr.bf16.mxu0 %v1552
      %2146 = vmatpush1.bf16.msra.mxu0 %v1551
      %2147 = vmatprep.subr.bf16.mxu0 %v1554
      %2148 = vmatpush1.bf16.msra.mxu0 %v1553
      %2149 = vmatprep.subr.bf16.mxu0 %v1556
      %2150 = vmatpush1.bf16.msra.mxu0 %v1555
      %2151 = vmatprep.subr.bf16.mxu0 %v1558
      %2152 = vmatpush1.bf16.msra.mxu0 %v1557
      %2153 = vmatprep.subr.bf16.mxu0 %v1560
      %2154 = vmatpush1.bf16.msra.mxu0 %v1559
      %2155 = vmatprep.subr.bf16.mxu0 %v1562
      %2156 = vmatpush1.bf16.msra.mxu0 %v1561
      %2157 = vmatprep.subr.bf16.mxu0 %v1564
      %2158 = vmatpush1.bf16.msra.mxu0 %v1563
      %2159 = vmatprep.subr.bf16.mxu0 %v1566
      %2160 = vmatpush1.bf16.msra.mxu0 %v1565
      %2161 = vmatprep.subr.bf16.mxu0 %v1568
      %2162 = vmatpush1.bf16.msra.mxu0 %v1567
      %2163 = vmatprep.mubr.bf16.mxu0 %v547
      %2164 = vmatmul.mubr.bf16.gmra.mrb[0].mxu0 %v539
      %v2165 = vpop.f32.mrb[0].mxu0
      %v2166 = vadd.f32 %v2125, %v2165
      %v2167 = vpop.f32.mrb[0].mxu0
      %v2168 = vadd.f32 %v2127, %v2167
      %v2169 = vpop.f32.mrb[0].mxu0
      %v2170 = vpop.f32.mrb[0].mxu0
      %2171 = vdwg.mxu0
      %2172 = vmatprep.subr.bf16.mxu0 %v1570
      %2173 = vmatpush1.bf16.msra.mxu0 %v1569
      %2174 = vmatprep.subr.bf16.mxu0 %v1572
      %2175 = vmatpush1.bf16.msra.mxu0 %v1571
      %2176 = vmatprep.subr.bf16.mxu0 %v1574
      %2177 = vmatpush1.bf16.msra.mxu0 %v1573
      %2178 = vmatprep.subr.bf16.mxu0 %v1576
      %2179 = vmatpush1.bf16.msra.mxu0 %v1575
      %2180 = vmatprep.subr.bf16.mxu0 %v1578
      %2181 = vmatpush1.bf16.msra.mxu0 %v1577
      %2182 = vmatprep.subr.bf16.mxu0 %v1580
      %2183 = vmatpush1.bf16.msra.mxu0 %v1579
      %2184 = vmatprep.subr.bf16.mxu0 %v1582
      %2185 = vmatpush1.bf16.msra.mxu0 %v1581
      %2186 = vmatprep.subr.bf16.mxu0 %v1584
      %2187 = vmatpush1.bf16.msra.mxu0 %v1583
      %2188 = vmatprep.subr.bf16.mxu0 %v1586
      %2189 = vmatpush1.bf16.msra.mxu0 %v1585
      %2190 = vmatprep.subr.bf16.mxu0 %v1588
      %2191 = vmatpush1.bf16.msra.mxu0 %v1587
      %2192 = vmatprep.subr.bf16.mxu0 %v1590
      %2193 = vmatpush1.bf16.msra.mxu0 %v1589
      %2194 = vmatprep.subr.bf16.mxu0 %v1592
      %2195 = vmatpush1.bf16.msra.mxu0 %v1591
      %2196 = vmatprep.subr.bf16.mxu0 %v1594
      %2197 = vmatpush1.bf16.msra.mxu0 %v1593
      %2198 = vmatprep.subr.bf16.mxu0 %v1596
      %2199 = vmatpush1.bf16.msra.mxu0 %v1595
      %2200 = vmatprep.subr.bf16.mxu0 %v1598
      %2201 = vmatpush1.bf16.msra.mxu0 %v1597
      %2202 = vmatprep.subr.bf16.mxu0 %v1600
      %2203 = vmatpush1.bf16.msra.mxu0 %v1599
      %2204 = vmatprep.mubr.bf16.mxu0 %v548
      %2205 = vmatmul.mubr.bf16.gmra.mrb[0].mxu0 %v546
      %v2206 = vpop.f32.mrb[0].mxu0
      %v2207 = vadd.f32 %v2166, %v2206
      %v2208 = vpop.f32.mrb[0].mxu0
      %v2209 = vadd.f32 %v2168, %v2208
      %v2210 = vpop.f32.mrb[0].mxu0
      %v2211 = vpop.f32.mrb[0].mxu0
      %2212 = vdwg.mxu0
      %2213 = vmatprep.subr.bf16.mxu0 %v1602
      %2214 = vmatpush1.bf16.msra.mxu0 %v1601
      %2215 = vmatprep.subr.bf16.mxu0 %v1604
      %2216 = vmatpush1.bf16.msra.mxu0 %v1603
      %2217 = vmatprep.subr.bf16.mxu0 %v1606
      %2218 = vmatpush1.bf16.msra.mxu0 %v1605
      %2219 = vmatprep.subr.bf16.mxu0 %v1608
      %2220 = vmatpush1.bf16.msra.mxu0 %v1607
      %2221 = vmatprep.subr.bf16.mxu0 %v1610
      %2222 = vmatpush1.bf16.msra.mxu0 %v1609
      %2223 = vmatprep.subr.bf16.mxu0 %v1612
      %2224 = vmatpush1.bf16.msra.mxu0 %v1611
      %2225 = vmatprep.subr.bf16.mxu0 %v1614
      %2226 = vmatpush1.bf16.msra.mxu0 %v1613
      %2227 = vmatprep.subr.bf16.mxu0 %v1616
      %2228 = vmatpush1.bf16.msra.mxu0 %v1615
      %2229 = vmatprep.subr.bf16.mxu0 %v1618
      %2230 = vmatpush1.bf16.msra.mxu0 %v1617
      %2231 = vmatprep.subr.bf16.mxu0 %v1620
      %2232 = vmatpush1.bf16.msra.mxu0 %v1619
      %2233 = vmatprep.subr.bf16.mxu0 %v1622
      %2234 = vmatpush1.bf16.msra.mxu0 %v1621
      %2235 = vmatprep.subr.bf16.mxu0 %v1624
      %2236 = vmatpush1.bf16.msra.mxu0 %v1623
      %2237 = vmatprep.subr.bf16.mxu0 %v1626
      %2238 = vmatpush1.bf16.msra.mxu0 %v1625
      %2239 = vmatprep.subr.bf16.mxu0 %v1628
      %2240 = vmatpush1.bf16.msra.mxu0 %v1627
      %2241 = vmatprep.subr.bf16.mxu0 %v1630
      %2242 = vmatpush1.bf16.msra.mxu0 %v1629
      %2243 = vmatprep.subr.bf16.mxu0 %v1632
      %2244 = vmatpush1.bf16.msra.mxu0 %v1631
      %2245 = vmatprep.mubr.bf16.mxu0 %v564
      %2246 = vmatmul.mubr.bf16.gmra.mrb[0].mxu0 %v556
      %v2247 = vpop.f32.mrb[0].mxu0
      %v2248 = vadd.f32 %v2207, %v2247
      %v2249 = vpop.f32.mrb[0].mxu0
      %v2250 = vadd.f32 %v2209, %v2249
      %v2251 = vpop.f32.mrb[0].mxu0
      %v2252 = vpop.f32.mrb[0].mxu0
      %2253 = vdwg.mxu0
      %2254 = vmatprep.subr.bf16.mxu0 %v1634
      %2255 = vmatpush1.bf16.msra.mxu0 %v1633
      %2256 = vmatprep.subr.bf16.mxu0 %v1636
      %2257 = vmatpush1.bf16.msra.mxu0 %v1635
      %2258 = vmatprep.subr.bf16.mxu0 %v1638
      %2259 = vmatpush1.bf16.msra.mxu0 %v1637
      %2260 = vmatprep.subr.bf16.mxu0 %v1640
      %2261 = vmatpush1.bf16.msra.mxu0 %v1639
      %2262 = vmatprep.subr.bf16.mxu0 %v1642
      %2263 = vmatpush1.bf16.msra.mxu0 %v1641
      %2264 = vmatprep.subr.bf16.mxu0 %v1644
      %2265 = vmatpush1.bf16.msra.mxu0 %v1643
      %2266 = vmatprep.subr.bf16.mxu0 %v1646
      %2267 = vmatpush1.bf16.msra.mxu0 %v1645
      %2268 = vmatprep.subr.bf16.mxu0 %v1648
      %2269 = vmatpush1.bf16.msra.mxu0 %v1647
      %2270 = vmatprep.subr.bf16.mxu0 %v1650
      %2271 = vmatpush1.bf16.msra.mxu0 %v1649
      %2272 = vmatprep.subr.bf16.mxu0 %v1652
      %2273 = vmatpush1.bf16.msra.mxu0 %v1651
      %2274 = vmatprep.subr.bf16.mxu0 %v1654
      %2275 = vmatpush1.bf16.msra.mxu0 %v1653
      %2276 = vmatprep.subr.bf16.mxu0 %v1656
      %2277 = vmatpush1.bf16.msra.mxu0 %v1655
      %2278 = vmatprep.subr.bf16.mxu0 %v1658
      %2279 = vmatpush1.bf16.msra.mxu0 %v1657
      %2280 = vmatprep.subr.bf16.mxu0 %v1660
      %2281 = vmatpush1.bf16.msra.mxu0 %v1659
      %2282 = vmatprep.subr.bf16.mxu0 %v1662
      %2283 = vmatpush1.bf16.msra.mxu0 %v1661
      %2284 = vmatprep.subr.bf16.mxu0 %v1664
      %2285 = vmatpush1.bf16.msra.mxu0 %v1663
      %2286 = vmatprep.mubr.bf16.mxu0 %v565
      %2287 = vmatmul.mubr.bf16.gmra.mrb[0].mxu0 %v563
      %v2288 = vpop.f32.mrb[0].mxu0
      %v2289 = vadd.f32 %v2248, %v2288
      %v2290 = vpop.f32.mrb[0].mxu0
      %v2291 = vadd.f32 %v2250, %v2290
      %v2292 = vpop.f32.mrb[0].mxu0
      %v2293 = vpop.f32.mrb[0].mxu0
      %2294 = vdwg.mxu0
      %2295 = vmatprep.subr.bf16.mxu0 %v1666
      %2296 = vmatpush1.bf16.msra.mxu0 %v1665
      %2297 = vmatprep.subr.bf16.mxu0 %v1668
      %2298 = vmatpush1.bf16.msra.mxu0 %v1667
      %2299 = vmatprep.subr.bf16.mxu0 %v1670
      %2300 = vmatpush1.bf16.msra.mxu0 %v1669
      %2301 = vmatprep.subr.bf16.mxu0 %v1672
      %2302 = vmatpush1.bf16.msra.mxu0 %v1671
      %2303 = vmatprep.subr.bf16.mxu0 %v1674
      %2304 = vmatpush1.bf16.msra.mxu0 %v1673
      %2305 = vmatprep.subr.bf16.mxu0 %v1676
      %2306 = vmatpush1.bf16.msra.mxu0 %v1675
      %2307 = vmatprep.subr.bf16.mxu0 %v1678
      %2308 = vmatpush1.bf16.msra.mxu0 %v1677
      %2309 = vmatprep.subr.bf16.mxu0 %v1680
      %2310 = vmatpush1.bf16.msra.mxu0 %v1679
      %2311 = vmatprep.subr.bf16.mxu0 %v1682
      %2312 = vmatpush1.bf16.msra.mxu0 %v1681
      %2313 = vmatprep.subr.bf16.mxu0 %v1684
      %2314 = vmatpush1.bf16.msra.mxu0 %v1683
      %2315 = vmatprep.subr.bf16.mxu0 %v1686
      %2316 = vmatpush1.bf16.msra.mxu0 %v1685
      %2317 = vmatprep.subr.bf16.mxu0 %v1688
      %2318 = vmatpush1.bf16.msra.mxu0 %v1687
      %2319 = vmatprep.subr.bf16.mxu0 %v1690
      %2320 = vmatpush1.bf16.msra.mxu0 %v1689
      %2321 = vmatprep.subr.bf16.mxu0 %v1692
      %2322 = vmatpush1.bf16.msra.mxu0 %v1691
      %2323 = vmatprep.subr.bf16.mxu0 %v1694
      %2324 = vmatpush1.bf16.msra.mxu0 %v1693
      %2325 = vmatprep.subr.bf16.mxu0 %v1696
      %2326 = vmatpush1.bf16.msra.mxu0 %v1695
      %2327 = vmatprep.mubr.bf16.mxu0 %v581
      %2328 = vmatmul.mubr.bf16.gmra.mrb[0].mxu0 %v573
      %v2329 = vpop.f32.mrb[0].mxu0
      %v2330 = vadd.f32 %v2289, %v2329
      %v2331 = vpop.f32.mrb[0].mxu0
      %v2332 = vadd.f32 %v2291, %v2331
      %v2333 = vpop.f32.mrb[0].mxu0
      %v2334 = vpop.f32.mrb[0].mxu0
      %2335 = vdwg.mxu0
      %2336 = vmatprep.subr.bf16.mxu0 %v1698
      %2337 = vmatpush1.bf16.msra.mxu0 %v1697
      %2338 = vmatprep.subr.bf16.mxu0 %v1700
      %2339 = vmatpush1.bf16.msra.mxu0 %v1699
      %2340 = vmatprep.subr.bf16.mxu0 %v1702
      %2341 = vmatpush1.bf16.msra.mxu0 %v1701
      %2342 = vmatprep.subr.bf16.mxu0 %v1704
      %2343 = vmatpush1.bf16.msra.mxu0 %v1703
      %2344 = vmatprep.subr.bf16.mxu0 %v1706
      %2345 = vmatpush1.bf16.msra.mxu0 %v1705
      %2346 = vmatprep.subr.bf16.mxu0 %v1708
      %2347 = vmatpush1.bf16.msra.mxu0 %v1707
      %2348 = vmatprep.subr.bf16.mxu0 %v1710
      %2349 = vmatpush1.bf16.msra.mxu0 %v1709
      %2350 = vmatprep.subr.bf16.mxu0 %v1712
      %2351 = vmatpush1.bf16.msra.mxu0 %v1711
      %2352 = vmatprep.subr.bf16.mxu0 %v1714
      %2353 = vmatpush1.bf16.msra.mxu0 %v1713
      %2354 = vmatprep.subr.bf16.mxu0 %v1716
      %2355 = vmatpush1.bf16.msra.mxu0 %v1715
      %2356 = vmatprep.subr.bf16.mxu0 %v1718
      %2357 = vmatpush1.bf16.msra.mxu0 %v1717
      %2358 = vmatprep.subr.bf16.mxu0 %v1720
      %2359 = vmatpush1.bf16.msra.mxu0 %v1719
      %2360 = vmatprep.subr.bf16.mxu0 %v1722
      %2361 = vmatpush1.bf16.msra.mxu0 %v1721
      %2362 = vmatprep.subr.bf16.mxu0 %v1724
      %2363 = vmatpush1.bf16.msra.mxu0 %v1723
      %2364 = vmatprep.subr.bf16.mxu0 %v1726
      %2365 = vmatpush1.bf16.msra.mxu0 %v1725
      %2366 = vmatprep.subr.bf16.mxu0 %v1728
      %2367 = vmatpush1.bf16.msra.mxu0 %v1727
      %2368 = vmatprep.mubr.bf16.mxu0 %v582
      %2369 = vmatmul.mubr.bf16.gmra.mrb[0].mxu0 %v580
      %v2370 = vpop.f32.mrb[0].mxu0
      %v2371 = vadd.f32 %v2330, %v2370
      %v2372 = vpop.f32.mrb[0].mxu0
      %v2373 = vadd.f32 %v2332, %v2372
      %v2374 = vpop.f32.mrb[0].mxu0
      %v2375 = vpop.f32.mrb[0].mxu0
      %2376 = vdwg.mxu0
      %2377 = vmatprep.subr.bf16.mxu0 %v1730
      %2378 = vmatpush1.bf16.msra.mxu0 %v1729
      %2379 = vmatprep.subr.bf16.mxu0 %v1732
      %2380 = vmatpush1.bf16.msra.mxu0 %v1731
      %2381 = vmatprep.subr.bf16.mxu0 %v1734
      %2382 = vmatpush1.bf16.msra.mxu0 %v1733
      %2383 = vmatprep.subr.bf16.mxu0 %v1736
      %2384 = vmatpush1.bf16.msra.mxu0 %v1735
      %2385 = vmatprep.subr.bf16.mxu0 %v1738
      %2386 = vmatpush1.bf16.msra.mxu0 %v1737
      %2387 = vmatprep.subr.bf16.mxu0 %v1740
      %2388 = vmatpush1.bf16.msra.mxu0 %v1739
      %2389 = vmatprep.subr.bf16.mxu0 %v1742
      %2390 = vmatpush1.bf16.msra.mxu0 %v1741
      %2391 = vmatprep.subr.bf16.mxu0 %v1744
      %2392 = vmatpush1.bf16.msra.mxu0 %v1743
      %2393 = vmatprep.subr.bf16.mxu0 %v1746
      %2394 = vmatpush1.bf16.msra.mxu0 %v1745
      %2395 = vmatprep.subr.bf16.mxu0 %v1748
      %2396 = vmatpush1.bf16.msra.mxu0 %v1747
      %2397 = vmatprep.subr.bf16.mxu0 %v1750
      %2398 = vmatpush1.bf16.msra.mxu0 %v1749
      %2399 = vmatprep.subr.bf16.mxu0 %v1752
      %2400 = vmatpush1.bf16.msra.mxu0 %v1751
      %2401 = vmatprep.subr.bf16.mxu0 %v1754
      %2402 = vmatpush1.bf16.msra.mxu0 %v1753
      %2403 = vmatprep.subr.bf16.mxu0 %v1756
      %2404 = vmatpush1.bf16.msra.mxu0 %v1755
      %2405 = vmatprep.subr.bf16.mxu0 %v1758
      %2406 = vmatpush1.bf16.msra.mxu0 %v1757
      %2407 = vmatprep.subr.bf16.mxu0 %v1760
      %2408 = vmatpush1.bf16.msra.mxu0 %v1759
      %2409 = vmatprep.mubr.bf16.mxu0 %v590
      %2410 = vmatmul.mubr.bf16.gmra.mrb[0].mxu0 %v589
      %v2411 = vpop.f32.mrb[0].mxu0
      %v2412 = vadd.f32 %v2371, %v2411
      %v2413 = vpop.f32.mrb[0].mxu0
      %v2414 = vadd.f32 %v2373, %v2413
      %v2415 = vpop.f32.mrb[0].mxu0
      %v2416 = vpop.f32.mrb[0].mxu0
      %2417 = vdwg.mxu0
      %v2418 = vmax.f32 %v2412, 0.0
      %v2419 = vmax.f32 %v2414, 0.0
      %2420 = vxpose.xlu0.b32.start [1/16] %v2418, 128
      %2421 = vxpose.xlu0.b32.cont [2/16] 0.0, 128
      %2422 = vxpose.xlu0.b32.cont [3/16] 0.0, 128
      %2423 = vxpose.xlu0.b32.cont [4/16] 0.0, 128
      %2424 = vxpose.xlu0.b32.cont [5/16] 0.0, 128
      %2425 = vxpose.xlu0.b32.cont [6/16] 0.0, 128
      %2426 = vxpose.xlu0.b32.cont [7/16] 0.0, 128
      %2427 = vxpose.xlu0.b32.cont [8/16] 0.0, 128
      %2428 = vxpose.xlu0.b32.cont [9/16] 0.0, 128
      %2429 = vxpose.xlu0.b32.cont [10/16] 0.0, 128
      %2430 = vxpose.xlu0.b32.cont [11/16] 0.0, 128
      %2431 = vxpose.xlu0.b32.cont [12/16] 0.0, 128
      %2432 = vxpose.xlu0.b32.cont [13/16] 0.0, 128
      %2433 = vxpose.xlu0.b32.cont [14/16] 0.0, 128
      %2434 = vxpose.xlu0.b32.cont [15/16] 0.0, 128
      %2435 = vxpose.xlu0.b32.end [16/16] 0.0, 128
      %v2436 = vpop.trf.xlu0
      %v2437 = vpop.trf.xlu0
      %v2438 = vpop.trf.xlu0
      %v2439 = vpop.trf.xlu0
      %v2440 = vpop.trf.xlu0
      %v2441 = vpop.trf.xlu0
      %v2442 = vpop.trf.xlu0
      %v2443 = vpop.trf.xlu0
      %v2444 = vpop.trf.xlu0
      %v2445 = vpop.trf.xlu0
      %v2446 = vpop.trf.xlu0
      %v2447 = vpop.trf.xlu0
      %v2448 = vpop.trf.xlu0
      %v2449 = vpop.trf.xlu0
      %v2450 = vpop.trf.xlu0
      %v2451 = vpop.trf.xlu0
      %2452 = vxpose.xlu0.b32.start [1/16] %v2419, 128
      %2453 = vxpose.xlu0.b32.cont [2/16] 0.0, 128
      %2454 = vxpose.xlu0.b32.cont [3/16] 0.0, 128
      %2455 = vxpose.xlu0.b32.cont [4/16] 0.0, 128
      %2456 = vxpose.xlu0.b32.cont [5/16] 0.0, 128
      %2457 = vxpose.xlu0.b32.cont [6/16] 0.0, 128
      %2458 = vxpose.xlu0.b32.cont [7/16] 0.0, 128
      %2459 = vxpose.xlu0.b32.cont [8/16] 0.0, 128
      %2460 = vxpose.xlu0.b32.cont [9/16] 0.0, 128
      %2461 = vxpose.xlu0.b32.cont [10/16] 0.0, 128
      %2462 = vxpose.xlu0.b32.cont [11/16] 0.0, 128
      %2463 = vxpose.xlu0.b32.cont [12/16] 0.0, 128
      %2464 = vxpose.xlu0.b32.cont [13/16] 0.0, 128
      %2465 = vxpose.xlu0.b32.cont [14/16] 0.0, 128
      %2466 = vxpose.xlu0.b32.cont [15/16] 0.0, 128
      %2467 = vxpose.xlu0.b32.end [16/16] 0.0, 128
      %v2468 = vpop.trf.xlu0
      %v2469 = vpop.trf.xlu0
      %v2470 = vpop.trf.xlu0
      %v2471 = vpop.trf.xlu0
      %v2472 = vpop.trf.xlu0
      %v2473 = vpop.trf.xlu0
      %v2474 = vpop.trf.xlu0
      %v2475 = vpop.trf.xlu0
      %v2476 = vpop.trf.xlu0
      %v2477 = vpop.trf.xlu0
      %v2478 = vpop.trf.xlu0
      %v2479 = vpop.trf.xlu0
      %v2480 = vpop.trf.xlu0
      %v2481 = vpop.trf.xlu0
      %v2482 = vpop.trf.xlu0
      %v2483 = vpop.trf.xlu0
      %vm2484 = vcmask 31744
      %2485 = vst.msk [vmem:[%s204] sm:$0xff] %vm2484, %v2436
      %2486 = vst.msk [vmem:[%s204 + $0x8] sm:$0xff] %vm2484, %v2437
      %2487 = vst.msk [vmem:[%s204 + $0x10] sm:$0xff] %vm2484, %v2438
      %2488 = vst.msk [vmem:[%s204 + $0x18] sm:$0xff] %vm2484, %v2439
      %2489 = vst.msk [vmem:[%s204 + $0x20] sm:$0xff] %vm2484, %v2440
      %2490 = vst.msk [vmem:[%s204 + $0x28] sm:$0xff] %vm2484, %v2441
      %2491 = vst.msk [vmem:[%s204 + $0x30] sm:$0xff] %vm2484, %v2442
      %2492 = vst.msk [vmem:[%s204 + $0x38] sm:$0xff] %vm2484, %v2443
      %2493 = vst.msk [vmem:[%s204 + $0x40] sm:$0xff] %vm2484, %v2444
      %2494 = vst.msk [vmem:[%s204 + $0x48] sm:$0xff] %vm2484, %v2445
      %2495 = vst.msk [vmem:[%s204 + $0x50] sm:$0xff] %vm2484, %v2446
      %2496 = vst.msk [vmem:[%s204 + $0x58] sm:$0xff] %vm2484, %v2447
      %2497 = vst.msk [vmem:[%s204 + $0x60] sm:$0xff] %vm2484, %v2448
      %2498 = vst.msk [vmem:[%s204 + $0x68] sm:$0xff] %vm2484, %v2449
      %2499 = vst.msk [vmem:[%s204 + $0x70] sm:$0xff] %vm2484, %v2450
      %2500 = vst.msk [vmem:[%s204 + $0x78] sm:$0xff] %vm2484, %v2451
      %2501 = vst.msk [vmem:[%s204 + $0x80] sm:$0xff] %vm2484, %v2468
      %2502 = vst.msk [vmem:[%s204 + $0x88] sm:$0xff] %vm2484, %v2469
      %2503 = vst.msk [vmem:[%s204 + $0x90] sm:$0xff] %vm2484, %v2470
      %2504 = vst.msk [vmem:[%s204 + $0x98] sm:$0xff] %vm2484, %v2471
      %2505 = vst.msk [vmem:[%s204 + $0xa0] sm:$0xff] %vm2484, %v2472
      %2506 = vst.msk [vmem:[%s204 + $0xa8] sm:$0xff] %vm2484, %v2473
      %2507 = vst.msk [vmem:[%s204 + $0xb0] sm:$0xff] %vm2484, %v2474
      %2508 = vst.msk [vmem:[%s204 + $0xb8] sm:$0xff] %vm2484, %v2475
      %2509 = vst.msk [vmem:[%s204 + $0xc0] sm:$0xff] %vm2484, %v2476
      %2510 = vst.msk [vmem:[%s204 + $0xc8] sm:$0xff] %vm2484, %v2477
      %2511 = vst.msk [vmem:[%s204 + $0xd0] sm:$0xff] %vm2484, %v2478
      %2512 = vst.msk [vmem:[%s204 + $0xd8] sm:$0xff] %vm2484, %v2479
      %2513 = vst.msk [vmem:[%s204 + $0xe0] sm:$0xff] %vm2484, %v2480
      %2514 = vst.msk [vmem:[%s204 + $0xe8] sm:$0xff] %vm2484, %v2481
      %2515 = vst.msk [vmem:[%s204 + $0xf0] sm:$0xff] %vm2484, %v2482
      %2516 = vst.msk [vmem:[%s204 + $0xf8] sm:$0xff] %vm2484, %v2483
      %p2517 = scmp.lt.s32.totalorder %s18, 1
      %s2518 = scalar_select %p2517, %s18, 1
      %p2519 = scmp.lt.s32.totalorder %s19, 0
      %s2520 = scalar_select %p2519, %s19, 0
      %s2521 = smul.addr %s2518, 32
      %s2522 = sadd.s32 %s2520, %s2521
      %s2523 = smul.addr %s2522, 8
      %s2524 = scalar_lea.vmem %s3, %s2523
      // Predicated region
      $region33: #{forward.8} parent=31 // pred_check
        %p2525 = pneg %p116
      $region34: #{forward.8} parent=31 // pred_check_branch
        %2527 = sbr.rel (%p2525) target = $region36
      $region35: #{forward.8} parent=31 // pred_region
        _
      $region36: #{forward.8} parent=31 // pred_fallthru
        _
    $region32: #{forward.8} parent=5 // pred_fallthru
      _
    %p2528 = scmp.le.s32.totalorder 2, %s9
    // Predicated region
    $region37: #{forward.8} parent=5 // pred_check
      %p2529 = pneg %p2528
    $region38: #{forward.8} parent=5 // pred_check_branch
      %2531 = sbr.rel (%p2529) target = $region40
    $region39: #{forward.8} parent=5 // pred_region
      %s2532 = ssub.s32 %s9, 2
      // Predicated region
      $region41: #{forward.8} parent=39 // pred_check
        %p2533 = pneg %p122
      $region42: #{forward.8} parent=39 // pred_check_branch
        %2535 = sbr.rel (%p2533) target = $region44
      $region43: #{forward.8} parent=39 // pred_region
        %p2536 = scmp.lt.s32.totalorder %s20, 1
        %s2537 = scalar_select %p2536, %s20, 1
        %p2538 = scmp.lt.s32.totalorder %s21, 0
        %s2539 = scalar_select %p2538, %s21, 0
        %s2540 = smul.addr %s2537, 32
        %s2541 = sadd.s32 %s2539, %s2540
        %s2542 = smul.addr %s2541, 8
        %s2543 = scalar_lea.vmem %s3, %s2542
      $region44: #{forward.8} parent=39 // pred_fallthru
        _
    $region40: #{forward.8} parent=5 // pred_fallthru
      _
  $region6: #{forward.8} parent=0 // loop_footer
    %s13 = sadd.s32 1, %s9
  $region7: #{forward.8} parent=0 // loop_footer_branch
    %8 = sbr.rel target = $region3
  $region8: #{forward.8} parent=0 // loop_exit
    _

</llo_original>
